<compile_context>
chip_gen: v6e
topology: v6e:2x2x1
jax: 0.10.0
libtpu: 0.0.40
codegen_flags: <defaults>
</compile_context>

<pallas_src>
import random

import jax
import jax.numpy as jnp
from jax.experimental import pallas as pl
from jax.experimental.pallas import tpu as pltpu

# Small, forward-consistent shapes.
B = 2        # batch
S = 8        # src / trg sequence length (max_len)
E = 16       # embedding dim
H = 32       # hidden dim (enc_hid == dec_hid)
V_SRC = 20   # source vocab
V_TRG = 20   # target vocab (decoder.output_dimension)


def _gru_gates(gi, gh, h):
    # PyTorch GRU gate order: r, z, n
    r = jax.nn.sigmoid(gi[:, :H] + gh[:, :H])
    z = jax.nn.sigmoid(gi[:, H:2 * H] + gh[:, H:2 * H])
    n = jnp.tanh(gi[:, 2 * H:] + r * gh[:, 2 * H:])
    return (1.0 - z) * n + z * h


def _one_hot_col(tok_ref, col, vocab):
    """[B, vocab] f32 one-hot for column `col` of an SMEM int32 token table [B, S]."""
    lane = jax.lax.broadcasted_iota(jnp.int32, (B, vocab), 1)
    sub = jax.lax.broadcasted_iota(jnp.int32, (B, vocab), 0)
    tok = jnp.zeros((B, vocab), jnp.int32)
    for b in range(B):                      # B = 2: a couple of SMEM scalar reads + selects
        tok = jnp.where(sub == b, tok_ref[b, col], tok)
    return (lane == tok).astype(jnp.float32)


# ---------------------------------------------------------------------------
# Fused Seq2Seq forward kernel: encoder GRU + attention decoder, one invocation.
# ---------------------------------------------------------------------------
def seq2seq_kernel(src_ref, trg_ref, tf_ref,                     # SMEM int32
                   enc_emb_ref, dec_emb_ref,
                   wih_enc_ref, whh_enc_ref, bih_enc_ref, bhh_enc_ref,
                   wa_h_ref, wa_e_ref, ba_ref, v_ref,
                   wih_de_ref, wih_dw_ref, whh_dec_ref, bih_dec_ref, bhh_dec_ref,
                   wfc_h_ref, wfc_w_ref, wfc_e_ref, bfc_ref,
                   out_ref,                                      # [S, B, V_TRG]
                   enc_scr, eenc_scr):                           # VMEM [B, S, H] each
    f32 = jnp.float32
    enc_emb = enc_emb_ref[...]
    dec_emb = dec_emb_ref[...]
    wih_enc = wih_enc_ref[...]
    whh_enc = whh_enc_ref[...]
    bih_enc = bih_enc_ref[...]
    bhh_enc = bhh_enc_ref[...]
    wa_h = wa_h_ref[...]
    wa_e = wa_e_ref[...]
    ba = ba_ref[...]
    v = v_ref[...]
    wih_de = wih_de_ref[...]
    wih_dw = wih_dw_ref[...]
    whh_dec = whh_dec_ref[...]
    bih_dec = bih_dec_ref[...]
    bhh_dec = bhh_dec_ref[...]
    wfc_h = wfc_h_ref[...]
    wfc_w = wfc_w_ref[...]
    wfc_e = wfc_e_ref[...]
    bfc = bfc_ref[...]

    # ----------------- Encoder GRU (trace-time unrolled, h in vregs) ---------
    h = jnp.zeros((B, H), f32)
    for t in range(S):
        x = jnp.dot(_one_hot_col(src_ref, t, V_SRC), enc_emb,
                    preferred_element_type=f32)                              # [B, E]
        gi = jnp.dot(x, wih_enc, preferred_element_type=f32) + bih_enc
        gh = jnp.dot(h, whh_enc, preferred_element_type=f32) + bhh_enc
        h = _gru_gates(gi, gh, h)
        enc_scr[:, t, :] = h
        # Decode-step-invariant attention projection, hoisted into the encoder loop.
        eenc_scr[:, t, :] = jnp.dot(h, wa_e, preferred_element_type=f32) + ba

    enc = enc_scr[...]                                                       # [B, S, H]
    eenc = eenc_scr[...]                                                     # [B, S, H]

    # outputs[0] stays the zero-init row, exactly like the PyTorch reference.
    out_ref[0] = jnp.zeros((B, V_TRG), f32)

    # ----------------- Decoder: S-1 steps, all state in vregs ----------------
    in_emb = jnp.dot(_one_hot_col(trg_ref, 0, V_TRG), dec_emb,
                     preferred_element_type=f32)                             # [B, E]
    for t in range(1, S):
        # Bahdanau attention over source positions.
        e_h = jnp.dot(h, wa_h, preferred_element_type=f32)                   # [B, H]
        energy = jnp.tanh(e_h[:, None, :] + eenc)                            # [B, S, H]
        scores = jnp.sum(energy * v[None, :, :], axis=-1)                    # [B, S]
        m = jnp.max(scores, axis=1, keepdims=True)
        p = jnp.exp(scores - m)
        a = p * pl.reciprocal(jnp.sum(p, axis=1, keepdims=True), approx=True)
        weighted = jnp.sum(a[:, :, None] * enc, axis=1)                      # [B, H]

        # Decoder GRU cell on [emb ; weighted].
        gi = (jnp.dot(in_emb, wih_de, preferred_element_type=f32)
              + jnp.dot(weighted, wih_dw, preferred_element_type=f32) + bih_dec)
        gh = jnp.dot(h, whh_dec, preferred_element_type=f32) + bhh_dec
        h = _gru_gates(gi, gh, h)

        # Output projection on [h ; weighted ; emb].
        logits = (jnp.dot(h, wfc_h, preferred_element_type=f32)
                  + jnp.dot(weighted, wfc_w, preferred_element_type=f32)
                  + jnp.dot(in_emb, wfc_e, preferred_element_type=f32) + bfc)  # [B, V_TRG]
        out_ref[t] = logits

        if t < S - 1:   # last step's next-token is never consumed: skip the work
            # Greedy argmax (first maximal index, like torch .max(1)[1]).
            lane = jax.lax.broadcasted_iota(jnp.int32, (B, V_TRG), 1)
            mx = jnp.max(logits, axis=1, keepdims=True)
            top1 = jnp.min(jnp.where(logits >= mx, lane, V_TRG), axis=1,
                           keepdims=True)                                    # [B, 1]
            pred_oh = (lane == top1).astype(f32)                             # [B, V_TRG]
            # Teacher forcing decision for this step (host-sampled, SMEM mask).
            trg_oh = _one_hot_col(trg_ref, t, V_TRG)
            tf_f = (tf_ref[t - 1] > 0).astype(f32)
            next_oh = tf_f * trg_oh + (1.0 - tf_f) * pred_oh
            in_emb = jnp.dot(next_oh, dec_emb, preferred_element_type=f32)


# ---------------------------------------------------------------------------
# Wrapper: one pallas_call, everything resident (total footprint << 1 MiB VMEM).
# ---------------------------------------------------------------------------
def seq2seq_forward_impl(src, trg, tf_mask, params):
    smem = pl.BlockSpec(memory_space=pltpu.MemorySpace.SMEM)
    vmem = pl.BlockSpec(memory_space=pltpu.MemorySpace.VMEM)
    return pl.pallas_call(
        seq2seq_kernel,
        out_shape=jax.ShapeDtypeStruct((S, B, V_TRG), jnp.float32),
        in_specs=[smem, smem, smem] + [vmem] * 19,
        out_specs=vmem,
        scratch_shapes=[
            pltpu.VMEM((B, S, H), jnp.float32),   # encoder outputs
            pltpu.VMEM((B, S, H), jnp.float32),   # hoisted enc @ wa_e + ba
        ],
    )(src, trg, tf_mask,
      params["enc_emb"], params["dec_emb"],
      params["wih_enc"], params["whh_enc"], params["bih_enc"], params["bhh_enc"],
      params["wa_h"], params["wa_e"], params["ba"], params["v"],
      params["wih_e"], params["wih_w"], params["whh_dec"], params["bih_dec"],
      params["bhh_dec"],
      params["wfc_h"], params["wfc_w"], params["wfc_e"], params["bfc"])


seq2seq_forward = jax.jit(seq2seq_forward_impl)


# ---------------------------------------------------------------------------
# Parameters (deterministic synthetic init)
# ---------------------------------------------------------------------------
def init_params(key):
    ks = jax.random.split(key, 20)
    n = lambda k, shp: (0.1 * jax.random.normal(k, shp)).astype(jnp.float32)
    return {
        # embeddings
        "enc_emb": n(ks[0], (V_SRC, E)),
        "dec_emb": n(ks[1], (V_TRG, E)),
        # encoder GRU
        "wih_enc": n(ks[2], (E, 3 * H)),
        "whh_enc": n(ks[3], (H, 3 * H)),
        "bih_enc": n(ks[4], (1, 3 * H)),
        "bhh_enc": n(ks[5], (1, 3 * H)),
        # attention
        "wa_h": n(ks[6], (H, H)),
        "wa_e": n(ks[7], (H, H)),
        "ba": n(ks[8], (1, H)),
        "v": n(ks[9], (1, H)),
        # decoder GRU (input = [emb ; weighted])
        "wih_e": n(ks[10], (E, 3 * H)),
        "wih_w": n(ks[11], (H, 3 * H)),
        "whh_dec": n(ks[12], (H, 3 * H)),
        "bih_dec": n(ks[13], (1, 3 * H)),
        "bhh_dec": n(ks[14], (1, 3 * H)),
        # output fc (input = [h ; weighted ; emb])
        "wfc_h": n(ks[15], (H, V_TRG)),
        "wfc_w": n(ks[16], (H, V_TRG)),
        "wfc_e": n(ks[17], (E, V_TRG)),
        "bfc": n(ks[18], (1, V_TRG)),
    }


def sample_teacher_forcing(max_len, teacher_forcing_ratio):
    # Host-side random draws, same count/order as the PyTorch loop (one per t in
    # 1..max_len-1); passed explicitly so jit does not freeze the decisions.
    return jnp.array(
        [1 if random.random() < teacher_forcing_ratio else 0 for _ in range(max_len - 1)],
        dtype=jnp.int32)


if __name__ == "__main__":
    key = jax.random.PRNGKey(0)
    kp, ksrc, ktrg = jax.random.split(key, 3)
    params = init_params(kp)

    src = jax.random.randint(ksrc, (B, S), 0, V_SRC, dtype=jnp.int32)
    trg = jax.random.randint(ktrg, (B, S), 0, V_TRG, dtype=jnp.int32)

    random.seed(0)  # deterministic teacher-forcing decisions (same semantics as random.random())
    tf_mask = sample_teacher_forcing(S, 0.5)

    out = seq2seq_forward(src, trg, tf_mask, params)
    out = jax.block_until_ready(out)

    assert out.shape == (S, B, V_TRG)
    assert bool(jnp.all(out[0] == 0.0))          # outputs[0] stays zero, as in PyTorch
    assert bool(jnp.all(jnp.isfinite(out)))
    print("KERNEL_OK")
</pallas_src>

<mosaic_0001>
module attributes {stable_mosaic.version = 11 : i64} {
  func.func @seq2seq_kernel(%arg0: memref<2x8xi32, #tpu.memory_space<smem>>, %arg1: memref<2x8xi32, #tpu.memory_space<smem>>, %arg2: memref<7xi32, #tpu.memory_space<smem>>, %arg3: memref<20x16xf32, #tpu.memory_space<vmem>>, %arg4: memref<20x16xf32, #tpu.memory_space<vmem>>, %arg5: memref<16x96xf32, #tpu.memory_space<vmem>>, %arg6: memref<32x96xf32, #tpu.memory_space<vmem>>, %arg7: memref<1x96xf32, #tpu.memory_space<vmem>>, %arg8: memref<1x96xf32, #tpu.memory_space<vmem>>, %arg9: memref<32x32xf32, #tpu.memory_space<vmem>>, %arg10: memref<32x32xf32, #tpu.memory_space<vmem>>, %arg11: memref<1x32xf32, #tpu.memory_space<vmem>>, %arg12: memref<1x32xf32, #tpu.memory_space<vmem>>, %arg13: memref<16x96xf32, #tpu.memory_space<vmem>>, %arg14: memref<32x96xf32, #tpu.memory_space<vmem>>, %arg15: memref<32x96xf32, #tpu.memory_space<vmem>>, %arg16: memref<1x96xf32, #tpu.memory_space<vmem>>, %arg17: memref<1x96xf32, #tpu.memory_space<vmem>>, %arg18: memref<32x20xf32, #tpu.memory_space<vmem>>, %arg19: memref<32x20xf32, #tpu.memory_space<vmem>>, %arg20: memref<16x20xf32, #tpu.memory_space<vmem>>, %arg21: memref<1x20xf32, #tpu.memory_space<vmem>>, %arg22: memref<8x2x20xf32, #tpu.memory_space<vmem>>, %arg23: memref<2x8x32xf32, #tpu.memory_space<vmem>>, %arg24: memref<2x8x32xf32, #tpu.memory_space<vmem>>) attributes {dimension_semantics = [], scalar_prefetch = 0 : i64, scratch_operands = 2 : i64, tpu.core_type = #tpu.core_type<tc>} {
    %c0 = arith.constant 0 : index
    %c0_0 = arith.constant 0 : index
    %0 = vector.load %arg3[%c0, %c0_0] : memref<20x16xf32, #tpu.memory_space<vmem>>, vector<20x16xf32>
    %c0_1 = arith.constant 0 : index
    %c0_2 = arith.constant 0 : index
    %1 = vector.load %arg4[%c0_1, %c0_2] : memref<20x16xf32, #tpu.memory_space<vmem>>, vector<20x16xf32>
    %c0_3 = arith.constant 0 : index
    %c0_4 = arith.constant 0 : index
    %2 = vector.load %arg5[%c0_3, %c0_4] : memref<16x96xf32, #tpu.memory_space<vmem>>, vector<16x96xf32>
    %c0_5 = arith.constant 0 : index
    %c0_6 = arith.constant 0 : index
    %3 = vector.load %arg6[%c0_5, %c0_6] : memref<32x96xf32, #tpu.memory_space<vmem>>, vector<32x96xf32>
    %c0_7 = arith.constant 0 : index
    %c0_8 = arith.constant 0 : index
    %4 = vector.load %arg7[%c0_7, %c0_8] : memref<1x96xf32, #tpu.memory_space<vmem>>, vector<1x96xf32>
    %c0_9 = arith.constant 0 : index
    %c0_10 = arith.constant 0 : index
    %5 = vector.load %arg8[%c0_9, %c0_10] : memref<1x96xf32, #tpu.memory_space<vmem>>, vector<1x96xf32>
    %c0_11 = arith.constant 0 : index
    %c0_12 = arith.constant 0 : index
    %6 = vector.load %arg9[%c0_11, %c0_12] : memref<32x32xf32, #tpu.memory_space<vmem>>, vector<32x32xf32>
    %c0_13 = arith.constant 0 : index
    %c0_14 = arith.constant 0 : index
    %7 = vector.load %arg10[%c0_13, %c0_14] : memref<32x32xf32, #tpu.memory_space<vmem>>, vector<32x32xf32>
    %c0_15 = arith.constant 0 : index
    %c0_16 = arith.constant 0 : index
    %8 = vector.load %arg11[%c0_15, %c0_16] : memref<1x32xf32, #tpu.memory_space<vmem>>, vector<1x32xf32>
    %c0_17 = arith.constant 0 : index
    %c0_18 = arith.constant 0 : index
    %9 = vector.load %arg12[%c0_17, %c0_18] : memref<1x32xf32, #tpu.memory_space<vmem>>, vector<1x32xf32>
    %c0_19 = arith.constant 0 : index
    %c0_20 = arith.constant 0 : index
    %10 = vector.load %arg13[%c0_19, %c0_20] : memref<16x96xf32, #tpu.memory_space<vmem>>, vector<16x96xf32>
    %c0_21 = arith.constant 0 : index
    %c0_22 = arith.constant 0 : index
    %11 = vector.load %arg14[%c0_21, %c0_22] : memref<32x96xf32, #tpu.memory_space<vmem>>, vector<32x96xf32>
    %c0_23 = arith.constant 0 : index
    %c0_24 = arith.constant 0 : index
    %12 = vector.load %arg15[%c0_23, %c0_24] : memref<32x96xf32, #tpu.memory_space<vmem>>, vector<32x96xf32>
    %c0_25 = arith.constant 0 : index
    %c0_26 = arith.constant 0 : index
    %13 = vector.load %arg16[%c0_25, %c0_26] : memref<1x96xf32, #tpu.memory_space<vmem>>, vector<1x96xf32>
    %c0_27 = arith.constant 0 : index
    %c0_28 = arith.constant 0 : index
    %14 = vector.load %arg17[%c0_27, %c0_28] : memref<1x96xf32, #tpu.memory_space<vmem>>, vector<1x96xf32>
    %c0_29 = arith.constant 0 : index
    %c0_30 = arith.constant 0 : index
    %15 = vector.load %arg18[%c0_29, %c0_30] : memref<32x20xf32, #tpu.memory_space<vmem>>, vector<32x20xf32>
    %c0_31 = arith.constant 0 : index
    %c0_32 = arith.constant 0 : index
    %16 = vector.load %arg19[%c0_31, %c0_32] : memref<32x20xf32, #tpu.memory_space<vmem>>, vector<32x20xf32>
    %c0_33 = arith.constant 0 : index
    %c0_34 = arith.constant 0 : index
    %17 = vector.load %arg20[%c0_33, %c0_34] : memref<16x20xf32, #tpu.memory_space<vmem>>, vector<16x20xf32>
    %c0_35 = arith.constant 0 : index
    %c0_36 = arith.constant 0 : index
    %18 = vector.load %arg21[%c0_35, %c0_36] : memref<1x20xf32, #tpu.memory_space<vmem>>, vector<1x20xf32>
    %cst = arith.constant 0.000000e+00 : f32
    %19 = vector.broadcast %cst : f32 to vector<2x32xf32>
    %20 = tpu.iota {dimensions = array<i32: 1>} : vector<2x20xi32>
    %21 = tpu.iota {dimensions = array<i32: 0>} : vector<2x20xi32>
    %c0_i32 = arith.constant 0 : i32
    %22 = vector.broadcast %c0_i32 : i32 to vector<2x20xi32>
    %c0_i32_37 = arith.constant 0 : i32
    %23 = vector.broadcast %c0_i32_37 : i32 to vector<2x20xi32>
    %24 = arith.cmpi eq, %21, %23 : vector<2x20xi32>
    %c0_38 = arith.constant 0 : index
    %c0_39 = arith.constant 0 : index
    %25 = memref.load %arg0[%c0_38, %c0_39] : memref<2x8xi32, #tpu.memory_space<smem>>
    %26 = vector.broadcast %25 : i32 to vector<2x20xi32>
    %27 = arith.select %24, %26, %22 : vector<2x20xi1>, vector<2x20xi32>
    %c1_i32 = arith.constant 1 : i32
    %28 = vector.broadcast %c1_i32 : i32 to vector<2x20xi32>
    %29 = arith.cmpi eq, %21, %28 : vector<2x20xi32>
    %c1 = arith.constant 1 : index
    %c0_40 = arith.constant 0 : index
    %30 = memref.load %arg0[%c1, %c0_40] : memref<2x8xi32, #tpu.memory_space<smem>>
    %31 = vector.broadcast %30 : i32 to vector<2x20xi32>
    %32 = arith.select %29, %31, %27 : vector<2x20xi1>, vector<2x20xi32>
    %33 = arith.cmpi eq, %20, %32 : vector<2x20xi32>
    %34 = arith.extui %33 : vector<2x20xi1> to vector<2x20xi32>
    %35 = arith.sitofp %34 : vector<2x20xi32> to vector<2x20xf32>
    %cst_41 = arith.constant dense<0.000000e+00> : vector<2x16xf32>
    %36 = tpu.matmul %35, %0, %cst_41 {dimension_numbers = #tpu.dot_dimension_numbers<[1], [0], [0], [1], [0, 0, 1, 1], [], []>} : vector<2x20xf32>, vector<20x16xf32>, vector<2x16xf32> -> vector<2x16xf32>
    %cst_42 = arith.constant dense<0.000000e+00> : vector<2x96xf32>
    %37 = tpu.matmul %36, %2, %cst_42 {dimension_numbers = #tpu.dot_dimension_numbers<[1], [0], [0], [1], [0, 0, 1, 1], [], []>} : vector<2x16xf32>, vector<16x96xf32>, vector<2x96xf32> -> vector<2x96xf32>
    %38 = vector.broadcast %4 : vector<1x96xf32> to vector<2x96xf32>
    %39 = arith.addf %37, %38 : vector<2x96xf32>
    %cst_43 = arith.constant dense<0.000000e+00> : vector<2x96xf32>
    %40 = tpu.matmul %19, %3, %cst_43 {dimension_numbers = #tpu.dot_dimension_numbers<[1], [0], [0], [1], [0, 0, 1, 1], [], []>} : vector<2x32xf32>, vector<32x96xf32>, vector<2x96xf32> -> vector<2x96xf32>
    %41 = vector.broadcast %5 : vector<1x96xf32> to vector<2x96xf32>
    %42 = arith.addf %40, %41 : vector<2x96xf32>
    %43 = vector.extract_strided_slice %39 {offsets = [0, 0], sizes = [2, 32], strides = [1, 1]} : vector<2x96xf32> to vector<2x32xf32>
    %44 = vector.extract_strided_slice %42 {offsets = [0, 0], sizes = [2, 32], strides = [1, 1]} : vector<2x96xf32> to vector<2x32xf32>
    %45 = arith.addf %43, %44 : vector<2x32xf32>
    %46 = arith.negf %45 : vector<2x32xf32>
    %47 = math.exp %46 : vector<2x32xf32>
    %cst_44 = arith.constant 1.000000e+00 : f32
    %48 = vector.broadcast %cst_44 : f32 to vector<2x32xf32>
    %49 = arith.addf %48, %47 : vector<2x32xf32>
    %50 = arith.divf %48, %49 : vector<2x32xf32>
    %51 = vector.extract_strided_slice %39 {offsets = [0, 32], sizes = [2, 32], strides = [1, 1]} : vector<2x96xf32> to vector<2x32xf32>
    %52 = vector.extract_strided_slice %42 {offsets = [0, 32], sizes = [2, 32], strides = [1, 1]} : vector<2x96xf32> to vector<2x32xf32>
    %53 = arith.addf %51, %52 : vector<2x32xf32>
    %54 = arith.negf %53 : vector<2x32xf32>
    %55 = math.exp %54 : vector<2x32xf32>
    %cst_45 = arith.constant 1.000000e+00 : f32
    %56 = vector.broadcast %cst_45 : f32 to vector<2x32xf32>
    %57 = arith.addf %56, %55 : vector<2x32xf32>
    %58 = arith.divf %56, %57 : vector<2x32xf32>
    %59 = vector.extract_strided_slice %39 {offsets = [0, 64], sizes = [2, 32], strides = [1, 1]} : vector<2x96xf32> to vector<2x32xf32>
    %60 = vector.extract_strided_slice %42 {offsets = [0, 64], sizes = [2, 32], strides = [1, 1]} : vector<2x96xf32> to vector<2x32xf32>
    %61 = arith.mulf %50, %60 : vector<2x32xf32>
    %62 = arith.addf %59, %61 : vector<2x32xf32>
    %63 = math.tanh %62 : vector<2x32xf32>
    %cst_46 = arith.constant 1.000000e+00 : f32
    %64 = vector.broadcast %cst_46 : f32 to vector<2x32xf32>
    %65 = arith.subf %64, %58 : vector<2x32xf32>
    %66 = arith.mulf %65, %63 : vector<2x32xf32>
    %67 = arith.mulf %58, %19 : vector<2x32xf32>
    %68 = arith.addf %66, %67 : vector<2x32xf32>
    %c0_47 = arith.constant 0 : index
    %c0_48 = arith.constant 0 : index
    %c0_49 = arith.constant 0 : index
    %69 = vector.load %arg23[%c0_47, %c0_48, %c0_49] : memref<2x8x32xf32, #tpu.memory_space<vmem>>, vector<2x1x32xf32>
    %70 = vector.shape_cast %69 : vector<2x1x32xf32> to vector<2x32xf32>
    %71 = vector.shape_cast %68 : vector<2x32xf32> to vector<2x1x32xf32>
    tpu.vector_store %arg23[%c0_47, %c0_48, %c0_49], %71 {strides = array<i32>} : memref<2x8x32xf32, #tpu.memory_space<vmem>>, vector<2x1x32xf32>,
    %cst_50 = arith.constant dense<0.000000e+00> : vector<2x32xf32>
    %72 = tpu.matmul %68, %7, %cst_50 {dimension_numbers = #tpu.dot_dimension_numbers<[1], [0], [0], [1], [0, 0, 1, 1], [], []>} : vector<2x32xf32>, vector<32x32xf32>, vector<2x32xf32> -> vector<2x32xf32>
    %73 = vector.broadcast %8 : vector<1x32xf32> to vector<2x32xf32>
    %74 = arith.addf %72, %73 : vector<2x32xf32>
    %c0_51 = arith.constant 0 : index
    %c0_52 = arith.constant 0 : index
    %c0_53 = arith.constant 0 : index
    %75 = vector.load %arg24[%c0_51, %c0_52, %c0_53] : memref<2x8x32xf32, #tpu.memory_space<vmem>>, vector<2x1x32xf32>
    %76 = vector.shape_cast %75 : vector<2x1x32xf32> to vector<2x32xf32>
    %77 = vector.shape_cast %74 : vector<2x32xf32> to vector<2x1x32xf32>
    tpu.vector_store %arg24[%c0_51, %c0_52, %c0_53], %77 {strides = array<i32>} : memref<2x8x32xf32, #tpu.memory_space<vmem>>, vector<2x1x32xf32>,
    %78 = tpu.iota {dimensions = array<i32: 1>} : vector<2x20xi32>
    %79 = tpu.iota {dimensions = array<i32: 0>} : vector<2x20xi32>
    %c0_i32_54 = arith.constant 0 : i32
    %80 = vector.broadcast %c0_i32_54 : i32 to vector<2x20xi32>
    %c0_i32_55 = arith.constant 0 : i32
    %81 = vector.broadcast %c0_i32_55 : i32 to vector<2x20xi32>
    %82 = arith.cmpi eq, %79, %81 : vector<2x20xi32>
    %c0_56 = arith.constant 0 : index
    %c1_57 = arith.constant 1 : index
    %83 = memref.load %arg0[%c0_56, %c1_57] : memref<2x8xi32, #tpu.memory_space<smem>>
    %84 = vector.broadcast %83 : i32 to vector<2x20xi32>
    %85 = arith.select %82, %84, %80 : vector<2x20xi1>, vector<2x20xi32>
    %c1_i32_58 = arith.constant 1 : i32
    %86 = vector.broadcast %c1_i32_58 : i32 to vector<2x20xi32>
    %87 = arith.cmpi eq, %79, %86 : vector<2x20xi32>
    %c1_59 = arith.constant 1 : index
    %c1_60 = arith.constant 1 : index
    %88 = memref.load %arg0[%c1_59, %c1_60] : memref<2x8xi32, #tpu.memory_space<smem>>
    %89 = vector.broadcast %88 : i32 to vector<2x20xi32>
    %90 = arith.select %87, %89, %85 : vector<2x20xi1>, vector<2x20xi32>
    %91 = arith.cmpi eq, %78, %90 : vector<2x20xi32>
    %92 = arith.extui %91 : vector<2x20xi1> to vector<2x20xi32>
    %93 = arith.sitofp %92 : vector<2x20xi32> to vector<2x20xf32>
    %cst_61 = arith.constant dense<0.000000e+00> : vector<2x16xf32>
    %94 = tpu.matmul %93, %0, %cst_61 {dimension_numbers = #tpu.dot_dimension_numbers<[1], [0], [0], [1], [0, 0, 1, 1], [], []>} : vector<2x20xf32>, vector<20x16xf32>, vector<2x16xf32> -> vector<2x16xf32>
    %cst_62 = arith.constant dense<0.000000e+00> : vector<2x96xf32>
    %95 = tpu.matmul %94, %2, %cst_62 {dimension_numbers = #tpu.dot_dimension_numbers<[1], [0], [0], [1], [0, 0, 1, 1], [], []>} : vector<2x16xf32>, vector<16x96xf32>, vector<2x96xf32> -> vector<2x96xf32>
    %96 = vector.broadcast %4 : vector<1x96xf32> to vector<2x96xf32>
    %97 = arith.addf %95, %96 : vector<2x96xf32>
    %cst_63 = arith.constant dense<0.000000e+00> : vector<2x96xf32>
    %98 = tpu.matmul %68, %3, %cst_63 {dimension_numbers = #tpu.dot_dimension_numbers<[1], [0], [0], [1], [0, 0, 1, 1], [], []>} : vector<2x32xf32>, vector<32x96xf32>, vector<2x96xf32> -> vector<2x96xf32>
    %99 = vector.broadcast %5 : vector<1x96xf32> to vector<2x96xf32>
    %100 = arith.addf %98, %99 : vector<2x96xf32>
    %101 = vector.extract_strided_slice %97 {offsets = [0, 0], sizes = [2, 32], strides = [1, 1]} : vector<2x96xf32> to vector<2x32xf32>
    %102 = vector.extract_strided_slice %100 {offsets = [0, 0], sizes = [2, 32], strides = [1, 1]} : vector<2x96xf32> to vector<2x32xf32>
    %103 = arith.addf %101, %102 : vector<2x32xf32>
    %104 = arith.negf %103 : vector<2x32xf32>
    %105 = math.exp %104 : vector<2x32xf32>
    %cst_64 = arith.constant 1.000000e+00 : f32
    %106 = vector.broadcast %cst_64 : f32 to vector<2x32xf32>
    %107 = arith.addf %106, %105 : vector<2x32xf32>
    %108 = arith.divf %106, %107 : vector<2x32xf32>
    %109 = vector.extract_strided_slice %97 {offsets = [0, 32], sizes = [2, 32], strides = [1, 1]} : vector<2x96xf32> to vector<2x32xf32>
    %110 = vector.extract_strided_slice %100 {offsets = [0, 32], sizes = [2, 32], strides = [1, 1]} : vector<2x96xf32> to vector<2x32xf32>
    %111 = arith.addf %109, %110 : vector<2x32xf32>
    %112 = arith.negf %111 : vector<2x32xf32>
    %113 = math.exp %112 : vector<2x32xf32>
    %cst_65 = arith.constant 1.000000e+00 : f32
    %114 = vector.broadcast %cst_65 : f32 to vector<2x32xf32>
    %115 = arith.addf %114, %113 : vector<2x32xf32>
    %116 = arith.divf %114, %115 : vector<2x32xf32>
    %117 = vector.extract_strided_slice %97 {offsets = [0, 64], sizes = [2, 32], strides = [1, 1]} : vector<2x96xf32> to vector<2x32xf32>
    %118 = vector.extract_strided_slice %100 {offsets = [0, 64], sizes = [2, 32], strides = [1, 1]} : vector<2x96xf32> to vector<2x32xf32>
    %119 = arith.mulf %108, %118 : vector<2x32xf32>
    %120 = arith.addf %117, %119 : vector<2x32xf32>
    %121 = math.tanh %120 : vector<2x32xf32>
    %cst_66 = arith.constant 1.000000e+00 : f32
    %122 = vector.broadcast %cst_66 : f32 to vector<2x32xf32>
    %123 = arith.subf %122, %116 : vector<2x32xf32>
    %124 = arith.mulf %123, %121 : vector<2x32xf32>
    %125 = arith.mulf %116, %68 : vector<2x32xf32>
    %126 = arith.addf %124, %125 : vector<2x32xf32>
    %c0_67 = arith.constant 0 : index
    %c1_68 = arith.constant 1 : index
    %c0_69 = arith.constant 0 : index
    %127 = vector.load %arg23[%c0_67, %c1_68, %c0_69] : memref<2x8x32xf32, #tpu.memory_space<vmem>>, vector<2x1x32xf32>
    %128 = vector.shape_cast %127 : vector<2x1x32xf32> to vector<2x32xf32>
    %129 = vector.shape_cast %126 : vector<2x32xf32> to vector<2x1x32xf32>
    tpu.vector_store %arg23[%c0_67, %c1_68, %c0_69], %129 {strides = array<i32>} : memref<2x8x32xf32, #tpu.memory_space<vmem>>, vector<2x1x32xf32>,
    %cst_70 = arith.constant dense<0.000000e+00> : vector<2x32xf32>
    %130 = tpu.matmul %126, %7, %cst_70 {dimension_numbers = #tpu.dot_dimension_numbers<[1], [0], [0], [1], [0, 0, 1, 1], [], []>} : vector<2x32xf32>, vector<32x32xf32>, vector<2x32xf32> -> vector<2x32xf32>
    %131 = vector.broadcast %8 : vector<1x32xf32> to vector<2x32xf32>
    %132 = arith.addf %130, %131 : vector<2x32xf32>
    %c0_71 = arith.constant 0 : index
    %c1_72 = arith.constant 1 : index
    %c0_73 = arith.constant 0 : index
    %133 = vector.load %arg24[%c0_71, %c1_72, %c0_73] : memref<2x8x32xf32, #tpu.memory_space<vmem>>, vector<2x1x32xf32>
    %134 = vector.shape_cast %133 : vector<2x1x32xf32> to vector<2x32xf32>
    %135 = vector.shape_cast %132 : vector<2x32xf32> to vector<2x1x32xf32>
    tpu.vector_store %arg24[%c0_71, %c1_72, %c0_73], %135 {strides = array<i32>} : memref<2x8x32xf32, #tpu.memory_space<vmem>>, vector<2x1x32xf32>,
    %136 = tpu.iota {dimensions = array<i32: 1>} : vector<2x20xi32>
    %137 = tpu.iota {dimensions = array<i32: 0>} : vector<2x20xi32>
    %c0_i32_74 = arith.constant 0 : i32
    %138 = vector.broadcast %c0_i32_74 : i32 to vector<2x20xi32>
    %c0_i32_75 = arith.constant 0 : i32
    %139 = vector.broadcast %c0_i32_75 : i32 to vector<2x20xi32>
    %140 = arith.cmpi eq, %137, %139 : vector<2x20xi32>
    %c0_76 = arith.constant 0 : index
    %c2 = arith.constant 2 : index
    %141 = memref.load %arg0[%c0_76, %c2] : memref<2x8xi32, #tpu.memory_space<smem>>
    %142 = vector.broadcast %141 : i32 to vector<2x20xi32>
    %143 = arith.select %140, %142, %138 : vector<2x20xi1>, vector<2x20xi32>
    %c1_i32_77 = arith.constant 1 : i32
    %144 = vector.broadcast %c1_i32_77 : i32 to vector<2x20xi32>
    %145 = arith.cmpi eq, %137, %144 : vector<2x20xi32>
    %c1_78 = arith.constant 1 : index
    %c2_79 = arith.constant 2 : index
    %146 = memref.load %arg0[%c1_78, %c2_79] : memref<2x8xi32, #tpu.memory_space<smem>>
    %147 = vector.broadcast %146 : i32 to vector<2x20xi32>
    %148 = arith.select %145, %147, %143 : vector<2x20xi1>, vector<2x20xi32>
    %149 = arith.cmpi eq, %136, %148 : vector<2x20xi32>
    %150 = arith.extui %149 : vector<2x20xi1> to vector<2x20xi32>
    %151 = arith.sitofp %150 : vector<2x20xi32> to vector<2x20xf32>
    %cst_80 = arith.constant dense<0.000000e+00> : vector<2x16xf32>
    %152 = tpu.matmul %151, %0, %cst_80 {dimension_numbers = #tpu.dot_dimension_numbers<[1], [0], [0], [1], [0, 0, 1, 1], [], []>} : vector<2x20xf32>, vector<20x16xf32>, vector<2x16xf32> -> vector<2x16xf32>
    %cst_81 = arith.constant dense<0.000000e+00> : vector<2x96xf32>
    %153 = tpu.matmul %152, %2, %cst_81 {dimension_numbers = #tpu.dot_dimension_numbers<[1], [0], [0], [1], [0, 0, 1, 1], [], []>} : vector<2x16xf32>, vector<16x96xf32>, vector<2x96xf32> -> vector<2x96xf32>
    %154 = vector.broadcast %4 : vector<1x96xf32> to vector<2x96xf32>
    %155 = arith.addf %153, %154 : vector<2x96xf32>
    %cst_82 = arith.constant dense<0.000000e+00> : vector<2x96xf32>
    %156 = tpu.matmul %126, %3, %cst_82 {dimension_numbers = #tpu.dot_dimension_numbers<[1], [0], [0], [1], [0, 0, 1, 1], [], []>} : vector<2x32xf32>, vector<32x96xf32>, vector<2x96xf32> -> vector<2x96xf32>
    %157 = vector.broadcast %5 : vector<1x96xf32> to vector<2x96xf32>
    %158 = arith.addf %156, %157 : vector<2x96xf32>
    %159 = vector.extract_strided_slice %155 {offsets = [0, 0], sizes = [2, 32], strides = [1, 1]} : vector<2x96xf32> to vector<2x32xf32>
    %160 = vector.extract_strided_slice %158 {offsets = [0, 0], sizes = [2, 32], strides = [1, 1]} : vector<2x96xf32> to vector<2x32xf32>
    %161 = arith.addf %159, %160 : vector<2x32xf32>
    %162 = arith.negf %161 : vector<2x32xf32>
    %163 = math.exp %162 : vector<2x32xf32>
    %cst_83 = arith.constant 1.000000e+00 : f32
    %164 = vector.broadcast %cst_83 : f32 to vector<2x32xf32>
    %165 = arith.addf %164, %163 : vector<2x32xf32>
    %166 = arith.divf %164, %165 : vector<2x32xf32>
    %167 = vector.extract_strided_slice %155 {offsets = [0, 32], sizes = [2, 32], strides = [1, 1]} : vector<2x96xf32> to vector<2x32xf32>
    %168 = vector.extract_strided_slice %158 {offsets = [0, 32], sizes = [2, 32], strides = [1, 1]} : vector<2x96xf32> to vector<2x32xf32>
    %169 = arith.addf %167, %168 : vector<2x32xf32>
    %170 = arith.negf %169 : vector<2x32xf32>
    %171 = math.exp %170 : vector<2x32xf32>
    %cst_84 = arith.constant 1.000000e+00 : f32
    %172 = vector.broadcast %cst_84 : f32 to vector<2x32xf32>
    %173 = arith.addf %172, %171 : vector<2x32xf32>
    %174 = arith.divf %172, %173 : vector<2x32xf32>
    %175 = vector.extract_strided_slice %155 {offsets = [0, 64], sizes = [2, 32], strides = [1, 1]} : vector<2x96xf32> to vector<2x32xf32>
    %176 = vector.extract_strided_slice %158 {offsets = [0, 64], sizes = [2, 32], strides = [1, 1]} : vector<2x96xf32> to vector<2x32xf32>
    %177 = arith.mulf %166, %176 : vector<2x32xf32>
    %178 = arith.addf %175, %177 : vector<2x32xf32>
    %179 = math.tanh %178 : vector<2x32xf32>
    %cst_85 = arith.constant 1.000000e+00 : f32
    %180 = vector.broadcast %cst_85 : f32 to vector<2x32xf32>
    %181 = arith.subf %180, %174 : vector<2x32xf32>
    %182 = arith.mulf %181, %179 : vector<2x32xf32>
    %183 = arith.mulf %174, %126 : vector<2x32xf32>
    %184 = arith.addf %182, %183 : vector<2x32xf32>
    %c0_86 = arith.constant 0 : index
    %c2_87 = arith.constant 2 : index
    %c0_88 = arith.constant 0 : index
    %185 = vector.load %arg23[%c0_86, %c2_87, %c0_88] : memref<2x8x32xf32, #tpu.memory_space<vmem>>, vector<2x1x32xf32>
    %186 = vector.shape_cast %185 : vector<2x1x32xf32> to vector<2x32xf32>
    %187 = vector.shape_cast %184 : vector<2x32xf32> to vector<2x1x32xf32>
    tpu.vector_store %arg23[%c0_86, %c2_87, %c0_88], %187 {strides = array<i32>} : memref<2x8x32xf32, #tpu.memory_space<vmem>>, vector<2x1x32xf32>,
    %cst_89 = arith.constant dense<0.000000e+00> : vector<2x32xf32>
    %188 = tpu.matmul %184, %7, %cst_89 {dimension_numbers = #tpu.dot_dimension_numbers<[1], [0], [0], [1], [0, 0, 1, 1], [], []>} : vector<2x32xf32>, vector<32x32xf32>, vector<2x32xf32> -> vector<2x32xf32>
    %189 = vector.broadcast %8 : vector<1x32xf32> to vector<2x32xf32>
    %190 = arith.addf %188, %189 : vector<2x32xf32>
    %c0_90 = arith.constant 0 : index
    %c2_91 = arith.constant 2 : index
    %c0_92 = arith.constant 0 : index
    %191 = vector.load %arg24[%c0_90, %c2_91, %c0_92] : memref<2x8x32xf32, #tpu.memory_space<vmem>>, vector<2x1x32xf32>
    %192 = vector.shape_cast %191 : vector<2x1x32xf32> to vector<2x32xf32>
    %193 = vector.shape_cast %190 : vector<2x32xf32> to vector<2x1x32xf32>
    tpu.vector_store %arg24[%c0_90, %c2_91, %c0_92], %193 {strides = array<i32>} : memref<2x8x32xf32, #tpu.memory_space<vmem>>, vector<2x1x32xf32>,
    %194 = tpu.iota {dimensions = array<i32: 1>} : vector<2x20xi32>
    %195 = tpu.iota {dimensions = array<i32: 0>} : vector<2x20xi32>
    %c0_i32_93 = arith.constant 0 : i32
    %196 = vector.broadcast %c0_i32_93 : i32 to vector<2x20xi32>
    %c0_i32_94 = arith.constant 0 : i32
    %197 = vector.broadcast %c0_i32_94 : i32 to vector<2x20xi32>
    %198 = arith.cmpi eq, %195, %197 : vector<2x20xi32>
    %c0_95 = arith.constant 0 : index
    %c3 = arith.constant 3 : index
    %199 = memref.load %arg0[%c0_95, %c3] : memref<2x8xi32, #tpu.memory_space<smem>>
    %200 = vector.broadcast %199 : i32 to vector<2x20xi32>
    %201 = arith.select %198, %200, %196 : vector<2x20xi1>, vector<2x20xi32>
    %c1_i32_96 = arith.constant 1 : i32
    %202 = vector.broadcast %c1_i32_96 : i32 to vector<2x20xi32>
    %203 = arith.cmpi eq, %195, %202 : vector<2x20xi32>
    %c1_97 = arith.constant 1 : index
    %c3_98 = arith.constant 3 : index
    %204 = memref.load %arg0[%c1_97, %c3_98] : memref<2x8xi32, #tpu.memory_space<smem>>
    %205 = vector.broadcast %204 : i32 to vector<2x20xi32>
    %206 = arith.select %203, %205, %201 : vector<2x20xi1>, vector<2x20xi32>
    %207 = arith.cmpi eq, %194, %206 : vector<2x20xi32>
    %208 = arith.extui %207 : vector<2x20xi1> to vector<2x20xi32>
    %209 = arith.sitofp %208 : vector<2x20xi32> to vector<2x20xf32>
    %cst_99 = arith.constant dense<0.000000e+00> : vector<2x16xf32>
    %210 = tpu.matmul %209, %0, %cst_99 {dimension_numbers = #tpu.dot_dimension_numbers<[1], [0], [0], [1], [0, 0, 1, 1], [], []>} : vector<2x20xf32>, vector<20x16xf32>, vector<2x16xf32> -> vector<2x16xf32>
    %cst_100 = arith.constant dense<0.000000e+00> : vector<2x96xf32>
    %211 = tpu.matmul %210, %2, %cst_100 {dimension_numbers = #tpu.dot_dimension_numbers<[1], [0], [0], [1], [0, 0, 1, 1], [], []>} : vector<2x16xf32>, vector<16x96xf32>, vector<2x96xf32> -> vector<2x96xf32>
    %212 = vector.broadcast %4 : vector<1x96xf32> to vector<2x96xf32>
    %213 = arith.addf %211, %212 : vector<2x96xf32>
    %cst_101 = arith.constant dense<0.000000e+00> : vector<2x96xf32>
    %214 = tpu.matmul %184, %3, %cst_101 {dimension_numbers = #tpu.dot_dimension_numbers<[1], [0], [0], [1], [0, 0, 1, 1], [], []>} : vector<2x32xf32>, vector<32x96xf32>, vector<2x96xf32> -> vector<2x96xf32>
    %215 = vector.broadcast %5 : vector<1x96xf32> to vector<2x96xf32>
    %216 = arith.addf %214, %215 : vector<2x96xf32>
    %217 = vector.extract_strided_slice %213 {offsets = [0, 0], sizes = [2, 32], strides = [1, 1]} : vector<2x96xf32> to vector<2x32xf32>
    %218 = vector.extract_strided_slice %216 {offsets = [0, 0], sizes = [2, 32], strides = [1, 1]} : vector<2x96xf32> to vector<2x32xf32>
    %219 = arith.addf %217, %218 : vector<2x32xf32>
    %220 = arith.negf %219 : vector<2x32xf32>
    %221 = math.exp %220 : vector<2x32xf32>
    %cst_102 = arith.constant 1.000000e+00 : f32
    %222 = vector.broadcast %cst_102 : f32 to vector<2x32xf32>
    %223 = arith.addf %222, %221 : vector<2x32xf32>
    %224 = arith.divf %222, %223 : vector<2x32xf32>
    %225 = vector.extract_strided_slice %213 {offsets = [0, 32], sizes = [2, 32], strides = [1, 1]} : vector<2x96xf32> to vector<2x32xf32>
    %226 = vector.extract_strided_slice %216 {offsets = [0, 32], sizes = [2, 32], strides = [1, 1]} : vector<2x96xf32> to vector<2x32xf32>
    %227 = arith.addf %225, %226 : vector<2x32xf32>
    %228 = arith.negf %227 : vector<2x32xf32>
    %229 = math.exp %228 : vector<2x32xf32>
    %cst_103 = arith.constant 1.000000e+00 : f32
    %230 = vector.broadcast %cst_103 : f32 to vector<2x32xf32>
    %231 = arith.addf %230, %229 : vector<2x32xf32>
    %232 = arith.divf %230, %231 : vector<2x32xf32>
    %233 = vector.extract_strided_slice %213 {offsets = [0, 64], sizes = [2, 32], strides = [1, 1]} : vector<2x96xf32> to vector<2x32xf32>
    %234 = vector.extract_strided_slice %216 {offsets = [0, 64], sizes = [2, 32], strides = [1, 1]} : vector<2x96xf32> to vector<2x32xf32>
    %235 = arith.mulf %224, %234 : vector<2x32xf32>
    %236 = arith.addf %233, %235 : vector<2x32xf32>
    %237 = math.tanh %236 : vector<2x32xf32>
    %cst_104 = arith.constant 1.000000e+00 : f32
    %238 = vector.broadcast %cst_104 : f32 to vector<2x32xf32>
    %239 = arith.subf %238, %232 : vector<2x32xf32>
    %240 = arith.mulf %239, %237 : vector<2x32xf32>
    %241 = arith.mulf %232, %184 : vector<2x32xf32>
    %242 = arith.addf %240, %241 : vector<2x32xf32>
    %c0_105 = arith.constant 0 : index
    %c3_106 = arith.constant 3 : index
    %c0_107 = arith.constant 0 : index
    %243 = vector.load %arg23[%c0_105, %c3_106, %c0_107] : memref<2x8x32xf32, #tpu.memory_space<vmem>>, vector<2x1x32xf32>
    %244 = vector.shape_cast %243 : vector<2x1x32xf32> to vector<2x32xf32>
    %245 = vector.shape_cast %242 : vector<2x32xf32> to vector<2x1x32xf32>
    tpu.vector_store %arg23[%c0_105, %c3_106, %c0_107], %245 {strides = array<i32>} : memref<2x8x32xf32, #tpu.memory_space<vmem>>, vector<2x1x32xf32>,
    %cst_108 = arith.constant dense<0.000000e+00> : vector<2x32xf32>
    %246 = tpu.matmul %242, %7, %cst_108 {dimension_numbers = #tpu.dot_dimension_numbers<[1], [0], [0], [1], [0, 0, 1, 1], [], []>} : vector<2x32xf32>, vector<32x32xf32>, vector<2x32xf32> -> vector<2x32xf32>
    %247 = vector.broadcast %8 : vector<1x32xf32> to vector<2x32xf32>
    %248 = arith.addf %246, %247 : vector<2x32xf32>
    %c0_109 = arith.constant 0 : index
    %c3_110 = arith.constant 3 : index
    %c0_111 = arith.constant 0 : index
    %249 = vector.load %arg24[%c0_109, %c3_110, %c0_111] : memref<2x8x32xf32, #tpu.memory_space<vmem>>, vector<2x1x32xf32>
    %250 = vector.shape_cast %249 : vector<2x1x32xf32> to vector<2x32xf32>
    %251 = vector.shape_cast %248 : vector<2x32xf32> to vector<2x1x32xf32>
    tpu.vector_store %arg24[%c0_109, %c3_110, %c0_111], %251 {strides = array<i32>} : memref<2x8x32xf32, #tpu.memory_space<vmem>>, vector<2x1x32xf32>,
    %252 = tpu.iota {dimensions = array<i32: 1>} : vector<2x20xi32>
    %253 = tpu.iota {dimensions = array<i32: 0>} : vector<2x20xi32>
    %c0_i32_112 = arith.constant 0 : i32
    %254 = vector.broadcast %c0_i32_112 : i32 to vector<2x20xi32>
    %c0_i32_113 = arith.constant 0 : i32
    %255 = vector.broadcast %c0_i32_113 : i32 to vector<2x20xi32>
    %256 = arith.cmpi eq, %253, %255 : vector<2x20xi32>
    %c0_114 = arith.constant 0 : index
    %c4 = arith.constant 4 : index
    %257 = memref.load %arg0[%c0_114, %c4] : memref<2x8xi32, #tpu.memory_space<smem>>
    %258 = vector.broadcast %257 : i32 to vector<2x20xi32>
    %259 = arith.select %256, %258, %254 : vector<2x20xi1>, vector<2x20xi32>
    %c1_i32_115 = arith.constant 1 : i32
    %260 = vector.broadcast %c1_i32_115 : i32 to vector<2x20xi32>
    %261 = arith.cmpi eq, %253, %260 : vector<2x20xi32>
    %c1_116 = arith.constant 1 : index
    %c4_117 = arith.constant 4 : index
    %262 = memref.load %arg0[%c1_116, %c4_117] : memref<2x8xi32, #tpu.memory_space<smem>>
    %263 = vector.broadcast %262 : i32 to vector<2x20xi32>
    %264 = arith.select %261, %263, %259 : vector<2x20xi1>, vector<2x20xi32>
    %265 = arith.cmpi eq, %252, %264 : vector<2x20xi32>
    %266 = arith.extui %265 : vector<2x20xi1> to vector<2x20xi32>
    %267 = arith.sitofp %266 : vector<2x20xi32> to vector<2x20xf32>
    %cst_118 = arith.constant dense<0.000000e+00> : vector<2x16xf32>
    %268 = tpu.matmul %267, %0, %cst_118 {dimension_numbers = #tpu.dot_dimension_numbers<[1], [0], [0], [1], [0, 0, 1, 1], [], []>} : vector<2x20xf32>, vector<20x16xf32>, vector<2x16xf32> -> vector<2x16xf32>
    %cst_119 = arith.constant dense<0.000000e+00> : vector<2x96xf32>
    %269 = tpu.matmul %268, %2, %cst_119 {dimension_numbers = #tpu.dot_dimension_numbers<[1], [0], [0], [1], [0, 0, 1, 1], [], []>} : vector<2x16xf32>, vector<16x96xf32>, vector<2x96xf32> -> vector<2x96xf32>
    %270 = vector.broadcast %4 : vector<1x96xf32> to vector<2x96xf32>
    %271 = arith.addf %269, %270 : vector<2x96xf32>
    %cst_120 = arith.constant dense<0.000000e+00> : vector<2x96xf32>
    %272 = tpu.matmul %242, %3, %cst_120 {dimension_numbers = #tpu.dot_dimension_numbers<[1], [0], [0], [1], [0, 0, 1, 1], [], []>} : vector<2x32xf32>, vector<32x96xf32>, vector<2x96xf32> -> vector<2x96xf32>
    %273 = vector.broadcast %5 : vector<1x96xf32> to vector<2x96xf32>
    %274 = arith.addf %272, %273 : vector<2x96xf32>
    %275 = vector.extract_strided_slice %271 {offsets = [0, 0], sizes = [2, 32], strides = [1, 1]} : vector<2x96xf32> to vector<2x32xf32>
    %276 = vector.extract_strided_slice %274 {offsets = [0, 0], sizes = [2, 32], strides = [1, 1]} : vector<2x96xf32> to vector<2x32xf32>
    %277 = arith.addf %275, %276 : vector<2x32xf32>
    %278 = arith.negf %277 : vector<2x32xf32>
    %279 = math.exp %278 : vector<2x32xf32>
    %cst_121 = arith.constant 1.000000e+00 : f32
    %280 = vector.broadcast %cst_121 : f32 to vector<2x32xf32>
    %281 = arith.addf %280, %279 : vector<2x32xf32>
    %282 = arith.divf %280, %281 : vector<2x32xf32>
    %283 = vector.extract_strided_slice %271 {offsets = [0, 32], sizes = [2, 32], strides = [1, 1]} : vector<2x96xf32> to vector<2x32xf32>
    %284 = vector.extract_strided_slice %274 {offsets = [0, 32], sizes = [2, 32], strides = [1, 1]} : vector<2x96xf32> to vector<2x32xf32>
    %285 = arith.addf %283, %284 : vector<2x32xf32>
    %286 = arith.negf %285 : vector<2x32xf32>
    %287 = math.exp %286 : vector<2x32xf32>
    %cst_122 = arith.constant 1.000000e+00 : f32
    %288 = vector.broadcast %cst_122 : f32 to vector<2x32xf32>
    %289 = arith.addf %288, %287 : vector<2x32xf32>
    %290 = arith.divf %288, %289 : vector<2x32xf32>
    %291 = vector.extract_strided_slice %271 {offsets = [0, 64], sizes = [2, 32], strides = [1, 1]} : vector<2x96xf32> to vector<2x32xf32>
    %292 = vector.extract_strided_slice %274 {offsets = [0, 64], sizes = [2, 32], strides = [1, 1]} : vector<2x96xf32> to vector<2x32xf32>
    %293 = arith.mulf %282, %292 : vector<2x32xf32>
    %294 = arith.addf %291, %293 : vector<2x32xf32>
    %295 = math.tanh %294 : vector<2x32xf32>
    %cst_123 = arith.constant 1.000000e+00 : f32
    %296 = vector.broadcast %cst_123 : f32 to vector<2x32xf32>
    %297 = arith.subf %296, %290 : vector<2x32xf32>
    %298 = arith.mulf %297, %295 : vector<2x32xf32>
    %299 = arith.mulf %290, %242 : vector<2x32xf32>
    %300 = arith.addf %298, %299 : vector<2x32xf32>
    %c0_124 = arith.constant 0 : index
    %c4_125 = arith.constant 4 : index
    %c0_126 = arith.constant 0 : index
    %301 = vector.load %arg23[%c0_124, %c4_125, %c0_126] : memref<2x8x32xf32, #tpu.memory_space<vmem>>, vector<2x1x32xf32>
    %302 = vector.shape_cast %301 : vector<2x1x32xf32> to vector<2x32xf32>
    %303 = vector.shape_cast %300 : vector<2x32xf32> to vector<2x1x32xf32>
    tpu.vector_store %arg23[%c0_124, %c4_125, %c0_126], %303 {strides = array<i32>} : memref<2x8x32xf32, #tpu.memory_space<vmem>>, vector<2x1x32xf32>,
    %cst_127 = arith.constant dense<0.000000e+00> : vector<2x32xf32>
    %304 = tpu.matmul %300, %7, %cst_127 {dimension_numbers = #tpu.dot_dimension_numbers<[1], [0], [0], [1], [0, 0, 1, 1], [], []>} : vector<2x32xf32>, vector<32x32xf32>, vector<2x32xf32> -> vector<2x32xf32>
    %305 = vector.broadcast %8 : vector<1x32xf32> to vector<2x32xf32>
    %306 = arith.addf %304, %305 : vector<2x32xf32>
    %c0_128 = arith.constant 0 : index
    %c4_129 = arith.constant 4 : index
    %c0_130 = arith.constant 0 : index
    %307 = vector.load %arg24[%c0_128, %c4_129, %c0_130] : memref<2x8x32xf32, #tpu.memory_space<vmem>>, vector<2x1x32xf32>
    %308 = vector.shape_cast %307 : vector<2x1x32xf32> to vector<2x32xf32>
    %309 = vector.shape_cast %306 : vector<2x32xf32> to vector<2x1x32xf32>
    tpu.vector_store %arg24[%c0_128, %c4_129, %c0_130], %309 {strides = array<i32>} : memref<2x8x32xf32, #tpu.memory_space<vmem>>, vector<2x1x32xf32>,
    %310 = tpu.iota {dimensions = array<i32: 1>} : vector<2x20xi32>
    %311 = tpu.iota {dimensions = array<i32: 0>} : vector<2x20xi32>
    %c0_i32_131 = arith.constant 0 : i32
    %312 = vector.broadcast %c0_i32_131 : i32 to vector<2x20xi32>
    %c0_i32_132 = arith.constant 0 : i32
    %313 = vector.broadcast %c0_i32_132 : i32 to vector<2x20xi32>
    %314 = arith.cmpi eq, %311, %313 : vector<2x20xi32>
    %c0_133 = arith.constant 0 : index
    %c5 = arith.constant 5 : index
    %315 = memref.load %arg0[%c0_133, %c5] : memref<2x8xi32, #tpu.memory_space<smem>>
    %316 = vector.broadcast %315 : i32 to vector<2x20xi32>
    %317 = arith.select %314, %316, %312 : vector<2x20xi1>, vector<2x20xi32>
    %c1_i32_134 = arith.constant 1 : i32
    %318 = vector.broadcast %c1_i32_134 : i32 to vector<2x20xi32>
    %319 = arith.cmpi eq, %311, %318 : vector<2x20xi32>
    %c1_135 = arith.constant 1 : index
    %c5_136 = arith.constant 5 : index
    %320 = memref.load %arg0[%c1_135, %c5_136] : memref<2x8xi32, #tpu.memory_space<smem>>
    %321 = vector.broadcast %320 : i32 to vector<2x20xi32>
    %322 = arith.select %319, %321, %317 : vector<2x20xi1>, vector<2x20xi32>
    %323 = arith.cmpi eq, %310, %322 : vector<2x20xi32>
    %324 = arith.extui %323 : vector<2x20xi1> to vector<2x20xi32>
    %325 = arith.sitofp %324 : vector<2x20xi32> to vector<2x20xf32>
    %cst_137 = arith.constant dense<0.000000e+00> : vector<2x16xf32>
    %326 = tpu.matmul %325, %0, %cst_137 {dimension_numbers = #tpu.dot_dimension_numbers<[1], [0], [0], [1], [0, 0, 1, 1], [], []>} : vector<2x20xf32>, vector<20x16xf32>, vector<2x16xf32> -> vector<2x16xf32>
    %cst_138 = arith.constant dense<0.000000e+00> : vector<2x96xf32>
    %327 = tpu.matmul %326, %2, %cst_138 {dimension_numbers = #tpu.dot_dimension_numbers<[1], [0], [0], [1], [0, 0, 1, 1], [], []>} : vector<2x16xf32>, vector<16x96xf32>, vector<2x96xf32> -> vector<2x96xf32>
    %328 = vector.broadcast %4 : vector<1x96xf32> to vector<2x96xf32>
    %329 = arith.addf %327, %328 : vector<2x96xf32>
    %cst_139 = arith.constant dense<0.000000e+00> : vector<2x96xf32>
    %330 = tpu.matmul %300, %3, %cst_139 {dimension_numbers = #tpu.dot_dimension_numbers<[1], [0], [0], [1], [0, 0, 1, 1], [], []>} : vector<2x32xf32>, vector<32x96xf32>, vector<2x96xf32> -> vector<2x96xf32>
    %331 = vector.broadcast %5 : vector<1x96xf32> to vector<2x96xf32>
    %332 = arith.addf %330, %331 : vector<2x96xf32>
    %333 = vector.extract_strided_slice %329 {offsets = [0, 0], sizes = [2, 32], strides = [1, 1]} : vector<2x96xf32> to vector<2x32xf32>
    %334 = vector.extract_strided_slice %332 {offsets = [0, 0], sizes = [2, 32], strides = [1, 1]} : vector<2x96xf32> to vector<2x32xf32>
    %335 = arith.addf %333, %334 : vector<2x32xf32>
    %336 = arith.negf %335 : vector<2x32xf32>
    %337 = math.exp %336 : vector<2x32xf32>
    %cst_140 = arith.constant 1.000000e+00 : f32
    %338 = vector.broadcast %cst_140 : f32 to vector<2x32xf32>
    %339 = arith.addf %338, %337 : vector<2x32xf32>
    %340 = arith.divf %338, %339 : vector<2x32xf32>
    %341 = vector.extract_strided_slice %329 {offsets = [0, 32], sizes = [2, 32], strides = [1, 1]} : vector<2x96xf32> to vector<2x32xf32>
    %342 = vector.extract_strided_slice %332 {offsets = [0, 32], sizes = [2, 32], strides = [1, 1]} : vector<2x96xf32> to vector<2x32xf32>
    %343 = arith.addf %341, %342 : vector<2x32xf32>
    %344 = arith.negf %343 : vector<2x32xf32>
    %345 = math.exp %344 : vector<2x32xf32>
    %cst_141 = arith.constant 1.000000e+00 : f32
    %346 = vector.broadcast %cst_141 : f32 to vector<2x32xf32>
    %347 = arith.addf %346, %345 : vector<2x32xf32>
    %348 = arith.divf %346, %347 : vector<2x32xf32>
    %349 = vector.extract_strided_slice %329 {offsets = [0, 64], sizes = [2, 32], strides = [1, 1]} : vector<2x96xf32> to vector<2x32xf32>
    %350 = vector.extract_strided_slice %332 {offsets = [0, 64], sizes = [2, 32], strides = [1, 1]} : vector<2x96xf32> to vector<2x32xf32>
    %351 = arith.mulf %340, %350 : vector<2x32xf32>
    %352 = arith.addf %349, %351 : vector<2x32xf32>
    %353 = math.tanh %352 : vector<2x32xf32>
    %cst_142 = arith.constant 1.000000e+00 : f32
    %354 = vector.broadcast %cst_142 : f32 to vector<2x32xf32>
    %355 = arith.subf %354, %348 : vector<2x32xf32>
    %356 = arith.mulf %355, %353 : vector<2x32xf32>
    %357 = arith.mulf %348, %300 : vector<2x32xf32>
    %358 = arith.addf %356, %357 : vector<2x32xf32>
    %c0_143 = arith.constant 0 : index
    %c5_144 = arith.constant 5 : index
    %c0_145 = arith.constant 0 : index
    %359 = vector.load %arg23[%c0_143, %c5_144, %c0_145] : memref<2x8x32xf32, #tpu.memory_space<vmem>>, vector<2x1x32xf32>
    %360 = vector.shape_cast %359 : vector<2x1x32xf32> to vector<2x32xf32>
    %361 = vector.shape_cast %358 : vector<2x32xf32> to vector<2x1x32xf32>
    tpu.vector_store %arg23[%c0_143, %c5_144, %c0_145], %361 {strides = array<i32>} : memref<2x8x32xf32, #tpu.memory_space<vmem>>, vector<2x1x32xf32>,
    %cst_146 = arith.constant dense<0.000000e+00> : vector<2x32xf32>
    %362 = tpu.matmul %358, %7, %cst_146 {dimension_numbers = #tpu.dot_dimension_numbers<[1], [0], [0], [1], [0, 0, 1, 1], [], []>} : vector<2x32xf32>, vector<32x32xf32>, vector<2x32xf32> -> vector<2x32xf32>
    %363 = vector.broadcast %8 : vector<1x32xf32> to vector<2x32xf32>
    %364 = arith.addf %362, %363 : vector<2x32xf32>
    %c0_147 = arith.constant 0 : index
    %c5_148 = arith.constant 5 : index
    %c0_149 = arith.constant 0 : index
    %365 = vector.load %arg24[%c0_147, %c5_148, %c0_149] : memref<2x8x32xf32, #tpu.memory_space<vmem>>, vector<2x1x32xf32>
    %366 = vector.shape_cast %365 : vector<2x1x32xf32> to vector<2x32xf32>
    %367 = vector.shape_cast %364 : vector<2x32xf32> to vector<2x1x32xf32>
    tpu.vector_store %arg24[%c0_147, %c5_148, %c0_149], %367 {strides = array<i32>} : memref<2x8x32xf32, #tpu.memory_space<vmem>>, vector<2x1x32xf32>,
    %368 = tpu.iota {dimensions = array<i32: 1>} : vector<2x20xi32>
    %369 = tpu.iota {dimensions = array<i32: 0>} : vector<2x20xi32>
    %c0_i32_150 = arith.constant 0 : i32
    %370 = vector.broadcast %c0_i32_150 : i32 to vector<2x20xi32>
    %c0_i32_151 = arith.constant 0 : i32
    %371 = vector.broadcast %c0_i32_151 : i32 to vector<2x20xi32>
    %372 = arith.cmpi eq, %369, %371 : vector<2x20xi32>
    %c0_152 = arith.constant 0 : index
    %c6 = arith.constant 6 : index
    %373 = memref.load %arg0[%c0_152, %c6] : memref<2x8xi32, #tpu.memory_space<smem>>
    %374 = vector.broadcast %373 : i32 to vector<2x20xi32>
    %375 = arith.select %372, %374, %370 : vector<2x20xi1>, vector<2x20xi32>
    %c1_i32_153 = arith.constant 1 : i32
    %376 = vector.broadcast %c1_i32_153 : i32 to vector<2x20xi32>
    %377 = arith.cmpi eq, %369, %376 : vector<2x20xi32>
    %c1_154 = arith.constant 1 : index
    %c6_155 = arith.constant 6 : index
    %378 = memref.load %arg0[%c1_154, %c6_155] : memref<2x8xi32, #tpu.memory_space<smem>>
    %379 = vector.broadcast %378 : i32 to vector<2x20xi32>
    %380 = arith.select %377, %379, %375 : vector<2x20xi1>, vector<2x20xi32>
    %381 = arith.cmpi eq, %368, %380 : vector<2x20xi32>
    %382 = arith.extui %381 : vector<2x20xi1> to vector<2x20xi32>
    %383 = arith.sitofp %382 : vector<2x20xi32> to vector<2x20xf32>
    %cst_156 = arith.constant dense<0.000000e+00> : vector<2x16xf32>
    %384 = tpu.matmul %383, %0, %cst_156 {dimension_numbers = #tpu.dot_dimension_numbers<[1], [0], [0], [1], [0, 0, 1, 1], [], []>} : vector<2x20xf32>, vector<20x16xf32>, vector<2x16xf32> -> vector<2x16xf32>
    %cst_157 = arith.constant dense<0.000000e+00> : vector<2x96xf32>
    %385 = tpu.matmul %384, %2, %cst_157 {dimension_numbers = #tpu.dot_dimension_numbers<[1], [0], [0], [1], [0, 0, 1, 1], [], []>} : vector<2x16xf32>, vector<16x96xf32>, vector<2x96xf32> -> vector<2x96xf32>
    %386 = vector.broadcast %4 : vector<1x96xf32> to vector<2x96xf32>
    %387 = arith.addf %385, %386 : vector<2x96xf32>
    %cst_158 = arith.constant dense<0.000000e+00> : vector<2x96xf32>
    %388 = tpu.matmul %358, %3, %cst_158 {dimension_numbers = #tpu.dot_dimension_numbers<[1], [0], [0], [1], [0, 0, 1, 1], [], []>} : vector<2x32xf32>, vector<32x96xf32>, vector<2x96xf32> -> vector<2x96xf32>
    %389 = vector.broadcast %5 : vector<1x96xf32> to vector<2x96xf32>
    %390 = arith.addf %388, %389 : vector<2x96xf32>
    %391 = vector.extract_strided_slice %387 {offsets = [0, 0], sizes = [2, 32], strides = [1, 1]} : vector<2x96xf32> to vector<2x32xf32>
    %392 = vector.extract_strided_slice %390 {offsets = [0, 0], sizes = [2, 32], strides = [1, 1]} : vector<2x96xf32> to vector<2x32xf32>
    %393 = arith.addf %391, %392 : vector<2x32xf32>
    %394 = arith.negf %393 : vector<2x32xf32>
    %395 = math.exp %394 : vector<2x32xf32>
    %cst_159 = arith.constant 1.000000e+00 : f32
    %396 = vector.broadcast %cst_159 : f32 to vector<2x32xf32>
    %397 = arith.addf %396, %395 : vector<2x32xf32>
    %398 = arith.divf %396, %397 : vector<2x32xf32>
    %399 = vector.extract_strided_slice %387 {offsets = [0, 32], sizes = [2, 32], strides = [1, 1]} : vector<2x96xf32> to vector<2x32xf32>
    %400 = vector.extract_strided_slice %390 {offsets = [0, 32], sizes = [2, 32], strides = [1, 1]} : vector<2x96xf32> to vector<2x32xf32>
    %401 = arith.addf %399, %400 : vector<2x32xf32>
    %402 = arith.negf %401 : vector<2x32xf32>
    %403 = math.exp %402 : vector<2x32xf32>
    %cst_160 = arith.constant 1.000000e+00 : f32
    %404 = vector.broadcast %cst_160 : f32 to vector<2x32xf32>
    %405 = arith.addf %404, %403 : vector<2x32xf32>
    %406 = arith.divf %404, %405 : vector<2x32xf32>
    %407 = vector.extract_strided_slice %387 {offsets = [0, 64], sizes = [2, 32], strides = [1, 1]} : vector<2x96xf32> to vector<2x32xf32>
    %408 = vector.extract_strided_slice %390 {offsets = [0, 64], sizes = [2, 32], strides = [1, 1]} : vector<2x96xf32> to vector<2x32xf32>
    %409 = arith.mulf %398, %408 : vector<2x32xf32>
    %410 = arith.addf %407, %409 : vector<2x32xf32>
    %411 = math.tanh %410 : vector<2x32xf32>
    %cst_161 = arith.constant 1.000000e+00 : f32
    %412 = vector.broadcast %cst_161 : f32 to vector<2x32xf32>
    %413 = arith.subf %412, %406 : vector<2x32xf32>
    %414 = arith.mulf %413, %411 : vector<2x32xf32>
    %415 = arith.mulf %406, %358 : vector<2x32xf32>
    %416 = arith.addf %414, %415 : vector<2x32xf32>
    %c0_162 = arith.constant 0 : index
    %c6_163 = arith.constant 6 : index
    %c0_164 = arith.constant 0 : index
    %417 = vector.load %arg23[%c0_162, %c6_163, %c0_164] : memref<2x8x32xf32, #tpu.memory_space<vmem>>, vector<2x1x32xf32>
    %418 = vector.shape_cast %417 : vector<2x1x32xf32> to vector<2x32xf32>
    %419 = vector.shape_cast %416 : vector<2x32xf32> to vector<2x1x32xf32>
    tpu.vector_store %arg23[%c0_162, %c6_163, %c0_164], %419 {strides = array<i32>} : memref<2x8x32xf32, #tpu.memory_space<vmem>>, vector<2x1x32xf32>,
    %cst_165 = arith.constant dense<0.000000e+00> : vector<2x32xf32>
    %420 = tpu.matmul %416, %7, %cst_165 {dimension_numbers = #tpu.dot_dimension_numbers<[1], [0], [0], [1], [0, 0, 1, 1], [], []>} : vector<2x32xf32>, vector<32x32xf32>, vector<2x32xf32> -> vector<2x32xf32>
    %421 = vector.broadcast %8 : vector<1x32xf32> to vector<2x32xf32>
    %422 = arith.addf %420, %421 : vector<2x32xf32>
    %c0_166 = arith.constant 0 : index
    %c6_167 = arith.constant 6 : index
    %c0_168 = arith.constant 0 : index
    %423 = vector.load %arg24[%c0_166, %c6_167, %c0_168] : memref<2x8x32xf32, #tpu.memory_space<vmem>>, vector<2x1x32xf32>
    %424 = vector.shape_cast %423 : vector<2x1x32xf32> to vector<2x32xf32>
    %425 = vector.shape_cast %422 : vector<2x32xf32> to vector<2x1x32xf32>
    tpu.vector_store %arg24[%c0_166, %c6_167, %c0_168], %425 {strides = array<i32>} : memref<2x8x32xf32, #tpu.memory_space<vmem>>, vector<2x1x32xf32>,
    %426 = tpu.iota {dimensions = array<i32: 1>} : vector<2x20xi32>
    %427 = tpu.iota {dimensions = array<i32: 0>} : vector<2x20xi32>
    %c0_i32_169 = arith.constant 0 : i32
    %428 = vector.broadcast %c0_i32_169 : i32 to vector<2x20xi32>
    %c0_i32_170 = arith.constant 0 : i32
    %429 = vector.broadcast %c0_i32_170 : i32 to vector<2x20xi32>
    %430 = arith.cmpi eq, %427, %429 : vector<2x20xi32>
    %c0_171 = arith.constant 0 : index
    %c7 = arith.constant 7 : index
    %431 = memref.load %arg0[%c0_171, %c7] : memref<2x8xi32, #tpu.memory_space<smem>>
    %432 = vector.broadcast %431 : i32 to vector<2x20xi32>
    %433 = arith.select %430, %432, %428 : vector<2x20xi1>, vector<2x20xi32>
    %c1_i32_172 = arith.constant 1 : i32
    %434 = vector.broadcast %c1_i32_172 : i32 to vector<2x20xi32>
    %435 = arith.cmpi eq, %427, %434 : vector<2x20xi32>
    %c1_173 = arith.constant 1 : index
    %c7_174 = arith.constant 7 : index
    %436 = memref.load %arg0[%c1_173, %c7_174] : memref<2x8xi32, #tpu.memory_space<smem>>
    %437 = vector.broadcast %436 : i32 to vector<2x20xi32>
    %438 = arith.select %435, %437, %433 : vector<2x20xi1>, vector<2x20xi32>
    %439 = arith.cmpi eq, %426, %438 : vector<2x20xi32>
    %440 = arith.extui %439 : vector<2x20xi1> to vector<2x20xi32>
    %441 = arith.sitofp %440 : vector<2x20xi32> to vector<2x20xf32>
    %cst_175 = arith.constant dense<0.000000e+00> : vector<2x16xf32>
    %442 = tpu.matmul %441, %0, %cst_175 {dimension_numbers = #tpu.dot_dimension_numbers<[1], [0], [0], [1], [0, 0, 1, 1], [], []>} : vector<2x20xf32>, vector<20x16xf32>, vector<2x16xf32> -> vector<2x16xf32>
    %cst_176 = arith.constant dense<0.000000e+00> : vector<2x96xf32>
    %443 = tpu.matmul %442, %2, %cst_176 {dimension_numbers = #tpu.dot_dimension_numbers<[1], [0], [0], [1], [0, 0, 1, 1], [], []>} : vector<2x16xf32>, vector<16x96xf32>, vector<2x96xf32> -> vector<2x96xf32>
    %444 = vector.broadcast %4 : vector<1x96xf32> to vector<2x96xf32>
    %445 = arith.addf %443, %444 : vector<2x96xf32>
    %cst_177 = arith.constant dense<0.000000e+00> : vector<2x96xf32>
    %446 = tpu.matmul %416, %3, %cst_177 {dimension_numbers = #tpu.dot_dimension_numbers<[1], [0], [0], [1], [0, 0, 1, 1], [], []>} : vector<2x32xf32>, vector<32x96xf32>, vector<2x96xf32> -> vector<2x96xf32>
    %447 = vector.broadcast %5 : vector<1x96xf32> to vector<2x96xf32>
    %448 = arith.addf %446, %447 : vector<2x96xf32>
    %449 = vector.extract_strided_slice %445 {offsets = [0, 0], sizes = [2, 32], strides = [1, 1]} : vector<2x96xf32> to vector<2x32xf32>
    %450 = vector.extract_strided_slice %448 {offsets = [0, 0], sizes = [2, 32], strides = [1, 1]} : vector<2x96xf32> to vector<2x32xf32>
    %451 = arith.addf %449, %450 : vector<2x32xf32>
    %452 = arith.negf %451 : vector<2x32xf32>
    %453 = math.exp %452 : vector<2x32xf32>
    %cst_178 = arith.constant 1.000000e+00 : f32
    %454 = vector.broadcast %cst_178 : f32 to vector<2x32xf32>
    %455 = arith.addf %454, %453 : vector<2x32xf32>
    %456 = arith.divf %454, %455 : vector<2x32xf32>
    %457 = vector.extract_strided_slice %445 {offsets = [0, 32], sizes = [2, 32], strides = [1, 1]} : vector<2x96xf32> to vector<2x32xf32>
    %458 = vector.extract_strided_slice %448 {offsets = [0, 32], sizes = [2, 32], strides = [1, 1]} : vector<2x96xf32> to vector<2x32xf32>
    %459 = arith.addf %457, %458 : vector<2x32xf32>
    %460 = arith.negf %459 : vector<2x32xf32>
    %461 = math.exp %460 : vector<2x32xf32>
    %cst_179 = arith.constant 1.000000e+00 : f32
    %462 = vector.broadcast %cst_179 : f32 to vector<2x32xf32>
    %463 = arith.addf %462, %461 : vector<2x32xf32>
    %464 = arith.divf %462, %463 : vector<2x32xf32>
    %465 = vector.extract_strided_slice %445 {offsets = [0, 64], sizes = [2, 32], strides = [1, 1]} : vector<2x96xf32> to vector<2x32xf32>
    %466 = vector.extract_strided_slice %448 {offsets = [0, 64], sizes = [2, 32], strides = [1, 1]} : vector<2x96xf32> to vector<2x32xf32>
    %467 = arith.mulf %456, %466 : vector<2x32xf32>
    %468 = arith.addf %465, %467 : vector<2x32xf32>
    %469 = math.tanh %468 : vector<2x32xf32>
    %cst_180 = arith.constant 1.000000e+00 : f32
    %470 = vector.broadcast %cst_180 : f32 to vector<2x32xf32>
    %471 = arith.subf %470, %464 : vector<2x32xf32>
    %472 = arith.mulf %471, %469 : vector<2x32xf32>
    %473 = arith.mulf %464, %416 : vector<2x32xf32>
    %474 = arith.addf %472, %473 : vector<2x32xf32>
    %c0_181 = arith.constant 0 : index
    %c7_182 = arith.constant 7 : index
    %c0_183 = arith.constant 0 : index
    %475 = vector.load %arg23[%c0_181, %c7_182, %c0_183] : memref<2x8x32xf32, #tpu.memory_space<vmem>>, vector<2x1x32xf32>
    %476 = vector.shape_cast %475 : vector<2x1x32xf32> to vector<2x32xf32>
    %477 = vector.shape_cast %474 : vector<2x32xf32> to vector<2x1x32xf32>
    tpu.vector_store %arg23[%c0_181, %c7_182, %c0_183], %477 {strides = array<i32>} : memref<2x8x32xf32, #tpu.memory_space<vmem>>, vector<2x1x32xf32>,
    %cst_184 = arith.constant dense<0.000000e+00> : vector<2x32xf32>
    %478 = tpu.matmul %474, %7, %cst_184 {dimension_numbers = #tpu.dot_dimension_numbers<[1], [0], [0], [1], [0, 0, 1, 1], [], []>} : vector<2x32xf32>, vector<32x32xf32>, vector<2x32xf32> -> vector<2x32xf32>
    %479 = vector.broadcast %8 : vector<1x32xf32> to vector<2x32xf32>
    %480 = arith.addf %478, %479 : vector<2x32xf32>
    %c0_185 = arith.constant 0 : index
    %c7_186 = arith.constant 7 : index
    %c0_187 = arith.constant 0 : index
    %481 = vector.load %arg24[%c0_185, %c7_186, %c0_187] : memref<2x8x32xf32, #tpu.memory_space<vmem>>, vector<2x1x32xf32>
    %482 = vector.shape_cast %481 : vector<2x1x32xf32> to vector<2x32xf32>
    %483 = vector.shape_cast %480 : vector<2x32xf32> to vector<2x1x32xf32>
    tpu.vector_store %arg24[%c0_185, %c7_186, %c0_187], %483 {strides = array<i32>} : memref<2x8x32xf32, #tpu.memory_space<vmem>>, vector<2x1x32xf32>,
    %c0_188 = arith.constant 0 : index
    %c0_189 = arith.constant 0 : index
    %c0_190 = arith.constant 0 : index
    %484 = vector.load %arg23[%c0_188, %c0_189, %c0_190] : memref<2x8x32xf32, #tpu.memory_space<vmem>>, vector<2x8x32xf32>
    %c0_191 = arith.constant 0 : index
    %c0_192 = arith.constant 0 : index
    %c0_193 = arith.constant 0 : index
    %485 = vector.load %arg24[%c0_191, %c0_192, %c0_193] : memref<2x8x32xf32, #tpu.memory_space<vmem>>, vector<2x8x32xf32>
    %cst_194 = arith.constant 0.000000e+00 : f32
    %486 = vector.broadcast %cst_194 : f32 to vector<2x20xf32>
    %c0_195 = arith.constant 0 : index
    %c0_196 = arith.constant 0 : index
    %c0_197 = arith.constant 0 : index
    %487 = vector.load %arg22[%c0_195, %c0_196, %c0_197] : memref<8x2x20xf32, #tpu.memory_space<vmem>>, vector<1x2x20xf32>
    %488 = vector.shape_cast %487 : vector<1x2x20xf32> to vector<2x20xf32>
    %489 = vector.shape_cast %486 : vector<2x20xf32> to vector<1x2x20xf32>
    tpu.vector_store %arg22[%c0_195, %c0_196, %c0_197], %489 {strides = array<i32>} : memref<8x2x20xf32, #tpu.memory_space<vmem>>, vector<1x2x20xf32>,
    %490 = tpu.iota {dimensions = array<i32: 1>} : vector<2x20xi32>
    %491 = tpu.iota {dimensions = array<i32: 0>} : vector<2x20xi32>
    %c0_i32_198 = arith.constant 0 : i32
    %492 = vector.broadcast %c0_i32_198 : i32 to vector<2x20xi32>
    %c0_i32_199 = arith.constant 0 : i32
    %493 = vector.broadcast %c0_i32_199 : i32 to vector<2x20xi32>
    %494 = arith.cmpi eq, %491, %493 : vector<2x20xi32>
    %c0_200 = arith.constant 0 : index
    %c0_201 = arith.constant 0 : index
    %495 = memref.load %arg1[%c0_200, %c0_201] : memref<2x8xi32, #tpu.memory_space<smem>>
    %496 = vector.broadcast %495 : i32 to vector<2x20xi32>
    %497 = arith.select %494, %496, %492 : vector<2x20xi1>, vector<2x20xi32>
    %c1_i32_202 = arith.constant 1 : i32
    %498 = vector.broadcast %c1_i32_202 : i32 to vector<2x20xi32>
    %499 = arith.cmpi eq, %491, %498 : vector<2x20xi32>
    %c1_203 = arith.constant 1 : index
    %c0_204 = arith.constant 0 : index
    %500 = memref.load %arg1[%c1_203, %c0_204] : memref<2x8xi32, #tpu.memory_space<smem>>
    %501 = vector.broadcast %500 : i32 to vector<2x20xi32>
    %502 = arith.select %499, %501, %497 : vector<2x20xi1>, vector<2x20xi32>
    %503 = arith.cmpi eq, %490, %502 : vector<2x20xi32>
    %504 = arith.extui %503 : vector<2x20xi1> to vector<2x20xi32>
    %505 = arith.sitofp %504 : vector<2x20xi32> to vector<2x20xf32>
    %cst_205 = arith.constant dense<0.000000e+00> : vector<2x16xf32>
    %506 = tpu.matmul %505, %1, %cst_205 {dimension_numbers = #tpu.dot_dimension_numbers<[1], [0], [0], [1], [0, 0, 1, 1], [], []>} : vector<2x20xf32>, vector<20x16xf32>, vector<2x16xf32> -> vector<2x16xf32>
    %cst_206 = arith.constant dense<0.000000e+00> : vector<2x32xf32>
    %507 = tpu.matmul %474, %6, %cst_206 {dimension_numbers = #tpu.dot_dimension_numbers<[1], [0], [0], [1], [0, 0, 1, 1], [], []>} : vector<2x32xf32>, vector<32x32xf32>, vector<2x32xf32> -> vector<2x32xf32>
    %508 = vector.shape_cast %507 : vector<2x32xf32> to vector<2x1x32xf32>
    %509 = vector.broadcast %508 : vector<2x1x32xf32> to vector<2x8x32xf32>
    %510 = arith.addf %509, %485 : vector<2x8x32xf32>
    %511 = math.tanh %510 : vector<2x8x32xf32>
    %512 = vector.shape_cast %9 : vector<1x32xf32> to vector<1x1x32xf32>
    %513 = vector.broadcast %512 : vector<1x1x32xf32> to vector<2x8x32xf32>
    %514 = arith.mulf %511, %513 : vector<2x8x32xf32>
    %cst_207 = arith.constant dense<0.000000e+00> : vector<2x8xf32>
    %515 = vector.multi_reduction <add>, %514, %cst_207 [2] : vector<2x8x32xf32> to vector<2x8xf32>
    %cst_208 = arith.constant dense<0xFF800000> : vector<2xf32>
    %516 = vector.multi_reduction <maximumf>, %515, %cst_208 [1] : vector<2x8xf32> to vector<2xf32>
    %517 = vector.shape_cast %516 : vector<2xf32> to vector<2x1xf32>
    %518 = vector.broadcast %517 : vector<2x1xf32> to vector<2x8xf32>
    %519 = arith.subf %515, %518 : vector<2x8xf32>
    %520 = math.exp %519 : vector<2x8xf32>
    %cst_209 = arith.constant dense<0.000000e+00> : vector<2xf32>
    %521 = vector.multi_reduction <add>, %520, %cst_209 [1] : vector<2x8xf32> to vector<2xf32>
    %522 = vector.shape_cast %521 : vector<2xf32> to vector<2x1xf32>
    %523 = tpu.reciprocal %522 {approx = true} : vector<2x1xf32> -> vector<2x1xf32>
    %524 = vector.broadcast %523 : vector<2x1xf32> to vector<2x8xf32>
    %525 = arith.mulf %520, %524 : vector<2x8xf32>
    %526 = vector.shape_cast %525 : vector<2x8xf32> to vector<2x8x1xf32>
    %527 = vector.broadcast %526 : vector<2x8x1xf32> to vector<2x8x32xf32>
    %528 = arith.mulf %527, %484 : vector<2x8x32xf32>
    %cst_210 = arith.constant dense<0.000000e+00> : vector<2x32xf32>
    %529 = vector.multi_reduction <add>, %528, %cst_210 [1] : vector<2x8x32xf32> to vector<2x32xf32>
    %cst_211 = arith.constant dense<0.000000e+00> : vector<2x96xf32>
    %530 = tpu.matmul %506, %10, %cst_211 {dimension_numbers = #tpu.dot_dimension_numbers<[1], [0], [0], [1], [0, 0, 1, 1], [], []>} : vector<2x16xf32>, vector<16x96xf32>, vector<2x96xf32> -> vector<2x96xf32>
    %cst_212 = arith.constant dense<0.000000e+00> : vector<2x96xf32>
    %531 = tpu.matmul %529, %11, %cst_212 {dimension_numbers = #tpu.dot_dimension_numbers<[1], [0], [0], [1], [0, 0, 1, 1], [], []>} : vector<2x32xf32>, vector<32x96xf32>, vector<2x96xf32> -> vector<2x96xf32>
    %532 = arith.addf %530, %531 : vector<2x96xf32>
    %533 = vector.broadcast %13 : vector<1x96xf32> to vector<2x96xf32>
    %534 = arith.addf %532, %533 : vector<2x96xf32>
    %cst_213 = arith.constant dense<0.000000e+00> : vector<2x96xf32>
    %535 = tpu.matmul %474, %12, %cst_213 {dimension_numbers = #tpu.dot_dimension_numbers<[1], [0], [0], [1], [0, 0, 1, 1], [], []>} : vector<2x32xf32>, vector<32x96xf32>, vector<2x96xf32> -> vector<2x96xf32>
    %536 = vector.broadcast %14 : vector<1x96xf32> to vector<2x96xf32>
    %537 = arith.addf %535, %536 : vector<2x96xf32>
    %538 = vector.extract_strided_slice %534 {offsets = [0, 0], sizes = [2, 32], strides = [1, 1]} : vector<2x96xf32> to vector<2x32xf32>
    %539 = vector.extract_strided_slice %537 {offsets = [0, 0], sizes = [2, 32], strides = [1, 1]} : vector<2x96xf32> to vector<2x32xf32>
    %540 = arith.addf %538, %539 : vector<2x32xf32>
    %541 = arith.negf %540 : vector<2x32xf32>
    %542 = math.exp %541 : vector<2x32xf32>
    %cst_214 = arith.constant 1.000000e+00 : f32
    %543 = vector.broadcast %cst_214 : f32 to vector<2x32xf32>
    %544 = arith.addf %543, %542 : vector<2x32xf32>
    %545 = arith.divf %543, %544 : vector<2x32xf32>
    %546 = vector.extract_strided_slice %534 {offsets = [0, 32], sizes = [2, 32], strides = [1, 1]} : vector<2x96xf32> to vector<2x32xf32>
    %547 = vector.extract_strided_slice %537 {offsets = [0, 32], sizes = [2, 32], strides = [1, 1]} : vector<2x96xf32> to vector<2x32xf32>
    %548 = arith.addf %546, %547 : vector<2x32xf32>
    %549 = arith.negf %548 : vector<2x32xf32>
    %550 = math.exp %549 : vector<2x32xf32>
    %cst_215 = arith.constant 1.000000e+00 : f32
    %551 = vector.broadcast %cst_215 : f32 to vector<2x32xf32>
    %552 = arith.addf %551, %550 : vector<2x32xf32>
    %553 = arith.divf %551, %552 : vector<2x32xf32>
    %554 = vector.extract_strided_slice %534 {offsets = [0, 64], sizes = [2, 32], strides = [1, 1]} : vector<2x96xf32> to vector<2x32xf32>
    %555 = vector.extract_strided_slice %537 {offsets = [0, 64], sizes = [2, 32], strides = [1, 1]} : vector<2x96xf32> to vector<2x32xf32>
    %556 = arith.mulf %545, %555 : vector<2x32xf32>
    %557 = arith.addf %554, %556 : vector<2x32xf32>
    %558 = math.tanh %557 : vector<2x32xf32>
    %cst_216 = arith.constant 1.000000e+00 : f32
    %559 = vector.broadcast %cst_216 : f32 to vector<2x32xf32>
    %560 = arith.subf %559, %553 : vector<2x32xf32>
    %561 = arith.mulf %560, %558 : vector<2x32xf32>
    %562 = arith.mulf %553, %474 : vector<2x32xf32>
    %563 = arith.addf %561, %562 : vector<2x32xf32>
    %cst_217 = arith.constant dense<0.000000e+00> : vector<2x20xf32>
    %564 = tpu.matmul %563, %15, %cst_217 {dimension_numbers = #tpu.dot_dimension_numbers<[1], [0], [0], [1], [0, 0, 1, 1], [], []>} : vector<2x32xf32>, vector<32x20xf32>, vector<2x20xf32> -> vector<2x20xf32>
    %cst_218 = arith.constant dense<0.000000e+00> : vector<2x20xf32>
    %565 = tpu.matmul %529, %16, %cst_218 {dimension_numbers = #tpu.dot_dimension_numbers<[1], [0], [0], [1], [0, 0, 1, 1], [], []>} : vector<2x32xf32>, vector<32x20xf32>, vector<2x20xf32> -> vector<2x20xf32>
    %566 = arith.addf %564, %565 : vector<2x20xf32>
    %cst_219 = arith.constant dense<0.000000e+00> : vector<2x20xf32>
    %567 = tpu.matmul %506, %17, %cst_219 {dimension_numbers = #tpu.dot_dimension_numbers<[1], [0], [0], [1], [0, 0, 1, 1], [], []>} : vector<2x16xf32>, vector<16x20xf32>, vector<2x20xf32> -> vector<2x20xf32>
    %568 = arith.addf %566, %567 : vector<2x20xf32>
    %569 = vector.broadcast %18 : vector<1x20xf32> to vector<2x20xf32>
    %570 = arith.addf %568, %569 : vector<2x20xf32>
    %c1_220 = arith.constant 1 : index
    %c0_221 = arith.constant 0 : index
    %c0_222 = arith.constant 0 : index
    %571 = vector.load %arg22[%c1_220, %c0_221, %c0_222] : memref<8x2x20xf32, #tpu.memory_space<vmem>>, vector<1x2x20xf32>
    %572 = vector.shape_cast %571 : vector<1x2x20xf32> to vector<2x20xf32>
    %573 = vector.shape_cast %570 : vector<2x20xf32> to vector<1x2x20xf32>
    tpu.vector_store %arg22[%c1_220, %c0_221, %c0_222], %573 {strides = array<i32>} : memref<8x2x20xf32, #tpu.memory_space<vmem>>, vector<1x2x20xf32>,
    %574 = tpu.iota {dimensions = array<i32: 1>} : vector<2x20xi32>
    %cst_223 = arith.constant dense<0xFF800000> : vector<2xf32>
    %575 = vector.multi_reduction <maximumf>, %570, %cst_223 [1] : vector<2x20xf32> to vector<2xf32>
    %576 = vector.shape_cast %575 : vector<2xf32> to vector<2x1xf32>
    %577 = vector.broadcast %576 : vector<2x1xf32> to vector<2x20xf32>
    %578 = arith.cmpf oge, %570, %577 : vector<2x20xf32>
    %c20_i32 = arith.constant 20 : i32
    %579 = vector.broadcast %c20_i32 : i32 to vector<2x20xi32>
    %580 = arith.select %578, %574, %579 : vector<2x20xi1>, vector<2x20xi32>
    %cst_224 = arith.constant dense<2147483647> : vector<2xi32>
    %581 = vector.multi_reduction <minsi>, %580, %cst_224 [1] : vector<2x20xi32> to vector<2xi32>
    %582 = vector.shape_cast %581 : vector<2xi32> to vector<2x1xi32>
    %583 = vector.broadcast %582 : vector<2x1xi32> to vector<2x20xi32>
    %584 = arith.cmpi eq, %574, %583 : vector<2x20xi32>
    %585 = arith.extui %584 : vector<2x20xi1> to vector<2x20xi32>
    %586 = arith.sitofp %585 : vector<2x20xi32> to vector<2x20xf32>
    %587 = tpu.iota {dimensions = array<i32: 1>} : vector<2x20xi32>
    %588 = tpu.iota {dimensions = array<i32: 0>} : vector<2x20xi32>
    %c0_i32_225 = arith.constant 0 : i32
    %589 = vector.broadcast %c0_i32_225 : i32 to vector<2x20xi32>
    %c0_i32_226 = arith.constant 0 : i32
    %590 = vector.broadcast %c0_i32_226 : i32 to vector<2x20xi32>
    %591 = arith.cmpi eq, %588, %590 : vector<2x20xi32>
    %c0_227 = arith.constant 0 : index
    %c1_228 = arith.constant 1 : index
    %592 = memref.load %arg1[%c0_227, %c1_228] : memref<2x8xi32, #tpu.memory_space<smem>>
    %593 = vector.broadcast %592 : i32 to vector<2x20xi32>
    %594 = arith.select %591, %593, %589 : vector<2x20xi1>, vector<2x20xi32>
    %c1_i32_229 = arith.constant 1 : i32
    %595 = vector.broadcast %c1_i32_229 : i32 to vector<2x20xi32>
    %596 = arith.cmpi eq, %588, %595 : vector<2x20xi32>
    %c1_230 = arith.constant 1 : index
    %c1_231 = arith.constant 1 : index
    %597 = memref.load %arg1[%c1_230, %c1_231] : memref<2x8xi32, #tpu.memory_space<smem>>
    %598 = vector.broadcast %597 : i32 to vector<2x20xi32>
    %599 = arith.select %596, %598, %594 : vector<2x20xi1>, vector<2x20xi32>
    %600 = arith.cmpi eq, %587, %599 : vector<2x20xi32>
    %601 = arith.extui %600 : vector<2x20xi1> to vector<2x20xi32>
    %602 = arith.sitofp %601 : vector<2x20xi32> to vector<2x20xf32>
    %c0_232 = arith.constant 0 : index
    %603 = memref.load %arg2[%c0_232] : memref<7xi32, #tpu.memory_space<smem>>
    %c0_i32_233 = arith.constant 0 : i32
    %604 = arith.cmpi sgt, %603, %c0_i32_233 : i32
    %605 = arith.extui %604 : i1 to i32
    %606 = arith.sitofp %605 : i32 to f32
    %607 = vector.broadcast %606 : f32 to vector<2x20xf32>
    %608 = arith.mulf %607, %602 : vector<2x20xf32>
    %cst_234 = arith.constant 1.000000e+00 : f32
    %609 = arith.subf %cst_234, %606 : f32
    %610 = vector.broadcast %609 : f32 to vector<2x20xf32>
    %611 = arith.mulf %610, %586 : vector<2x20xf32>
    %612 = arith.addf %608, %611 : vector<2x20xf32>
    %cst_235 = arith.constant dense<0.000000e+00> : vector<2x16xf32>
    %613 = tpu.matmul %612, %1, %cst_235 {dimension_numbers = #tpu.dot_dimension_numbers<[1], [0], [0], [1], [0, 0, 1, 1], [], []>} : vector<2x20xf32>, vector<20x16xf32>, vector<2x16xf32> -> vector<2x16xf32>
    %cst_236 = arith.constant dense<0.000000e+00> : vector<2x32xf32>
    %614 = tpu.matmul %563, %6, %cst_236 {dimension_numbers = #tpu.dot_dimension_numbers<[1], [0], [0], [1], [0, 0, 1, 1], [], []>} : vector<2x32xf32>, vector<32x32xf32>, vector<2x32xf32> -> vector<2x32xf32>
    %615 = vector.shape_cast %614 : vector<2x32xf32> to vector<2x1x32xf32>
    %616 = vector.broadcast %615 : vector<2x1x32xf32> to vector<2x8x32xf32>
    %617 = arith.addf %616, %485 : vector<2x8x32xf32>
    %618 = math.tanh %617 : vector<2x8x32xf32>
    %619 = vector.shape_cast %9 : vector<1x32xf32> to vector<1x1x32xf32>
    %620 = vector.broadcast %619 : vector<1x1x32xf32> to vector<2x8x32xf32>
    %621 = arith.mulf %618, %620 : vector<2x8x32xf32>
    %cst_237 = arith.constant dense<0.000000e+00> : vector<2x8xf32>
    %622 = vector.multi_reduction <add>, %621, %cst_237 [2] : vector<2x8x32xf32> to vector<2x8xf32>
    %cst_238 = arith.constant dense<0xFF800000> : vector<2xf32>
    %623 = vector.multi_reduction <maximumf>, %622, %cst_238 [1] : vector<2x8xf32> to vector<2xf32>
    %624 = vector.shape_cast %623 : vector<2xf32> to vector<2x1xf32>
    %625 = vector.broadcast %624 : vector<2x1xf32> to vector<2x8xf32>
    %626 = arith.subf %622, %625 : vector<2x8xf32>
    %627 = math.exp %626 : vector<2x8xf32>
    %cst_239 = arith.constant dense<0.000000e+00> : vector<2xf32>
    %628 = vector.multi_reduction <add>, %627, %cst_239 [1] : vector<2x8xf32> to vector<2xf32>
    %629 = vector.shape_cast %628 : vector<2xf32> to vector<2x1xf32>
    %630 = tpu.reciprocal %629 {approx = true} : vector<2x1xf32> -> vector<2x1xf32>
    %631 = vector.broadcast %630 : vector<2x1xf32> to vector<2x8xf32>
    %632 = arith.mulf %627, %631 : vector<2x8xf32>
    %633 = vector.shape_cast %632 : vector<2x8xf32> to vector<2x8x1xf32>
    %634 = vector.broadcast %633 : vector<2x8x1xf32> to vector<2x8x32xf32>
    %635 = arith.mulf %634, %484 : vector<2x8x32xf32>
    %cst_240 = arith.constant dense<0.000000e+00> : vector<2x32xf32>
    %636 = vector.multi_reduction <add>, %635, %cst_240 [1] : vector<2x8x32xf32> to vector<2x32xf32>
    %cst_241 = arith.constant dense<0.000000e+00> : vector<2x96xf32>
    %637 = tpu.matmul %613, %10, %cst_241 {dimension_numbers = #tpu.dot_dimension_numbers<[1], [0], [0], [1], [0, 0, 1, 1], [], []>} : vector<2x16xf32>, vector<16x96xf32>, vector<2x96xf32> -> vector<2x96xf32>
    %cst_242 = arith.constant dense<0.000000e+00> : vector<2x96xf32>
    %638 = tpu.matmul %636, %11, %cst_242 {dimension_numbers = #tpu.dot_dimension_numbers<[1], [0], [0], [1], [0, 0, 1, 1], [], []>} : vector<2x32xf32>, vector<32x96xf32>, vector<2x96xf32> -> vector<2x96xf32>
    %639 = arith.addf %637, %638 : vector<2x96xf32>
    %640 = vector.broadcast %13 : vector<1x96xf32> to vector<2x96xf32>
    %641 = arith.addf %639, %640 : vector<2x96xf32>
    %cst_243 = arith.constant dense<0.000000e+00> : vector<2x96xf32>
    %642 = tpu.matmul %563, %12, %cst_243 {dimension_numbers = #tpu.dot_dimension_numbers<[1], [0], [0], [1], [0, 0, 1, 1], [], []>} : vector<2x32xf32>, vector<32x96xf32>, vector<2x96xf32> -> vector<2x96xf32>
    %643 = vector.broadcast %14 : vector<1x96xf32> to vector<2x96xf32>
    %644 = arith.addf %642, %643 : vector<2x96xf32>
    %645 = vector.extract_strided_slice %641 {offsets = [0, 0], sizes = [2, 32], strides = [1, 1]} : vector<2x96xf32> to vector<2x32xf32>
    %646 = vector.extract_strided_slice %644 {offsets = [0, 0], sizes = [2, 32], strides = [1, 1]} : vector<2x96xf32> to vector<2x32xf32>
    %647 = arith.addf %645, %646 : vector<2x32xf32>
    %648 = arith.negf %647 : vector<2x32xf32>
    %649 = math.exp %648 : vector<2x32xf32>
    %cst_244 = arith.constant 1.000000e+00 : f32
    %650 = vector.broadcast %cst_244 : f32 to vector<2x32xf32>
    %651 = arith.addf %650, %649 : vector<2x32xf32>
    %652 = arith.divf %650, %651 : vector<2x32xf32>
    %653 = vector.extract_strided_slice %641 {offsets = [0, 32], sizes = [2, 32], strides = [1, 1]} : vector<2x96xf32> to vector<2x32xf32>
    %654 = vector.extract_strided_slice %644 {offsets = [0, 32], sizes = [2, 32], strides = [1, 1]} : vector<2x96xf32> to vector<2x32xf32>
    %655 = arith.addf %653, %654 : vector<2x32xf32>
    %656 = arith.negf %655 : vector<2x32xf32>
    %657 = math.exp %656 : vector<2x32xf32>
    %cst_245 = arith.constant 1.000000e+00 : f32
    %658 = vector.broadcast %cst_245 : f32 to vector<2x32xf32>
    %659 = arith.addf %658, %657 : vector<2x32xf32>
    %660 = arith.divf %658, %659 : vector<2x32xf32>
    %661 = vector.extract_strided_slice %641 {offsets = [0, 64], sizes = [2, 32], strides = [1, 1]} : vector<2x96xf32> to vector<2x32xf32>
    %662 = vector.extract_strided_slice %644 {offsets = [0, 64], sizes = [2, 32], strides = [1, 1]} : vector<2x96xf32> to vector<2x32xf32>
    %663 = arith.mulf %652, %662 : vector<2x32xf32>
    %664 = arith.addf %661, %663 : vector<2x32xf32>
    %665 = math.tanh %664 : vector<2x32xf32>
    %cst_246 = arith.constant 1.000000e+00 : f32
    %666 = vector.broadcast %cst_246 : f32 to vector<2x32xf32>
    %667 = arith.subf %666, %660 : vector<2x32xf32>
    %668 = arith.mulf %667, %665 : vector<2x32xf32>
    %669 = arith.mulf %660, %563 : vector<2x32xf32>
    %670 = arith.addf %668, %669 : vector<2x32xf32>
    %cst_247 = arith.constant dense<0.000000e+00> : vector<2x20xf32>
    %671 = tpu.matmul %670, %15, %cst_247 {dimension_numbers = #tpu.dot_dimension_numbers<[1], [0], [0], [1], [0, 0, 1, 1], [], []>} : vector<2x32xf32>, vector<32x20xf32>, vector<2x20xf32> -> vector<2x20xf32>
    %cst_248 = arith.constant dense<0.000000e+00> : vector<2x20xf32>
    %672 = tpu.matmul %636, %16, %cst_248 {dimension_numbers = #tpu.dot_dimension_numbers<[1], [0], [0], [1], [0, 0, 1, 1], [], []>} : vector<2x32xf32>, vector<32x20xf32>, vector<2x20xf32> -> vector<2x20xf32>
    %673 = arith.addf %671, %672 : vector<2x20xf32>
    %cst_249 = arith.constant dense<0.000000e+00> : vector<2x20xf32>
    %674 = tpu.matmul %613, %17, %cst_249 {dimension_numbers = #tpu.dot_dimension_numbers<[1], [0], [0], [1], [0, 0, 1, 1], [], []>} : vector<2x16xf32>, vector<16x20xf32>, vector<2x20xf32> -> vector<2x20xf32>
    %675 = arith.addf %673, %674 : vector<2x20xf32>
    %676 = vector.broadcast %18 : vector<1x20xf32> to vector<2x20xf32>
    %677 = arith.addf %675, %676 : vector<2x20xf32>
    %c2_250 = arith.constant 2 : index
    %c0_251 = arith.constant 0 : index
    %c0_252 = arith.constant 0 : index
    %678 = vector.load %arg22[%c2_250, %c0_251, %c0_252] : memref<8x2x20xf32, #tpu.memory_space<vmem>>, vector<1x2x20xf32>
    %679 = vector.shape_cast %678 : vector<1x2x20xf32> to vector<2x20xf32>
    %680 = vector.shape_cast %677 : vector<2x20xf32> to vector<1x2x20xf32>
    tpu.vector_store %arg22[%c2_250, %c0_251, %c0_252], %680 {strides = array<i32>} : memref<8x2x20xf32, #tpu.memory_space<vmem>>, vector<1x2x20xf32>,
    %681 = tpu.iota {dimensions = array<i32: 1>} : vector<2x20xi32>
    %cst_253 = arith.constant dense<0xFF800000> : vector<2xf32>
    %682 = vector.multi_reduction <maximumf>, %677, %cst_253 [1] : vector<2x20xf32> to vector<2xf32>
    %683 = vector.shape_cast %682 : vector<2xf32> to vector<2x1xf32>
    %684 = vector.broadcast %683 : vector<2x1xf32> to vector<2x20xf32>
    %685 = arith.cmpf oge, %677, %684 : vector<2x20xf32>
    %c20_i32_254 = arith.constant 20 : i32
    %686 = vector.broadcast %c20_i32_254 : i32 to vector<2x20xi32>
    %687 = arith.select %685, %681, %686 : vector<2x20xi1>, vector<2x20xi32>
    %cst_255 = arith.constant dense<2147483647> : vector<2xi32>
    %688 = vector.multi_reduction <minsi>, %687, %cst_255 [1] : vector<2x20xi32> to vector<2xi32>
    %689 = vector.shape_cast %688 : vector<2xi32> to vector<2x1xi32>
    %690 = vector.broadcast %689 : vector<2x1xi32> to vector<2x20xi32>
    %691 = arith.cmpi eq, %681, %690 : vector<2x20xi32>
    %692 = arith.extui %691 : vector<2x20xi1> to vector<2x20xi32>
    %693 = arith.sitofp %692 : vector<2x20xi32> to vector<2x20xf32>
    %694 = tpu.iota {dimensions = array<i32: 1>} : vector<2x20xi32>
    %695 = tpu.iota {dimensions = array<i32: 0>} : vector<2x20xi32>
    %c0_i32_256 = arith.constant 0 : i32
    %696 = vector.broadcast %c0_i32_256 : i32 to vector<2x20xi32>
    %c0_i32_257 = arith.constant 0 : i32
    %697 = vector.broadcast %c0_i32_257 : i32 to vector<2x20xi32>
    %698 = arith.cmpi eq, %695, %697 : vector<2x20xi32>
    %c0_258 = arith.constant 0 : index
    %c2_259 = arith.constant 2 : index
    %699 = memref.load %arg1[%c0_258, %c2_259] : memref<2x8xi32, #tpu.memory_space<smem>>
    %700 = vector.broadcast %699 : i32 to vector<2x20xi32>
    %701 = arith.select %698, %700, %696 : vector<2x20xi1>, vector<2x20xi32>
    %c1_i32_260 = arith.constant 1 : i32
    %702 = vector.broadcast %c1_i32_260 : i32 to vector<2x20xi32>
    %703 = arith.cmpi eq, %695, %702 : vector<2x20xi32>
    %c1_261 = arith.constant 1 : index
    %c2_262 = arith.constant 2 : index
    %704 = memref.load %arg1[%c1_261, %c2_262] : memref<2x8xi32, #tpu.memory_space<smem>>
    %705 = vector.broadcast %704 : i32 to vector<2x20xi32>
    %706 = arith.select %703, %705, %701 : vector<2x20xi1>, vector<2x20xi32>
    %707 = arith.cmpi eq, %694, %706 : vector<2x20xi32>
    %708 = arith.extui %707 : vector<2x20xi1> to vector<2x20xi32>
    %709 = arith.sitofp %708 : vector<2x20xi32> to vector<2x20xf32>
    %c1_263 = arith.constant 1 : index
    %710 = memref.load %arg2[%c1_263] : memref<7xi32, #tpu.memory_space<smem>>
    %c0_i32_264 = arith.constant 0 : i32
    %711 = arith.cmpi sgt, %710, %c0_i32_264 : i32
    %712 = arith.extui %711 : i1 to i32
    %713 = arith.sitofp %712 : i32 to f32
    %714 = vector.broadcast %713 : f32 to vector<2x20xf32>
    %715 = arith.mulf %714, %709 : vector<2x20xf32>
    %cst_265 = arith.constant 1.000000e+00 : f32
    %716 = arith.subf %cst_265, %713 : f32
    %717 = vector.broadcast %716 : f32 to vector<2x20xf32>
    %718 = arith.mulf %717, %693 : vector<2x20xf32>
    %719 = arith.addf %715, %718 : vector<2x20xf32>
    %cst_266 = arith.constant dense<0.000000e+00> : vector<2x16xf32>
    %720 = tpu.matmul %719, %1, %cst_266 {dimension_numbers = #tpu.dot_dimension_numbers<[1], [0], [0], [1], [0, 0, 1, 1], [], []>} : vector<2x20xf32>, vector<20x16xf32>, vector<2x16xf32> -> vector<2x16xf32>
    %cst_267 = arith.constant dense<0.000000e+00> : vector<2x32xf32>
    %721 = tpu.matmul %670, %6, %cst_267 {dimension_numbers = #tpu.dot_dimension_numbers<[1], [0], [0], [1], [0, 0, 1, 1], [], []>} : vector<2x32xf32>, vector<32x32xf32>, vector<2x32xf32> -> vector<2x32xf32>
    %722 = vector.shape_cast %721 : vector<2x32xf32> to vector<2x1x32xf32>
    %723 = vector.broadcast %722 : vector<2x1x32xf32> to vector<2x8x32xf32>
    %724 = arith.addf %723, %485 : vector<2x8x32xf32>
    %725 = math.tanh %724 : vector<2x8x32xf32>
    %726 = vector.shape_cast %9 : vector<1x32xf32> to vector<1x1x32xf32>
    %727 = vector.broadcast %726 : vector<1x1x32xf32> to vector<2x8x32xf32>
    %728 = arith.mulf %725, %727 : vector<2x8x32xf32>
    %cst_268 = arith.constant dense<0.000000e+00> : vector<2x8xf32>
    %729 = vector.multi_reduction <add>, %728, %cst_268 [2] : vector<2x8x32xf32> to vector<2x8xf32>
    %cst_269 = arith.constant dense<0xFF800000> : vector<2xf32>
    %730 = vector.multi_reduction <maximumf>, %729, %cst_269 [1] : vector<2x8xf32> to vector<2xf32>
    %731 = vector.shape_cast %730 : vector<2xf32> to vector<2x1xf32>
    %732 = vector.broadcast %731 : vector<2x1xf32> to vector<2x8xf32>
    %733 = arith.subf %729, %732 : vector<2x8xf32>
    %734 = math.exp %733 : vector<2x8xf32>
    %cst_270 = arith.constant dense<0.000000e+00> : vector<2xf32>
    %735 = vector.multi_reduction <add>, %734, %cst_270 [1] : vector<2x8xf32> to vector<2xf32>
    %736 = vector.shape_cast %735 : vector<2xf32> to vector<2x1xf32>
    %737 = tpu.reciprocal %736 {approx = true} : vector<2x1xf32> -> vector<2x1xf32>
    %738 = vector.broadcast %737 : vector<2x1xf32> to vector<2x8xf32>
    %739 = arith.mulf %734, %738 : vector<2x8xf32>
    %740 = vector.shape_cast %739 : vector<2x8xf32> to vector<2x8x1xf32>
    %741 = vector.broadcast %740 : vector<2x8x1xf32> to vector<2x8x32xf32>
    %742 = arith.mulf %741, %484 : vector<2x8x32xf32>
    %cst_271 = arith.constant dense<0.000000e+00> : vector<2x32xf32>
    %743 = vector.multi_reduction <add>, %742, %cst_271 [1] : vector<2x8x32xf32> to vector<2x32xf32>
    %cst_272 = arith.constant dense<0.000000e+00> : vector<2x96xf32>
    %744 = tpu.matmul %720, %10, %cst_272 {dimension_numbers = #tpu.dot_dimension_numbers<[1], [0], [0], [1], [0, 0, 1, 1], [], []>} : vector<2x16xf32>, vector<16x96xf32>, vector<2x96xf32> -> vector<2x96xf32>
    %cst_273 = arith.constant dense<0.000000e+00> : vector<2x96xf32>
    %745 = tpu.matmul %743, %11, %cst_273 {dimension_numbers = #tpu.dot_dimension_numbers<[1], [0], [0], [1], [0, 0, 1, 1], [], []>} : vector<2x32xf32>, vector<32x96xf32>, vector<2x96xf32> -> vector<2x96xf32>
    %746 = arith.addf %744, %745 : vector<2x96xf32>
    %747 = vector.broadcast %13 : vector<1x96xf32> to vector<2x96xf32>
    %748 = arith.addf %746, %747 : vector<2x96xf32>
    %cst_274 = arith.constant dense<0.000000e+00> : vector<2x96xf32>
    %749 = tpu.matmul %670, %12, %cst_274 {dimension_numbers = #tpu.dot_dimension_numbers<[1], [0], [0], [1], [0, 0, 1, 1], [], []>} : vector<2x32xf32>, vector<32x96xf32>, vector<2x96xf32> -> vector<2x96xf32>
    %750 = vector.broadcast %14 : vector<1x96xf32> to vector<2x96xf32>
    %751 = arith.addf %749, %750 : vector<2x96xf32>
    %752 = vector.extract_strided_slice %748 {offsets = [0, 0], sizes = [2, 32], strides = [1, 1]} : vector<2x96xf32> to vector<2x32xf32>
    %753 = vector.extract_strided_slice %751 {offsets = [0, 0], sizes = [2, 32], strides = [1, 1]} : vector<2x96xf32> to vector<2x32xf32>
    %754 = arith.addf %752, %753 : vector<2x32xf32>
    %755 = arith.negf %754 : vector<2x32xf32>
    %756 = math.exp %755 : vector<2x32xf32>
    %cst_275 = arith.constant 1.000000e+00 : f32
    %757 = vector.broadcast %cst_275 : f32 to vector<2x32xf32>
    %758 = arith.addf %757, %756 : vector<2x32xf32>
    %759 = arith.divf %757, %758 : vector<2x32xf32>
    %760 = vector.extract_strided_slice %748 {offsets = [0, 32], sizes = [2, 32], strides = [1, 1]} : vector<2x96xf32> to vector<2x32xf32>
    %761 = vector.extract_strided_slice %751 {offsets = [0, 32], sizes = [2, 32], strides = [1, 1]} : vector<2x96xf32> to vector<2x32xf32>
    %762 = arith.addf %760, %761 : vector<2x32xf32>
    %763 = arith.negf %762 : vector<2x32xf32>
    %764 = math.exp %763 : vector<2x32xf32>
    %cst_276 = arith.constant 1.000000e+00 : f32
    %765 = vector.broadcast %cst_276 : f32 to vector<2x32xf32>
    %766 = arith.addf %765, %764 : vector<2x32xf32>
    %767 = arith.divf %765, %766 : vector<2x32xf32>
    %768 = vector.extract_strided_slice %748 {offsets = [0, 64], sizes = [2, 32], strides = [1, 1]} : vector<2x96xf32> to vector<2x32xf32>
    %769 = vector.extract_strided_slice %751 {offsets = [0, 64], sizes = [2, 32], strides = [1, 1]} : vector<2x96xf32> to vector<2x32xf32>
    %770 = arith.mulf %759, %769 : vector<2x32xf32>
    %771 = arith.addf %768, %770 : vector<2x32xf32>
    %772 = math.tanh %771 : vector<2x32xf32>
    %cst_277 = arith.constant 1.000000e+00 : f32
    %773 = vector.broadcast %cst_277 : f32 to vector<2x32xf32>
    %774 = arith.subf %773, %767 : vector<2x32xf32>
    %775 = arith.mulf %774, %772 : vector<2x32xf32>
    %776 = arith.mulf %767, %670 : vector<2x32xf32>
    %777 = arith.addf %775, %776 : vector<2x32xf32>
    %cst_278 = arith.constant dense<0.000000e+00> : vector<2x20xf32>
    %778 = tpu.matmul %777, %15, %cst_278 {dimension_numbers = #tpu.dot_dimension_numbers<[1], [0], [0], [1], [0, 0, 1, 1], [], []>} : vector<2x32xf32>, vector<32x20xf32>, vector<2x20xf32> -> vector<2x20xf32>
    %cst_279 = arith.constant dense<0.000000e+00> : vector<2x20xf32>
    %779 = tpu.matmul %743, %16, %cst_279 {dimension_numbers = #tpu.dot_dimension_numbers<[1], [0], [0], [1], [0, 0, 1, 1], [], []>} : vector<2x32xf32>, vector<32x20xf32>, vector<2x20xf32> -> vector<2x20xf32>
    %780 = arith.addf %778, %779 : vector<2x20xf32>
    %cst_280 = arith.constant dense<0.000000e+00> : vector<2x20xf32>
    %781 = tpu.matmul %720, %17, %cst_280 {dimension_numbers = #tpu.dot_dimension_numbers<[1], [0], [0], [1], [0, 0, 1, 1], [], []>} : vector<2x16xf32>, vector<16x20xf32>, vector<2x20xf32> -> vector<2x20xf32>
    %782 = arith.addf %780, %781 : vector<2x20xf32>
    %783 = vector.broadcast %18 : vector<1x20xf32> to vector<2x20xf32>
    %784 = arith.addf %782, %783 : vector<2x20xf32>
    %c3_281 = arith.constant 3 : index
    %c0_282 = arith.constant 0 : index
    %c0_283 = arith.constant 0 : index
    %785 = vector.load %arg22[%c3_281, %c0_282, %c0_283] : memref<8x2x20xf32, #tpu.memory_space<vmem>>, vector<1x2x20xf32>
    %786 = vector.shape_cast %785 : vector<1x2x20xf32> to vector<2x20xf32>
    %787 = vector.shape_cast %784 : vector<2x20xf32> to vector<1x2x20xf32>
    tpu.vector_store %arg22[%c3_281, %c0_282, %c0_283], %787 {strides = array<i32>} : memref<8x2x20xf32, #tpu.memory_space<vmem>>, vector<1x2x20xf32>,
    %788 = tpu.iota {dimensions = array<i32: 1>} : vector<2x20xi32>
    %cst_284 = arith.constant dense<0xFF800000> : vector<2xf32>
    %789 = vector.multi_reduction <maximumf>, %784, %cst_284 [1] : vector<2x20xf32> to vector<2xf32>
    %790 = vector.shape_cast %789 : vector<2xf32> to vector<2x1xf32>
    %791 = vector.broadcast %790 : vector<2x1xf32> to vector<2x20xf32>
    %792 = arith.cmpf oge, %784, %791 : vector<2x20xf32>
    %c20_i32_285 = arith.constant 20 : i32
    %793 = vector.broadcast %c20_i32_285 : i32 to vector<2x20xi32>
    %794 = arith.select %792, %788, %793 : vector<2x20xi1>, vector<2x20xi32>
    %cst_286 = arith.constant dense<2147483647> : vector<2xi32>
    %795 = vector.multi_reduction <minsi>, %794, %cst_286 [1] : vector<2x20xi32> to vector<2xi32>
    %796 = vector.shape_cast %795 : vector<2xi32> to vector<2x1xi32>
    %797 = vector.broadcast %796 : vector<2x1xi32> to vector<2x20xi32>
    %798 = arith.cmpi eq, %788, %797 : vector<2x20xi32>
    %799 = arith.extui %798 : vector<2x20xi1> to vector<2x20xi32>
    %800 = arith.sitofp %799 : vector<2x20xi32> to vector<2x20xf32>
    %801 = tpu.iota {dimensions = array<i32: 1>} : vector<2x20xi32>
    %802 = tpu.iota {dimensions = array<i32: 0>} : vector<2x20xi32>
    %c0_i32_287 = arith.constant 0 : i32
    %803 = vector.broadcast %c0_i32_287 : i32 to vector<2x20xi32>
    %c0_i32_288 = arith.constant 0 : i32
    %804 = vector.broadcast %c0_i32_288 : i32 to vector<2x20xi32>
    %805 = arith.cmpi eq, %802, %804 : vector<2x20xi32>
    %c0_289 = arith.constant 0 : index
    %c3_290 = arith.constant 3 : index
    %806 = memref.load %arg1[%c0_289, %c3_290] : memref<2x8xi32, #tpu.memory_space<smem>>
    %807 = vector.broadcast %806 : i32 to vector<2x20xi32>
    %808 = arith.select %805, %807, %803 : vector<2x20xi1>, vector<2x20xi32>
    %c1_i32_291 = arith.constant 1 : i32
    %809 = vector.broadcast %c1_i32_291 : i32 to vector<2x20xi32>
    %810 = arith.cmpi eq, %802, %809 : vector<2x20xi32>
    %c1_292 = arith.constant 1 : index
    %c3_293 = arith.constant 3 : index
    %811 = memref.load %arg1[%c1_292, %c3_293] : memref<2x8xi32, #tpu.memory_space<smem>>
    %812 = vector.broadcast %811 : i32 to vector<2x20xi32>
    %813 = arith.select %810, %812, %808 : vector<2x20xi1>, vector<2x20xi32>
    %814 = arith.cmpi eq, %801, %813 : vector<2x20xi32>
    %815 = arith.extui %814 : vector<2x20xi1> to vector<2x20xi32>
    %816 = arith.sitofp %815 : vector<2x20xi32> to vector<2x20xf32>
    %c2_294 = arith.constant 2 : index
    %817 = memref.load %arg2[%c2_294] : memref<7xi32, #tpu.memory_space<smem>>
    %c0_i32_295 = arith.constant 0 : i32
    %818 = arith.cmpi sgt, %817, %c0_i32_295 : i32
    %819 = arith.extui %818 : i1 to i32
    %820 = arith.sitofp %819 : i32 to f32
    %821 = vector.broadcast %820 : f32 to vector<2x20xf32>
    %822 = arith.mulf %821, %816 : vector<2x20xf32>
    %cst_296 = arith.constant 1.000000e+00 : f32
    %823 = arith.subf %cst_296, %820 : f32
    %824 = vector.broadcast %823 : f32 to vector<2x20xf32>
    %825 = arith.mulf %824, %800 : vector<2x20xf32>
    %826 = arith.addf %822, %825 : vector<2x20xf32>
    %cst_297 = arith.constant dense<0.000000e+00> : vector<2x16xf32>
    %827 = tpu.matmul %826, %1, %cst_297 {dimension_numbers = #tpu.dot_dimension_numbers<[1], [0], [0], [1], [0, 0, 1, 1], [], []>} : vector<2x20xf32>, vector<20x16xf32>, vector<2x16xf32> -> vector<2x16xf32>
    %cst_298 = arith.constant dense<0.000000e+00> : vector<2x32xf32>
    %828 = tpu.matmul %777, %6, %cst_298 {dimension_numbers = #tpu.dot_dimension_numbers<[1], [0], [0], [1], [0, 0, 1, 1], [], []>} : vector<2x32xf32>, vector<32x32xf32>, vector<2x32xf32> -> vector<2x32xf32>
    %829 = vector.shape_cast %828 : vector<2x32xf32> to vector<2x1x32xf32>
    %830 = vector.broadcast %829 : vector<2x1x32xf32> to vector<2x8x32xf32>
    %831 = arith.addf %830, %485 : vector<2x8x32xf32>
    %832 = math.tanh %831 : vector<2x8x32xf32>
    %833 = vector.shape_cast %9 : vector<1x32xf32> to vector<1x1x32xf32>
    %834 = vector.broadcast %833 : vector<1x1x32xf32> to vector<2x8x32xf32>
    %835 = arith.mulf %832, %834 : vector<2x8x32xf32>
    %cst_299 = arith.constant dense<0.000000e+00> : vector<2x8xf32>
    %836 = vector.multi_reduction <add>, %835, %cst_299 [2] : vector<2x8x32xf32> to vector<2x8xf32>
    %cst_300 = arith.constant dense<0xFF800000> : vector<2xf32>
    %837 = vector.multi_reduction <maximumf>, %836, %cst_300 [1] : vector<2x8xf32> to vector<2xf32>
    %838 = vector.shape_cast %837 : vector<2xf32> to vector<2x1xf32>
    %839 = vector.broadcast %838 : vector<2x1xf32> to vector<2x8xf32>
    %840 = arith.subf %836, %839 : vector<2x8xf32>
    %841 = math.exp %840 : vector<2x8xf32>
    %cst_301 = arith.constant dense<0.000000e+00> : vector<2xf32>
    %842 = vector.multi_reduction <add>, %841, %cst_301 [1] : vector<2x8xf32> to vector<2xf32>
    %843 = vector.shape_cast %842 : vector<2xf32> to vector<2x1xf32>
    %844 = tpu.reciprocal %843 {approx = true} : vector<2x1xf32> -> vector<2x1xf32>
    %845 = vector.broadcast %844 : vector<2x1xf32> to vector<2x8xf32>
    %846 = arith.mulf %841, %845 : vector<2x8xf32>
    %847 = vector.shape_cast %846 : vector<2x8xf32> to vector<2x8x1xf32>
    %848 = vector.broadcast %847 : vector<2x8x1xf32> to vector<2x8x32xf32>
    %849 = arith.mulf %848, %484 : vector<2x8x32xf32>
    %cst_302 = arith.constant dense<0.000000e+00> : vector<2x32xf32>
    %850 = vector.multi_reduction <add>, %849, %cst_302 [1] : vector<2x8x32xf32> to vector<2x32xf32>
    %cst_303 = arith.constant dense<0.000000e+00> : vector<2x96xf32>
    %851 = tpu.matmul %827, %10, %cst_303 {dimension_numbers = #tpu.dot_dimension_numbers<[1], [0], [0], [1], [0, 0, 1, 1], [], []>} : vector<2x16xf32>, vector<16x96xf32>, vector<2x96xf32> -> vector<2x96xf32>
    %cst_304 = arith.constant dense<0.000000e+00> : vector<2x96xf32>
    %852 = tpu.matmul %850, %11, %cst_304 {dimension_numbers = #tpu.dot_dimension_numbers<[1], [0], [0], [1], [0, 0, 1, 1], [], []>} : vector<2x32xf32>, vector<32x96xf32>, vector<2x96xf32> -> vector<2x96xf32>
    %853 = arith.addf %851, %852 : vector<2x96xf32>
    %854 = vector.broadcast %13 : vector<1x96xf32> to vector<2x96xf32>
    %855 = arith.addf %853, %854 : vector<2x96xf32>
    %cst_305 = arith.constant dense<0.000000e+00> : vector<2x96xf32>
    %856 = tpu.matmul %777, %12, %cst_305 {dimension_numbers = #tpu.dot_dimension_numbers<[1], [0], [0], [1], [0, 0, 1, 1], [], []>} : vector<2x32xf32>, vector<32x96xf32>, vector<2x96xf32> -> vector<2x96xf32>
    %857 = vector.broadcast %14 : vector<1x96xf32> to vector<2x96xf32>
    %858 = arith.addf %856, %857 : vector<2x96xf32>
    %859 = vector.extract_strided_slice %855 {offsets = [0, 0], sizes = [2, 32], strides = [1, 1]} : vector<2x96xf32> to vector<2x32xf32>
    %860 = vector.extract_strided_slice %858 {offsets = [0, 0], sizes = [2, 32], strides = [1, 1]} : vector<2x96xf32> to vector<2x32xf32>
    %861 = arith.addf %859, %860 : vector<2x32xf32>
    %862 = arith.negf %861 : vector<2x32xf32>
    %863 = math.exp %862 : vector<2x32xf32>
    %cst_306 = arith.constant 1.000000e+00 : f32
    %864 = vector.broadcast %cst_306 : f32 to vector<2x32xf32>
    %865 = arith.addf %864, %863 : vector<2x32xf32>
    %866 = arith.divf %864, %865 : vector<2x32xf32>
    %867 = vector.extract_strided_slice %855 {offsets = [0, 32], sizes = [2, 32], strides = [1, 1]} : vector<2x96xf32> to vector<2x32xf32>
    %868 = vector.extract_strided_slice %858 {offsets = [0, 32], sizes = [2, 32], strides = [1, 1]} : vector<2x96xf32> to vector<2x32xf32>
    %869 = arith.addf %867, %868 : vector<2x32xf32>
    %870 = arith.negf %869 : vector<2x32xf32>
    %871 = math.exp %870 : vector<2x32xf32>
    %cst_307 = arith.constant 1.000000e+00 : f32
    %872 = vector.broadcast %cst_307 : f32 to vector<2x32xf32>
    %873 = arith.addf %872, %871 : vector<2x32xf32>
    %874 = arith.divf %872, %873 : vector<2x32xf32>
    %875 = vector.extract_strided_slice %855 {offsets = [0, 64], sizes = [2, 32], strides = [1, 1]} : vector<2x96xf32> to vector<2x32xf32>
    %876 = vector.extract_strided_slice %858 {offsets = [0, 64], sizes = [2, 32], strides = [1, 1]} : vector<2x96xf32> to vector<2x32xf32>
    %877 = arith.mulf %866, %876 : vector<2x32xf32>
    %878 = arith.addf %875, %877 : vector<2x32xf32>
    %879 = math.tanh %878 : vector<2x32xf32>
    %cst_308 = arith.constant 1.000000e+00 : f32
    %880 = vector.broadcast %cst_308 : f32 to vector<2x32xf32>
    %881 = arith.subf %880, %874 : vector<2x32xf32>
    %882 = arith.mulf %881, %879 : vector<2x32xf32>
    %883 = arith.mulf %874, %777 : vector<2x32xf32>
    %884 = arith.addf %882, %883 : vector<2x32xf32>
    %cst_309 = arith.constant dense<0.000000e+00> : vector<2x20xf32>
    %885 = tpu.matmul %884, %15, %cst_309 {dimension_numbers = #tpu.dot_dimension_numbers<[1], [0], [0], [1], [0, 0, 1, 1], [], []>} : vector<2x32xf32>, vector<32x20xf32>, vector<2x20xf32> -> vector<2x20xf32>
    %cst_310 = arith.constant dense<0.000000e+00> : vector<2x20xf32>
    %886 = tpu.matmul %850, %16, %cst_310 {dimension_numbers = #tpu.dot_dimension_numbers<[1], [0], [0], [1], [0, 0, 1, 1], [], []>} : vector<2x32xf32>, vector<32x20xf32>, vector<2x20xf32> -> vector<2x20xf32>
    %887 = arith.addf %885, %886 : vector<2x20xf32>
    %cst_311 = arith.constant dense<0.000000e+00> : vector<2x20xf32>
    %888 = tpu.matmul %827, %17, %cst_311 {dimension_numbers = #tpu.dot_dimension_numbers<[1], [0], [0], [1], [0, 0, 1, 1], [], []>} : vector<2x16xf32>, vector<16x20xf32>, vector<2x20xf32> -> vector<2x20xf32>
    %889 = arith.addf %887, %888 : vector<2x20xf32>
    %890 = vector.broadcast %18 : vector<1x20xf32> to vector<2x20xf32>
    %891 = arith.addf %889, %890 : vector<2x20xf32>
    %c4_312 = arith.constant 4 : index
    %c0_313 = arith.constant 0 : index
    %c0_314 = arith.constant 0 : index
    %892 = vector.load %arg22[%c4_312, %c0_313, %c0_314] : memref<8x2x20xf32, #tpu.memory_space<vmem>>, vector<1x2x20xf32>
    %893 = vector.shape_cast %892 : vector<1x2x20xf32> to vector<2x20xf32>
    %894 = vector.shape_cast %891 : vector<2x20xf32> to vector<1x2x20xf32>
    tpu.vector_store %arg22[%c4_312, %c0_313, %c0_314], %894 {strides = array<i32>} : memref<8x2x20xf32, #tpu.memory_space<vmem>>, vector<1x2x20xf32>,
    %895 = tpu.iota {dimensions = array<i32: 1>} : vector<2x20xi32>
    %cst_315 = arith.constant dense<0xFF800000> : vector<2xf32>
    %896 = vector.multi_reduction <maximumf>, %891, %cst_315 [1] : vector<2x20xf32> to vector<2xf32>
    %897 = vector.shape_cast %896 : vector<2xf32> to vector<2x1xf32>
    %898 = vector.broadcast %897 : vector<2x1xf32> to vector<2x20xf32>
    %899 = arith.cmpf oge, %891, %898 : vector<2x20xf32>
    %c20_i32_316 = arith.constant 20 : i32
    %900 = vector.broadcast %c20_i32_316 : i32 to vector<2x20xi32>
    %901 = arith.select %899, %895, %900 : vector<2x20xi1>, vector<2x20xi32>
    %cst_317 = arith.constant dense<2147483647> : vector<2xi32>
    %902 = vector.multi_reduction <minsi>, %901, %cst_317 [1] : vector<2x20xi32> to vector<2xi32>
    %903 = vector.shape_cast %902 : vector<2xi32> to vector<2x1xi32>
    %904 = vector.broadcast %903 : vector<2x1xi32> to vector<2x20xi32>
    %905 = arith.cmpi eq, %895, %904 : vector<2x20xi32>
    %906 = arith.extui %905 : vector<2x20xi1> to vector<2x20xi32>
    %907 = arith.sitofp %906 : vector<2x20xi32> to vector<2x20xf32>
    %908 = tpu.iota {dimensions = array<i32: 1>} : vector<2x20xi32>
    %909 = tpu.iota {dimensions = array<i32: 0>} : vector<2x20xi32>
    %c0_i32_318 = arith.constant 0 : i32
    %910 = vector.broadcast %c0_i32_318 : i32 to vector<2x20xi32>
    %c0_i32_319 = arith.constant 0 : i32
    %911 = vector.broadcast %c0_i32_319 : i32 to vector<2x20xi32>
    %912 = arith.cmpi eq, %909, %911 : vector<2x20xi32>
    %c0_320 = arith.constant 0 : index
    %c4_321 = arith.constant 4 : index
    %913 = memref.load %arg1[%c0_320, %c4_321] : memref<2x8xi32, #tpu.memory_space<smem>>
    %914 = vector.broadcast %913 : i32 to vector<2x20xi32>
    %915 = arith.select %912, %914, %910 : vector<2x20xi1>, vector<2x20xi32>
    %c1_i32_322 = arith.constant 1 : i32
    %916 = vector.broadcast %c1_i32_322 : i32 to vector<2x20xi32>
    %917 = arith.cmpi eq, %909, %916 : vector<2x20xi32>
    %c1_323 = arith.constant 1 : index
    %c4_324 = arith.constant 4 : index
    %918 = memref.load %arg1[%c1_323, %c4_324] : memref<2x8xi32, #tpu.memory_space<smem>>
    %919 = vector.broadcast %918 : i32 to vector<2x20xi32>
    %920 = arith.select %917, %919, %915 : vector<2x20xi1>, vector<2x20xi32>
    %921 = arith.cmpi eq, %908, %920 : vector<2x20xi32>
    %922 = arith.extui %921 : vector<2x20xi1> to vector<2x20xi32>
    %923 = arith.sitofp %922 : vector<2x20xi32> to vector<2x20xf32>
    %c3_325 = arith.constant 3 : index
    %924 = memref.load %arg2[%c3_325] : memref<7xi32, #tpu.memory_space<smem>>
    %c0_i32_326 = arith.constant 0 : i32
    %925 = arith.cmpi sgt, %924, %c0_i32_326 : i32
    %926 = arith.extui %925 : i1 to i32
    %927 = arith.sitofp %926 : i32 to f32
    %928 = vector.broadcast %927 : f32 to vector<2x20xf32>
    %929 = arith.mulf %928, %923 : vector<2x20xf32>
    %cst_327 = arith.constant 1.000000e+00 : f32
    %930 = arith.subf %cst_327, %927 : f32
    %931 = vector.broadcast %930 : f32 to vector<2x20xf32>
    %932 = arith.mulf %931, %907 : vector<2x20xf32>
    %933 = arith.addf %929, %932 : vector<2x20xf32>
    %cst_328 = arith.constant dense<0.000000e+00> : vector<2x16xf32>
    %934 = tpu.matmul %933, %1, %cst_328 {dimension_numbers = #tpu.dot_dimension_numbers<[1], [0], [0], [1], [0, 0, 1, 1], [], []>} : vector<2x20xf32>, vector<20x16xf32>, vector<2x16xf32> -> vector<2x16xf32>
    %cst_329 = arith.constant dense<0.000000e+00> : vector<2x32xf32>
    %935 = tpu.matmul %884, %6, %cst_329 {dimension_numbers = #tpu.dot_dimension_numbers<[1], [0], [0], [1], [0, 0, 1, 1], [], []>} : vector<2x32xf32>, vector<32x32xf32>, vector<2x32xf32> -> vector<2x32xf32>
    %936 = vector.shape_cast %935 : vector<2x32xf32> to vector<2x1x32xf32>
    %937 = vector.broadcast %936 : vector<2x1x32xf32> to vector<2x8x32xf32>
    %938 = arith.addf %937, %485 : vector<2x8x32xf32>
    %939 = math.tanh %938 : vector<2x8x32xf32>
    %940 = vector.shape_cast %9 : vector<1x32xf32> to vector<1x1x32xf32>
    %941 = vector.broadcast %940 : vector<1x1x32xf32> to vector<2x8x32xf32>
    %942 = arith.mulf %939, %941 : vector<2x8x32xf32>
    %cst_330 = arith.constant dense<0.000000e+00> : vector<2x8xf32>
    %943 = vector.multi_reduction <add>, %942, %cst_330 [2] : vector<2x8x32xf32> to vector<2x8xf32>
    %cst_331 = arith.constant dense<0xFF800000> : vector<2xf32>
    %944 = vector.multi_reduction <maximumf>, %943, %cst_331 [1] : vector<2x8xf32> to vector<2xf32>
    %945 = vector.shape_cast %944 : vector<2xf32> to vector<2x1xf32>
    %946 = vector.broadcast %945 : vector<2x1xf32> to vector<2x8xf32>
    %947 = arith.subf %943, %946 : vector<2x8xf32>
    %948 = math.exp %947 : vector<2x8xf32>
    %cst_332 = arith.constant dense<0.000000e+00> : vector<2xf32>
    %949 = vector.multi_reduction <add>, %948, %cst_332 [1] : vector<2x8xf32> to vector<2xf32>
    %950 = vector.shape_cast %949 : vector<2xf32> to vector<2x1xf32>
    %951 = tpu.reciprocal %950 {approx = true} : vector<2x1xf32> -> vector<2x1xf32>
    %952 = vector.broadcast %951 : vector<2x1xf32> to vector<2x8xf32>
    %953 = arith.mulf %948, %952 : vector<2x8xf32>
    %954 = vector.shape_cast %953 : vector<2x8xf32> to vector<2x8x1xf32>
    %955 = vector.broadcast %954 : vector<2x8x1xf32> to vector<2x8x32xf32>
    %956 = arith.mulf %955, %484 : vector<2x8x32xf32>
    %cst_333 = arith.constant dense<0.000000e+00> : vector<2x32xf32>
    %957 = vector.multi_reduction <add>, %956, %cst_333 [1] : vector<2x8x32xf32> to vector<2x32xf32>
    %cst_334 = arith.constant dense<0.000000e+00> : vector<2x96xf32>
    %958 = tpu.matmul %934, %10, %cst_334 {dimension_numbers = #tpu.dot_dimension_numbers<[1], [0], [0], [1], [0, 0, 1, 1], [], []>} : vector<2x16xf32>, vector<16x96xf32>, vector<2x96xf32> -> vector<2x96xf32>
    %cst_335 = arith.constant dense<0.000000e+00> : vector<2x96xf32>
    %959 = tpu.matmul %957, %11, %cst_335 {dimension_numbers = #tpu.dot_dimension_numbers<[1], [0], [0], [1], [0, 0, 1, 1], [], []>} : vector<2x32xf32>, vector<32x96xf32>, vector<2x96xf32> -> vector<2x96xf32>
    %960 = arith.addf %958, %959 : vector<2x96xf32>
    %961 = vector.broadcast %13 : vector<1x96xf32> to vector<2x96xf32>
    %962 = arith.addf %960, %961 : vector<2x96xf32>
    %cst_336 = arith.constant dense<0.000000e+00> : vector<2x96xf32>
    %963 = tpu.matmul %884, %12, %cst_336 {dimension_numbers = #tpu.dot_dimension_numbers<[1], [0], [0], [1], [0, 0, 1, 1], [], []>} : vector<2x32xf32>, vector<32x96xf32>, vector<2x96xf32> -> vector<2x96xf32>
    %964 = vector.broadcast %14 : vector<1x96xf32> to vector<2x96xf32>
    %965 = arith.addf %963, %964 : vector<2x96xf32>
    %966 = vector.extract_strided_slice %962 {offsets = [0, 0], sizes = [2, 32], strides = [1, 1]} : vector<2x96xf32> to vector<2x32xf32>
    %967 = vector.extract_strided_slice %965 {offsets = [0, 0], sizes = [2, 32], strides = [1, 1]} : vector<2x96xf32> to vector<2x32xf32>
    %968 = arith.addf %966, %967 : vector<2x32xf32>
    %969 = arith.negf %968 : vector<2x32xf32>
    %970 = math.exp %969 : vector<2x32xf32>
    %cst_337 = arith.constant 1.000000e+00 : f32
    %971 = vector.broadcast %cst_337 : f32 to vector<2x32xf32>
    %972 = arith.addf %971, %970 : vector<2x32xf32>
    %973 = arith.divf %971, %972 : vector<2x32xf32>
    %974 = vector.extract_strided_slice %962 {offsets = [0, 32], sizes = [2, 32], strides = [1, 1]} : vector<2x96xf32> to vector<2x32xf32>
    %975 = vector.extract_strided_slice %965 {offsets = [0, 32], sizes = [2, 32], strides = [1, 1]} : vector<2x96xf32> to vector<2x32xf32>
    %976 = arith.addf %974, %975 : vector<2x32xf32>
    %977 = arith.negf %976 : vector<2x32xf32>
    %978 = math.exp %977 : vector<2x32xf32>
    %cst_338 = arith.constant 1.000000e+00 : f32
    %979 = vector.broadcast %cst_338 : f32 to vector<2x32xf32>
    %980 = arith.addf %979, %978 : vector<2x32xf32>
    %981 = arith.divf %979, %980 : vector<2x32xf32>
    %982 = vector.extract_strided_slice %962 {offsets = [0, 64], sizes = [2, 32], strides = [1, 1]} : vector<2x96xf32> to vector<2x32xf32>
    %983 = vector.extract_strided_slice %965 {offsets = [0, 64], sizes = [2, 32], strides = [1, 1]} : vector<2x96xf32> to vector<2x32xf32>
    %984 = arith.mulf %973, %983 : vector<2x32xf32>
    %985 = arith.addf %982, %984 : vector<2x32xf32>
    %986 = math.tanh %985 : vector<2x32xf32>
    %cst_339 = arith.constant 1.000000e+00 : f32
    %987 = vector.broadcast %cst_339 : f32 to vector<2x32xf32>
    %988 = arith.subf %987, %981 : vector<2x32xf32>
    %989 = arith.mulf %988, %986 : vector<2x32xf32>
    %990 = arith.mulf %981, %884 : vector<2x32xf32>
    %991 = arith.addf %989, %990 : vector<2x32xf32>
    %cst_340 = arith.constant dense<0.000000e+00> : vector<2x20xf32>
    %992 = tpu.matmul %991, %15, %cst_340 {dimension_numbers = #tpu.dot_dimension_numbers<[1], [0], [0], [1], [0, 0, 1, 1], [], []>} : vector<2x32xf32>, vector<32x20xf32>, vector<2x20xf32> -> vector<2x20xf32>
    %cst_341 = arith.constant dense<0.000000e+00> : vector<2x20xf32>
    %993 = tpu.matmul %957, %16, %cst_341 {dimension_numbers = #tpu.dot_dimension_numbers<[1], [0], [0], [1], [0, 0, 1, 1], [], []>} : vector<2x32xf32>, vector<32x20xf32>, vector<2x20xf32> -> vector<2x20xf32>
    %994 = arith.addf %992, %993 : vector<2x20xf32>
    %cst_342 = arith.constant dense<0.000000e+00> : vector<2x20xf32>
    %995 = tpu.matmul %934, %17, %cst_342 {dimension_numbers = #tpu.dot_dimension_numbers<[1], [0], [0], [1], [0, 0, 1, 1], [], []>} : vector<2x16xf32>, vector<16x20xf32>, vector<2x20xf32> -> vector<2x20xf32>
    %996 = arith.addf %994, %995 : vector<2x20xf32>
    %997 = vector.broadcast %18 : vector<1x20xf32> to vector<2x20xf32>
    %998 = arith.addf %996, %997 : vector<2x20xf32>
    %c5_343 = arith.constant 5 : index
    %c0_344 = arith.constant 0 : index
    %c0_345 = arith.constant 0 : index
    %999 = vector.load %arg22[%c5_343, %c0_344, %c0_345] : memref<8x2x20xf32, #tpu.memory_space<vmem>>, vector<1x2x20xf32>
    %1000 = vector.shape_cast %999 : vector<1x2x20xf32> to vector<2x20xf32>
    %1001 = vector.shape_cast %998 : vector<2x20xf32> to vector<1x2x20xf32>
    tpu.vector_store %arg22[%c5_343, %c0_344, %c0_345], %1001 {strides = array<i32>} : memref<8x2x20xf32, #tpu.memory_space<vmem>>, vector<1x2x20xf32>,
    %1002 = tpu.iota {dimensions = array<i32: 1>} : vector<2x20xi32>
    %cst_346 = arith.constant dense<0xFF800000> : vector<2xf32>
    %1003 = vector.multi_reduction <maximumf>, %998, %cst_346 [1] : vector<2x20xf32> to vector<2xf32>
    %1004 = vector.shape_cast %1003 : vector<2xf32> to vector<2x1xf32>
    %1005 = vector.broadcast %1004 : vector<2x1xf32> to vector<2x20xf32>
    %1006 = arith.cmpf oge, %998, %1005 : vector<2x20xf32>
    %c20_i32_347 = arith.constant 20 : i32
    %1007 = vector.broadcast %c20_i32_347 : i32 to vector<2x20xi32>
    %1008 = arith.select %1006, %1002, %1007 : vector<2x20xi1>, vector<2x20xi32>
    %cst_348 = arith.constant dense<2147483647> : vector<2xi32>
    %1009 = vector.multi_reduction <minsi>, %1008, %cst_348 [1] : vector<2x20xi32> to vector<2xi32>
    %1010 = vector.shape_cast %1009 : vector<2xi32> to vector<2x1xi32>
    %1011 = vector.broadcast %1010 : vector<2x1xi32> to vector<2x20xi32>
    %1012 = arith.cmpi eq, %1002, %1011 : vector<2x20xi32>
    %1013 = arith.extui %1012 : vector<2x20xi1> to vector<2x20xi32>
    %1014 = arith.sitofp %1013 : vector<2x20xi32> to vector<2x20xf32>
    %1015 = tpu.iota {dimensions = array<i32: 1>} : vector<2x20xi32>
    %1016 = tpu.iota {dimensions = array<i32: 0>} : vector<2x20xi32>
    %c0_i32_349 = arith.constant 0 : i32
    %1017 = vector.broadcast %c0_i32_349 : i32 to vector<2x20xi32>
    %c0_i32_350 = arith.constant 0 : i32
    %1018 = vector.broadcast %c0_i32_350 : i32 to vector<2x20xi32>
    %1019 = arith.cmpi eq, %1016, %1018 : vector<2x20xi32>
    %c0_351 = arith.constant 0 : index
    %c5_352 = arith.constant 5 : index
    %1020 = memref.load %arg1[%c0_351, %c5_352] : memref<2x8xi32, #tpu.memory_space<smem>>
    %1021 = vector.broadcast %1020 : i32 to vector<2x20xi32>
    %1022 = arith.select %1019, %1021, %1017 : vector<2x20xi1>, vector<2x20xi32>
    %c1_i32_353 = arith.constant 1 : i32
    %1023 = vector.broadcast %c1_i32_353 : i32 to vector<2x20xi32>
    %1024 = arith.cmpi eq, %1016, %1023 : vector<2x20xi32>
    %c1_354 = arith.constant 1 : index
    %c5_355 = arith.constant 5 : index
    %1025 = memref.load %arg1[%c1_354, %c5_355] : memref<2x8xi32, #tpu.memory_space<smem>>
    %1026 = vector.broadcast %1025 : i32 to vector<2x20xi32>
    %1027 = arith.select %1024, %1026, %1022 : vector<2x20xi1>, vector<2x20xi32>
    %1028 = arith.cmpi eq, %1015, %1027 : vector<2x20xi32>
    %1029 = arith.extui %1028 : vector<2x20xi1> to vector<2x20xi32>
    %1030 = arith.sitofp %1029 : vector<2x20xi32> to vector<2x20xf32>
    %c4_356 = arith.constant 4 : index
    %1031 = memref.load %arg2[%c4_356] : memref<7xi32, #tpu.memory_space<smem>>
    %c0_i32_357 = arith.constant 0 : i32
    %1032 = arith.cmpi sgt, %1031, %c0_i32_357 : i32
    %1033 = arith.extui %1032 : i1 to i32
    %1034 = arith.sitofp %1033 : i32 to f32
    %1035 = vector.broadcast %1034 : f32 to vector<2x20xf32>
    %1036 = arith.mulf %1035, %1030 : vector<2x20xf32>
    %cst_358 = arith.constant 1.000000e+00 : f32
    %1037 = arith.subf %cst_358, %1034 : f32
    %1038 = vector.broadcast %1037 : f32 to vector<2x20xf32>
    %1039 = arith.mulf %1038, %1014 : vector<2x20xf32>
    %1040 = arith.addf %1036, %1039 : vector<2x20xf32>
    %cst_359 = arith.constant dense<0.000000e+00> : vector<2x16xf32>
    %1041 = tpu.matmul %1040, %1, %cst_359 {dimension_numbers = #tpu.dot_dimension_numbers<[1], [0], [0], [1], [0, 0, 1, 1], [], []>} : vector<2x20xf32>, vector<20x16xf32>, vector<2x16xf32> -> vector<2x16xf32>
    %cst_360 = arith.constant dense<0.000000e+00> : vector<2x32xf32>
    %1042 = tpu.matmul %991, %6, %cst_360 {dimension_numbers = #tpu.dot_dimension_numbers<[1], [0], [0], [1], [0, 0, 1, 1], [], []>} : vector<2x32xf32>, vector<32x32xf32>, vector<2x32xf32> -> vector<2x32xf32>
    %1043 = vector.shape_cast %1042 : vector<2x32xf32> to vector<2x1x32xf32>
    %1044 = vector.broadcast %1043 : vector<2x1x32xf32> to vector<2x8x32xf32>
    %1045 = arith.addf %1044, %485 : vector<2x8x32xf32>
    %1046 = math.tanh %1045 : vector<2x8x32xf32>
    %1047 = vector.shape_cast %9 : vector<1x32xf32> to vector<1x1x32xf32>
    %1048 = vector.broadcast %1047 : vector<1x1x32xf32> to vector<2x8x32xf32>
    %1049 = arith.mulf %1046, %1048 : vector<2x8x32xf32>
    %cst_361 = arith.constant dense<0.000000e+00> : vector<2x8xf32>
    %1050 = vector.multi_reduction <add>, %1049, %cst_361 [2] : vector<2x8x32xf32> to vector<2x8xf32>
    %cst_362 = arith.constant dense<0xFF800000> : vector<2xf32>
    %1051 = vector.multi_reduction <maximumf>, %1050, %cst_362 [1] : vector<2x8xf32> to vector<2xf32>
    %1052 = vector.shape_cast %1051 : vector<2xf32> to vector<2x1xf32>
    %1053 = vector.broadcast %1052 : vector<2x1xf32> to vector<2x8xf32>
    %1054 = arith.subf %1050, %1053 : vector<2x8xf32>
    %1055 = math.exp %1054 : vector<2x8xf32>
    %cst_363 = arith.constant dense<0.000000e+00> : vector<2xf32>
    %1056 = vector.multi_reduction <add>, %1055, %cst_363 [1] : vector<2x8xf32> to vector<2xf32>
    %1057 = vector.shape_cast %1056 : vector<2xf32> to vector<2x1xf32>
    %1058 = tpu.reciprocal %1057 {approx = true} : vector<2x1xf32> -> vector<2x1xf32>
    %1059 = vector.broadcast %1058 : vector<2x1xf32> to vector<2x8xf32>
    %1060 = arith.mulf %1055, %1059 : vector<2x8xf32>
    %1061 = vector.shape_cast %1060 : vector<2x8xf32> to vector<2x8x1xf32>
    %1062 = vector.broadcast %1061 : vector<2x8x1xf32> to vector<2x8x32xf32>
    %1063 = arith.mulf %1062, %484 : vector<2x8x32xf32>
    %cst_364 = arith.constant dense<0.000000e+00> : vector<2x32xf32>
    %1064 = vector.multi_reduction <add>, %1063, %cst_364 [1] : vector<2x8x32xf32> to vector<2x32xf32>
    %cst_365 = arith.constant dense<0.000000e+00> : vector<2x96xf32>
    %1065 = tpu.matmul %1041, %10, %cst_365 {dimension_numbers = #tpu.dot_dimension_numbers<[1], [0], [0], [1], [0, 0, 1, 1], [], []>} : vector<2x16xf32>, vector<16x96xf32>, vector<2x96xf32> -> vector<2x96xf32>
    %cst_366 = arith.constant dense<0.000000e+00> : vector<2x96xf32>
    %1066 = tpu.matmul %1064, %11, %cst_366 {dimension_numbers = #tpu.dot_dimension_numbers<[1], [0], [0], [1], [0, 0, 1, 1], [], []>} : vector<2x32xf32>, vector<32x96xf32>, vector<2x96xf32> -> vector<2x96xf32>
    %1067 = arith.addf %1065, %1066 : vector<2x96xf32>
    %1068 = vector.broadcast %13 : vector<1x96xf32> to vector<2x96xf32>
    %1069 = arith.addf %1067, %1068 : vector<2x96xf32>
    %cst_367 = arith.constant dense<0.000000e+00> : vector<2x96xf32>
    %1070 = tpu.matmul %991, %12, %cst_367 {dimension_numbers = #tpu.dot_dimension_numbers<[1], [0], [0], [1], [0, 0, 1, 1], [], []>} : vector<2x32xf32>, vector<32x96xf32>, vector<2x96xf32> -> vector<2x96xf32>
    %1071 = vector.broadcast %14 : vector<1x96xf32> to vector<2x96xf32>
    %1072 = arith.addf %1070, %1071 : vector<2x96xf32>
    %1073 = vector.extract_strided_slice %1069 {offsets = [0, 0], sizes = [2, 32], strides = [1, 1]} : vector<2x96xf32> to vector<2x32xf32>
    %1074 = vector.extract_strided_slice %1072 {offsets = [0, 0], sizes = [2, 32], strides = [1, 1]} : vector<2x96xf32> to vector<2x32xf32>
    %1075 = arith.addf %1073, %1074 : vector<2x32xf32>
    %1076 = arith.negf %1075 : vector<2x32xf32>
    %1077 = math.exp %1076 : vector<2x32xf32>
    %cst_368 = arith.constant 1.000000e+00 : f32
    %1078 = vector.broadcast %cst_368 : f32 to vector<2x32xf32>
    %1079 = arith.addf %1078, %1077 : vector<2x32xf32>
    %1080 = arith.divf %1078, %1079 : vector<2x32xf32>
    %1081 = vector.extract_strided_slice %1069 {offsets = [0, 32], sizes = [2, 32], strides = [1, 1]} : vector<2x96xf32> to vector<2x32xf32>
    %1082 = vector.extract_strided_slice %1072 {offsets = [0, 32], sizes = [2, 32], strides = [1, 1]} : vector<2x96xf32> to vector<2x32xf32>
    %1083 = arith.addf %1081, %1082 : vector<2x32xf32>
    %1084 = arith.negf %1083 : vector<2x32xf32>
    %1085 = math.exp %1084 : vector<2x32xf32>
    %cst_369 = arith.constant 1.000000e+00 : f32
    %1086 = vector.broadcast %cst_369 : f32 to vector<2x32xf32>
    %1087 = arith.addf %1086, %1085 : vector<2x32xf32>
    %1088 = arith.divf %1086, %1087 : vector<2x32xf32>
    %1089 = vector.extract_strided_slice %1069 {offsets = [0, 64], sizes = [2, 32], strides = [1, 1]} : vector<2x96xf32> to vector<2x32xf32>
    %1090 = vector.extract_strided_slice %1072 {offsets = [0, 64], sizes = [2, 32], strides = [1, 1]} : vector<2x96xf32> to vector<2x32xf32>
    %1091 = arith.mulf %1080, %1090 : vector<2x32xf32>
    %1092 = arith.addf %1089, %1091 : vector<2x32xf32>
    %1093 = math.tanh %1092 : vector<2x32xf32>
    %cst_370 = arith.constant 1.000000e+00 : f32
    %1094 = vector.broadcast %cst_370 : f32 to vector<2x32xf32>
    %1095 = arith.subf %1094, %1088 : vector<2x32xf32>
    %1096 = arith.mulf %1095, %1093 : vector<2x32xf32>
    %1097 = arith.mulf %1088, %991 : vector<2x32xf32>
    %1098 = arith.addf %1096, %1097 : vector<2x32xf32>
    %cst_371 = arith.constant dense<0.000000e+00> : vector<2x20xf32>
    %1099 = tpu.matmul %1098, %15, %cst_371 {dimension_numbers = #tpu.dot_dimension_numbers<[1], [0], [0], [1], [0, 0, 1, 1], [], []>} : vector<2x32xf32>, vector<32x20xf32>, vector<2x20xf32> -> vector<2x20xf32>
    %cst_372 = arith.constant dense<0.000000e+00> : vector<2x20xf32>
    %1100 = tpu.matmul %1064, %16, %cst_372 {dimension_numbers = #tpu.dot_dimension_numbers<[1], [0], [0], [1], [0, 0, 1, 1], [], []>} : vector<2x32xf32>, vector<32x20xf32>, vector<2x20xf32> -> vector<2x20xf32>
    %1101 = arith.addf %1099, %1100 : vector<2x20xf32>
    %cst_373 = arith.constant dense<0.000000e+00> : vector<2x20xf32>
    %1102 = tpu.matmul %1041, %17, %cst_373 {dimension_numbers = #tpu.dot_dimension_numbers<[1], [0], [0], [1], [0, 0, 1, 1], [], []>} : vector<2x16xf32>, vector<16x20xf32>, vector<2x20xf32> -> vector<2x20xf32>
    %1103 = arith.addf %1101, %1102 : vector<2x20xf32>
    %1104 = vector.broadcast %18 : vector<1x20xf32> to vector<2x20xf32>
    %1105 = arith.addf %1103, %1104 : vector<2x20xf32>
    %c6_374 = arith.constant 6 : index
    %c0_375 = arith.constant 0 : index
    %c0_376 = arith.constant 0 : index
    %1106 = vector.load %arg22[%c6_374, %c0_375, %c0_376] : memref<8x2x20xf32, #tpu.memory_space<vmem>>, vector<1x2x20xf32>
    %1107 = vector.shape_cast %1106 : vector<1x2x20xf32> to vector<2x20xf32>
    %1108 = vector.shape_cast %1105 : vector<2x20xf32> to vector<1x2x20xf32>
    tpu.vector_store %arg22[%c6_374, %c0_375, %c0_376], %1108 {strides = array<i32>} : memref<8x2x20xf32, #tpu.memory_space<vmem>>, vector<1x2x20xf32>,
    %1109 = tpu.iota {dimensions = array<i32: 1>} : vector<2x20xi32>
    %cst_377 = arith.constant dense<0xFF800000> : vector<2xf32>
    %1110 = vector.multi_reduction <maximumf>, %1105, %cst_377 [1] : vector<2x20xf32> to vector<2xf32>
    %1111 = vector.shape_cast %1110 : vector<2xf32> to vector<2x1xf32>
    %1112 = vector.broadcast %1111 : vector<2x1xf32> to vector<2x20xf32>
    %1113 = arith.cmpf oge, %1105, %1112 : vector<2x20xf32>
    %c20_i32_378 = arith.constant 20 : i32
    %1114 = vector.broadcast %c20_i32_378 : i32 to vector<2x20xi32>
    %1115 = arith.select %1113, %1109, %1114 : vector<2x20xi1>, vector<2x20xi32>
    %cst_379 = arith.constant dense<2147483647> : vector<2xi32>
    %1116 = vector.multi_reduction <minsi>, %1115, %cst_379 [1] : vector<2x20xi32> to vector<2xi32>
    %1117 = vector.shape_cast %1116 : vector<2xi32> to vector<2x1xi32>
    %1118 = vector.broadcast %1117 : vector<2x1xi32> to vector<2x20xi32>
    %1119 = arith.cmpi eq, %1109, %1118 : vector<2x20xi32>
    %1120 = arith.extui %1119 : vector<2x20xi1> to vector<2x20xi32>
    %1121 = arith.sitofp %1120 : vector<2x20xi32> to vector<2x20xf32>
    %1122 = tpu.iota {dimensions = array<i32: 1>} : vector<2x20xi32>
    %1123 = tpu.iota {dimensions = array<i32: 0>} : vector<2x20xi32>
    %c0_i32_380 = arith.constant 0 : i32
    %1124 = vector.broadcast %c0_i32_380 : i32 to vector<2x20xi32>
    %c0_i32_381 = arith.constant 0 : i32
    %1125 = vector.broadcast %c0_i32_381 : i32 to vector<2x20xi32>
    %1126 = arith.cmpi eq, %1123, %1125 : vector<2x20xi32>
    %c0_382 = arith.constant 0 : index
    %c6_383 = arith.constant 6 : index
    %1127 = memref.load %arg1[%c0_382, %c6_383] : memref<2x8xi32, #tpu.memory_space<smem>>
    %1128 = vector.broadcast %1127 : i32 to vector<2x20xi32>
    %1129 = arith.select %1126, %1128, %1124 : vector<2x20xi1>, vector<2x20xi32>
    %c1_i32_384 = arith.constant 1 : i32
    %1130 = vector.broadcast %c1_i32_384 : i32 to vector<2x20xi32>
    %1131 = arith.cmpi eq, %1123, %1130 : vector<2x20xi32>
    %c1_385 = arith.constant 1 : index
    %c6_386 = arith.constant 6 : index
    %1132 = memref.load %arg1[%c1_385, %c6_386] : memref<2x8xi32, #tpu.memory_space<smem>>
    %1133 = vector.broadcast %1132 : i32 to vector<2x20xi32>
    %1134 = arith.select %1131, %1133, %1129 : vector<2x20xi1>, vector<2x20xi32>
    %1135 = arith.cmpi eq, %1122, %1134 : vector<2x20xi32>
    %1136 = arith.extui %1135 : vector<2x20xi1> to vector<2x20xi32>
    %1137 = arith.sitofp %1136 : vector<2x20xi32> to vector<2x20xf32>
    %c5_387 = arith.constant 5 : index
    %1138 = memref.load %arg2[%c5_387] : memref<7xi32, #tpu.memory_space<smem>>
    %c0_i32_388 = arith.constant 0 : i32
    %1139 = arith.cmpi sgt, %1138, %c0_i32_388 : i32
    %1140 = arith.extui %1139 : i1 to i32
    %1141 = arith.sitofp %1140 : i32 to f32
    %1142 = vector.broadcast %1141 : f32 to vector<2x20xf32>
    %1143 = arith.mulf %1142, %1137 : vector<2x20xf32>
    %cst_389 = arith.constant 1.000000e+00 : f32
    %1144 = arith.subf %cst_389, %1141 : f32
    %1145 = vector.broadcast %1144 : f32 to vector<2x20xf32>
    %1146 = arith.mulf %1145, %1121 : vector<2x20xf32>
    %1147 = arith.addf %1143, %1146 : vector<2x20xf32>
    %cst_390 = arith.constant dense<0.000000e+00> : vector<2x16xf32>
    %1148 = tpu.matmul %1147, %1, %cst_390 {dimension_numbers = #tpu.dot_dimension_numbers<[1], [0], [0], [1], [0, 0, 1, 1], [], []>} : vector<2x20xf32>, vector<20x16xf32>, vector<2x16xf32> -> vector<2x16xf32>
    %cst_391 = arith.constant dense<0.000000e+00> : vector<2x32xf32>
    %1149 = tpu.matmul %1098, %6, %cst_391 {dimension_numbers = #tpu.dot_dimension_numbers<[1], [0], [0], [1], [0, 0, 1, 1], [], []>} : vector<2x32xf32>, vector<32x32xf32>, vector<2x32xf32> -> vector<2x32xf32>
    %1150 = vector.shape_cast %1149 : vector<2x32xf32> to vector<2x1x32xf32>
    %1151 = vector.broadcast %1150 : vector<2x1x32xf32> to vector<2x8x32xf32>
    %1152 = arith.addf %1151, %485 : vector<2x8x32xf32>
    %1153 = math.tanh %1152 : vector<2x8x32xf32>
    %1154 = vector.shape_cast %9 : vector<1x32xf32> to vector<1x1x32xf32>
    %1155 = vector.broadcast %1154 : vector<1x1x32xf32> to vector<2x8x32xf32>
    %1156 = arith.mulf %1153, %1155 : vector<2x8x32xf32>
    %cst_392 = arith.constant dense<0.000000e+00> : vector<2x8xf32>
    %1157 = vector.multi_reduction <add>, %1156, %cst_392 [2] : vector<2x8x32xf32> to vector<2x8xf32>
    %cst_393 = arith.constant dense<0xFF800000> : vector<2xf32>
    %1158 = vector.multi_reduction <maximumf>, %1157, %cst_393 [1] : vector<2x8xf32> to vector<2xf32>
    %1159 = vector.shape_cast %1158 : vector<2xf32> to vector<2x1xf32>
    %1160 = vector.broadcast %1159 : vector<2x1xf32> to vector<2x8xf32>
    %1161 = arith.subf %1157, %1160 : vector<2x8xf32>
    %1162 = math.exp %1161 : vector<2x8xf32>
    %cst_394 = arith.constant dense<0.000000e+00> : vector<2xf32>
    %1163 = vector.multi_reduction <add>, %1162, %cst_394 [1] : vector<2x8xf32> to vector<2xf32>
    %1164 = vector.shape_cast %1163 : vector<2xf32> to vector<2x1xf32>
    %1165 = tpu.reciprocal %1164 {approx = true} : vector<2x1xf32> -> vector<2x1xf32>
    %1166 = vector.broadcast %1165 : vector<2x1xf32> to vector<2x8xf32>
    %1167 = arith.mulf %1162, %1166 : vector<2x8xf32>
    %1168 = vector.shape_cast %1167 : vector<2x8xf32> to vector<2x8x1xf32>
    %1169 = vector.broadcast %1168 : vector<2x8x1xf32> to vector<2x8x32xf32>
    %1170 = arith.mulf %1169, %484 : vector<2x8x32xf32>
    %cst_395 = arith.constant dense<0.000000e+00> : vector<2x32xf32>
    %1171 = vector.multi_reduction <add>, %1170, %cst_395 [1] : vector<2x8x32xf32> to vector<2x32xf32>
    %cst_396 = arith.constant dense<0.000000e+00> : vector<2x96xf32>
    %1172 = tpu.matmul %1148, %10, %cst_396 {dimension_numbers = #tpu.dot_dimension_numbers<[1], [0], [0], [1], [0, 0, 1, 1], [], []>} : vector<2x16xf32>, vector<16x96xf32>, vector<2x96xf32> -> vector<2x96xf32>
    %cst_397 = arith.constant dense<0.000000e+00> : vector<2x96xf32>
    %1173 = tpu.matmul %1171, %11, %cst_397 {dimension_numbers = #tpu.dot_dimension_numbers<[1], [0], [0], [1], [0, 0, 1, 1], [], []>} : vector<2x32xf32>, vector<32x96xf32>, vector<2x96xf32> -> vector<2x96xf32>
    %1174 = arith.addf %1172, %1173 : vector<2x96xf32>
    %1175 = vector.broadcast %13 : vector<1x96xf32> to vector<2x96xf32>
    %1176 = arith.addf %1174, %1175 : vector<2x96xf32>
    %cst_398 = arith.constant dense<0.000000e+00> : vector<2x96xf32>
    %1177 = tpu.matmul %1098, %12, %cst_398 {dimension_numbers = #tpu.dot_dimension_numbers<[1], [0], [0], [1], [0, 0, 1, 1], [], []>} : vector<2x32xf32>, vector<32x96xf32>, vector<2x96xf32> -> vector<2x96xf32>
    %1178 = vector.broadcast %14 : vector<1x96xf32> to vector<2x96xf32>
    %1179 = arith.addf %1177, %1178 : vector<2x96xf32>
    %1180 = vector.extract_strided_slice %1176 {offsets = [0, 0], sizes = [2, 32], strides = [1, 1]} : vector<2x96xf32> to vector<2x32xf32>
    %1181 = vector.extract_strided_slice %1179 {offsets = [0, 0], sizes = [2, 32], strides = [1, 1]} : vector<2x96xf32> to vector<2x32xf32>
    %1182 = arith.addf %1180, %1181 : vector<2x32xf32>
    %1183 = arith.negf %1182 : vector<2x32xf32>
    %1184 = math.exp %1183 : vector<2x32xf32>
    %cst_399 = arith.constant 1.000000e+00 : f32
    %1185 = vector.broadcast %cst_399 : f32 to vector<2x32xf32>
    %1186 = arith.addf %1185, %1184 : vector<2x32xf32>
    %1187 = arith.divf %1185, %1186 : vector<2x32xf32>
    %1188 = vector.extract_strided_slice %1176 {offsets = [0, 32], sizes = [2, 32], strides = [1, 1]} : vector<2x96xf32> to vector<2x32xf32>
    %1189 = vector.extract_strided_slice %1179 {offsets = [0, 32], sizes = [2, 32], strides = [1, 1]} : vector<2x96xf32> to vector<2x32xf32>
    %1190 = arith.addf %1188, %1189 : vector<2x32xf32>
    %1191 = arith.negf %1190 : vector<2x32xf32>
    %1192 = math.exp %1191 : vector<2x32xf32>
    %cst_400 = arith.constant 1.000000e+00 : f32
    %1193 = vector.broadcast %cst_400 : f32 to vector<2x32xf32>
    %1194 = arith.addf %1193, %1192 : vector<2x32xf32>
    %1195 = arith.divf %1193, %1194 : vector<2x32xf32>
    %1196 = vector.extract_strided_slice %1176 {offsets = [0, 64], sizes = [2, 32], strides = [1, 1]} : vector<2x96xf32> to vector<2x32xf32>
    %1197 = vector.extract_strided_slice %1179 {offsets = [0, 64], sizes = [2, 32], strides = [1, 1]} : vector<2x96xf32> to vector<2x32xf32>
    %1198 = arith.mulf %1187, %1197 : vector<2x32xf32>
    %1199 = arith.addf %1196, %1198 : vector<2x32xf32>
    %1200 = math.tanh %1199 : vector<2x32xf32>
    %cst_401 = arith.constant 1.000000e+00 : f32
    %1201 = vector.broadcast %cst_401 : f32 to vector<2x32xf32>
    %1202 = arith.subf %1201, %1195 : vector<2x32xf32>
    %1203 = arith.mulf %1202, %1200 : vector<2x32xf32>
    %1204 = arith.mulf %1195, %1098 : vector<2x32xf32>
    %1205 = arith.addf %1203, %1204 : vector<2x32xf32>
    %cst_402 = arith.constant dense<0.000000e+00> : vector<2x20xf32>
    %1206 = tpu.matmul %1205, %15, %cst_402 {dimension_numbers = #tpu.dot_dimension_numbers<[1], [0], [0], [1], [0, 0, 1, 1], [], []>} : vector<2x32xf32>, vector<32x20xf32>, vector<2x20xf32> -> vector<2x20xf32>
    %cst_403 = arith.constant dense<0.000000e+00> : vector<2x20xf32>
    %1207 = tpu.matmul %1171, %16, %cst_403 {dimension_numbers = #tpu.dot_dimension_numbers<[1], [0], [0], [1], [0, 0, 1, 1], [], []>} : vector<2x32xf32>, vector<32x20xf32>, vector<2x20xf32> -> vector<2x20xf32>
    %1208 = arith.addf %1206, %1207 : vector<2x20xf32>
    %cst_404 = arith.constant dense<0.000000e+00> : vector<2x20xf32>
    %1209 = tpu.matmul %1148, %17, %cst_404 {dimension_numbers = #tpu.dot_dimension_numbers<[1], [0], [0], [1], [0, 0, 1, 1], [], []>} : vector<2x16xf32>, vector<16x20xf32>, vector<2x20xf32> -> vector<2x20xf32>
    %1210 = arith.addf %1208, %1209 : vector<2x20xf32>
    %1211 = vector.broadcast %18 : vector<1x20xf32> to vector<2x20xf32>
    %1212 = arith.addf %1210, %1211 : vector<2x20xf32>
    %c7_405 = arith.constant 7 : index
    %c0_406 = arith.constant 0 : index
    %c0_407 = arith.constant 0 : index
    %1213 = vector.load %arg22[%c7_405, %c0_406, %c0_407] : memref<8x2x20xf32, #tpu.memory_space<vmem>>, vector<1x2x20xf32>
    %1214 = vector.shape_cast %1213 : vector<1x2x20xf32> to vector<2x20xf32>
    %1215 = vector.shape_cast %1212 : vector<2x20xf32> to vector<1x2x20xf32>
    tpu.vector_store %arg22[%c7_405, %c0_406, %c0_407], %1215 {strides = array<i32>} : memref<8x2x20xf32, #tpu.memory_space<vmem>>, vector<1x2x20xf32>,
    return
  }
}

</mosaic_0001>

<llo_original>
// kernel: seq2seq_forward_impl.1
$region0: #{seq2seq_forward_impl.1}
  #allocation0 [shape = 'u32[]', space=smem, size = 0x4, offset = 0x4, fixed_abs, tag = 'smem constant byte address 0x4 - core index']
  #allocation1 [shape = 'u32[144,128]{1,0:T(1,128)}', space=vmem, size = 0x12000, scoped, tag = 'internal scratch']
  #allocation2 [shape = 'f32[2,8,32]{2,1,0:T(8,128)}', space=vmem, size = 0x2000, scoped, tag = 'scratch operand']
  #allocation3 [shape = 'f32[2,8,32]{2,1,0:T(8,128)}', space=vmem, size = 0x2000, scoped, tag = 'scratch operand']
  %s0 = inlined_call_operand.hbm [shape: s32[2,8], index: 0, kind: input, shape index: {}]
  %s1 = inlined_call_operand.hbm [shape: s32[2,8], index: 1, kind: input, shape index: {}]
  %s2 = inlined_call_operand.hbm [shape: s32[7], index: 2, kind: input, shape index: {}]
  %s3 = inlined_call_operand.vmem [shape: f32[20,16], index: 3, kind: input, shape index: {}]
  %s4 = inlined_call_operand.vmem [shape: f32[20,16], index: 4, kind: input, shape index: {}]
  %s5 = inlined_call_operand.vmem [shape: f32[16,96], index: 5, kind: input, shape index: {}]
  %s6 = inlined_call_operand.vmem [shape: f32[32,96], index: 6, kind: input, shape index: {}]
  %s7 = inlined_call_operand.hbm [shape: f32[1,96], index: 7, kind: input, shape index: {}]
  %s8 = inlined_call_operand.hbm [shape: f32[1,96], index: 8, kind: input, shape index: {}]
  %s9 = inlined_call_operand.vmem [shape: f32[32,32], index: 9, kind: input, shape index: {}]
  %s10 = inlined_call_operand.vmem [shape: f32[32,32], index: 10, kind: input, shape index: {}]
  %s11 = inlined_call_operand.hbm [shape: f32[1,32], index: 11, kind: input, shape index: {}]
  %s12 = inlined_call_operand.hbm [shape: f32[1,32], index: 12, kind: input, shape index: {}]
  %s13 = inlined_call_operand.hbm [shape: f32[16,96], index: 13, kind: input, shape index: {}]
  %s14 = inlined_call_operand.vmem [shape: f32[32,96], index: 14, kind: input, shape index: {}]
  %s15 = inlined_call_operand.vmem [shape: f32[32,96], index: 15, kind: input, shape index: {}]
  %s16 = inlined_call_operand.hbm [shape: f32[1,96], index: 16, kind: input, shape index: {}]
  %s17 = inlined_call_operand.hbm [shape: f32[1,96], index: 17, kind: input, shape index: {}]
  %s18 = inlined_call_operand.vmem [shape: f32[32,20], index: 18, kind: input, shape index: {}]
  %s19 = inlined_call_operand.vmem [shape: f32[32,20], index: 19, kind: input, shape index: {}]
  %s20 = inlined_call_operand.hbm [shape: f32[16,20], index: 20, kind: input, shape index: {}]
  %s21 = inlined_call_operand.hbm [shape: f32[1,20], index: 21, kind: input, shape index: {}]
  %s22 = inlined_call_operand.hbm [shape: f32[8,2,20], index: 22, kind: output, shape index: {}]
  %s23 = sld [smem:[#allocation0]]
  $region146: #{seq2seq_forward_impl.1} parent=0
    _
  %s25 = ssub.s32 1, %s23
  %s26 = scalar_select 0, %s25, %s23
  $region1: #{seq2seq_forward_impl.1} parent=0
    #allocation4 [shape = 'u8[1024]{0}', space=smem, size = 0x400, scoped, tag = 'input window, operand 0, single buffered']
    #allocation5 [shape = 's32[1]{0}', space=sflag, size = 0x4, scoped, tag = 'scoped memory for seq2seq_forward_impl.1']
    #allocation6 [shape = 's32[1]{0}', space=sflag, size = 0x4, scoped, tag = 'scoped memory for seq2seq_forward_impl.1']
    #allocation7 [shape = 's32[1]{0}', space=sflag, size = 0x4, scoped, tag = 'scoped memory for seq2seq_forward_impl.1']
    #allocation8 [shape = 'u8[1024]{0}', space=smem, size = 0x400, scoped, tag = 'input window, operand 1, single buffered']
    #allocation9 [shape = 's32[1]{0}', space=sflag, size = 0x4, scoped, tag = 'scoped memory for seq2seq_forward_impl.1']
    #allocation10 [shape = 'u8[512]{0}', space=smem, size = 0x200, scoped, tag = 'input window, operand 2, single buffered']
    #allocation11 [shape = 'u8[512]{0}', space=vmem, size = 0x400, scoped, tag = 'input window, operand 7, single buffered']
    #allocation12 [shape = 'u8[512]{0}', space=vmem, size = 0x400, scoped, tag = 'input window, operand 8, single buffered']
    #allocation13 [shape = 's32[1]{0}', space=sflag, size = 0x4, scoped, tag = 'scoped memory for seq2seq_forward_impl.1']
    #allocation14 [shape = 'u8[512]{0}', space=vmem, size = 0x400, scoped, tag = 'input window, operand 11, single buffered']
    #allocation15 [shape = 'u8[512]{0}', space=vmem, size = 0x400, scoped, tag = 'input window, operand 12, single buffered']
    #allocation16 [shape = 's32[1]{0}', space=sflag, size = 0x4, scoped, tag = 'scoped memory for seq2seq_forward_impl.1']
    #allocation17 [shape = 'u8[8192]{0}', space=vmem, size = 0x2000, scoped, tag = 'input window, operand 13, single buffered']
    #allocation18 [shape = 'u8[512]{0}', space=vmem, size = 0x400, scoped, tag = 'input window, operand 16, single buffered']
    #allocation19 [shape = 's32[1]{0}', space=sflag, size = 0x4, scoped, tag = 'scoped memory for seq2seq_forward_impl.1']
    #allocation20 [shape = 'u8[512]{0}', space=vmem, size = 0x400, scoped, tag = 'input window, operand 17, single buffered']
    #allocation21 [shape = 'u8[8192]{0}', space=vmem, size = 0x2000, scoped, tag = 'input window, operand 20, single buffered']
    #allocation22 [shape = 's32[1]{0}', space=sflag, size = 0x4, scoped, tag = 'scoped memory for seq2seq_forward_impl.1']
    #allocation23 [shape = 'u8[512]{0}', space=vmem, size = 0x400, scoped, tag = 'input window, operand 21, single buffered']
    #allocation24 [shape = 'u8[8192]{0}', space=vmem, size = 0x2000, scoped, tag = 'output window, operand 0, single buffered']
    %27 = vsyncpa [#allocation7], 0
    %28 = vsyncpa [#allocation9], 0
    %29 = vsyncpa [#allocation5], 0
    %30 = vsyncpa [#allocation13], 0
    %31 = vsyncpa [#allocation16], 0
    %32 = vsyncpa [#allocation19], 0
    %33 = vsyncpa [#allocation22], 0
    %34 = vsyncpa [#allocation6], 0
    // Predicated region
    $region2: #{seq2seq_forward_impl.1} parent=1 // pred_check
      _
    $region3: #{seq2seq_forward_impl.1} parent=1 // pred_check_branch
      %36 = sbr.rel (0) target = $region5
    $region4: #{seq2seq_forward_impl.1} parent=1 // pred_region
      %s38 = ssub.s32 32, 32
      %39 = vsyncadd [#allocation7], %s38
      %42 = dma.hbm_to_smem %s0, 32, [#allocation4], [#allocation7]
    $region5: #{seq2seq_forward_impl.1} parent=1 // pred_fallthru
      _
    // Predicated region
    $region6: #{seq2seq_forward_impl.1} parent=1 // pred_check
      _
    $region7: #{seq2seq_forward_impl.1} parent=1 // pred_check_branch
      %44 = sbr.rel (0) target = $region9
    $region8: #{seq2seq_forward_impl.1} parent=1 // pred_region
      %s46 = ssub.s32 32, 32
      %47 = vsyncadd [#allocation9], %s46
      %50 = dma.hbm_to_smem %s1, 32, [#allocation8], [#allocation9]
    $region9: #{seq2seq_forward_impl.1} parent=1 // pred_fallthru
      _
    // Predicated region
    $region10: #{seq2seq_forward_impl.1} parent=1 // pred_check
      _
    $region11: #{seq2seq_forward_impl.1} parent=1 // pred_check_branch
      %52 = sbr.rel (0) target = $region13
    $region12: #{seq2seq_forward_impl.1} parent=1 // pred_region
      %s54 = ssub.s32 16, 16
      %55 = vsyncadd [#allocation9], %s54
      %58 = dma.hbm_to_smem %s2, 16, [#allocation10], [#allocation9]
    $region13: #{seq2seq_forward_impl.1} parent=1 // pred_fallthru
      _
    // Predicated region
    $region14: #{seq2seq_forward_impl.1} parent=1 // pred_check
      _
    $region15: #{seq2seq_forward_impl.1} parent=1 // pred_check_branch
      %60 = sbr.rel (0) target = $region17
    $region16: #{seq2seq_forward_impl.1} parent=1 // pred_region
      _
    $region17: #{seq2seq_forward_impl.1} parent=1 // pred_fallthru
      _
    // Predicated region
    $region18: #{seq2seq_forward_impl.1} parent=1 // pred_check
      _
    $region19: #{seq2seq_forward_impl.1} parent=1 // pred_check_branch
      %62 = sbr.rel (0) target = $region21
    $region20: #{seq2seq_forward_impl.1} parent=1 // pred_region
      _
    $region21: #{seq2seq_forward_impl.1} parent=1 // pred_fallthru
      _
    // Predicated region
    $region22: #{seq2seq_forward_impl.1} parent=1 // pred_check
      _
    $region23: #{seq2seq_forward_impl.1} parent=1 // pred_check_branch
      %64 = sbr.rel (0) target = $region25
    $region24: #{seq2seq_forward_impl.1} parent=1 // pred_region
      _
    $region25: #{seq2seq_forward_impl.1} parent=1 // pred_fallthru
      _
    // Predicated region
    $region26: #{seq2seq_forward_impl.1} parent=1 // pred_check
      _
    $region27: #{seq2seq_forward_impl.1} parent=1 // pred_check_branch
      %66 = sbr.rel (0) target = $region29
    $region28: #{seq2seq_forward_impl.1} parent=1 // pred_region
      _
    $region29: #{seq2seq_forward_impl.1} parent=1 // pred_fallthru
      _
    // Predicated region
    $region30: #{seq2seq_forward_impl.1} parent=1 // pred_check
      _
    $region31: #{seq2seq_forward_impl.1} parent=1 // pred_check_branch
      %68 = sbr.rel (0) target = $region33
    $region32: #{seq2seq_forward_impl.1} parent=1 // pred_region
      %s70 = ssub.s32 16, 16
      %71 = vsyncadd [#allocation5], %s70
      %s73 = sshll.u32 [#allocation11], 4
      %s74 = int_to_ptr.vmem [resolvable:$true] %s73
      %76 = dma.hbm_to_vmem [thread:$0]  %s7, 16, %s74, [#allocation5]
    $region33: #{seq2seq_forward_impl.1} parent=1 // pred_fallthru
      _
    // Predicated region
    $region34: #{seq2seq_forward_impl.1} parent=1 // pred_check
      _
    $region35: #{seq2seq_forward_impl.1} parent=1 // pred_check_branch
      %78 = sbr.rel (0) target = $region37
    $region36: #{seq2seq_forward_impl.1} parent=1 // pred_region
      %s80 = ssub.s32 16, 16
      %81 = vsyncadd [#allocation13], %s80
      %s83 = sshll.u32 [#allocation12], 4
      %s84 = int_to_ptr.vmem [resolvable:$true] %s83
      %86 = dma.hbm_to_vmem [thread:$0]  %s8, 16, %s84, [#allocation13]
    $region37: #{seq2seq_forward_impl.1} parent=1 // pred_fallthru
      _
    // Predicated region
    $region38: #{seq2seq_forward_impl.1} parent=1 // pred_check
      _
    $region39: #{seq2seq_forward_impl.1} parent=1 // pred_check_branch
      %88 = sbr.rel (0) target = $region41
    $region40: #{seq2seq_forward_impl.1} parent=1 // pred_region
      _
    $region41: #{seq2seq_forward_impl.1} parent=1 // pred_fallthru
      _
    // Predicated region
    $region42: #{seq2seq_forward_impl.1} parent=1 // pred_check
      _
    $region43: #{seq2seq_forward_impl.1} parent=1 // pred_check_branch
      %90 = sbr.rel (0) target = $region45
    $region44: #{seq2seq_forward_impl.1} parent=1 // pred_region
      _
    $region45: #{seq2seq_forward_impl.1} parent=1 // pred_fallthru
      _
    // Predicated region
    $region46: #{seq2seq_forward_impl.1} parent=1 // pred_check
      _
    $region47: #{seq2seq_forward_impl.1} parent=1 // pred_check_branch
      %92 = sbr.rel (0) target = $region49
    $region48: #{seq2seq_forward_impl.1} parent=1 // pred_region
      %s94 = ssub.s32 16, 16
      %95 = vsyncadd [#allocation13], %s94
      %s97 = sshll.u32 [#allocation14], 4
      %s98 = int_to_ptr.vmem [resolvable:$true] %s97
      %100 = dma.hbm_to_vmem [thread:$0]  %s11, 16, %s98, [#allocation13]
    $region49: #{seq2seq_forward_impl.1} parent=1 // pred_fallthru
      _
    // Predicated region
    $region50: #{seq2seq_forward_impl.1} parent=1 // pred_check
      _
    $region51: #{seq2seq_forward_impl.1} parent=1 // pred_check_branch
      %102 = sbr.rel (0) target = $region53
    $region52: #{seq2seq_forward_impl.1} parent=1 // pred_region
      %s104 = ssub.s32 16, 16
      %105 = vsyncadd [#allocation16], %s104
      %s107 = sshll.u32 [#allocation15], 4
      %s108 = int_to_ptr.vmem [resolvable:$true] %s107
      %110 = dma.hbm_to_vmem [thread:$0]  %s12, 16, %s108, [#allocation16]
    $region53: #{seq2seq_forward_impl.1} parent=1 // pred_fallthru
      _
    // Predicated region
    $region54: #{seq2seq_forward_impl.1} parent=1 // pred_check
      _
    $region55: #{seq2seq_forward_impl.1} parent=1 // pred_check_branch
      %112 = sbr.rel (0) target = $region57
    $region56: #{seq2seq_forward_impl.1} parent=1 // pred_region
      %s114 = ssub.s32 256, 256
      %115 = vsyncadd [#allocation16], %s114
      %s116 = sshll.u32 [#allocation17], 4
      %s117 = int_to_ptr.vmem [resolvable:$true] %s116
      %122 = dma.hbm_to_vmem [thread:$0]  %s13, 256, %s117, [#allocation16], 128, 128, 8
    $region57: #{seq2seq_forward_impl.1} parent=1 // pred_fallthru
      _
    // Predicated region
    $region58: #{seq2seq_forward_impl.1} parent=1 // pred_check
      _
    $region59: #{seq2seq_forward_impl.1} parent=1 // pred_check_branch
      %124 = sbr.rel (0) target = $region61
    $region60: #{seq2seq_forward_impl.1} parent=1 // pred_region
      _
    $region61: #{seq2seq_forward_impl.1} parent=1 // pred_fallthru
      _
    // Predicated region
    $region62: #{seq2seq_forward_impl.1} parent=1 // pred_check
      _
    $region63: #{seq2seq_forward_impl.1} parent=1 // pred_check_branch
      %126 = sbr.rel (0) target = $region65
    $region64: #{seq2seq_forward_impl.1} parent=1 // pred_region
      _
    $region65: #{seq2seq_forward_impl.1} parent=1 // pred_fallthru
      _
    // Predicated region
    $region66: #{seq2seq_forward_impl.1} parent=1 // pred_check
      _
    $region67: #{seq2seq_forward_impl.1} parent=1 // pred_check_branch
      %128 = sbr.rel (0) target = $region69
    $region68: #{seq2seq_forward_impl.1} parent=1 // pred_region
      %s130 = ssub.s32 16, 16
      %131 = vsyncadd [#allocation19], %s130
      %s133 = sshll.u32 [#allocation18], 4
      %s134 = int_to_ptr.vmem [resolvable:$true] %s133
      %136 = dma.hbm_to_vmem [thread:$0]  %s16, 16, %s134, [#allocation19]
    $region69: #{seq2seq_forward_impl.1} parent=1 // pred_fallthru
      _
    // Predicated region
    $region70: #{seq2seq_forward_impl.1} parent=1 // pred_check
      _
    $region71: #{seq2seq_forward_impl.1} parent=1 // pred_check_branch
      %138 = sbr.rel (0) target = $region73
    $region72: #{seq2seq_forward_impl.1} parent=1 // pred_region
      %s140 = ssub.s32 16, 16
      %141 = vsyncadd [#allocation19], %s140
      %s143 = sshll.u32 [#allocation20], 4
      %s144 = int_to_ptr.vmem [resolvable:$true] %s143
      %146 = dma.hbm_to_vmem [thread:$0]  %s17, 16, %s144, [#allocation19]
    $region73: #{seq2seq_forward_impl.1} parent=1 // pred_fallthru
      _
    // Predicated region
    $region74: #{seq2seq_forward_impl.1} parent=1 // pred_check
      _
    $region75: #{seq2seq_forward_impl.1} parent=1 // pred_check_branch
      %148 = sbr.rel (0) target = $region77
    $region76: #{seq2seq_forward_impl.1} parent=1 // pred_region
      _
    $region77: #{seq2seq_forward_impl.1} parent=1 // pred_fallthru
      _
    // Predicated region
    $region78: #{seq2seq_forward_impl.1} parent=1 // pred_check
      _
    $region79: #{seq2seq_forward_impl.1} parent=1 // pred_check_branch
      %150 = sbr.rel (0) target = $region81
    $region80: #{seq2seq_forward_impl.1} parent=1 // pred_region
      _
    $region81: #{seq2seq_forward_impl.1} parent=1 // pred_fallthru
      _
    // Predicated region
    $region82: #{seq2seq_forward_impl.1} parent=1 // pred_check
      _
    $region83: #{seq2seq_forward_impl.1} parent=1 // pred_check_branch
      %152 = sbr.rel (0) target = $region85
    $region84: #{seq2seq_forward_impl.1} parent=1 // pred_region
      %s154 = ssub.s32 256, 256
      %155 = vsyncadd [#allocation22], %s154
      %s156 = sshll.u32 [#allocation21], 4
      %s157 = int_to_ptr.vmem [resolvable:$true] %s156
      %162 = dma.hbm_to_vmem [thread:$0]  %s20, 256, %s157, [#allocation22], 128, 128, 8
    $region85: #{seq2seq_forward_impl.1} parent=1 // pred_fallthru
      _
    // Predicated region
    $region86: #{seq2seq_forward_impl.1} parent=1 // pred_check
      _
    $region87: #{seq2seq_forward_impl.1} parent=1 // pred_check_branch
      %164 = sbr.rel (0) target = $region89
    $region88: #{seq2seq_forward_impl.1} parent=1 // pred_region
      %s166 = ssub.s32 16, 16
      %167 = vsyncadd [#allocation22], %s166
      %s169 = sshll.u32 [#allocation23], 4
      %s170 = int_to_ptr.vmem [resolvable:$true] %s169
      %172 = dma.hbm_to_vmem [thread:$0]  %s21, 16, %s170, [#allocation22]
    $region89: #{seq2seq_forward_impl.1} parent=1 // pred_fallthru
      _
    // Predicated region
    $region90: #{seq2seq_forward_impl.1} parent=1 // pred_check
      _
    $region91: #{seq2seq_forward_impl.1} parent=1 // pred_check_branch
      %174 = sbr.rel (0) target = $region93
    $region92: #{seq2seq_forward_impl.1} parent=1 // pred_region
      %175 = dma.done [#allocation7], 32
    $region93: #{seq2seq_forward_impl.1} parent=1 // pred_fallthru
      _
    // Predicated region
    $region94: #{seq2seq_forward_impl.1} parent=1 // pred_check
      _
    $region95: #{seq2seq_forward_impl.1} parent=1 // pred_check_branch
      %177 = sbr.rel (0) target = $region97
    $region96: #{seq2seq_forward_impl.1} parent=1 // pred_region
      %178 = dma.done [#allocation9], 32
    $region97: #{seq2seq_forward_impl.1} parent=1 // pred_fallthru
      _
    // Predicated region
    $region98: #{seq2seq_forward_impl.1} parent=1 // pred_check
      _
    $region99: #{seq2seq_forward_impl.1} parent=1 // pred_check_branch
      %180 = sbr.rel (0) target = $region101
    $region100: #{seq2seq_forward_impl.1} parent=1 // pred_region
      %181 = dma.done [#allocation9], 16
    $region101: #{seq2seq_forward_impl.1} parent=1 // pred_fallthru
      _
    // Predicated region
    $region102: #{seq2seq_forward_impl.1} parent=1 // pred_check
      _
    $region103: #{seq2seq_forward_impl.1} parent=1 // pred_check_branch
      %183 = sbr.rel (0) target = $region105
    $region104: #{seq2seq_forward_impl.1} parent=1 // pred_region
      %184 = dma.done [#allocation5], 16
    $region105: #{seq2seq_forward_impl.1} parent=1 // pred_fallthru
      _
    // Predicated region
    $region106: #{seq2seq_forward_impl.1} parent=1 // pred_check
      _
    $region107: #{seq2seq_forward_impl.1} parent=1 // pred_check_branch
      %186 = sbr.rel (0) target = $region109
    $region108: #{seq2seq_forward_impl.1} parent=1 // pred_region
      %187 = dma.done [#allocation13], 16
    $region109: #{seq2seq_forward_impl.1} parent=1 // pred_fallthru
      _
    // Predicated region
    $region110: #{seq2seq_forward_impl.1} parent=1 // pred_check
      _
    $region111: #{seq2seq_forward_impl.1} parent=1 // pred_check_branch
      %189 = sbr.rel (0) target = $region113
    $region112: #{seq2seq_forward_impl.1} parent=1 // pred_region
      %190 = dma.done [#allocation13], 16
    $region113: #{seq2seq_forward_impl.1} parent=1 // pred_fallthru
      _
    // Predicated region
    $region114: #{seq2seq_forward_impl.1} parent=1 // pred_check
      _
    $region115: #{seq2seq_forward_impl.1} parent=1 // pred_check_branch
      %192 = sbr.rel (0) target = $region117
    $region116: #{seq2seq_forward_impl.1} parent=1 // pred_region
      %193 = dma.done [#allocation16], 16
    $region117: #{seq2seq_forward_impl.1} parent=1 // pred_fallthru
      _
    // Predicated region
    $region118: #{seq2seq_forward_impl.1} parent=1 // pred_check
      _
    $region119: #{seq2seq_forward_impl.1} parent=1 // pred_check_branch
      %195 = sbr.rel (0) target = $region121
    $region120: #{seq2seq_forward_impl.1} parent=1 // pred_region
      %196 = dma.done [#allocation16], 256
    $region121: #{seq2seq_forward_impl.1} parent=1 // pred_fallthru
      _
    // Predicated region
    $region122: #{seq2seq_forward_impl.1} parent=1 // pred_check
      _
    $region123: #{seq2seq_forward_impl.1} parent=1 // pred_check_branch
      %198 = sbr.rel (0) target = $region125
    $region124: #{seq2seq_forward_impl.1} parent=1 // pred_region
      %199 = dma.done [#allocation19], 16
    $region125: #{seq2seq_forward_impl.1} parent=1 // pred_fallthru
      _
    // Predicated region
    $region126: #{seq2seq_forward_impl.1} parent=1 // pred_check
      _
    $region127: #{seq2seq_forward_impl.1} parent=1 // pred_check_branch
      %201 = sbr.rel (0) target = $region129
    $region128: #{seq2seq_forward_impl.1} parent=1 // pred_region
      %202 = dma.done [#allocation19], 16
    $region129: #{seq2seq_forward_impl.1} parent=1 // pred_fallthru
      _
    // Predicated region
    $region130: #{seq2seq_forward_impl.1} parent=1 // pred_check
      _
    $region131: #{seq2seq_forward_impl.1} parent=1 // pred_check_branch
      %204 = sbr.rel (0) target = $region133
    $region132: #{seq2seq_forward_impl.1} parent=1 // pred_region
      %205 = dma.done [#allocation22], 256
    $region133: #{seq2seq_forward_impl.1} parent=1 // pred_fallthru
      _
    // Predicated region
    $region134: #{seq2seq_forward_impl.1} parent=1 // pred_check
      _
    $region135: #{seq2seq_forward_impl.1} parent=1 // pred_check_branch
      %207 = sbr.rel (0) target = $region137
    $region136: #{seq2seq_forward_impl.1} parent=1 // pred_region
      %208 = dma.done [#allocation22], 16
    $region137: #{seq2seq_forward_impl.1} parent=1 // pred_fallthru
      _
    %209 = sfence
    %v210 = vld [vmem:[%s3] sm:$0xff]
    %v211 = vld [vmem:[%s3 + $0x8] sm:$0xff]
    %v212 = vld [vmem:[%s3 + $0x10] sm:$0xf]
    %v213 = vld [vmem:[%s4] sm:$0xff]
    %v214 = vld [vmem:[%s4 + $0x8] sm:$0xff]
    %v215 = vld [vmem:[%s4 + $0x10] sm:$0xf]
    %v216 = vld [vmem:[%s5] sm:$0xff]
    %v217 = vld [vmem:[%s5 + $0x8] sm:$0xff]
    %v218 = vld [vmem:[%s6] sm:$0xff]
    %v219 = vld [vmem:[%s6 + $0x8] sm:$0xff]
    %v220 = vld [vmem:[%s6 + $0x10] sm:$0xff]
    %v221 = vld [vmem:[%s6 + $0x18] sm:$0xff]
    %v222 = vld [vmem:[#allocation11] sm:$0x1]
    %v223 = vld [vmem:[#allocation12] sm:$0x1]
    %v224 = vld [vmem:[%s9] sm:$0xff]
    %v225 = vld [vmem:[%s9 + $0x8] sm:$0xff]
    %v226 = vld [vmem:[%s9 + $0x10] sm:$0xff]
    %v227 = vld [vmem:[%s9 + $0x18] sm:$0xff]
    %v228 = vld [vmem:[%s10] sm:$0xff]
    %v229 = vld [vmem:[%s10 + $0x8] sm:$0xff]
    %v230 = vld [vmem:[%s10 + $0x10] sm:$0xff]
    %v231 = vld [vmem:[%s10 + $0x18] sm:$0xff]
    %v232 = vld [vmem:[#allocation14] sm:$0x1]
    %v233 = vld [vmem:[#allocation15] sm:$0x1]
    %v234 = vld [vmem:[#allocation17] sm:$0xff]
    %v235 = vld [vmem:[#allocation17 + $0x8] sm:$0xff]
    %v236 = vld [vmem:[%s14] sm:$0xff]
    %v237 = vld [vmem:[%s14 + $0x8] sm:$0xff]
    %v238 = vld [vmem:[%s14 + $0x10] sm:$0xff]
    %v239 = vld [vmem:[%s14 + $0x18] sm:$0xff]
    %v240 = vld [vmem:[%s15] sm:$0xff]
    %v241 = vld [vmem:[%s15 + $0x8] sm:$0xff]
    %v242 = vld [vmem:[%s15 + $0x10] sm:$0xff]
    %v243 = vld [vmem:[%s15 + $0x18] sm:$0xff]
    %v244 = vld [vmem:[#allocation18] sm:$0x1]
    %v245 = vld [vmem:[#allocation20] sm:$0x1]
    %v246 = vld [vmem:[%s18] sm:$0xff]
    %v247 = vld [vmem:[%s18 + $0x8] sm:$0xff]
    %v248 = vld [vmem:[%s18 + $0x10] sm:$0xff]
    %v249 = vld [vmem:[%s18 + $0x18] sm:$0xff]
    %v250 = vld [vmem:[%s19] sm:$0xff]
    %v251 = vld [vmem:[%s19 + $0x8] sm:$0xff]
    %v252 = vld [vmem:[%s19 + $0x10] sm:$0xff]
    %v253 = vld [vmem:[%s19 + $0x18] sm:$0xff]
    %v254 = vld [vmem:[#allocation21] sm:$0xff]
    %v255 = vld [vmem:[#allocation21 + $0x8] sm:$0xff]
    %v256 = vld [vmem:[#allocation23] sm:$0x1]
    %v257 = vlaneseq
    %v258 = vand.u32 %v257, 127
    %v259 = vlaneseq
    %v260 = vshrl.u32 %v259, 7
    %vm261 = vcmp.eq.s32.totalorder %v260, 0
    %s262 = sld [smem:[#allocation4]]
    %v263 = vstv %s262
    %v264 = vsel %vm261, %v263, 0
    %vm265 = vcmp.eq.s32.totalorder %v260, 1
    %s266 = sld [smem:[#allocation4 + $0x80]]
    %v267 = vstv %s266
    %v268 = vsel %vm265, %v267, %v264
    %vm269 = vcmp.eq.s32.totalorder %v258, %v268
    %v270 = vsel %vm269, 1, 0
    %v271 = vcvt.s32.f32 %v270
    %vm272 = vcmask 162816
    %v274 = vsel %vm272, %v271, 0
    %vm276 = vcmask 1043456
    %v278 = vsel %vm276, %v212, 0
    %280 = vmatprep.subr.mxu0 0.0
    %281 = vmatpush1.msra.mxu0 0.0
    %282 = vmatprep.subr.mxu0 0.0
    %283 = vmatpush1.msra.mxu0 0.0
    %284 = vmatprep.subr.mxu0 0.0
    %285 = vmatpush1.msra.mxu0 0.0
    %286 = vmatprep.subr.mxu0 0.0
    %287 = vmatpush1.msra.mxu0 0.0
    %288 = vmatprep.subr.mxu0 0.0
    %289 = vmatpush1.msra.mxu0 0.0
    %290 = vmatprep.subr.mxu0 0.0
    %291 = vmatpush1.msra.mxu0 0.0
    %292 = vmatprep.subr.mxu0 0.0
    %293 = vmatpush1.msra.mxu0 0.0
    %294 = vmatprep.subr.mxu0 0.0
    %295 = vmatpush1.msra.mxu0 0.0
    %296 = vmatprep.subr.mxu0 0.0
    %297 = vmatpush1.msra.mxu0 0.0
    %298 = vmatprep.subr.mxu0 0.0
    %299 = vmatpush1.msra.mxu0 0.0
    %300 = vmatprep.subr.mxu0 0.0
    %301 = vmatpush1.msra.mxu0 0.0
    %302 = vmatprep.subr.mxu0 0.0
    %303 = vmatpush1.msra.mxu0 0.0
    %304 = vmatprep.subr.mxu0 0.0
    %305 = vmatpush1.msra.mxu0 0.0
    %306 = vmatprep.subr.mxu0 0.0
    %307 = vmatpush1.msra.mxu0 %v278
    %308 = vmatprep.subr.mxu0 0.0
    %309 = vmatpush1.msra.mxu0 %v211
    %310 = vmatprep.subr.mxu0 0.0
    %311 = vmatpush1.msra.mxu0 %v210
    %312 = vmatprep.subr.mxu0 0.0
    %313 = vmatpush2.msra.mxu0 0.0
    %314 = vmatprep.subr.mxu0 0.0
    %315 = vmatpush2.msra.mxu0 0.0
    %316 = vmatprep.subr.mxu0 0.0
    %317 = vmatpush2.msra.mxu0 0.0
    %318 = vmatprep.subr.mxu0 0.0
    %319 = vmatpush2.msra.mxu0 0.0
    %320 = vmatprep.subr.mxu0 0.0
    %321 = vmatpush2.msra.mxu0 0.0
    %322 = vmatprep.subr.mxu0 0.0
    %323 = vmatpush2.msra.mxu0 0.0
    %324 = vmatprep.subr.mxu0 0.0
    %325 = vmatpush2.msra.mxu0 0.0
    %326 = vmatprep.subr.mxu0 0.0
    %327 = vmatpush2.msra.mxu0 0.0
    %328 = vmatprep.subr.mxu0 0.0
    %329 = vmatpush2.msra.mxu0 0.0
    %330 = vmatprep.subr.mxu0 0.0
    %331 = vmatpush2.msra.mxu0 0.0
    %332 = vmatprep.subr.mxu0 0.0
    %333 = vmatpush2.msra.mxu0 0.0
    %334 = vmatprep.subr.mxu0 0.0
    %335 = vmatpush2.msra.mxu0 0.0
    %336 = vmatprep.subr.mxu0 0.0
    %337 = vmatpush2.msra.mxu0 0.0
    %338 = vmatprep.subr.mxu0 0.0
    %339 = vmatpush2.msra.mxu0 0.0
    %340 = vmatprep.subr.mxu0 0.0
    %341 = vmatpush2.msra.mxu0 0.0
    %342 = vmatprep.subr.mxu0 0.0
    %343 = vmatpush2.msra.mxu0 0.0
    %344 = vmatprep.mubr.f32.mxu0 0.0
    %345 = vmatmul.mubr.f32.gmra.mxu0 %v274
    %v346 = vpop.f32.mrf.mxu0
    %v347 = vadd.f32 0.0, %v346
    %v348 = vpop.f32.mrf.mxu0
    %349 = vdwg.mxu0
    %v351 = vlaneseq
    %v352 = vshrl.u32 %v351, 7
    %v353 = vsub.s32 0, %v352
    %v354 = vrot.slane %v222, %v353
    %vm356 = vcmask 130048
    %v358 = vsel %vm356, %v347, 0
    %360 = vmatprep.subr.mxu0 0.0
    %361 = vmatpush1.msra.mxu0 0.0
    %362 = vmatprep.subr.mxu0 0.0
    %363 = vmatpush1.msra.mxu0 0.0
    %364 = vmatprep.subr.mxu0 0.0
    %365 = vmatpush1.msra.mxu0 0.0
    %366 = vmatprep.subr.mxu0 0.0
    %367 = vmatpush1.msra.mxu0 0.0
    %368 = vmatprep.subr.mxu0 0.0
    %369 = vmatpush1.msra.mxu0 0.0
    %370 = vmatprep.subr.mxu0 0.0
    %371 = vmatpush1.msra.mxu0 0.0
    %372 = vmatprep.subr.mxu0 0.0
    %373 = vmatpush1.msra.mxu0 0.0
    %374 = vmatprep.subr.mxu0 0.0
    %375 = vmatpush1.msra.mxu0 0.0
    %376 = vmatprep.subr.mxu0 0.0
    %377 = vmatpush1.msra.mxu0 0.0
    %378 = vmatprep.subr.mxu0 0.0
    %379 = vmatpush1.msra.mxu0 0.0
    %380 = vmatprep.subr.mxu0 0.0
    %381 = vmatpush1.msra.mxu0 0.0
    %382 = vmatprep.subr.mxu0 0.0
    %383 = vmatpush1.msra.mxu0 0.0
    %384 = vmatprep.subr.mxu0 0.0
    %385 = vmatpush1.msra.mxu0 0.0
    %386 = vmatprep.subr.mxu0 0.0
    %387 = vmatpush1.msra.mxu0 0.0
    %388 = vmatprep.subr.mxu0 0.0
    %389 = vmatpush1.msra.mxu0 %v217
    %390 = vmatprep.subr.mxu0 0.0
    %391 = vmatpush1.msra.mxu0 %v216
    %392 = vmatprep.subr.mxu0 0.0
    %393 = vmatpush2.msra.mxu0 0.0
    %394 = vmatprep.subr.mxu0 0.0
    %395 = vmatpush2.msra.mxu0 0.0
    %396 = vmatprep.subr.mxu0 0.0
    %397 = vmatpush2.msra.mxu0 0.0
    %398 = vmatprep.subr.mxu0 0.0
    %399 = vmatpush2.msra.mxu0 0.0
    %400 = vmatprep.subr.mxu0 0.0
    %401 = vmatpush2.msra.mxu0 0.0
    %402 = vmatprep.subr.mxu0 0.0
    %403 = vmatpush2.msra.mxu0 0.0
    %404 = vmatprep.subr.mxu0 0.0
    %405 = vmatpush2.msra.mxu0 0.0
    %406 = vmatprep.subr.mxu0 0.0
    %407 = vmatpush2.msra.mxu0 0.0
    %408 = vmatprep.subr.mxu0 0.0
    %409 = vmatpush2.msra.mxu0 0.0
    %410 = vmatprep.subr.mxu0 0.0
    %411 = vmatpush2.msra.mxu0 0.0
    %412 = vmatprep.subr.mxu0 0.0
    %413 = vmatpush2.msra.mxu0 0.0
    %414 = vmatprep.subr.mxu0 0.0
    %415 = vmatpush2.msra.mxu0 0.0
    %416 = vmatprep.subr.mxu0 0.0
    %417 = vmatpush2.msra.mxu0 0.0
    %418 = vmatprep.subr.mxu0 0.0
    %419 = vmatpush2.msra.mxu0 0.0
    %420 = vmatprep.subr.mxu0 0.0
    %421 = vmatpush2.msra.mxu0 0.0
    %422 = vmatprep.subr.mxu0 0.0
    %423 = vmatpush2.msra.mxu0 0.0
    %424 = vmatprep.mubr.f32.mxu0 0.0
    %425 = vmatmul.mubr.f32.gmra.mxu0 %v358
    %v426 = vpop.f32.mrf.mxu0
    %v427 = vadd.f32 %v354, %v426
    %v428 = vpop.f32.mrf.mxu0
    %429 = vdwg.mxu0
    %v431 = vlaneseq
    %v432 = vshrl.u32 %v431, 7
    %v433 = vsub.s32 0, %v432
    %v434 = vrot.slane %v223, %v433
    %vm436 = vcmask 261120
    %v438 = vsel %vm436, 0.0, 0
    %440 = vmatprep.subr.mxu0 0.0
    %441 = vmatpush1.msra.mxu0 0.0
    %442 = vmatprep.subr.mxu0 0.0
    %443 = vmatpush1.msra.mxu0 0.0
    %444 = vmatprep.subr.mxu0 0.0
    %445 = vmatpush1.msra.mxu0 0.0
    %446 = vmatprep.subr.mxu0 0.0
    %447 = vmatpush1.msra.mxu0 0.0
    %448 = vmatprep.subr.mxu0 0.0
    %449 = vmatpush1.msra.mxu0 0.0
    %450 = vmatprep.subr.mxu0 0.0
    %451 = vmatpush1.msra.mxu0 0.0
    %452 = vmatprep.subr.mxu0 0.0
    %453 = vmatpush1.msra.mxu0 0.0
    %454 = vmatprep.subr.mxu0 0.0
    %455 = vmatpush1.msra.mxu0 0.0
    %456 = vmatprep.subr.mxu0 0.0
    %457 = vmatpush1.msra.mxu0 0.0
    %458 = vmatprep.subr.mxu0 0.0
    %459 = vmatpush1.msra.mxu0 0.0
    %460 = vmatprep.subr.mxu0 0.0
    %461 = vmatpush1.msra.mxu0 0.0
    %462 = vmatprep.subr.mxu0 0.0
    %463 = vmatpush1.msra.mxu0 0.0
    %464 = vmatprep.subr.mxu0 0.0
    %465 = vmatpush1.msra.mxu0 %v221
    %466 = vmatprep.subr.mxu0 0.0
    %467 = vmatpush1.msra.mxu0 %v220
    %468 = vmatprep.subr.mxu0 0.0
    %469 = vmatpush1.msra.mxu0 %v219
    %470 = vmatprep.subr.mxu0 0.0
    %471 = vmatpush1.msra.mxu0 %v218
    %472 = vmatprep.subr.mxu0 0.0
    %473 = vmatpush2.msra.mxu0 0.0
    %474 = vmatprep.subr.mxu0 0.0
    %475 = vmatpush2.msra.mxu0 0.0
    %476 = vmatprep.subr.mxu0 0.0
    %477 = vmatpush2.msra.mxu0 0.0
    %478 = vmatprep.subr.mxu0 0.0
    %479 = vmatpush2.msra.mxu0 0.0
    %480 = vmatprep.subr.mxu0 0.0
    %481 = vmatpush2.msra.mxu0 0.0
    %482 = vmatprep.subr.mxu0 0.0
    %483 = vmatpush2.msra.mxu0 0.0
    %484 = vmatprep.subr.mxu0 0.0
    %485 = vmatpush2.msra.mxu0 0.0
    %486 = vmatprep.subr.mxu0 0.0
    %487 = vmatpush2.msra.mxu0 0.0
    %488 = vmatprep.subr.mxu0 0.0
    %489 = vmatpush2.msra.mxu0 0.0
    %490 = vmatprep.subr.mxu0 0.0
    %491 = vmatpush2.msra.mxu0 0.0
    %492 = vmatprep.subr.mxu0 0.0
    %493 = vmatpush2.msra.mxu0 0.0
    %494 = vmatprep.subr.mxu0 0.0
    %495 = vmatpush2.msra.mxu0 0.0
    %496 = vmatprep.subr.mxu0 0.0
    %497 = vmatpush2.msra.mxu0 0.0
    %498 = vmatprep.subr.mxu0 0.0
    %499 = vmatpush2.msra.mxu0 0.0
    %500 = vmatprep.subr.mxu0 0.0
    %501 = vmatpush2.msra.mxu0 0.0
    %502 = vmatprep.subr.mxu0 0.0
    %503 = vmatpush2.msra.mxu0 0.0
    %504 = vmatprep.mubr.f32.mxu0 0.0
    %505 = vmatmul.mubr.f32.gmra.mxu0 %v438
    %v506 = vpop.f32.mrf.mxu0
    %v507 = vadd.f32 %v434, %v506
    %v508 = vpop.f32.mrf.mxu0
    %509 = vdwg.mxu0
    %v510 = vadd.f32 %v427, %v507
    %v511 = vxor.u32 %v510, 2147483648
    %v512 = vmul.f32 %v511, 1.442695
    %v513 = vpow.pop %v512
    %v514 = vadd.f32 %v513, 1.0
    %v515 = vrcp.pop %v514
    %v516 = vmul.f32 1.0, %v515
    %518 = vrot.lane.b32.xlu0 %v507, 64
    %v519 = vpop.permute.xlu0 %518
    %v521 = vmul.f32 %v516, %v519
    %523 = vrot.lane.b32.xlu0 %v521, 64
    %v524 = vpop.permute.xlu0 %523
    %v526 = vadd.f32 %v427, %v524
    %v527 = vtanh.pop %v526
    %v528 = vsub.f32 1.0, %v516
    %530 = vrot.lane.b32.xlu0 %v527, 96
    %v531 = vpop.permute.xlu0 %530
    %v533 = vmul.f32 %v528, %v531
    %v534 = vmul.f32 %v516, 0.0
    %v535 = vadd.f32 %v533, %v534
    %v538 = vunpack.c.l.s4 1966171168
    %v539 = vunpack.c.0.s8 %v538
    %v540 = vlaneseq
    %v541 = vshrl.u32 %v540, 7
    %v542 = vsub.s32 %v539, %v541
    %v543 = vrot.slane %v535, %v542
    %v544 = vcombine.high %v543, %v543
    %v546 = vunpack.c.l.s4 1966171168
    %v547 = vunpack.c.0.s8 %v546
    %v548 = vlaneseq
    %v549 = vshrl.u32 %v548, 7
    %v550 = vsub.s32 %v547, %v549
    %v551 = vrot.slane %v543, %v550
    %v553 = vunpack.c.l.s4 1966171168
    %v554 = vunpack.c.0.s8 %v553
    %v555 = vlaneseq
    %v556 = vshrl.u32 %v555, 7
    %v557 = vsub.s32 %v554, %v556
    %v558 = vrot.slane %v544, %v557
    %v559 = vlaneseq
    %v560 = vshrl.u32 %v559, 7
    %v561 = vsub.s32 0, %v560
    %v562 = vrot.slane %v551, %v561
    %v563 = vlaneseq
    %v564 = vshrl.u32 %v563, 7
    %v565 = vsub.s32 0, %v564
    %v566 = vrot.slane %v558, %v565
    %567 = vrot.lane.b32.xlu0 %v562, 96
    %v568 = vpop.permute.xlu0 %567
    %569 = vrot.lane.b32.xlu0 %v566, 96
    %v570 = vpop.permute.xlu0 %569
    %vm573 = vcmask 253952
    %574 = vst.msk [vmem:[#allocation2] sm:$0x1] %vm573, %v568
    %575 = vst.msk [vmem:[#allocation2 + $0x8] sm:$0x1] %vm573, %v570
    %v577 = vlaneseq
    %v578 = vshrl.u32 %v577, 7
    %v579 = vsub.s32 0, %v578
    %v580 = vrot.slane %v232, %v579
    %582 = vrot.lane.b32.xlu0 %v535, 96
    %v583 = vpop.permute.xlu0 %582
    %v584 = vsel %vm436, %v583, 0
    %586 = vmatprep.subr.mxu0 0.0
    %587 = vmatpush1.msra.mxu0 0.0
    %588 = vmatprep.subr.mxu0 0.0
    %589 = vmatpush1.msra.mxu0 0.0
    %590 = vmatprep.subr.mxu0 0.0
    %591 = vmatpush1.msra.mxu0 0.0
    %592 = vmatprep.subr.mxu0 0.0
    %593 = vmatpush1.msra.mxu0 0.0
    %594 = vmatprep.subr.mxu0 0.0
    %595 = vmatpush1.msra.mxu0 0.0
    %596 = vmatprep.subr.mxu0 0.0
    %597 = vmatpush1.msra.mxu0 0.0
    %598 = vmatprep.subr.mxu0 0.0
    %599 = vmatpush1.msra.mxu0 0.0
    %600 = vmatprep.subr.mxu0 0.0
    %601 = vmatpush1.msra.mxu0 0.0
    %602 = vmatprep.subr.mxu0 0.0
    %603 = vmatpush1.msra.mxu0 0.0
    %604 = vmatprep.subr.mxu0 0.0
    %605 = vmatpush1.msra.mxu0 0.0
    %606 = vmatprep.subr.mxu0 0.0
    %607 = vmatpush1.msra.mxu0 0.0
    %608 = vmatprep.subr.mxu0 0.0
    %609 = vmatpush1.msra.mxu0 0.0
    %610 = vmatprep.subr.mxu0 0.0
    %611 = vmatpush1.msra.mxu0 %v231
    %612 = vmatprep.subr.mxu0 0.0
    %613 = vmatpush1.msra.mxu0 %v230
    %614 = vmatprep.subr.mxu0 0.0
    %615 = vmatpush1.msra.mxu0 %v229
    %616 = vmatprep.subr.mxu0 0.0
    %617 = vmatpush1.msra.mxu0 %v228
    %618 = vmatprep.subr.mxu0 0.0
    %619 = vmatpush2.msra.mxu0 0.0
    %620 = vmatprep.subr.mxu0 0.0
    %621 = vmatpush2.msra.mxu0 0.0
    %622 = vmatprep.subr.mxu0 0.0
    %623 = vmatpush2.msra.mxu0 0.0
    %624 = vmatprep.subr.mxu0 0.0
    %625 = vmatpush2.msra.mxu0 0.0
    %626 = vmatprep.subr.mxu0 0.0
    %627 = vmatpush2.msra.mxu0 0.0
    %628 = vmatprep.subr.mxu0 0.0
    %629 = vmatpush2.msra.mxu0 0.0
    %630 = vmatprep.subr.mxu0 0.0
    %631 = vmatpush2.msra.mxu0 0.0
    %632 = vmatprep.subr.mxu0 0.0
    %633 = vmatpush2.msra.mxu0 0.0
    %634 = vmatprep.subr.mxu0 0.0
    %635 = vmatpush2.msra.mxu0 0.0
    %636 = vmatprep.subr.mxu0 0.0
    %637 = vmatpush2.msra.mxu0 0.0
    %638 = vmatprep.subr.mxu0 0.0
    %639 = vmatpush2.msra.mxu0 0.0
    %640 = vmatprep.subr.mxu0 0.0
    %641 = vmatpush2.msra.mxu0 0.0
    %642 = vmatprep.subr.mxu0 0.0
    %643 = vmatpush2.msra.mxu0 0.0
    %644 = vmatprep.subr.mxu0 0.0
    %645 = vmatpush2.msra.mxu0 0.0
    %646 = vmatprep.subr.mxu0 0.0
    %647 = vmatpush2.msra.mxu0 0.0
    %648 = vmatprep.subr.mxu0 0.0
    %649 = vmatpush2.msra.mxu0 0.0
    %650 = vmatprep.mubr.f32.mxu0 0.0
    %651 = vmatmul.mubr.f32.gmra.mxu0 %v584
    %v652 = vpop.f32.mrf.mxu0
    %v653 = vadd.f32 %v580, %v652
    %v654 = vpop.f32.mrf.mxu0
    %655 = vdwg.mxu0
    %v658 = vunpack.c.l.s4 1966171168
    %v659 = vunpack.c.0.s8 %v658
    %v660 = vlaneseq
    %v661 = vshrl.u32 %v660, 7
    %v662 = vsub.s32 %v659, %v661
    %v663 = vrot.slane %v653, %v662
    %v664 = vcombine.high %v663, %v663
    %v666 = vunpack.c.l.s4 1966171168
    %v667 = vunpack.c.0.s8 %v666
    %v668 = vlaneseq
    %v669 = vshrl.u32 %v668, 7
    %v670 = vsub.s32 %v667, %v669
    %v671 = vrot.slane %v663, %v670
    %v673 = vunpack.c.l.s4 1966171168
    %v674 = vunpack.c.0.s8 %v673
    %v675 = vlaneseq
    %v676 = vshrl.u32 %v675, 7
    %v677 = vsub.s32 %v674, %v676
    %v678 = vrot.slane %v664, %v677
    %681 = vst.msk [vmem:[#allocation3] sm:$0x1] %vm573, %v671
    %682 = vst.msk [vmem:[#allocation3 + $0x8] sm:$0x1] %vm573, %v678
    %s683 = sld [smem:[#allocation4 + $0x1]]
    %v684 = vstv %s683
    %v685 = vsel %vm261, %v684, 0
    %s686 = sld [smem:[#allocation4 + $0x81]]
    %v687 = vstv %s686
    %v688 = vsel %vm265, %v687, %v685
    %vm689 = vcmp.eq.s32.totalorder %v258, %v688
    %v690 = vsel %vm689, 1, 0
    %v691 = vcvt.s32.f32 %v690
    %v693 = vsel %vm272, %v691, 0
    %695 = vmatprep.subr.mxu0 0.0
    %696 = vmatpush1.msra.mxu0 0.0
    %697 = vmatprep.subr.mxu0 0.0
    %698 = vmatpush1.msra.mxu0 0.0
    %699 = vmatprep.subr.mxu0 0.0
    %700 = vmatpush1.msra.mxu0 0.0
    %701 = vmatprep.subr.mxu0 0.0
    %702 = vmatpush1.msra.mxu0 0.0
    %703 = vmatprep.subr.mxu0 0.0
    %704 = vmatpush1.msra.mxu0 0.0
    %705 = vmatprep.subr.mxu0 0.0
    %706 = vmatpush1.msra.mxu0 0.0
    %707 = vmatprep.subr.mxu0 0.0
    %708 = vmatpush1.msra.mxu0 0.0
    %709 = vmatprep.subr.mxu0 0.0
    %710 = vmatpush1.msra.mxu0 0.0
    %711 = vmatprep.subr.mxu0 0.0
    %712 = vmatpush1.msra.mxu0 0.0
    %713 = vmatprep.subr.mxu0 0.0
    %714 = vmatpush1.msra.mxu0 0.0
    %715 = vmatprep.subr.mxu0 0.0
    %716 = vmatpush1.msra.mxu0 0.0
    %717 = vmatprep.subr.mxu0 0.0
    %718 = vmatpush1.msra.mxu0 0.0
    %719 = vmatprep.subr.mxu0 0.0
    %720 = vmatpush1.msra.mxu0 0.0
    %721 = vmatprep.subr.mxu0 0.0
    %722 = vmatpush1.msra.mxu0 %v278
    %723 = vmatprep.subr.mxu0 0.0
    %724 = vmatpush1.msra.mxu0 %v211
    %725 = vmatprep.subr.mxu0 0.0
    %726 = vmatpush1.msra.mxu0 %v210
    %727 = vmatprep.subr.mxu0 0.0
    %728 = vmatpush2.msra.mxu0 0.0
    %729 = vmatprep.subr.mxu0 0.0
    %730 = vmatpush2.msra.mxu0 0.0
    %731 = vmatprep.subr.mxu0 0.0
    %732 = vmatpush2.msra.mxu0 0.0
    %733 = vmatprep.subr.mxu0 0.0
    %734 = vmatpush2.msra.mxu0 0.0
    %735 = vmatprep.subr.mxu0 0.0
    %736 = vmatpush2.msra.mxu0 0.0
    %737 = vmatprep.subr.mxu0 0.0
    %738 = vmatpush2.msra.mxu0 0.0
    %739 = vmatprep.subr.mxu0 0.0
    %740 = vmatpush2.msra.mxu0 0.0
    %741 = vmatprep.subr.mxu0 0.0
    %742 = vmatpush2.msra.mxu0 0.0
    %743 = vmatprep.subr.mxu0 0.0
    %744 = vmatpush2.msra.mxu0 0.0
    %745 = vmatprep.subr.mxu0 0.0
    %746 = vmatpush2.msra.mxu0 0.0
    %747 = vmatprep.subr.mxu0 0.0
    %748 = vmatpush2.msra.mxu0 0.0
    %749 = vmatprep.subr.mxu0 0.0
    %750 = vmatpush2.msra.mxu0 0.0
    %751 = vmatprep.subr.mxu0 0.0
    %752 = vmatpush2.msra.mxu0 0.0
    %753 = vmatprep.subr.mxu0 0.0
    %754 = vmatpush2.msra.mxu0 0.0
    %755 = vmatprep.subr.mxu0 0.0
    %756 = vmatpush2.msra.mxu0 0.0
    %757 = vmatprep.subr.mxu0 0.0
    %758 = vmatpush2.msra.mxu0 0.0
    %759 = vmatprep.mubr.f32.mxu0 0.0
    %760 = vmatmul.mubr.f32.gmra.mxu0 %v693
    %v761 = vpop.f32.mrf.mxu0
    %v762 = vadd.f32 0.0, %v761
    %v763 = vpop.f32.mrf.mxu0
    %764 = vdwg.mxu0
    %v766 = vsel %vm356, %v762, 0
    %768 = vmatprep.subr.mxu0 0.0
    %769 = vmatpush1.msra.mxu0 0.0
    %770 = vmatprep.subr.mxu0 0.0
    %771 = vmatpush1.msra.mxu0 0.0
    %772 = vmatprep.subr.mxu0 0.0
    %773 = vmatpush1.msra.mxu0 0.0
    %774 = vmatprep.subr.mxu0 0.0
    %775 = vmatpush1.msra.mxu0 0.0
    %776 = vmatprep.subr.mxu0 0.0
    %777 = vmatpush1.msra.mxu0 0.0
    %778 = vmatprep.subr.mxu0 0.0
    %779 = vmatpush1.msra.mxu0 0.0
    %780 = vmatprep.subr.mxu0 0.0
    %781 = vmatpush1.msra.mxu0 0.0
    %782 = vmatprep.subr.mxu0 0.0
    %783 = vmatpush1.msra.mxu0 0.0
    %784 = vmatprep.subr.mxu0 0.0
    %785 = vmatpush1.msra.mxu0 0.0
    %786 = vmatprep.subr.mxu0 0.0
    %787 = vmatpush1.msra.mxu0 0.0
    %788 = vmatprep.subr.mxu0 0.0
    %789 = vmatpush1.msra.mxu0 0.0
    %790 = vmatprep.subr.mxu0 0.0
    %791 = vmatpush1.msra.mxu0 0.0
    %792 = vmatprep.subr.mxu0 0.0
    %793 = vmatpush1.msra.mxu0 0.0
    %794 = vmatprep.subr.mxu0 0.0
    %795 = vmatpush1.msra.mxu0 0.0
    %796 = vmatprep.subr.mxu0 0.0
    %797 = vmatpush1.msra.mxu0 %v217
    %798 = vmatprep.subr.mxu0 0.0
    %799 = vmatpush1.msra.mxu0 %v216
    %800 = vmatprep.subr.mxu0 0.0
    %801 = vmatpush2.msra.mxu0 0.0
    %802 = vmatprep.subr.mxu0 0.0
    %803 = vmatpush2.msra.mxu0 0.0
    %804 = vmatprep.subr.mxu0 0.0
    %805 = vmatpush2.msra.mxu0 0.0
    %806 = vmatprep.subr.mxu0 0.0
    %807 = vmatpush2.msra.mxu0 0.0
    %808 = vmatprep.subr.mxu0 0.0
    %809 = vmatpush2.msra.mxu0 0.0
    %810 = vmatprep.subr.mxu0 0.0
    %811 = vmatpush2.msra.mxu0 0.0
    %812 = vmatprep.subr.mxu0 0.0
    %813 = vmatpush2.msra.mxu0 0.0
    %814 = vmatprep.subr.mxu0 0.0
    %815 = vmatpush2.msra.mxu0 0.0
    %816 = vmatprep.subr.mxu0 0.0
    %817 = vmatpush2.msra.mxu0 0.0
    %818 = vmatprep.subr.mxu0 0.0
    %819 = vmatpush2.msra.mxu0 0.0
    %820 = vmatprep.subr.mxu0 0.0
    %821 = vmatpush2.msra.mxu0 0.0
    %822 = vmatprep.subr.mxu0 0.0
    %823 = vmatpush2.msra.mxu0 0.0
    %824 = vmatprep.subr.mxu0 0.0
    %825 = vmatpush2.msra.mxu0 0.0
    %826 = vmatprep.subr.mxu0 0.0
    %827 = vmatpush2.msra.mxu0 0.0
    %828 = vmatprep.subr.mxu0 0.0
    %829 = vmatpush2.msra.mxu0 0.0
    %830 = vmatprep.subr.mxu0 0.0
    %831 = vmatpush2.msra.mxu0 0.0
    %832 = vmatprep.mubr.f32.mxu0 0.0
    %833 = vmatmul.mubr.f32.gmra.mxu0 %v766
    %v834 = vpop.f32.mrf.mxu0
    %v835 = vadd.f32 %v354, %v834
    %v836 = vpop.f32.mrf.mxu0
    %837 = vdwg.mxu0
    %838 = vmatprep.subr.mxu0 0.0
    %839 = vmatpush1.msra.mxu0 0.0
    %840 = vmatprep.subr.mxu0 0.0
    %841 = vmatpush1.msra.mxu0 0.0
    %842 = vmatprep.subr.mxu0 0.0
    %843 = vmatpush1.msra.mxu0 0.0
    %844 = vmatprep.subr.mxu0 0.0
    %845 = vmatpush1.msra.mxu0 0.0
    %846 = vmatprep.subr.mxu0 0.0
    %847 = vmatpush1.msra.mxu0 0.0
    %848 = vmatprep.subr.mxu0 0.0
    %849 = vmatpush1.msra.mxu0 0.0
    %850 = vmatprep.subr.mxu0 0.0
    %851 = vmatpush1.msra.mxu0 0.0
    %852 = vmatprep.subr.mxu0 0.0
    %853 = vmatpush1.msra.mxu0 0.0
    %854 = vmatprep.subr.mxu0 0.0
    %855 = vmatpush1.msra.mxu0 0.0
    %856 = vmatprep.subr.mxu0 0.0
    %857 = vmatpush1.msra.mxu0 0.0
    %858 = vmatprep.subr.mxu0 0.0
    %859 = vmatpush1.msra.mxu0 0.0
    %860 = vmatprep.subr.mxu0 0.0
    %861 = vmatpush1.msra.mxu0 0.0
    %862 = vmatprep.subr.mxu0 0.0
    %863 = vmatpush1.msra.mxu0 %v221
    %864 = vmatprep.subr.mxu0 0.0
    %865 = vmatpush1.msra.mxu0 %v220
    %866 = vmatprep.subr.mxu0 0.0
    %867 = vmatpush1.msra.mxu0 %v219
    %868 = vmatprep.subr.mxu0 0.0
    %869 = vmatpush1.msra.mxu0 %v218
    %870 = vmatprep.subr.mxu0 0.0
    %871 = vmatpush2.msra.mxu0 0.0
    %872 = vmatprep.subr.mxu0 0.0
    %873 = vmatpush2.msra.mxu0 0.0
    %874 = vmatprep.subr.mxu0 0.0
    %875 = vmatpush2.msra.mxu0 0.0
    %876 = vmatprep.subr.mxu0 0.0
    %877 = vmatpush2.msra.mxu0 0.0
    %878 = vmatprep.subr.mxu0 0.0
    %879 = vmatpush2.msra.mxu0 0.0
    %880 = vmatprep.subr.mxu0 0.0
    %881 = vmatpush2.msra.mxu0 0.0
    %882 = vmatprep.subr.mxu0 0.0
    %883 = vmatpush2.msra.mxu0 0.0
    %884 = vmatprep.subr.mxu0 0.0
    %885 = vmatpush2.msra.mxu0 0.0
    %886 = vmatprep.subr.mxu0 0.0
    %887 = vmatpush2.msra.mxu0 0.0
    %888 = vmatprep.subr.mxu0 0.0
    %889 = vmatpush2.msra.mxu0 0.0
    %890 = vmatprep.subr.mxu0 0.0
    %891 = vmatpush2.msra.mxu0 0.0
    %892 = vmatprep.subr.mxu0 0.0
    %893 = vmatpush2.msra.mxu0 0.0
    %894 = vmatprep.subr.mxu0 0.0
    %895 = vmatpush2.msra.mxu0 0.0
    %896 = vmatprep.subr.mxu0 0.0
    %897 = vmatpush2.msra.mxu0 0.0
    %898 = vmatprep.subr.mxu0 0.0
    %899 = vmatpush2.msra.mxu0 0.0
    %900 = vmatprep.subr.mxu0 0.0
    %901 = vmatpush2.msra.mxu0 0.0
    %902 = vmatprep.mubr.f32.mxu0 0.0
    %903 = vmatmul.mubr.f32.gmra.mxu0 %v584
    %v904 = vpop.f32.mrf.mxu0
    %v905 = vadd.f32 %v434, %v904
    %v906 = vpop.f32.mrf.mxu0
    %907 = vdwg.mxu0
    %v908 = vadd.f32 %v835, %v905
    %v909 = vxor.u32 %v908, 2147483648
    %v910 = vmul.f32 %v909, 1.442695
    %v911 = vpow.pop %v910
    %v912 = vadd.f32 %v911, 1.0
    %v913 = vrcp.pop %v912
    %v914 = vmul.f32 1.0, %v913
    %916 = vrot.lane.b32.xlu0 %v905, 64
    %v917 = vpop.permute.xlu0 %916
    %v919 = vmul.f32 %v914, %v917
    %921 = vrot.lane.b32.xlu0 %v919, 64
    %v922 = vpop.permute.xlu0 %921
    %v924 = vadd.f32 %v835, %v922
    %v925 = vtanh.pop %v924
    %v926 = vsub.f32 1.0, %v914
    %928 = vrot.lane.b32.xlu0 %v925, 96
    %v929 = vpop.permute.xlu0 %928
    %v931 = vmul.f32 %v926, %v929
    %v932 = vmul.f32 %v914, %v535
    %v933 = vadd.f32 %v931, %v932
    %v936 = vunpack.c.l.s4 1966171168
    %v937 = vunpack.c.0.s8 %v936
    %v938 = vlaneseq
    %v939 = vshrl.u32 %v938, 7
    %v940 = vsub.s32 %v937, %v939
    %v941 = vrot.slane %v933, %v940
    %v942 = vcombine.high %v941, %v941
    %v944 = vunpack.c.l.s4 1966171168
    %v945 = vunpack.c.0.s8 %v944
    %v946 = vlaneseq
    %v947 = vshrl.u32 %v946, 7
    %v948 = vsub.s32 %v945, %v947
    %v949 = vrot.slane %v941, %v948
    %v951 = vunpack.c.l.s4 1966171168
    %v952 = vunpack.c.0.s8 %v951
    %v953 = vlaneseq
    %v954 = vshrl.u32 %v953, 7
    %v955 = vsub.s32 %v952, %v954
    %v956 = vrot.slane %v942, %v955
    %v957 = vlaneseq
    %v958 = vshrl.u32 %v957, 7
    %v959 = vsub.s32 0, %v958
    %v960 = vrot.slane %v949, %v959
    %v961 = vlaneseq
    %v962 = vshrl.u32 %v961, 7
    %v963 = vsub.s32 0, %v962
    %v964 = vrot.slane %v956, %v963
    %965 = vrot.lane.b32.xlu0 %v960, 96
    %v966 = vpop.permute.xlu0 %965
    %967 = vrot.lane.b32.xlu0 %v964, 96
    %v968 = vpop.permute.xlu0 %967
    %971 = vst.msk [vmem:[#allocation2 + $0x1] sm:$0x1] %vm573, %v966
    %972 = vst.msk [vmem:[#allocation2 + $0x9] sm:$0x1] %vm573, %v968
    %973 = vrot.lane.b32.xlu0 %v933, 96
    %v974 = vpop.permute.xlu0 %973
    %v975 = vsel %vm436, %v974, 0
    %977 = vmatprep.subr.mxu0 0.0
    %978 = vmatpush1.msra.mxu0 0.0
    %979 = vmatprep.subr.mxu0 0.0
    %980 = vmatpush1.msra.mxu0 0.0
    %981 = vmatprep.subr.mxu0 0.0
    %982 = vmatpush1.msra.mxu0 0.0
    %983 = vmatprep.subr.mxu0 0.0
    %984 = vmatpush1.msra.mxu0 0.0
    %985 = vmatprep.subr.mxu0 0.0
    %986 = vmatpush1.msra.mxu0 0.0
    %987 = vmatprep.subr.mxu0 0.0
    %988 = vmatpush1.msra.mxu0 0.0
    %989 = vmatprep.subr.mxu0 0.0
    %990 = vmatpush1.msra.mxu0 0.0
    %991 = vmatprep.subr.mxu0 0.0
    %992 = vmatpush1.msra.mxu0 0.0
    %993 = vmatprep.subr.mxu0 0.0
    %994 = vmatpush1.msra.mxu0 0.0
    %995 = vmatprep.subr.mxu0 0.0
    %996 = vmatpush1.msra.mxu0 0.0
    %997 = vmatprep.subr.mxu0 0.0
    %998 = vmatpush1.msra.mxu0 0.0
    %999 = vmatprep.subr.mxu0 0.0
    %1000 = vmatpush1.msra.mxu0 0.0
    %1001 = vmatprep.subr.mxu0 0.0
    %1002 = vmatpush1.msra.mxu0 %v231
    %1003 = vmatprep.subr.mxu0 0.0
    %1004 = vmatpush1.msra.mxu0 %v230
    %1005 = vmatprep.subr.mxu0 0.0
    %1006 = vmatpush1.msra.mxu0 %v229
    %1007 = vmatprep.subr.mxu0 0.0
    %1008 = vmatpush1.msra.mxu0 %v228
    %1009 = vmatprep.subr.mxu0 0.0
    %1010 = vmatpush2.msra.mxu0 0.0
    %1011 = vmatprep.subr.mxu0 0.0
    %1012 = vmatpush2.msra.mxu0 0.0
    %1013 = vmatprep.subr.mxu0 0.0
    %1014 = vmatpush2.msra.mxu0 0.0
    %1015 = vmatprep.subr.mxu0 0.0
    %1016 = vmatpush2.msra.mxu0 0.0
    %1017 = vmatprep.subr.mxu0 0.0
    %1018 = vmatpush2.msra.mxu0 0.0
    %1019 = vmatprep.subr.mxu0 0.0
    %1020 = vmatpush2.msra.mxu0 0.0
    %1021 = vmatprep.subr.mxu0 0.0
    %1022 = vmatpush2.msra.mxu0 0.0
    %1023 = vmatprep.subr.mxu0 0.0
    %1024 = vmatpush2.msra.mxu0 0.0
    %1025 = vmatprep.subr.mxu0 0.0
    %1026 = vmatpush2.msra.mxu0 0.0
    %1027 = vmatprep.subr.mxu0 0.0
    %1028 = vmatpush2.msra.mxu0 0.0
    %1029 = vmatprep.subr.mxu0 0.0
    %1030 = vmatpush2.msra.mxu0 0.0
    %1031 = vmatprep.subr.mxu0 0.0
    %1032 = vmatpush2.msra.mxu0 0.0
    %1033 = vmatprep.subr.mxu0 0.0
    %1034 = vmatpush2.msra.mxu0 0.0
    %1035 = vmatprep.subr.mxu0 0.0
    %1036 = vmatpush2.msra.mxu0 0.0
    %1037 = vmatprep.subr.mxu0 0.0
    %1038 = vmatpush2.msra.mxu0 0.0
    %1039 = vmatprep.subr.mxu0 0.0
    %1040 = vmatpush2.msra.mxu0 0.0
    %1041 = vmatprep.mubr.f32.mxu0 0.0
    %1042 = vmatmul.mubr.f32.gmra.mxu0 %v975
    %v1043 = vpop.f32.mrf.mxu0
    %v1044 = vadd.f32 %v580, %v1043
    %v1045 = vpop.f32.mrf.mxu0
    %1046 = vdwg.mxu0
    %v1049 = vunpack.c.l.s4 1966171168
    %v1050 = vunpack.c.0.s8 %v1049
    %v1051 = vlaneseq
    %v1052 = vshrl.u32 %v1051, 7
    %v1053 = vsub.s32 %v1050, %v1052
    %v1054 = vrot.slane %v1044, %v1053
    %v1055 = vcombine.high %v1054, %v1054
    %v1057 = vunpack.c.l.s4 1966171168
    %v1058 = vunpack.c.0.s8 %v1057
    %v1059 = vlaneseq
    %v1060 = vshrl.u32 %v1059, 7
    %v1061 = vsub.s32 %v1058, %v1060
    %v1062 = vrot.slane %v1054, %v1061
    %v1064 = vunpack.c.l.s4 1966171168
    %v1065 = vunpack.c.0.s8 %v1064
    %v1066 = vlaneseq
    %v1067 = vshrl.u32 %v1066, 7
    %v1068 = vsub.s32 %v1065, %v1067
    %v1069 = vrot.slane %v1055, %v1068
    %1072 = vst.msk [vmem:[#allocation3 + $0x1] sm:$0x1] %vm573, %v1062
    %1073 = vst.msk [vmem:[#allocation3 + $0x9] sm:$0x1] %vm573, %v1069
    %s1074 = sld [smem:[#allocation4 + $0x2]]
    %v1075 = vstv %s1074
    %v1076 = vsel %vm261, %v1075, 0
    %s1077 = sld [smem:[#allocation4 + $0x82]]
    %v1078 = vstv %s1077
    %v1079 = vsel %vm265, %v1078, %v1076
    %vm1080 = vcmp.eq.s32.totalorder %v258, %v1079
    %v1081 = vsel %vm1080, 1, 0
    %v1082 = vcvt.s32.f32 %v1081
    %v1084 = vsel %vm272, %v1082, 0
    %1086 = vmatprep.subr.mxu0 0.0
    %1087 = vmatpush1.msra.mxu0 0.0
    %1088 = vmatprep.subr.mxu0 0.0
    %1089 = vmatpush1.msra.mxu0 0.0
    %1090 = vmatprep.subr.mxu0 0.0
    %1091 = vmatpush1.msra.mxu0 0.0
    %1092 = vmatprep.subr.mxu0 0.0
    %1093 = vmatpush1.msra.mxu0 0.0
    %1094 = vmatprep.subr.mxu0 0.0
    %1095 = vmatpush1.msra.mxu0 0.0
    %1096 = vmatprep.subr.mxu0 0.0
    %1097 = vmatpush1.msra.mxu0 0.0
    %1098 = vmatprep.subr.mxu0 0.0
    %1099 = vmatpush1.msra.mxu0 0.0
    %1100 = vmatprep.subr.mxu0 0.0
    %1101 = vmatpush1.msra.mxu0 0.0
    %1102 = vmatprep.subr.mxu0 0.0
    %1103 = vmatpush1.msra.mxu0 0.0
    %1104 = vmatprep.subr.mxu0 0.0
    %1105 = vmatpush1.msra.mxu0 0.0
    %1106 = vmatprep.subr.mxu0 0.0
    %1107 = vmatpush1.msra.mxu0 0.0
    %1108 = vmatprep.subr.mxu0 0.0
    %1109 = vmatpush1.msra.mxu0 0.0
    %1110 = vmatprep.subr.mxu0 0.0
    %1111 = vmatpush1.msra.mxu0 0.0
    %1112 = vmatprep.subr.mxu0 0.0
    %1113 = vmatpush1.msra.mxu0 %v278
    %1114 = vmatprep.subr.mxu0 0.0
    %1115 = vmatpush1.msra.mxu0 %v211
    %1116 = vmatprep.subr.mxu0 0.0
    %1117 = vmatpush1.msra.mxu0 %v210
    %1118 = vmatprep.subr.mxu0 0.0
    %1119 = vmatpush2.msra.mxu0 0.0
    %1120 = vmatprep.subr.mxu0 0.0
    %1121 = vmatpush2.msra.mxu0 0.0
    %1122 = vmatprep.subr.mxu0 0.0
    %1123 = vmatpush2.msra.mxu0 0.0
    %1124 = vmatprep.subr.mxu0 0.0
    %1125 = vmatpush2.msra.mxu0 0.0
    %1126 = vmatprep.subr.mxu0 0.0
    %1127 = vmatpush2.msra.mxu0 0.0
    %1128 = vmatprep.subr.mxu0 0.0
    %1129 = vmatpush2.msra.mxu0 0.0
    %1130 = vmatprep.subr.mxu0 0.0
    %1131 = vmatpush2.msra.mxu0 0.0
    %1132 = vmatprep.subr.mxu0 0.0
    %1133 = vmatpush2.msra.mxu0 0.0
    %1134 = vmatprep.subr.mxu0 0.0
    %1135 = vmatpush2.msra.mxu0 0.0
    %1136 = vmatprep.subr.mxu0 0.0
    %1137 = vmatpush2.msra.mxu0 0.0
    %1138 = vmatprep.subr.mxu0 0.0
    %1139 = vmatpush2.msra.mxu0 0.0
    %1140 = vmatprep.subr.mxu0 0.0
    %1141 = vmatpush2.msra.mxu0 0.0
    %1142 = vmatprep.subr.mxu0 0.0
    %1143 = vmatpush2.msra.mxu0 0.0
    %1144 = vmatprep.subr.mxu0 0.0
    %1145 = vmatpush2.msra.mxu0 0.0
    %1146 = vmatprep.subr.mxu0 0.0
    %1147 = vmatpush2.msra.mxu0 0.0
    %1148 = vmatprep.subr.mxu0 0.0
    %1149 = vmatpush2.msra.mxu0 0.0
    %1150 = vmatprep.mubr.f32.mxu0 0.0
    %1151 = vmatmul.mubr.f32.gmra.mxu0 %v1084
    %v1152 = vpop.f32.mrf.mxu0
    %v1153 = vadd.f32 0.0, %v1152
    %v1154 = vpop.f32.mrf.mxu0
    %1155 = vdwg.mxu0
    %v1157 = vsel %vm356, %v1153, 0
    %1159 = vmatprep.subr.mxu0 0.0
    %1160 = vmatpush1.msra.mxu0 0.0
    %1161 = vmatprep.subr.mxu0 0.0
    %1162 = vmatpush1.msra.mxu0 0.0
    %1163 = vmatprep.subr.mxu0 0.0
    %1164 = vmatpush1.msra.mxu0 0.0
    %1165 = vmatprep.subr.mxu0 0.0
    %1166 = vmatpush1.msra.mxu0 0.0
    %1167 = vmatprep.subr.mxu0 0.0
    %1168 = vmatpush1.msra.mxu0 0.0
    %1169 = vmatprep.subr.mxu0 0.0
    %1170 = vmatpush1.msra.mxu0 0.0
    %1171 = vmatprep.subr.mxu0 0.0
    %1172 = vmatpush1.msra.mxu0 0.0
    %1173 = vmatprep.subr.mxu0 0.0
    %1174 = vmatpush1.msra.mxu0 0.0
    %1175 = vmatprep.subr.mxu0 0.0
    %1176 = vmatpush1.msra.mxu0 0.0
    %1177 = vmatprep.subr.mxu0 0.0
    %1178 = vmatpush1.msra.mxu0 0.0
    %1179 = vmatprep.subr.mxu0 0.0
    %1180 = vmatpush1.msra.mxu0 0.0
    %1181 = vmatprep.subr.mxu0 0.0
    %1182 = vmatpush1.msra.mxu0 0.0
    %1183 = vmatprep.subr.mxu0 0.0
    %1184 = vmatpush1.msra.mxu0 0.0
    %1185 = vmatprep.subr.mxu0 0.0
    %1186 = vmatpush1.msra.mxu0 0.0
    %1187 = vmatprep.subr.mxu0 0.0
    %1188 = vmatpush1.msra.mxu0 %v217
    %1189 = vmatprep.subr.mxu0 0.0
    %1190 = vmatpush1.msra.mxu0 %v216
    %1191 = vmatprep.subr.mxu0 0.0
    %1192 = vmatpush2.msra.mxu0 0.0
    %1193 = vmatprep.subr.mxu0 0.0
    %1194 = vmatpush2.msra.mxu0 0.0
    %1195 = vmatprep.subr.mxu0 0.0
    %1196 = vmatpush2.msra.mxu0 0.0
    %1197 = vmatprep.subr.mxu0 0.0
    %1198 = vmatpush2.msra.mxu0 0.0
    %1199 = vmatprep.subr.mxu0 0.0
    %1200 = vmatpush2.msra.mxu0 0.0
    %1201 = vmatprep.subr.mxu0 0.0
    %1202 = vmatpush2.msra.mxu0 0.0
    %1203 = vmatprep.subr.mxu0 0.0
    %1204 = vmatpush2.msra.mxu0 0.0
    %1205 = vmatprep.subr.mxu0 0.0
    %1206 = vmatpush2.msra.mxu0 0.0
    %1207 = vmatprep.subr.mxu0 0.0
    %1208 = vmatpush2.msra.mxu0 0.0
    %1209 = vmatprep.subr.mxu0 0.0
    %1210 = vmatpush2.msra.mxu0 0.0
    %1211 = vmatprep.subr.mxu0 0.0
    %1212 = vmatpush2.msra.mxu0 0.0
    %1213 = vmatprep.subr.mxu0 0.0
    %1214 = vmatpush2.msra.mxu0 0.0
    %1215 = vmatprep.subr.mxu0 0.0
    %1216 = vmatpush2.msra.mxu0 0.0
    %1217 = vmatprep.subr.mxu0 0.0
    %1218 = vmatpush2.msra.mxu0 0.0
    %1219 = vmatprep.subr.mxu0 0.0
    %1220 = vmatpush2.msra.mxu0 0.0
    %1221 = vmatprep.subr.mxu0 0.0
    %1222 = vmatpush2.msra.mxu0 0.0
    %1223 = vmatprep.mubr.f32.mxu0 0.0
    %1224 = vmatmul.mubr.f32.gmra.mxu0 %v1157
    %v1225 = vpop.f32.mrf.mxu0
    %v1226 = vadd.f32 %v354, %v1225
    %v1227 = vpop.f32.mrf.mxu0
    %1228 = vdwg.mxu0
    %1229 = vmatprep.subr.mxu0 0.0
    %1230 = vmatpush1.msra.mxu0 0.0
    %1231 = vmatprep.subr.mxu0 0.0
    %1232 = vmatpush1.msra.mxu0 0.0
    %1233 = vmatprep.subr.mxu0 0.0
    %1234 = vmatpush1.msra.mxu0 0.0
    %1235 = vmatprep.subr.mxu0 0.0
    %1236 = vmatpush1.msra.mxu0 0.0
    %1237 = vmatprep.subr.mxu0 0.0
    %1238 = vmatpush1.msra.mxu0 0.0
    %1239 = vmatprep.subr.mxu0 0.0
    %1240 = vmatpush1.msra.mxu0 0.0
    %1241 = vmatprep.subr.mxu0 0.0
    %1242 = vmatpush1.msra.mxu0 0.0
    %1243 = vmatprep.subr.mxu0 0.0
    %1244 = vmatpush1.msra.mxu0 0.0
    %1245 = vmatprep.subr.mxu0 0.0
    %1246 = vmatpush1.msra.mxu0 0.0
    %1247 = vmatprep.subr.mxu0 0.0
    %1248 = vmatpush1.msra.mxu0 0.0
    %1249 = vmatprep.subr.mxu0 0.0
    %1250 = vmatpush1.msra.mxu0 0.0
    %1251 = vmatprep.subr.mxu0 0.0
    %1252 = vmatpush1.msra.mxu0 0.0
    %1253 = vmatprep.subr.mxu0 0.0
    %1254 = vmatpush1.msra.mxu0 %v221
    %1255 = vmatprep.subr.mxu0 0.0
    %1256 = vmatpush1.msra.mxu0 %v220
    %1257 = vmatprep.subr.mxu0 0.0
    %1258 = vmatpush1.msra.mxu0 %v219
    %1259 = vmatprep.subr.mxu0 0.0
    %1260 = vmatpush1.msra.mxu0 %v218
    %1261 = vmatprep.subr.mxu0 0.0
    %1262 = vmatpush2.msra.mxu0 0.0
    %1263 = vmatprep.subr.mxu0 0.0
    %1264 = vmatpush2.msra.mxu0 0.0
    %1265 = vmatprep.subr.mxu0 0.0
    %1266 = vmatpush2.msra.mxu0 0.0
    %1267 = vmatprep.subr.mxu0 0.0
    %1268 = vmatpush2.msra.mxu0 0.0
    %1269 = vmatprep.subr.mxu0 0.0
    %1270 = vmatpush2.msra.mxu0 0.0
    %1271 = vmatprep.subr.mxu0 0.0
    %1272 = vmatpush2.msra.mxu0 0.0
    %1273 = vmatprep.subr.mxu0 0.0
    %1274 = vmatpush2.msra.mxu0 0.0
    %1275 = vmatprep.subr.mxu0 0.0
    %1276 = vmatpush2.msra.mxu0 0.0
    %1277 = vmatprep.subr.mxu0 0.0
    %1278 = vmatpush2.msra.mxu0 0.0
    %1279 = vmatprep.subr.mxu0 0.0
    %1280 = vmatpush2.msra.mxu0 0.0
    %1281 = vmatprep.subr.mxu0 0.0
    %1282 = vmatpush2.msra.mxu0 0.0
    %1283 = vmatprep.subr.mxu0 0.0
    %1284 = vmatpush2.msra.mxu0 0.0
    %1285 = vmatprep.subr.mxu0 0.0
    %1286 = vmatpush2.msra.mxu0 0.0
    %1287 = vmatprep.subr.mxu0 0.0
    %1288 = vmatpush2.msra.mxu0 0.0
    %1289 = vmatprep.subr.mxu0 0.0
    %1290 = vmatpush2.msra.mxu0 0.0
    %1291 = vmatprep.subr.mxu0 0.0
    %1292 = vmatpush2.msra.mxu0 0.0
    %1293 = vmatprep.mubr.f32.mxu0 0.0
    %1294 = vmatmul.mubr.f32.gmra.mxu0 %v975
    %v1295 = vpop.f32.mrf.mxu0
    %v1296 = vadd.f32 %v434, %v1295
    %v1297 = vpop.f32.mrf.mxu0
    %1298 = vdwg.mxu0
    %v1299 = vadd.f32 %v1226, %v1296
    %v1300 = vxor.u32 %v1299, 2147483648
    %v1301 = vmul.f32 %v1300, 1.442695
    %v1302 = vpow.pop %v1301
    %v1303 = vadd.f32 %v1302, 1.0
    %v1304 = vrcp.pop %v1303
    %v1305 = vmul.f32 1.0, %v1304
    %1307 = vrot.lane.b32.xlu0 %v1296, 64
    %v1308 = vpop.permute.xlu0 %1307
    %v1310 = vmul.f32 %v1305, %v1308
    %1312 = vrot.lane.b32.xlu0 %v1310, 64
    %v1313 = vpop.permute.xlu0 %1312
    %v1315 = vadd.f32 %v1226, %v1313
    %v1316 = vtanh.pop %v1315
    %v1317 = vsub.f32 1.0, %v1305
    %1319 = vrot.lane.b32.xlu0 %v1316, 96
    %v1320 = vpop.permute.xlu0 %1319
    %v1322 = vmul.f32 %v1317, %v1320
    %v1323 = vmul.f32 %v1305, %v933
    %v1324 = vadd.f32 %v1322, %v1323
    %v1327 = vunpack.c.l.s4 1966171168
    %v1328 = vunpack.c.0.s8 %v1327
    %v1329 = vlaneseq
    %v1330 = vshrl.u32 %v1329, 7
    %v1331 = vsub.s32 %v1328, %v1330
    %v1332 = vrot.slane %v1324, %v1331
    %v1333 = vcombine.high %v1332, %v1332
    %v1335 = vunpack.c.l.s4 1966171168
    %v1336 = vunpack.c.0.s8 %v1335
    %v1337 = vlaneseq
    %v1338 = vshrl.u32 %v1337, 7
    %v1339 = vsub.s32 %v1336, %v1338
    %v1340 = vrot.slane %v1332, %v1339
    %v1342 = vunpack.c.l.s4 1966171168
    %v1343 = vunpack.c.0.s8 %v1342
    %v1344 = vlaneseq
    %v1345 = vshrl.u32 %v1344, 7
    %v1346 = vsub.s32 %v1343, %v1345
    %v1347 = vrot.slane %v1333, %v1346
    %v1348 = vlaneseq
    %v1349 = vshrl.u32 %v1348, 7
    %v1350 = vsub.s32 0, %v1349
    %v1351 = vrot.slane %v1340, %v1350
    %v1352 = vlaneseq
    %v1353 = vshrl.u32 %v1352, 7
    %v1354 = vsub.s32 0, %v1353
    %v1355 = vrot.slane %v1347, %v1354
    %1356 = vrot.lane.b32.xlu0 %v1351, 96
    %v1357 = vpop.permute.xlu0 %1356
    %1358 = vrot.lane.b32.xlu0 %v1355, 96
    %v1359 = vpop.permute.xlu0 %1358
    %1362 = vst.msk [vmem:[#allocation2 + $0x2] sm:$0x1] %vm573, %v1357
    %1363 = vst.msk [vmem:[#allocation2 + $0xa] sm:$0x1] %vm573, %v1359
    %1364 = vrot.lane.b32.xlu0 %v1324, 96
    %v1365 = vpop.permute.xlu0 %1364
    %v1366 = vsel %vm436, %v1365, 0
    %1368 = vmatprep.subr.mxu0 0.0
    %1369 = vmatpush1.msra.mxu0 0.0
    %1370 = vmatprep.subr.mxu0 0.0
    %1371 = vmatpush1.msra.mxu0 0.0
    %1372 = vmatprep.subr.mxu0 0.0
    %1373 = vmatpush1.msra.mxu0 0.0
    %1374 = vmatprep.subr.mxu0 0.0
    %1375 = vmatpush1.msra.mxu0 0.0
    %1376 = vmatprep.subr.mxu0 0.0
    %1377 = vmatpush1.msra.mxu0 0.0
    %1378 = vmatprep.subr.mxu0 0.0
    %1379 = vmatpush1.msra.mxu0 0.0
    %1380 = vmatprep.subr.mxu0 0.0
    %1381 = vmatpush1.msra.mxu0 0.0
    %1382 = vmatprep.subr.mxu0 0.0
    %1383 = vmatpush1.msra.mxu0 0.0
    %1384 = vmatprep.subr.mxu0 0.0
    %1385 = vmatpush1.msra.mxu0 0.0
    %1386 = vmatprep.subr.mxu0 0.0
    %1387 = vmatpush1.msra.mxu0 0.0
    %1388 = vmatprep.subr.mxu0 0.0
    %1389 = vmatpush1.msra.mxu0 0.0
    %1390 = vmatprep.subr.mxu0 0.0
    %1391 = vmatpush1.msra.mxu0 0.0
    %1392 = vmatprep.subr.mxu0 0.0
    %1393 = vmatpush1.msra.mxu0 %v231
    %1394 = vmatprep.subr.mxu0 0.0
    %1395 = vmatpush1.msra.mxu0 %v230
    %1396 = vmatprep.subr.mxu0 0.0
    %1397 = vmatpush1.msra.mxu0 %v229
    %1398 = vmatprep.subr.mxu0 0.0
    %1399 = vmatpush1.msra.mxu0 %v228
    %1400 = vmatprep.subr.mxu0 0.0
    %1401 = vmatpush2.msra.mxu0 0.0
    %1402 = vmatprep.subr.mxu0 0.0
    %1403 = vmatpush2.msra.mxu0 0.0
    %1404 = vmatprep.subr.mxu0 0.0
    %1405 = vmatpush2.msra.mxu0 0.0
    %1406 = vmatprep.subr.mxu0 0.0
    %1407 = vmatpush2.msra.mxu0 0.0
    %1408 = vmatprep.subr.mxu0 0.0
    %1409 = vmatpush2.msra.mxu0 0.0
    %1410 = vmatprep.subr.mxu0 0.0
    %1411 = vmatpush2.msra.mxu0 0.0
    %1412 = vmatprep.subr.mxu0 0.0
    %1413 = vmatpush2.msra.mxu0 0.0
    %1414 = vmatprep.subr.mxu0 0.0
    %1415 = vmatpush2.msra.mxu0 0.0
    %1416 = vmatprep.subr.mxu0 0.0
    %1417 = vmatpush2.msra.mxu0 0.0
    %1418 = vmatprep.subr.mxu0 0.0
    %1419 = vmatpush2.msra.mxu0 0.0
    %1420 = vmatprep.subr.mxu0 0.0
    %1421 = vmatpush2.msra.mxu0 0.0
    %1422 = vmatprep.subr.mxu0 0.0
    %1423 = vmatpush2.msra.mxu0 0.0
    %1424 = vmatprep.subr.mxu0 0.0
    %1425 = vmatpush2.msra.mxu0 0.0
    %1426 = vmatprep.subr.mxu0 0.0
    %1427 = vmatpush2.msra.mxu0 0.0
    %1428 = vmatprep.subr.mxu0 0.0
    %1429 = vmatpush2.msra.mxu0 0.0
    %1430 = vmatprep.subr.mxu0 0.0
    %1431 = vmatpush2.msra.mxu0 0.0
    %1432 = vmatprep.mubr.f32.mxu0 0.0
    %1433 = vmatmul.mubr.f32.gmra.mxu0 %v1366
    %v1434 = vpop.f32.mrf.mxu0
    %v1435 = vadd.f32 %v580, %v1434
    %v1436 = vpop.f32.mrf.mxu0
    %1437 = vdwg.mxu0
    %v1440 = vunpack.c.l.s4 1966171168
    %v1441 = vunpack.c.0.s8 %v1440
    %v1442 = vlaneseq
    %v1443 = vshrl.u32 %v1442, 7
    %v1444 = vsub.s32 %v1441, %v1443
    %v1445 = vrot.slane %v1435, %v1444
    %v1446 = vcombine.high %v1445, %v1445
    %v1448 = vunpack.c.l.s4 1966171168
    %v1449 = vunpack.c.0.s8 %v1448
    %v1450 = vlaneseq
    %v1451 = vshrl.u32 %v1450, 7
    %v1452 = vsub.s32 %v1449, %v1451
    %v1453 = vrot.slane %v1445, %v1452
    %v1455 = vunpack.c.l.s4 1966171168
    %v1456 = vunpack.c.0.s8 %v1455
    %v1457 = vlaneseq
    %v1458 = vshrl.u32 %v1457, 7
    %v1459 = vsub.s32 %v1456, %v1458
    %v1460 = vrot.slane %v1446, %v1459
    %1463 = vst.msk [vmem:[#allocation3 + $0x2] sm:$0x1] %vm573, %v1453
    %1464 = vst.msk [vmem:[#allocation3 + $0xa] sm:$0x1] %vm573, %v1460
    %s1465 = sld [smem:[#allocation4 + $0x3]]
    %v1466 = vstv %s1465
    %v1467 = vsel %vm261, %v1466, 0
    %s1468 = sld [smem:[#allocation4 + $0x83]]
    %v1469 = vstv %s1468
    %v1470 = vsel %vm265, %v1469, %v1467
    %vm1471 = vcmp.eq.s32.totalorder %v258, %v1470
    %v1472 = vsel %vm1471, 1, 0
    %v1473 = vcvt.s32.f32 %v1472
    %v1475 = vsel %vm272, %v1473, 0
    %1477 = vmatprep.subr.mxu0 0.0
    %1478 = vmatpush1.msra.mxu0 0.0
    %1479 = vmatprep.subr.mxu0 0.0
    %1480 = vmatpush1.msra.mxu0 0.0
    %1481 = vmatprep.subr.mxu0 0.0
    %1482 = vmatpush1.msra.mxu0 0.0
    %1483 = vmatprep.subr.mxu0 0.0
    %1484 = vmatpush1.msra.mxu0 0.0
    %1485 = vmatprep.subr.mxu0 0.0
    %1486 = vmatpush1.msra.mxu0 0.0
    %1487 = vmatprep.subr.mxu0 0.0
    %1488 = vmatpush1.msra.mxu0 0.0
    %1489 = vmatprep.subr.mxu0 0.0
    %1490 = vmatpush1.msra.mxu0 0.0
    %1491 = vmatprep.subr.mxu0 0.0
    %1492 = vmatpush1.msra.mxu0 0.0
    %1493 = vmatprep.subr.mxu0 0.0
    %1494 = vmatpush1.msra.mxu0 0.0
    %1495 = vmatprep.subr.mxu0 0.0
    %1496 = vmatpush1.msra.mxu0 0.0
    %1497 = vmatprep.subr.mxu0 0.0
    %1498 = vmatpush1.msra.mxu0 0.0
    %1499 = vmatprep.subr.mxu0 0.0
    %1500 = vmatpush1.msra.mxu0 0.0
    %1501 = vmatprep.subr.mxu0 0.0
    %1502 = vmatpush1.msra.mxu0 0.0
    %1503 = vmatprep.subr.mxu0 0.0
    %1504 = vmatpush1.msra.mxu0 %v278
    %1505 = vmatprep.subr.mxu0 0.0
    %1506 = vmatpush1.msra.mxu0 %v211
    %1507 = vmatprep.subr.mxu0 0.0
    %1508 = vmatpush1.msra.mxu0 %v210
    %1509 = vmatprep.subr.mxu0 0.0
    %1510 = vmatpush2.msra.mxu0 0.0
    %1511 = vmatprep.subr.mxu0 0.0
    %1512 = vmatpush2.msra.mxu0 0.0
    %1513 = vmatprep.subr.mxu0 0.0
    %1514 = vmatpush2.msra.mxu0 0.0
    %1515 = vmatprep.subr.mxu0 0.0
    %1516 = vmatpush2.msra.mxu0 0.0
    %1517 = vmatprep.subr.mxu0 0.0
    %1518 = vmatpush2.msra.mxu0 0.0
    %1519 = vmatprep.subr.mxu0 0.0
    %1520 = vmatpush2.msra.mxu0 0.0
    %1521 = vmatprep.subr.mxu0 0.0
    %1522 = vmatpush2.msra.mxu0 0.0
    %1523 = vmatprep.subr.mxu0 0.0
    %1524 = vmatpush2.msra.mxu0 0.0
    %1525 = vmatprep.subr.mxu0 0.0
    %1526 = vmatpush2.msra.mxu0 0.0
    %1527 = vmatprep.subr.mxu0 0.0
    %1528 = vmatpush2.msra.mxu0 0.0
    %1529 = vmatprep.subr.mxu0 0.0
    %1530 = vmatpush2.msra.mxu0 0.0
    %1531 = vmatprep.subr.mxu0 0.0
    %1532 = vmatpush2.msra.mxu0 0.0
    %1533 = vmatprep.subr.mxu0 0.0
    %1534 = vmatpush2.msra.mxu0 0.0
    %1535 = vmatprep.subr.mxu0 0.0
    %1536 = vmatpush2.msra.mxu0 0.0
    %1537 = vmatprep.subr.mxu0 0.0
    %1538 = vmatpush2.msra.mxu0 0.0
    %1539 = vmatprep.subr.mxu0 0.0
    %1540 = vmatpush2.msra.mxu0 0.0
    %1541 = vmatprep.mubr.f32.mxu0 0.0
    %1542 = vmatmul.mubr.f32.gmra.mxu0 %v1475
    %v1543 = vpop.f32.mrf.mxu0
    %v1544 = vadd.f32 0.0, %v1543
    %v1545 = vpop.f32.mrf.mxu0
    %1546 = vdwg.mxu0
    %v1548 = vsel %vm356, %v1544, 0
    %1550 = vmatprep.subr.mxu0 0.0
    %1551 = vmatpush1.msra.mxu0 0.0
    %1552 = vmatprep.subr.mxu0 0.0
    %1553 = vmatpush1.msra.mxu0 0.0
    %1554 = vmatprep.subr.mxu0 0.0
    %1555 = vmatpush1.msra.mxu0 0.0
    %1556 = vmatprep.subr.mxu0 0.0
    %1557 = vmatpush1.msra.mxu0 0.0
    %1558 = vmatprep.subr.mxu0 0.0
    %1559 = vmatpush1.msra.mxu0 0.0
    %1560 = vmatprep.subr.mxu0 0.0
    %1561 = vmatpush1.msra.mxu0 0.0
    %1562 = vmatprep.subr.mxu0 0.0
    %1563 = vmatpush1.msra.mxu0 0.0
    %1564 = vmatprep.subr.mxu0 0.0
    %1565 = vmatpush1.msra.mxu0 0.0
    %1566 = vmatprep.subr.mxu0 0.0
    %1567 = vmatpush1.msra.mxu0 0.0
    %1568 = vmatprep.subr.mxu0 0.0
    %1569 = vmatpush1.msra.mxu0 0.0
    %1570 = vmatprep.subr.mxu0 0.0
    %1571 = vmatpush1.msra.mxu0 0.0
    %1572 = vmatprep.subr.mxu0 0.0
    %1573 = vmatpush1.msra.mxu0 0.0
    %1574 = vmatprep.subr.mxu0 0.0
    %1575 = vmatpush1.msra.mxu0 0.0
    %1576 = vmatprep.subr.mxu0 0.0
    %1577 = vmatpush1.msra.mxu0 0.0
    %1578 = vmatprep.subr.mxu0 0.0
    %1579 = vmatpush1.msra.mxu0 %v217
    %1580 = vmatprep.subr.mxu0 0.0
    %1581 = vmatpush1.msra.mxu0 %v216
    %1582 = vmatprep.subr.mxu0 0.0
    %1583 = vmatpush2.msra.mxu0 0.0
    %1584 = vmatprep.subr.mxu0 0.0
    %1585 = vmatpush2.msra.mxu0 0.0
    %1586 = vmatprep.subr.mxu0 0.0
    %1587 = vmatpush2.msra.mxu0 0.0
    %1588 = vmatprep.subr.mxu0 0.0
    %1589 = vmatpush2.msra.mxu0 0.0
    %1590 = vmatprep.subr.mxu0 0.0
    %1591 = vmatpush2.msra.mxu0 0.0
    %1592 = vmatprep.subr.mxu0 0.0
    %1593 = vmatpush2.msra.mxu0 0.0
    %1594 = vmatprep.subr.mxu0 0.0
    %1595 = vmatpush2.msra.mxu0 0.0
    %1596 = vmatprep.subr.mxu0 0.0
    %1597 = vmatpush2.msra.mxu0 0.0
    %1598 = vmatprep.subr.mxu0 0.0
    %1599 = vmatpush2.msra.mxu0 0.0
    %1600 = vmatprep.subr.mxu0 0.0
    %1601 = vmatpush2.msra.mxu0 0.0
    %1602 = vmatprep.subr.mxu0 0.0
    %1603 = vmatpush2.msra.mxu0 0.0
    %1604 = vmatprep.subr.mxu0 0.0
    %1605 = vmatpush2.msra.mxu0 0.0
    %1606 = vmatprep.subr.mxu0 0.0
    %1607 = vmatpush2.msra.mxu0 0.0
    %1608 = vmatprep.subr.mxu0 0.0
    %1609 = vmatpush2.msra.mxu0 0.0
    %1610 = vmatprep.subr.mxu0 0.0
    %1611 = vmatpush2.msra.mxu0 0.0
    %1612 = vmatprep.subr.mxu0 0.0
    %1613 = vmatpush2.msra.mxu0 0.0
    %1614 = vmatprep.mubr.f32.mxu0 0.0
    %1615 = vmatmul.mubr.f32.gmra.mxu0 %v1548
    %v1616 = vpop.f32.mrf.mxu0
    %v1617 = vadd.f32 %v354, %v1616
    %v1618 = vpop.f32.mrf.mxu0
    %1619 = vdwg.mxu0
    %1620 = vmatprep.subr.mxu0 0.0
    %1621 = vmatpush1.msra.mxu0 0.0
    %1622 = vmatprep.subr.mxu0 0.0
    %1623 = vmatpush1.msra.mxu0 0.0
    %1624 = vmatprep.subr.mxu0 0.0
    %1625 = vmatpush1.msra.mxu0 0.0
    %1626 = vmatprep.subr.mxu0 0.0
    %1627 = vmatpush1.msra.mxu0 0.0
    %1628 = vmatprep.subr.mxu0 0.0
    %1629 = vmatpush1.msra.mxu0 0.0
    %1630 = vmatprep.subr.mxu0 0.0
    %1631 = vmatpush1.msra.mxu0 0.0
    %1632 = vmatprep.subr.mxu0 0.0
    %1633 = vmatpush1.msra.mxu0 0.0
    %1634 = vmatprep.subr.mxu0 0.0
    %1635 = vmatpush1.msra.mxu0 0.0
    %1636 = vmatprep.subr.mxu0 0.0
    %1637 = vmatpush1.msra.mxu0 0.0
    %1638 = vmatprep.subr.mxu0 0.0
    %1639 = vmatpush1.msra.mxu0 0.0
    %1640 = vmatprep.subr.mxu0 0.0
    %1641 = vmatpush1.msra.mxu0 0.0
    %1642 = vmatprep.subr.mxu0 0.0
    %1643 = vmatpush1.msra.mxu0 0.0
    %1644 = vmatprep.subr.mxu0 0.0
    %1645 = vmatpush1.msra.mxu0 %v221
    %1646 = vmatprep.subr.mxu0 0.0
    %1647 = vmatpush1.msra.mxu0 %v220
    %1648 = vmatprep.subr.mxu0 0.0
    %1649 = vmatpush1.msra.mxu0 %v219
    %1650 = vmatprep.subr.mxu0 0.0
    %1651 = vmatpush1.msra.mxu0 %v218
    %1652 = vmatprep.subr.mxu0 0.0
    %1653 = vmatpush2.msra.mxu0 0.0
    %1654 = vmatprep.subr.mxu0 0.0
    %1655 = vmatpush2.msra.mxu0 0.0
    %1656 = vmatprep.subr.mxu0 0.0
    %1657 = vmatpush2.msra.mxu0 0.0
    %1658 = vmatprep.subr.mxu0 0.0
    %1659 = vmatpush2.msra.mxu0 0.0
    %1660 = vmatprep.subr.mxu0 0.0
    %1661 = vmatpush2.msra.mxu0 0.0
    %1662 = vmatprep.subr.mxu0 0.0
    %1663 = vmatpush2.msra.mxu0 0.0
    %1664 = vmatprep.subr.mxu0 0.0
    %1665 = vmatpush2.msra.mxu0 0.0
    %1666 = vmatprep.subr.mxu0 0.0
    %1667 = vmatpush2.msra.mxu0 0.0
    %1668 = vmatprep.subr.mxu0 0.0
    %1669 = vmatpush2.msra.mxu0 0.0
    %1670 = vmatprep.subr.mxu0 0.0
    %1671 = vmatpush2.msra.mxu0 0.0
    %1672 = vmatprep.subr.mxu0 0.0
    %1673 = vmatpush2.msra.mxu0 0.0
    %1674 = vmatprep.subr.mxu0 0.0
    %1675 = vmatpush2.msra.mxu0 0.0
    %1676 = vmatprep.subr.mxu0 0.0
    %1677 = vmatpush2.msra.mxu0 0.0
    %1678 = vmatprep.subr.mxu0 0.0
    %1679 = vmatpush2.msra.mxu0 0.0
    %1680 = vmatprep.subr.mxu0 0.0
    %1681 = vmatpush2.msra.mxu0 0.0
    %1682 = vmatprep.subr.mxu0 0.0
    %1683 = vmatpush2.msra.mxu0 0.0
    %1684 = vmatprep.mubr.f32.mxu0 0.0
    %1685 = vmatmul.mubr.f32.gmra.mxu0 %v1366
    %v1686 = vpop.f32.mrf.mxu0
    %v1687 = vadd.f32 %v434, %v1686
    %v1688 = vpop.f32.mrf.mxu0
    %1689 = vdwg.mxu0
    %v1690 = vadd.f32 %v1617, %v1687
    %v1691 = vxor.u32 %v1690, 2147483648
    %v1692 = vmul.f32 %v1691, 1.442695
    %v1693 = vpow.pop %v1692
    %v1694 = vadd.f32 %v1693, 1.0
    %v1695 = vrcp.pop %v1694
    %v1696 = vmul.f32 1.0, %v1695
    %1698 = vrot.lane.b32.xlu0 %v1687, 64
    %v1699 = vpop.permute.xlu0 %1698
    %v1701 = vmul.f32 %v1696, %v1699
    %1703 = vrot.lane.b32.xlu0 %v1701, 64
    %v1704 = vpop.permute.xlu0 %1703
    %v1706 = vadd.f32 %v1617, %v1704
    %v1707 = vtanh.pop %v1706
    %v1708 = vsub.f32 1.0, %v1696
    %1710 = vrot.lane.b32.xlu0 %v1707, 96
    %v1711 = vpop.permute.xlu0 %1710
    %v1713 = vmul.f32 %v1708, %v1711
    %v1714 = vmul.f32 %v1696, %v1324
    %v1715 = vadd.f32 %v1713, %v1714
    %v1718 = vunpack.c.l.s4 1966171168
    %v1719 = vunpack.c.0.s8 %v1718
    %v1720 = vlaneseq
    %v1721 = vshrl.u32 %v1720, 7
    %v1722 = vsub.s32 %v1719, %v1721
    %v1723 = vrot.slane %v1715, %v1722
    %v1724 = vcombine.high %v1723, %v1723
    %v1726 = vunpack.c.l.s4 1966171168
    %v1727 = vunpack.c.0.s8 %v1726
    %v1728 = vlaneseq
    %v1729 = vshrl.u32 %v1728, 7
    %v1730 = vsub.s32 %v1727, %v1729
    %v1731 = vrot.slane %v1723, %v1730
    %v1733 = vunpack.c.l.s4 1966171168
    %v1734 = vunpack.c.0.s8 %v1733
    %v1735 = vlaneseq
    %v1736 = vshrl.u32 %v1735, 7
    %v1737 = vsub.s32 %v1734, %v1736
    %v1738 = vrot.slane %v1724, %v1737
    %v1739 = vlaneseq
    %v1740 = vshrl.u32 %v1739, 7
    %v1741 = vsub.s32 0, %v1740
    %v1742 = vrot.slane %v1731, %v1741
    %v1743 = vlaneseq
    %v1744 = vshrl.u32 %v1743, 7
    %v1745 = vsub.s32 0, %v1744
    %v1746 = vrot.slane %v1738, %v1745
    %1747 = vrot.lane.b32.xlu0 %v1742, 96
    %v1748 = vpop.permute.xlu0 %1747
    %1749 = vrot.lane.b32.xlu0 %v1746, 96
    %v1750 = vpop.permute.xlu0 %1749
    %1753 = vst.msk [vmem:[#allocation2 + $0x3] sm:$0x1] %vm573, %v1748
    %1754 = vst.msk [vmem:[#allocation2 + $0xb] sm:$0x1] %vm573, %v1750
    %1755 = vrot.lane.b32.xlu0 %v1715, 96
    %v1756 = vpop.permute.xlu0 %1755
    %v1757 = vsel %vm436, %v1756, 0
    %1759 = vmatprep.subr.mxu0 0.0
    %1760 = vmatpush1.msra.mxu0 0.0
    %1761 = vmatprep.subr.mxu0 0.0
    %1762 = vmatpush1.msra.mxu0 0.0
    %1763 = vmatprep.subr.mxu0 0.0
    %1764 = vmatpush1.msra.mxu0 0.0
    %1765 = vmatprep.subr.mxu0 0.0
    %1766 = vmatpush1.msra.mxu0 0.0
    %1767 = vmatprep.subr.mxu0 0.0
    %1768 = vmatpush1.msra.mxu0 0.0
    %1769 = vmatprep.subr.mxu0 0.0
    %1770 = vmatpush1.msra.mxu0 0.0
    %1771 = vmatprep.subr.mxu0 0.0
    %1772 = vmatpush1.msra.mxu0 0.0
    %1773 = vmatprep.subr.mxu0 0.0
    %1774 = vmatpush1.msra.mxu0 0.0
    %1775 = vmatprep.subr.mxu0 0.0
    %1776 = vmatpush1.msra.mxu0 0.0
    %1777 = vmatprep.subr.mxu0 0.0
    %1778 = vmatpush1.msra.mxu0 0.0
    %1779 = vmatprep.subr.mxu0 0.0
    %1780 = vmatpush1.msra.mxu0 0.0
    %1781 = vmatprep.subr.mxu0 0.0
    %1782 = vmatpush1.msra.mxu0 0.0
    %1783 = vmatprep.subr.mxu0 0.0
    %1784 = vmatpush1.msra.mxu0 %v231
    %1785 = vmatprep.subr.mxu0 0.0
    %1786 = vmatpush1.msra.mxu0 %v230
    %1787 = vmatprep.subr.mxu0 0.0
    %1788 = vmatpush1.msra.mxu0 %v229
    %1789 = vmatprep.subr.mxu0 0.0
    %1790 = vmatpush1.msra.mxu0 %v228
    %1791 = vmatprep.subr.mxu0 0.0
    %1792 = vmatpush2.msra.mxu0 0.0
    %1793 = vmatprep.subr.mxu0 0.0
    %1794 = vmatpush2.msra.mxu0 0.0
    %1795 = vmatprep.subr.mxu0 0.0
    %1796 = vmatpush2.msra.mxu0 0.0
    %1797 = vmatprep.subr.mxu0 0.0
    %1798 = vmatpush2.msra.mxu0 0.0
    %1799 = vmatprep.subr.mxu0 0.0
    %1800 = vmatpush2.msra.mxu0 0.0
    %1801 = vmatprep.subr.mxu0 0.0
    %1802 = vmatpush2.msra.mxu0 0.0
    %1803 = vmatprep.subr.mxu0 0.0
    %1804 = vmatpush2.msra.mxu0 0.0
    %1805 = vmatprep.subr.mxu0 0.0
    %1806 = vmatpush2.msra.mxu0 0.0
    %1807 = vmatprep.subr.mxu0 0.0
    %1808 = vmatpush2.msra.mxu0 0.0
    %1809 = vmatprep.subr.mxu0 0.0
    %1810 = vmatpush2.msra.mxu0 0.0
    %1811 = vmatprep.subr.mxu0 0.0
    %1812 = vmatpush2.msra.mxu0 0.0
    %1813 = vmatprep.subr.mxu0 0.0
    %1814 = vmatpush2.msra.mxu0 0.0
    %1815 = vmatprep.subr.mxu0 0.0
    %1816 = vmatpush2.msra.mxu0 0.0
    %1817 = vmatprep.subr.mxu0 0.0
    %1818 = vmatpush2.msra.mxu0 0.0
    %1819 = vmatprep.subr.mxu0 0.0
    %1820 = vmatpush2.msra.mxu0 0.0
    %1821 = vmatprep.subr.mxu0 0.0
    %1822 = vmatpush2.msra.mxu0 0.0
    %1823 = vmatprep.mubr.f32.mxu0 0.0
    %1824 = vmatmul.mubr.f32.gmra.mxu0 %v1757
    %v1825 = vpop.f32.mrf.mxu0
    %v1826 = vadd.f32 %v580, %v1825
    %v1827 = vpop.f32.mrf.mxu0
    %1828 = vdwg.mxu0
    %v1831 = vunpack.c.l.s4 1966171168
    %v1832 = vunpack.c.0.s8 %v1831
    %v1833 = vlaneseq
    %v1834 = vshrl.u32 %v1833, 7
    %v1835 = vsub.s32 %v1832, %v1834
    %v1836 = vrot.slane %v1826, %v1835
    %v1837 = vcombine.high %v1836, %v1836
    %v1839 = vunpack.c.l.s4 1966171168
    %v1840 = vunpack.c.0.s8 %v1839
    %v1841 = vlaneseq
    %v1842 = vshrl.u32 %v1841, 7
    %v1843 = vsub.s32 %v1840, %v1842
    %v1844 = vrot.slane %v1836, %v1843
    %v1846 = vunpack.c.l.s4 1966171168
    %v1847 = vunpack.c.0.s8 %v1846
    %v1848 = vlaneseq
    %v1849 = vshrl.u32 %v1848, 7
    %v1850 = vsub.s32 %v1847, %v1849
    %v1851 = vrot.slane %v1837, %v1850
    %1854 = vst.msk [vmem:[#allocation3 + $0x3] sm:$0x1] %vm573, %v1844
    %1855 = vst.msk [vmem:[#allocation3 + $0xb] sm:$0x1] %vm573, %v1851
    %s1856 = sld [smem:[#allocation4 + $0x4]]
    %v1857 = vstv %s1856
    %v1858 = vsel %vm261, %v1857, 0
    %s1859 = sld [smem:[#allocation4 + $0x84]]
    %v1860 = vstv %s1859
    %v1861 = vsel %vm265, %v1860, %v1858
    %vm1862 = vcmp.eq.s32.totalorder %v258, %v1861
    %v1863 = vsel %vm1862, 1, 0
    %v1864 = vcvt.s32.f32 %v1863
    %v1866 = vsel %vm272, %v1864, 0
    %1868 = vmatprep.subr.mxu0 0.0
    %1869 = vmatpush1.msra.mxu0 0.0
    %1870 = vmatprep.subr.mxu0 0.0
    %1871 = vmatpush1.msra.mxu0 0.0
    %1872 = vmatprep.subr.mxu0 0.0
    %1873 = vmatpush1.msra.mxu0 0.0
    %1874 = vmatprep.subr.mxu0 0.0
    %1875 = vmatpush1.msra.mxu0 0.0
    %1876 = vmatprep.subr.mxu0 0.0
    %1877 = vmatpush1.msra.mxu0 0.0
    %1878 = vmatprep.subr.mxu0 0.0
    %1879 = vmatpush1.msra.mxu0 0.0
    %1880 = vmatprep.subr.mxu0 0.0
    %1881 = vmatpush1.msra.mxu0 0.0
    %1882 = vmatprep.subr.mxu0 0.0
    %1883 = vmatpush1.msra.mxu0 0.0
    %1884 = vmatprep.subr.mxu0 0.0
    %1885 = vmatpush1.msra.mxu0 0.0
    %1886 = vmatprep.subr.mxu0 0.0
    %1887 = vmatpush1.msra.mxu0 0.0
    %1888 = vmatprep.subr.mxu0 0.0
    %1889 = vmatpush1.msra.mxu0 0.0
    %1890 = vmatprep.subr.mxu0 0.0
    %1891 = vmatpush1.msra.mxu0 0.0
    %1892 = vmatprep.subr.mxu0 0.0
    %1893 = vmatpush1.msra.mxu0 0.0
    %1894 = vmatprep.subr.mxu0 0.0
    %1895 = vmatpush1.msra.mxu0 %v278
    %1896 = vmatprep.subr.mxu0 0.0
    %1897 = vmatpush1.msra.mxu0 %v211
    %1898 = vmatprep.subr.mxu0 0.0
    %1899 = vmatpush1.msra.mxu0 %v210
    %1900 = vmatprep.subr.mxu0 0.0
    %1901 = vmatpush2.msra.mxu0 0.0
    %1902 = vmatprep.subr.mxu0 0.0
    %1903 = vmatpush2.msra.mxu0 0.0
    %1904 = vmatprep.subr.mxu0 0.0
    %1905 = vmatpush2.msra.mxu0 0.0
    %1906 = vmatprep.subr.mxu0 0.0
    %1907 = vmatpush2.msra.mxu0 0.0
    %1908 = vmatprep.subr.mxu0 0.0
    %1909 = vmatpush2.msra.mxu0 0.0
    %1910 = vmatprep.subr.mxu0 0.0
    %1911 = vmatpush2.msra.mxu0 0.0
    %1912 = vmatprep.subr.mxu0 0.0
    %1913 = vmatpush2.msra.mxu0 0.0
    %1914 = vmatprep.subr.mxu0 0.0
    %1915 = vmatpush2.msra.mxu0 0.0
    %1916 = vmatprep.subr.mxu0 0.0
    %1917 = vmatpush2.msra.mxu0 0.0
    %1918 = vmatprep.subr.mxu0 0.0
    %1919 = vmatpush2.msra.mxu0 0.0
    %1920 = vmatprep.subr.mxu0 0.0
    %1921 = vmatpush2.msra.mxu0 0.0
    %1922 = vmatprep.subr.mxu0 0.0
    %1923 = vmatpush2.msra.mxu0 0.0
    %1924 = vmatprep.subr.mxu0 0.0
    %1925 = vmatpush2.msra.mxu0 0.0
    %1926 = vmatprep.subr.mxu0 0.0
    %1927 = vmatpush2.msra.mxu0 0.0
    %1928 = vmatprep.subr.mxu0 0.0
    %1929 = vmatpush2.msra.mxu0 0.0
    %1930 = vmatprep.subr.mxu0 0.0
    %1931 = vmatpush2.msra.mxu0 0.0
    %1932 = vmatprep.mubr.f32.mxu0 0.0
    %1933 = vmatmul.mubr.f32.gmra.mxu0 %v1866
    %v1934 = vpop.f32.mrf.mxu0
    %v1935 = vadd.f32 0.0, %v1934
    %v1936 = vpop.f32.mrf.mxu0
    %1937 = vdwg.mxu0
    %v1939 = vsel %vm356, %v1935, 0
    %1941 = vmatprep.subr.mxu0 0.0
    %1942 = vmatpush1.msra.mxu0 0.0
    %1943 = vmatprep.subr.mxu0 0.0
    %1944 = vmatpush1.msra.mxu0 0.0
    %1945 = vmatprep.subr.mxu0 0.0
    %1946 = vmatpush1.msra.mxu0 0.0
    %1947 = vmatprep.subr.mxu0 0.0
    %1948 = vmatpush1.msra.mxu0 0.0
    %1949 = vmatprep.subr.mxu0 0.0
    %1950 = vmatpush1.msra.mxu0 0.0
    %1951 = vmatprep.subr.mxu0 0.0
    %1952 = vmatpush1.msra.mxu0 0.0
    %1953 = vmatprep.subr.mxu0 0.0
    %1954 = vmatpush1.msra.mxu0 0.0
    %1955 = vmatprep.subr.mxu0 0.0
    %1956 = vmatpush1.msra.mxu0 0.0
    %1957 = vmatprep.subr.mxu0 0.0
    %1958 = vmatpush1.msra.mxu0 0.0
    %1959 = vmatprep.subr.mxu0 0.0
    %1960 = vmatpush1.msra.mxu0 0.0
    %1961 = vmatprep.subr.mxu0 0.0
    %1962 = vmatpush1.msra.mxu0 0.0
    %1963 = vmatprep.subr.mxu0 0.0
    %1964 = vmatpush1.msra.mxu0 0.0
    %1965 = vmatprep.subr.mxu0 0.0
    %1966 = vmatpush1.msra.mxu0 0.0
    %1967 = vmatprep.subr.mxu0 0.0
    %1968 = vmatpush1.msra.mxu0 0.0
    %1969 = vmatprep.subr.mxu0 0.0
    %1970 = vmatpush1.msra.mxu0 %v217
    %1971 = vmatprep.subr.mxu0 0.0
    %1972 = vmatpush1.msra.mxu0 %v216
    %1973 = vmatprep.subr.mxu0 0.0
    %1974 = vmatpush2.msra.mxu0 0.0
    %1975 = vmatprep.subr.mxu0 0.0
    %1976 = vmatpush2.msra.mxu0 0.0
    %1977 = vmatprep.subr.mxu0 0.0
    %1978 = vmatpush2.msra.mxu0 0.0
    %1979 = vmatprep.subr.mxu0 0.0
    %1980 = vmatpush2.msra.mxu0 0.0
    %1981 = vmatprep.subr.mxu0 0.0
    %1982 = vmatpush2.msra.mxu0 0.0
    %1983 = vmatprep.subr.mxu0 0.0
    %1984 = vmatpush2.msra.mxu0 0.0
    %1985 = vmatprep.subr.mxu0 0.0
    %1986 = vmatpush2.msra.mxu0 0.0
    %1987 = vmatprep.subr.mxu0 0.0
    %1988 = vmatpush2.msra.mxu0 0.0
    %1989 = vmatprep.subr.mxu0 0.0
    %1990 = vmatpush2.msra.mxu0 0.0
    %1991 = vmatprep.subr.mxu0 0.0
    %1992 = vmatpush2.msra.mxu0 0.0
    %1993 = vmatprep.subr.mxu0 0.0
    %1994 = vmatpush2.msra.mxu0 0.0
    %1995 = vmatprep.subr.mxu0 0.0
    %1996 = vmatpush2.msra.mxu0 0.0
    %1997 = vmatprep.subr.mxu0 0.0
    %1998 = vmatpush2.msra.mxu0 0.0
    %1999 = vmatprep.subr.mxu0 0.0
    %2000 = vmatpush2.msra.mxu0 0.0
    %2001 = vmatprep.subr.mxu0 0.0
    %2002 = vmatpush2.msra.mxu0 0.0
    %2003 = vmatprep.subr.mxu0 0.0
    %2004 = vmatpush2.msra.mxu0 0.0
    %2005 = vmatprep.mubr.f32.mxu0 0.0
    %2006 = vmatmul.mubr.f32.gmra.mxu0 %v1939
    %v2007 = vpop.f32.mrf.mxu0
    %v2008 = vadd.f32 %v354, %v2007
    %v2009 = vpop.f32.mrf.mxu0
    %2010 = vdwg.mxu0
    %2011 = vmatprep.subr.mxu0 0.0
    %2012 = vmatpush1.msra.mxu0 0.0
    %2013 = vmatprep.subr.mxu0 0.0
    %2014 = vmatpush1.msra.mxu0 0.0
    %2015 = vmatprep.subr.mxu0 0.0
    %2016 = vmatpush1.msra.mxu0 0.0
    %2017 = vmatprep.subr.mxu0 0.0
    %2018 = vmatpush1.msra.mxu0 0.0
    %2019 = vmatprep.subr.mxu0 0.0
    %2020 = vmatpush1.msra.mxu0 0.0
    %2021 = vmatprep.subr.mxu0 0.0
    %2022 = vmatpush1.msra.mxu0 0.0
    %2023 = vmatprep.subr.mxu0 0.0
    %2024 = vmatpush1.msra.mxu0 0.0
    %2025 = vmatprep.subr.mxu0 0.0
    %2026 = vmatpush1.msra.mxu0 0.0
    %2027 = vmatprep.subr.mxu0 0.0
    %2028 = vmatpush1.msra.mxu0 0.0
    %2029 = vmatprep.subr.mxu0 0.0
    %2030 = vmatpush1.msra.mxu0 0.0
    %2031 = vmatprep.subr.mxu0 0.0
    %2032 = vmatpush1.msra.mxu0 0.0
    %2033 = vmatprep.subr.mxu0 0.0
    %2034 = vmatpush1.msra.mxu0 0.0
    %2035 = vmatprep.subr.mxu0 0.0
    %2036 = vmatpush1.msra.mxu0 %v221
    %2037 = vmatprep.subr.mxu0 0.0
    %2038 = vmatpush1.msra.mxu0 %v220
    %2039 = vmatprep.subr.mxu0 0.0
    %2040 = vmatpush1.msra.mxu0 %v219
    %2041 = vmatprep.subr.mxu0 0.0
    %2042 = vmatpush1.msra.mxu0 %v218
    %2043 = vmatprep.subr.mxu0 0.0
    %2044 = vmatpush2.msra.mxu0 0.0
    %2045 = vmatprep.subr.mxu0 0.0
    %2046 = vmatpush2.msra.mxu0 0.0
    %2047 = vmatprep.subr.mxu0 0.0
    %2048 = vmatpush2.msra.mxu0 0.0
    %2049 = vmatprep.subr.mxu0 0.0
    %2050 = vmatpush2.msra.mxu0 0.0
    %2051 = vmatprep.subr.mxu0 0.0
    %2052 = vmatpush2.msra.mxu0 0.0
    %2053 = vmatprep.subr.mxu0 0.0
    %2054 = vmatpush2.msra.mxu0 0.0
    %2055 = vmatprep.subr.mxu0 0.0
    %2056 = vmatpush2.msra.mxu0 0.0
    %2057 = vmatprep.subr.mxu0 0.0
    %2058 = vmatpush2.msra.mxu0 0.0
    %2059 = vmatprep.subr.mxu0 0.0
    %2060 = vmatpush2.msra.mxu0 0.0
    %2061 = vmatprep.subr.mxu0 0.0
    %2062 = vmatpush2.msra.mxu0 0.0
    %2063 = vmatprep.subr.mxu0 0.0
    %2064 = vmatpush2.msra.mxu0 0.0
    %2065 = vmatprep.subr.mxu0 0.0
    %2066 = vmatpush2.msra.mxu0 0.0
    %2067 = vmatprep.subr.mxu0 0.0
    %2068 = vmatpush2.msra.mxu0 0.0
    %2069 = vmatprep.subr.mxu0 0.0
    %2070 = vmatpush2.msra.mxu0 0.0
    %2071 = vmatprep.subr.mxu0 0.0
    %2072 = vmatpush2.msra.mxu0 0.0
    %2073 = vmatprep.subr.mxu0 0.0
    %2074 = vmatpush2.msra.mxu0 0.0
    %2075 = vmatprep.mubr.f32.mxu0 0.0
    %2076 = vmatmul.mubr.f32.gmra.mxu0 %v1757
    %v2077 = vpop.f32.mrf.mxu0
    %v2078 = vadd.f32 %v434, %v2077
    %v2079 = vpop.f32.mrf.mxu0
    %2080 = vdwg.mxu0
    %v2081 = vadd.f32 %v2008, %v2078
    %v2082 = vxor.u32 %v2081, 2147483648
    %v2083 = vmul.f32 %v2082, 1.442695
    %v2084 = vpow.pop %v2083
    %v2085 = vadd.f32 %v2084, 1.0
    %v2086 = vrcp.pop %v2085
    %v2087 = vmul.f32 1.0, %v2086
    %2089 = vrot.lane.b32.xlu0 %v2078, 64
    %v2090 = vpop.permute.xlu0 %2089
    %v2092 = vmul.f32 %v2087, %v2090
    %2094 = vrot.lane.b32.xlu0 %v2092, 64
    %v2095 = vpop.permute.xlu0 %2094
    %v2097 = vadd.f32 %v2008, %v2095
    %v2098 = vtanh.pop %v2097
    %v2099 = vsub.f32 1.0, %v2087
    %2101 = vrot.lane.b32.xlu0 %v2098, 96
    %v2102 = vpop.permute.xlu0 %2101
    %v2104 = vmul.f32 %v2099, %v2102
    %v2105 = vmul.f32 %v2087, %v1715
    %v2106 = vadd.f32 %v2104, %v2105
    %v2109 = vunpack.c.l.s4 1966171168
    %v2110 = vunpack.c.0.s8 %v2109
    %v2111 = vlaneseq
    %v2112 = vshrl.u32 %v2111, 7
    %v2113 = vsub.s32 %v2110, %v2112
    %v2114 = vrot.slane %v2106, %v2113
    %v2115 = vcombine.high %v2114, %v2114
    %v2117 = vunpack.c.l.s4 1966171168
    %v2118 = vunpack.c.0.s8 %v2117
    %v2119 = vlaneseq
    %v2120 = vshrl.u32 %v2119, 7
    %v2121 = vsub.s32 %v2118, %v2120
    %v2122 = vrot.slane %v2114, %v2121
    %v2124 = vunpack.c.l.s4 1966171168
    %v2125 = vunpack.c.0.s8 %v2124
    %v2126 = vlaneseq
    %v2127 = vshrl.u32 %v2126, 7
    %v2128 = vsub.s32 %v2125, %v2127
    %v2129 = vrot.slane %v2115, %v2128
    %v2130 = vlaneseq
    %v2131 = vshrl.u32 %v2130, 7
    %v2132 = vsub.s32 0, %v2131
    %v2133 = vrot.slane %v2122, %v2132
    %v2134 = vlaneseq
    %v2135 = vshrl.u32 %v2134, 7
    %v2136 = vsub.s32 0, %v2135
    %v2137 = vrot.slane %v2129, %v2136
    %2138 = vrot.lane.b32.xlu0 %v2133, 96
    %v2139 = vpop.permute.xlu0 %2138
    %2140 = vrot.lane.b32.xlu0 %v2137, 96
    %v2141 = vpop.permute.xlu0 %2140
    %2144 = vst.msk [vmem:[#allocation2 + $0x4] sm:$0x1] %vm573, %v2139
    %2145 = vst.msk [vmem:[#allocation2 + $0xc] sm:$0x1] %vm573, %v2141
    %2146 = vrot.lane.b32.xlu0 %v2106, 96
    %v2147 = vpop.permute.xlu0 %2146
    %v2148 = vsel %vm436, %v2147, 0
    %2150 = vmatprep.subr.mxu0 0.0
    %2151 = vmatpush1.msra.mxu0 0.0
    %2152 = vmatprep.subr.mxu0 0.0
    %2153 = vmatpush1.msra.mxu0 0.0
    %2154 = vmatprep.subr.mxu0 0.0
    %2155 = vmatpush1.msra.mxu0 0.0
    %2156 = vmatprep.subr.mxu0 0.0
    %2157 = vmatpush1.msra.mxu0 0.0
    %2158 = vmatprep.subr.mxu0 0.0
    %2159 = vmatpush1.msra.mxu0 0.0
    %2160 = vmatprep.subr.mxu0 0.0
    %2161 = vmatpush1.msra.mxu0 0.0
    %2162 = vmatprep.subr.mxu0 0.0
    %2163 = vmatpush1.msra.mxu0 0.0
    %2164 = vmatprep.subr.mxu0 0.0
    %2165 = vmatpush1.msra.mxu0 0.0
    %2166 = vmatprep.subr.mxu0 0.0
    %2167 = vmatpush1.msra.mxu0 0.0
    %2168 = vmatprep.subr.mxu0 0.0
    %2169 = vmatpush1.msra.mxu0 0.0
    %2170 = vmatprep.subr.mxu0 0.0
    %2171 = vmatpush1.msra.mxu0 0.0
    %2172 = vmatprep.subr.mxu0 0.0
    %2173 = vmatpush1.msra.mxu0 0.0
    %2174 = vmatprep.subr.mxu0 0.0
    %2175 = vmatpush1.msra.mxu0 %v231
    %2176 = vmatprep.subr.mxu0 0.0
    %2177 = vmatpush1.msra.mxu0 %v230
    %2178 = vmatprep.subr.mxu0 0.0
    %2179 = vmatpush1.msra.mxu0 %v229
    %2180 = vmatprep.subr.mxu0 0.0
    %2181 = vmatpush1.msra.mxu0 %v228
    %2182 = vmatprep.subr.mxu0 0.0
    %2183 = vmatpush2.msra.mxu0 0.0
    %2184 = vmatprep.subr.mxu0 0.0
    %2185 = vmatpush2.msra.mxu0 0.0
    %2186 = vmatprep.subr.mxu0 0.0
    %2187 = vmatpush2.msra.mxu0 0.0
    %2188 = vmatprep.subr.mxu0 0.0
    %2189 = vmatpush2.msra.mxu0 0.0
    %2190 = vmatprep.subr.mxu0 0.0
    %2191 = vmatpush2.msra.mxu0 0.0
    %2192 = vmatprep.subr.mxu0 0.0
    %2193 = vmatpush2.msra.mxu0 0.0
    %2194 = vmatprep.subr.mxu0 0.0
    %2195 = vmatpush2.msra.mxu0 0.0
    %2196 = vmatprep.subr.mxu0 0.0
    %2197 = vmatpush2.msra.mxu0 0.0
    %2198 = vmatprep.subr.mxu0 0.0
    %2199 = vmatpush2.msra.mxu0 0.0
    %2200 = vmatprep.subr.mxu0 0.0
    %2201 = vmatpush2.msra.mxu0 0.0
    %2202 = vmatprep.subr.mxu0 0.0
    %2203 = vmatpush2.msra.mxu0 0.0
    %2204 = vmatprep.subr.mxu0 0.0
    %2205 = vmatpush2.msra.mxu0 0.0
    %2206 = vmatprep.subr.mxu0 0.0
    %2207 = vmatpush2.msra.mxu0 0.0
    %2208 = vmatprep.subr.mxu0 0.0
    %2209 = vmatpush2.msra.mxu0 0.0
    %2210 = vmatprep.subr.mxu0 0.0
    %2211 = vmatpush2.msra.mxu0 0.0
    %2212 = vmatprep.subr.mxu0 0.0
    %2213 = vmatpush2.msra.mxu0 0.0
    %2214 = vmatprep.mubr.f32.mxu0 0.0
    %2215 = vmatmul.mubr.f32.gmra.mxu0 %v2148
    %v2216 = vpop.f32.mrf.mxu0
    %v2217 = vadd.f32 %v580, %v2216
    %v2218 = vpop.f32.mrf.mxu0
    %2219 = vdwg.mxu0
    %v2222 = vunpack.c.l.s4 1966171168
    %v2223 = vunpack.c.0.s8 %v2222
    %v2224 = vlaneseq
    %v2225 = vshrl.u32 %v2224, 7
    %v2226 = vsub.s32 %v2223, %v2225
    %v2227 = vrot.slane %v2217, %v2226
    %v2228 = vcombine.high %v2227, %v2227
    %v2230 = vunpack.c.l.s4 1966171168
    %v2231 = vunpack.c.0.s8 %v2230
    %v2232 = vlaneseq
    %v2233 = vshrl.u32 %v2232, 7
    %v2234 = vsub.s32 %v2231, %v2233
    %v2235 = vrot.slane %v2227, %v2234
    %v2237 = vunpack.c.l.s4 1966171168
    %v2238 = vunpack.c.0.s8 %v2237
    %v2239 = vlaneseq
    %v2240 = vshrl.u32 %v2239, 7
    %v2241 = vsub.s32 %v2238, %v2240
    %v2242 = vrot.slane %v2228, %v2241
    %2245 = vst.msk [vmem:[#allocation3 + $0x4] sm:$0x1] %vm573, %v2235
    %2246 = vst.msk [vmem:[#allocation3 + $0xc] sm:$0x1] %vm573, %v2242
    %s2247 = sld [smem:[#allocation4 + $0x5]]
    %v2248 = vstv %s2247
    %v2249 = vsel %vm261, %v2248, 0
    %s2250 = sld [smem:[#allocation4 + $0x85]]
    %v2251 = vstv %s2250
    %v2252 = vsel %vm265, %v2251, %v2249
    %vm2253 = vcmp.eq.s32.totalorder %v258, %v2252
    %v2254 = vsel %vm2253, 1, 0
    %v2255 = vcvt.s32.f32 %v2254
    %v2257 = vsel %vm272, %v2255, 0
    %2259 = vmatprep.subr.mxu0 0.0
    %2260 = vmatpush1.msra.mxu0 0.0
    %2261 = vmatprep.subr.mxu0 0.0
    %2262 = vmatpush1.msra.mxu0 0.0
    %2263 = vmatprep.subr.mxu0 0.0
    %2264 = vmatpush1.msra.mxu0 0.0
    %2265 = vmatprep.subr.mxu0 0.0
    %2266 = vmatpush1.msra.mxu0 0.0
    %2267 = vmatprep.subr.mxu0 0.0
    %2268 = vmatpush1.msra.mxu0 0.0
    %2269 = vmatprep.subr.mxu0 0.0
    %2270 = vmatpush1.msra.mxu0 0.0
    %2271 = vmatprep.subr.mxu0 0.0
    %2272 = vmatpush1.msra.mxu0 0.0
    %2273 = vmatprep.subr.mxu0 0.0
    %2274 = vmatpush1.msra.mxu0 0.0
    %2275 = vmatprep.subr.mxu0 0.0
    %2276 = vmatpush1.msra.mxu0 0.0
    %2277 = vmatprep.subr.mxu0 0.0
    %2278 = vmatpush1.msra.mxu0 0.0
    %2279 = vmatprep.subr.mxu0 0.0
    %2280 = vmatpush1.msra.mxu0 0.0
    %2281 = vmatprep.subr.mxu0 0.0
    %2282 = vmatpush1.msra.mxu0 0.0
    %2283 = vmatprep.subr.mxu0 0.0
    %2284 = vmatpush1.msra.mxu0 0.0
    %2285 = vmatprep.subr.mxu0 0.0
    %2286 = vmatpush1.msra.mxu0 %v278
    %2287 = vmatprep.subr.mxu0 0.0
    %2288 = vmatpush1.msra.mxu0 %v211
    %2289 = vmatprep.subr.mxu0 0.0
    %2290 = vmatpush1.msra.mxu0 %v210
    %2291 = vmatprep.subr.mxu0 0.0
    %2292 = vmatpush2.msra.mxu0 0.0
    %2293 = vmatprep.subr.mxu0 0.0
    %2294 = vmatpush2.msra.mxu0 0.0
    %2295 = vmatprep.subr.mxu0 0.0
    %2296 = vmatpush2.msra.mxu0 0.0
    %2297 = vmatprep.subr.mxu0 0.0
    %2298 = vmatpush2.msra.mxu0 0.0
    %2299 = vmatprep.subr.mxu0 0.0
    %2300 = vmatpush2.msra.mxu0 0.0
    %2301 = vmatprep.subr.mxu0 0.0
    %2302 = vmatpush2.msra.mxu0 0.0
    %2303 = vmatprep.subr.mxu0 0.0
    %2304 = vmatpush2.msra.mxu0 0.0
    %2305 = vmatprep.subr.mxu0 0.0
    %2306 = vmatpush2.msra.mxu0 0.0
    %2307 = vmatprep.subr.mxu0 0.0
    %2308 = vmatpush2.msra.mxu0 0.0
    %2309 = vmatprep.subr.mxu0 0.0
    %2310 = vmatpush2.msra.mxu0 0.0
    %2311 = vmatprep.subr.mxu0 0.0
    %2312 = vmatpush2.msra.mxu0 0.0
    %2313 = vmatprep.subr.mxu0 0.0
    %2314 = vmatpush2.msra.mxu0 0.0
    %2315 = vmatprep.subr.mxu0 0.0
    %2316 = vmatpush2.msra.mxu0 0.0
    %2317 = vmatprep.subr.mxu0 0.0
    %2318 = vmatpush2.msra.mxu0 0.0
    %2319 = vmatprep.subr.mxu0 0.0
    %2320 = vmatpush2.msra.mxu0 0.0
    %2321 = vmatprep.subr.mxu0 0.0
    %2322 = vmatpush2.msra.mxu0 0.0
    %2323 = vmatprep.mubr.f32.mxu0 0.0
    %2324 = vmatmul.mubr.f32.gmra.mxu0 %v2257
    %v2325 = vpop.f32.mrf.mxu0
    %v2326 = vadd.f32 0.0, %v2325
    %v2327 = vpop.f32.mrf.mxu0
    %2328 = vdwg.mxu0
    %v2330 = vsel %vm356, %v2326, 0
    %2332 = vmatprep.subr.mxu0 0.0
    %2333 = vmatpush1.msra.mxu0 0.0
    %2334 = vmatprep.subr.mxu0 0.0
    %2335 = vmatpush1.msra.mxu0 0.0
    %2336 = vmatprep.subr.mxu0 0.0
    %2337 = vmatpush1.msra.mxu0 0.0
    %2338 = vmatprep.subr.mxu0 0.0
    %2339 = vmatpush1.msra.mxu0 0.0
    %2340 = vmatprep.subr.mxu0 0.0
    %2341 = vmatpush1.msra.mxu0 0.0
    %2342 = vmatprep.subr.mxu0 0.0
    %2343 = vmatpush1.msra.mxu0 0.0
    %2344 = vmatprep.subr.mxu0 0.0
    %2345 = vmatpush1.msra.mxu0 0.0
    %2346 = vmatprep.subr.mxu0 0.0
    %2347 = vmatpush1.msra.mxu0 0.0
    %2348 = vmatprep.subr.mxu0 0.0
    %2349 = vmatpush1.msra.mxu0 0.0
    %2350 = vmatprep.subr.mxu0 0.0
    %2351 = vmatpush1.msra.mxu0 0.0
    %2352 = vmatprep.subr.mxu0 0.0
    %2353 = vmatpush1.msra.mxu0 0.0
    %2354 = vmatprep.subr.mxu0 0.0
    %2355 = vmatpush1.msra.mxu0 0.0
    %2356 = vmatprep.subr.mxu0 0.0
    %2357 = vmatpush1.msra.mxu0 0.0
    %2358 = vmatprep.subr.mxu0 0.0
    %2359 = vmatpush1.msra.mxu0 0.0
    %2360 = vmatprep.subr.mxu0 0.0
    %2361 = vmatpush1.msra.mxu0 %v217
    %2362 = vmatprep.subr.mxu0 0.0
    %2363 = vmatpush1.msra.mxu0 %v216
    %2364 = vmatprep.subr.mxu0 0.0
    %2365 = vmatpush2.msra.mxu0 0.0
    %2366 = vmatprep.subr.mxu0 0.0
    %2367 = vmatpush2.msra.mxu0 0.0
    %2368 = vmatprep.subr.mxu0 0.0
    %2369 = vmatpush2.msra.mxu0 0.0
    %2370 = vmatprep.subr.mxu0 0.0
    %2371 = vmatpush2.msra.mxu0 0.0
    %2372 = vmatprep.subr.mxu0 0.0
    %2373 = vmatpush2.msra.mxu0 0.0
    %2374 = vmatprep.subr.mxu0 0.0
    %2375 = vmatpush2.msra.mxu0 0.0
    %2376 = vmatprep.subr.mxu0 0.0
    %2377 = vmatpush2.msra.mxu0 0.0
    %2378 = vmatprep.subr.mxu0 0.0
    %2379 = vmatpush2.msra.mxu0 0.0
    %2380 = vmatprep.subr.mxu0 0.0
    %2381 = vmatpush2.msra.mxu0 0.0
    %2382 = vmatprep.subr.mxu0 0.0
    %2383 = vmatpush2.msra.mxu0 0.0
    %2384 = vmatprep.subr.mxu0 0.0
    %2385 = vmatpush2.msra.mxu0 0.0
    %2386 = vmatprep.subr.mxu0 0.0
    %2387 = vmatpush2.msra.mxu0 0.0
    %2388 = vmatprep.subr.mxu0 0.0
    %2389 = vmatpush2.msra.mxu0 0.0
    %2390 = vmatprep.subr.mxu0 0.0
    %2391 = vmatpush2.msra.mxu0 0.0
    %2392 = vmatprep.subr.mxu0 0.0
    %2393 = vmatpush2.msra.mxu0 0.0
    %2394 = vmatprep.subr.mxu0 0.0
    %2395 = vmatpush2.msra.mxu0 0.0
    %2396 = vmatprep.mubr.f32.mxu0 0.0
    %2397 = vmatmul.mubr.f32.gmra.mxu0 %v2330
    %v2398 = vpop.f32.mrf.mxu0
    %v2399 = vadd.f32 %v354, %v2398
    %v2400 = vpop.f32.mrf.mxu0
    %2401 = vdwg.mxu0
    %2402 = vmatprep.subr.mxu0 0.0
    %2403 = vmatpush1.msra.mxu0 0.0
    %2404 = vmatprep.subr.mxu0 0.0
    %2405 = vmatpush1.msra.mxu0 0.0
    %2406 = vmatprep.subr.mxu0 0.0
    %2407 = vmatpush1.msra.mxu0 0.0
    %2408 = vmatprep.subr.mxu0 0.0
    %2409 = vmatpush1.msra.mxu0 0.0
    %2410 = vmatprep.subr.mxu0 0.0
    %2411 = vmatpush1.msra.mxu0 0.0
    %2412 = vmatprep.subr.mxu0 0.0
    %2413 = vmatpush1.msra.mxu0 0.0
    %2414 = vmatprep.subr.mxu0 0.0
    %2415 = vmatpush1.msra.mxu0 0.0
    %2416 = vmatprep.subr.mxu0 0.0
    %2417 = vmatpush1.msra.mxu0 0.0
    %2418 = vmatprep.subr.mxu0 0.0
    %2419 = vmatpush1.msra.mxu0 0.0
    %2420 = vmatprep.subr.mxu0 0.0
    %2421 = vmatpush1.msra.mxu0 0.0
    %2422 = vmatprep.subr.mxu0 0.0
    %2423 = vmatpush1.msra.mxu0 0.0
    %2424 = vmatprep.subr.mxu0 0.0
    %2425 = vmatpush1.msra.mxu0 0.0
    %2426 = vmatprep.subr.mxu0 0.0
    %2427 = vmatpush1.msra.mxu0 %v221
    %2428 = vmatprep.subr.mxu0 0.0
    %2429 = vmatpush1.msra.mxu0 %v220
    %2430 = vmatprep.subr.mxu0 0.0
    %2431 = vmatpush1.msra.mxu0 %v219
    %2432 = vmatprep.subr.mxu0 0.0
    %2433 = vmatpush1.msra.mxu0 %v218
    %2434 = vmatprep.subr.mxu0 0.0
    %2435 = vmatpush2.msra.mxu0 0.0
    %2436 = vmatprep.subr.mxu0 0.0
    %2437 = vmatpush2.msra.mxu0 0.0
    %2438 = vmatprep.subr.mxu0 0.0
    %2439 = vmatpush2.msra.mxu0 0.0
    %2440 = vmatprep.subr.mxu0 0.0
    %2441 = vmatpush2.msra.mxu0 0.0
    %2442 = vmatprep.subr.mxu0 0.0
    %2443 = vmatpush2.msra.mxu0 0.0
    %2444 = vmatprep.subr.mxu0 0.0
    %2445 = vmatpush2.msra.mxu0 0.0
    %2446 = vmatprep.subr.mxu0 0.0
    %2447 = vmatpush2.msra.mxu0 0.0
    %2448 = vmatprep.subr.mxu0 0.0
    %2449 = vmatpush2.msra.mxu0 0.0
    %2450 = vmatprep.subr.mxu0 0.0
    %2451 = vmatpush2.msra.mxu0 0.0
    %2452 = vmatprep.subr.mxu0 0.0
    %2453 = vmatpush2.msra.mxu0 0.0
    %2454 = vmatprep.subr.mxu0 0.0
    %2455 = vmatpush2.msra.mxu0 0.0
    %2456 = vmatprep.subr.mxu0 0.0
    %2457 = vmatpush2.msra.mxu0 0.0
    %2458 = vmatprep.subr.mxu0 0.0
    %2459 = vmatpush2.msra.mxu0 0.0
    %2460 = vmatprep.subr.mxu0 0.0
    %2461 = vmatpush2.msra.mxu0 0.0
    %2462 = vmatprep.subr.mxu0 0.0
    %2463 = vmatpush2.msra.mxu0 0.0
    %2464 = vmatprep.subr.mxu0 0.0
    %2465 = vmatpush2.msra.mxu0 0.0
    %2466 = vmatprep.mubr.f32.mxu0 0.0
    %2467 = vmatmul.mubr.f32.gmra.mxu0 %v2148
    %v2468 = vpop.f32.mrf.mxu0
    %v2469 = vadd.f32 %v434, %v2468
    %v2470 = vpop.f32.mrf.mxu0
    %2471 = vdwg.mxu0
    %v2472 = vadd.f32 %v2399, %v2469
    %v2473 = vxor.u32 %v2472, 2147483648
    %v2474 = vmul.f32 %v2473, 1.442695
    %v2475 = vpow.pop %v2474
    %v2476 = vadd.f32 %v2475, 1.0
    %v2477 = vrcp.pop %v2476
    %v2478 = vmul.f32 1.0, %v2477
    %2480 = vrot.lane.b32.xlu0 %v2469, 64
    %v2481 = vpop.permute.xlu0 %2480
    %v2483 = vmul.f32 %v2478, %v2481
    %2485 = vrot.lane.b32.xlu0 %v2483, 64
    %v2486 = vpop.permute.xlu0 %2485
    %v2488 = vadd.f32 %v2399, %v2486
    %v2489 = vtanh.pop %v2488
    %v2490 = vsub.f32 1.0, %v2478
    %2492 = vrot.lane.b32.xlu0 %v2489, 96
    %v2493 = vpop.permute.xlu0 %2492
    %v2495 = vmul.f32 %v2490, %v2493
    %v2496 = vmul.f32 %v2478, %v2106
    %v2497 = vadd.f32 %v2495, %v2496
    %v2500 = vunpack.c.l.s4 1966171168
    %v2501 = vunpack.c.0.s8 %v2500
    %v2502 = vlaneseq
    %v2503 = vshrl.u32 %v2502, 7
    %v2504 = vsub.s32 %v2501, %v2503
    %v2505 = vrot.slane %v2497, %v2504
    %v2506 = vcombine.high %v2505, %v2505
    %v2508 = vunpack.c.l.s4 1966171168
    %v2509 = vunpack.c.0.s8 %v2508
    %v2510 = vlaneseq
    %v2511 = vshrl.u32 %v2510, 7
    %v2512 = vsub.s32 %v2509, %v2511
    %v2513 = vrot.slane %v2505, %v2512
    %v2515 = vunpack.c.l.s4 1966171168
    %v2516 = vunpack.c.0.s8 %v2515
    %v2517 = vlaneseq
    %v2518 = vshrl.u32 %v2517, 7
    %v2519 = vsub.s32 %v2516, %v2518
    %v2520 = vrot.slane %v2506, %v2519
    %v2521 = vlaneseq
    %v2522 = vshrl.u32 %v2521, 7
    %v2523 = vsub.s32 0, %v2522
    %v2524 = vrot.slane %v2513, %v2523
    %v2525 = vlaneseq
    %v2526 = vshrl.u32 %v2525, 7
    %v2527 = vsub.s32 0, %v2526
    %v2528 = vrot.slane %v2520, %v2527
    %2529 = vrot.lane.b32.xlu0 %v2524, 96
    %v2530 = vpop.permute.xlu0 %2529
    %2531 = vrot.lane.b32.xlu0 %v2528, 96
    %v2532 = vpop.permute.xlu0 %2531
    %2535 = vst.msk [vmem:[#allocation2 + $0x5] sm:$0x1] %vm573, %v2530
    %2536 = vst.msk [vmem:[#allocation2 + $0xd] sm:$0x1] %vm573, %v2532
    %2537 = vrot.lane.b32.xlu0 %v2497, 96
    %v2538 = vpop.permute.xlu0 %2537
    %v2539 = vsel %vm436, %v2538, 0
    %2541 = vmatprep.subr.mxu0 0.0
    %2542 = vmatpush1.msra.mxu0 0.0
    %2543 = vmatprep.subr.mxu0 0.0
    %2544 = vmatpush1.msra.mxu0 0.0
    %2545 = vmatprep.subr.mxu0 0.0
    %2546 = vmatpush1.msra.mxu0 0.0
    %2547 = vmatprep.subr.mxu0 0.0
    %2548 = vmatpush1.msra.mxu0 0.0
    %2549 = vmatprep.subr.mxu0 0.0
    %2550 = vmatpush1.msra.mxu0 0.0
    %2551 = vmatprep.subr.mxu0 0.0
    %2552 = vmatpush1.msra.mxu0 0.0
    %2553 = vmatprep.subr.mxu0 0.0
    %2554 = vmatpush1.msra.mxu0 0.0
    %2555 = vmatprep.subr.mxu0 0.0
    %2556 = vmatpush1.msra.mxu0 0.0
    %2557 = vmatprep.subr.mxu0 0.0
    %2558 = vmatpush1.msra.mxu0 0.0
    %2559 = vmatprep.subr.mxu0 0.0
    %2560 = vmatpush1.msra.mxu0 0.0
    %2561 = vmatprep.subr.mxu0 0.0
    %2562 = vmatpush1.msra.mxu0 0.0
    %2563 = vmatprep.subr.mxu0 0.0
    %2564 = vmatpush1.msra.mxu0 0.0
    %2565 = vmatprep.subr.mxu0 0.0
    %2566 = vmatpush1.msra.mxu0 %v231
    %2567 = vmatprep.subr.mxu0 0.0
    %2568 = vmatpush1.msra.mxu0 %v230
    %2569 = vmatprep.subr.mxu0 0.0
    %2570 = vmatpush1.msra.mxu0 %v229
    %2571 = vmatprep.subr.mxu0 0.0
    %2572 = vmatpush1.msra.mxu0 %v228
    %2573 = vmatprep.subr.mxu0 0.0
    %2574 = vmatpush2.msra.mxu0 0.0
    %2575 = vmatprep.subr.mxu0 0.0
    %2576 = vmatpush2.msra.mxu0 0.0
    %2577 = vmatprep.subr.mxu0 0.0
    %2578 = vmatpush2.msra.mxu0 0.0
    %2579 = vmatprep.subr.mxu0 0.0
    %2580 = vmatpush2.msra.mxu0 0.0
    %2581 = vmatprep.subr.mxu0 0.0
    %2582 = vmatpush2.msra.mxu0 0.0
    %2583 = vmatprep.subr.mxu0 0.0
    %2584 = vmatpush2.msra.mxu0 0.0
    %2585 = vmatprep.subr.mxu0 0.0
    %2586 = vmatpush2.msra.mxu0 0.0
    %2587 = vmatprep.subr.mxu0 0.0
    %2588 = vmatpush2.msra.mxu0 0.0
    %2589 = vmatprep.subr.mxu0 0.0
    %2590 = vmatpush2.msra.mxu0 0.0
    %2591 = vmatprep.subr.mxu0 0.0
    %2592 = vmatpush2.msra.mxu0 0.0
    %2593 = vmatprep.subr.mxu0 0.0
    %2594 = vmatpush2.msra.mxu0 0.0
    %2595 = vmatprep.subr.mxu0 0.0
    %2596 = vmatpush2.msra.mxu0 0.0
    %2597 = vmatprep.subr.mxu0 0.0
    %2598 = vmatpush2.msra.mxu0 0.0
    %2599 = vmatprep.subr.mxu0 0.0
    %2600 = vmatpush2.msra.mxu0 0.0
    %2601 = vmatprep.subr.mxu0 0.0
    %2602 = vmatpush2.msra.mxu0 0.0
    %2603 = vmatprep.subr.mxu0 0.0
    %2604 = vmatpush2.msra.mxu0 0.0
    %2605 = vmatprep.mubr.f32.mxu0 0.0
    %2606 = vmatmul.mubr.f32.gmra.mxu0 %v2539
    %v2607 = vpop.f32.mrf.mxu0
    %v2608 = vadd.f32 %v580, %v2607
    %v2609 = vpop.f32.mrf.mxu0
    %2610 = vdwg.mxu0
    %v2613 = vunpack.c.l.s4 1966171168
    %v2614 = vunpack.c.0.s8 %v2613
    %v2615 = vlaneseq
    %v2616 = vshrl.u32 %v2615, 7
    %v2617 = vsub.s32 %v2614, %v2616
    %v2618 = vrot.slane %v2608, %v2617
    %v2619 = vcombine.high %v2618, %v2618
    %v2621 = vunpack.c.l.s4 1966171168
    %v2622 = vunpack.c.0.s8 %v2621
    %v2623 = vlaneseq
    %v2624 = vshrl.u32 %v2623, 7
    %v2625 = vsub.s32 %v2622, %v2624
    %v2626 = vrot.slane %v2618, %v2625
    %v2628 = vunpack.c.l.s4 1966171168
    %v2629 = vunpack.c.0.s8 %v2628
    %v2630 = vlaneseq
    %v2631 = vshrl.u32 %v2630, 7
    %v2632 = vsub.s32 %v2629, %v2631
    %v2633 = vrot.slane %v2619, %v2632
    %2636 = vst.msk [vmem:[#allocation3 + $0x5] sm:$0x1] %vm573, %v2626
    %2637 = vst.msk [vmem:[#allocation3 + $0xd] sm:$0x1] %vm573, %v2633
    %s2638 = sld [smem:[#allocation4 + $0x6]]
    %v2639 = vstv %s2638
    %v2640 = vsel %vm261, %v2639, 0
    %s2641 = sld [smem:[#allocation4 + $0x86]]
    %v2642 = vstv %s2641
    %v2643 = vsel %vm265, %v2642, %v2640
    %vm2644 = vcmp.eq.s32.totalorder %v258, %v2643
    %v2645 = vsel %vm2644, 1, 0
    %v2646 = vcvt.s32.f32 %v2645
    %v2648 = vsel %vm272, %v2646, 0
    %2650 = vmatprep.subr.mxu0 0.0
    %2651 = vmatpush1.msra.mxu0 0.0
    %2652 = vmatprep.subr.mxu0 0.0
    %2653 = vmatpush1.msra.mxu0 0.0
    %2654 = vmatprep.subr.mxu0 0.0
    %2655 = vmatpush1.msra.mxu0 0.0
    %2656 = vmatprep.subr.mxu0 0.0
    %2657 = vmatpush1.msra.mxu0 0.0
    %2658 = vmatprep.subr.mxu0 0.0
    %2659 = vmatpush1.msra.mxu0 0.0
    %2660 = vmatprep.subr.mxu0 0.0
    %2661 = vmatpush1.msra.mxu0 0.0
    %2662 = vmatprep.subr.mxu0 0.0
    %2663 = vmatpush1.msra.mxu0 0.0
    %2664 = vmatprep.subr.mxu0 0.0
    %2665 = vmatpush1.msra.mxu0 0.0
    %2666 = vmatprep.subr.mxu0 0.0
    %2667 = vmatpush1.msra.mxu0 0.0
    %2668 = vmatprep.subr.mxu0 0.0
    %2669 = vmatpush1.msra.mxu0 0.0
    %2670 = vmatprep.subr.mxu0 0.0
    %2671 = vmatpush1.msra.mxu0 0.0
    %2672 = vmatprep.subr.mxu0 0.0
    %2673 = vmatpush1.msra.mxu0 0.0
    %2674 = vmatprep.subr.mxu0 0.0
    %2675 = vmatpush1.msra.mxu0 0.0
    %2676 = vmatprep.subr.mxu0 0.0
    %2677 = vmatpush1.msra.mxu0 %v278
    %2678 = vmatprep.subr.mxu0 0.0
    %2679 = vmatpush1.msra.mxu0 %v211
    %2680 = vmatprep.subr.mxu0 0.0
    %2681 = vmatpush1.msra.mxu0 %v210
    %2682 = vmatprep.subr.mxu0 0.0
    %2683 = vmatpush2.msra.mxu0 0.0
    %2684 = vmatprep.subr.mxu0 0.0
    %2685 = vmatpush2.msra.mxu0 0.0
    %2686 = vmatprep.subr.mxu0 0.0
    %2687 = vmatpush2.msra.mxu0 0.0
    %2688 = vmatprep.subr.mxu0 0.0
    %2689 = vmatpush2.msra.mxu0 0.0
    %2690 = vmatprep.subr.mxu0 0.0
    %2691 = vmatpush2.msra.mxu0 0.0
    %2692 = vmatprep.subr.mxu0 0.0
    %2693 = vmatpush2.msra.mxu0 0.0
    %2694 = vmatprep.subr.mxu0 0.0
    %2695 = vmatpush2.msra.mxu0 0.0
    %2696 = vmatprep.subr.mxu0 0.0
    %2697 = vmatpush2.msra.mxu0 0.0
    %2698 = vmatprep.subr.mxu0 0.0
    %2699 = vmatpush2.msra.mxu0 0.0
    %2700 = vmatprep.subr.mxu0 0.0
    %2701 = vmatpush2.msra.mxu0 0.0
    %2702 = vmatprep.subr.mxu0 0.0
    %2703 = vmatpush2.msra.mxu0 0.0
    %2704 = vmatprep.subr.mxu0 0.0
    %2705 = vmatpush2.msra.mxu0 0.0
    %2706 = vmatprep.subr.mxu0 0.0
    %2707 = vmatpush2.msra.mxu0 0.0
    %2708 = vmatprep.subr.mxu0 0.0
    %2709 = vmatpush2.msra.mxu0 0.0
    %2710 = vmatprep.subr.mxu0 0.0
    %2711 = vmatpush2.msra.mxu0 0.0
    %2712 = vmatprep.subr.mxu0 0.0
    %2713 = vmatpush2.msra.mxu0 0.0
    %2714 = vmatprep.mubr.f32.mxu0 0.0
    %2715 = vmatmul.mubr.f32.gmra.mxu0 %v2648
    %v2716 = vpop.f32.mrf.mxu0
    %v2717 = vadd.f32 0.0, %v2716
    %v2718 = vpop.f32.mrf.mxu0
    %2719 = vdwg.mxu0
    %v2721 = vsel %vm356, %v2717, 0
    %2723 = vmatprep.subr.mxu0 0.0
    %2724 = vmatpush1.msra.mxu0 0.0
    %2725 = vmatprep.subr.mxu0 0.0
    %2726 = vmatpush1.msra.mxu0 0.0
    %2727 = vmatprep.subr.mxu0 0.0
    %2728 = vmatpush1.msra.mxu0 0.0
    %2729 = vmatprep.subr.mxu0 0.0
    %2730 = vmatpush1.msra.mxu0 0.0
    %2731 = vmatprep.subr.mxu0 0.0
    %2732 = vmatpush1.msra.mxu0 0.0
    %2733 = vmatprep.subr.mxu0 0.0
    %2734 = vmatpush1.msra.mxu0 0.0
    %2735 = vmatprep.subr.mxu0 0.0
    %2736 = vmatpush1.msra.mxu0 0.0
    %2737 = vmatprep.subr.mxu0 0.0
    %2738 = vmatpush1.msra.mxu0 0.0
    %2739 = vmatprep.subr.mxu0 0.0
    %2740 = vmatpush1.msra.mxu0 0.0
    %2741 = vmatprep.subr.mxu0 0.0
    %2742 = vmatpush1.msra.mxu0 0.0
    %2743 = vmatprep.subr.mxu0 0.0
    %2744 = vmatpush1.msra.mxu0 0.0
    %2745 = vmatprep.subr.mxu0 0.0
    %2746 = vmatpush1.msra.mxu0 0.0
    %2747 = vmatprep.subr.mxu0 0.0
    %2748 = vmatpush1.msra.mxu0 0.0
    %2749 = vmatprep.subr.mxu0 0.0
    %2750 = vmatpush1.msra.mxu0 0.0
    %2751 = vmatprep.subr.mxu0 0.0
    %2752 = vmatpush1.msra.mxu0 %v217
    %2753 = vmatprep.subr.mxu0 0.0
    %2754 = vmatpush1.msra.mxu0 %v216
    %2755 = vmatprep.subr.mxu0 0.0
    %2756 = vmatpush2.msra.mxu0 0.0
    %2757 = vmatprep.subr.mxu0 0.0
    %2758 = vmatpush2.msra.mxu0 0.0
    %2759 = vmatprep.subr.mxu0 0.0
    %2760 = vmatpush2.msra.mxu0 0.0
    %2761 = vmatprep.subr.mxu0 0.0
    %2762 = vmatpush2.msra.mxu0 0.0
    %2763 = vmatprep.subr.mxu0 0.0
    %2764 = vmatpush2.msra.mxu0 0.0
    %2765 = vmatprep.subr.mxu0 0.0
    %2766 = vmatpush2.msra.mxu0 0.0
    %2767 = vmatprep.subr.mxu0 0.0
    %2768 = vmatpush2.msra.mxu0 0.0
    %2769 = vmatprep.subr.mxu0 0.0
    %2770 = vmatpush2.msra.mxu0 0.0
    %2771 = vmatprep.subr.mxu0 0.0
    %2772 = vmatpush2.msra.mxu0 0.0
    %2773 = vmatprep.subr.mxu0 0.0
    %2774 = vmatpush2.msra.mxu0 0.0
    %2775 = vmatprep.subr.mxu0 0.0
    %2776 = vmatpush2.msra.mxu0 0.0
    %2777 = vmatprep.subr.mxu0 0.0
    %2778 = vmatpush2.msra.mxu0 0.0
    %2779 = vmatprep.subr.mxu0 0.0
    %2780 = vmatpush2.msra.mxu0 0.0
    %2781 = vmatprep.subr.mxu0 0.0
    %2782 = vmatpush2.msra.mxu0 0.0
    %2783 = vmatprep.subr.mxu0 0.0
    %2784 = vmatpush2.msra.mxu0 0.0
    %2785 = vmatprep.subr.mxu0 0.0
    %2786 = vmatpush2.msra.mxu0 0.0
    %2787 = vmatprep.mubr.f32.mxu0 0.0
    %2788 = vmatmul.mubr.f32.gmra.mxu0 %v2721
    %v2789 = vpop.f32.mrf.mxu0
    %v2790 = vadd.f32 %v354, %v2789
    %v2791 = vpop.f32.mrf.mxu0
    %2792 = vdwg.mxu0
    %2793 = vmatprep.subr.mxu0 0.0
    %2794 = vmatpush1.msra.mxu0 0.0
    %2795 = vmatprep.subr.mxu0 0.0
    %2796 = vmatpush1.msra.mxu0 0.0
    %2797 = vmatprep.subr.mxu0 0.0
    %2798 = vmatpush1.msra.mxu0 0.0
    %2799 = vmatprep.subr.mxu0 0.0
    %2800 = vmatpush1.msra.mxu0 0.0
    %2801 = vmatprep.subr.mxu0 0.0
    %2802 = vmatpush1.msra.mxu0 0.0
    %2803 = vmatprep.subr.mxu0 0.0
    %2804 = vmatpush1.msra.mxu0 0.0
    %2805 = vmatprep.subr.mxu0 0.0
    %2806 = vmatpush1.msra.mxu0 0.0
    %2807 = vmatprep.subr.mxu0 0.0
    %2808 = vmatpush1.msra.mxu0 0.0
    %2809 = vmatprep.subr.mxu0 0.0
    %2810 = vmatpush1.msra.mxu0 0.0
    %2811 = vmatprep.subr.mxu0 0.0
    %2812 = vmatpush1.msra.mxu0 0.0
    %2813 = vmatprep.subr.mxu0 0.0
    %2814 = vmatpush1.msra.mxu0 0.0
    %2815 = vmatprep.subr.mxu0 0.0
    %2816 = vmatpush1.msra.mxu0 0.0
    %2817 = vmatprep.subr.mxu0 0.0
    %2818 = vmatpush1.msra.mxu0 %v221
    %2819 = vmatprep.subr.mxu0 0.0
    %2820 = vmatpush1.msra.mxu0 %v220
    %2821 = vmatprep.subr.mxu0 0.0
    %2822 = vmatpush1.msra.mxu0 %v219
    %2823 = vmatprep.subr.mxu0 0.0
    %2824 = vmatpush1.msra.mxu0 %v218
    %2825 = vmatprep.subr.mxu0 0.0
    %2826 = vmatpush2.msra.mxu0 0.0
    %2827 = vmatprep.subr.mxu0 0.0
    %2828 = vmatpush2.msra.mxu0 0.0
    %2829 = vmatprep.subr.mxu0 0.0
    %2830 = vmatpush2.msra.mxu0 0.0
    %2831 = vmatprep.subr.mxu0 0.0
    %2832 = vmatpush2.msra.mxu0 0.0
    %2833 = vmatprep.subr.mxu0 0.0
    %2834 = vmatpush2.msra.mxu0 0.0
    %2835 = vmatprep.subr.mxu0 0.0
    %2836 = vmatpush2.msra.mxu0 0.0
    %2837 = vmatprep.subr.mxu0 0.0
    %2838 = vmatpush2.msra.mxu0 0.0
    %2839 = vmatprep.subr.mxu0 0.0
    %2840 = vmatpush2.msra.mxu0 0.0
    %2841 = vmatprep.subr.mxu0 0.0
    %2842 = vmatpush2.msra.mxu0 0.0
    %2843 = vmatprep.subr.mxu0 0.0
    %2844 = vmatpush2.msra.mxu0 0.0
    %2845 = vmatprep.subr.mxu0 0.0
    %2846 = vmatpush2.msra.mxu0 0.0
    %2847 = vmatprep.subr.mxu0 0.0
    %2848 = vmatpush2.msra.mxu0 0.0
    %2849 = vmatprep.subr.mxu0 0.0
    %2850 = vmatpush2.msra.mxu0 0.0
    %2851 = vmatprep.subr.mxu0 0.0
    %2852 = vmatpush2.msra.mxu0 0.0
    %2853 = vmatprep.subr.mxu0 0.0
    %2854 = vmatpush2.msra.mxu0 0.0
    %2855 = vmatprep.subr.mxu0 0.0
    %2856 = vmatpush2.msra.mxu0 0.0
    %2857 = vmatprep.mubr.f32.mxu0 0.0
    %2858 = vmatmul.mubr.f32.gmra.mxu0 %v2539
    %v2859 = vpop.f32.mrf.mxu0
    %v2860 = vadd.f32 %v434, %v2859
    %v2861 = vpop.f32.mrf.mxu0
    %2862 = vdwg.mxu0
    %v2863 = vadd.f32 %v2790, %v2860
    %v2864 = vxor.u32 %v2863, 2147483648
    %v2865 = vmul.f32 %v2864, 1.442695
    %v2866 = vpow.pop %v2865
    %v2867 = vadd.f32 %v2866, 1.0
    %v2868 = vrcp.pop %v2867
    %v2869 = vmul.f32 1.0, %v2868
    %2871 = vrot.lane.b32.xlu0 %v2860, 64
    %v2872 = vpop.permute.xlu0 %2871
    %v2874 = vmul.f32 %v2869, %v2872
    %2876 = vrot.lane.b32.xlu0 %v2874, 64
    %v2877 = vpop.permute.xlu0 %2876
    %v2879 = vadd.f32 %v2790, %v2877
    %v2880 = vtanh.pop %v2879
    %v2881 = vsub.f32 1.0, %v2869
    %2883 = vrot.lane.b32.xlu0 %v2880, 96
    %v2884 = vpop.permute.xlu0 %2883
    %v2886 = vmul.f32 %v2881, %v2884
    %v2887 = vmul.f32 %v2869, %v2497
    %v2888 = vadd.f32 %v2886, %v2887
    %v2891 = vunpack.c.l.s4 1966171168
    %v2892 = vunpack.c.0.s8 %v2891
    %v2893 = vlaneseq
    %v2894 = vshrl.u32 %v2893, 7
    %v2895 = vsub.s32 %v2892, %v2894
    %v2896 = vrot.slane %v2888, %v2895
    %v2897 = vcombine.high %v2896, %v2896
    %v2899 = vunpack.c.l.s4 1966171168
    %v2900 = vunpack.c.0.s8 %v2899
    %v2901 = vlaneseq
    %v2902 = vshrl.u32 %v2901, 7
    %v2903 = vsub.s32 %v2900, %v2902
    %v2904 = vrot.slane %v2896, %v2903
    %v2906 = vunpack.c.l.s4 1966171168
    %v2907 = vunpack.c.0.s8 %v2906
    %v2908 = vlaneseq
    %v2909 = vshrl.u32 %v2908, 7
    %v2910 = vsub.s32 %v2907, %v2909
    %v2911 = vrot.slane %v2897, %v2910
    %v2912 = vlaneseq
    %v2913 = vshrl.u32 %v2912, 7
    %v2914 = vsub.s32 0, %v2913
    %v2915 = vrot.slane %v2904, %v2914
    %v2916 = vlaneseq
    %v2917 = vshrl.u32 %v2916, 7
    %v2918 = vsub.s32 0, %v2917
    %v2919 = vrot.slane %v2911, %v2918
    %2920 = vrot.lane.b32.xlu0 %v2915, 96
    %v2921 = vpop.permute.xlu0 %2920
    %2922 = vrot.lane.b32.xlu0 %v2919, 96
    %v2923 = vpop.permute.xlu0 %2922
    %2926 = vst.msk [vmem:[#allocation2 + $0x6] sm:$0x1] %vm573, %v2921
    %2927 = vst.msk [vmem:[#allocation2 + $0xe] sm:$0x1] %vm573, %v2923
    %2928 = vrot.lane.b32.xlu0 %v2888, 96
    %v2929 = vpop.permute.xlu0 %2928
    %v2930 = vsel %vm436, %v2929, 0
    %2932 = vmatprep.subr.mxu0 0.0
    %2933 = vmatpush1.msra.mxu0 0.0
    %2934 = vmatprep.subr.mxu0 0.0
    %2935 = vmatpush1.msra.mxu0 0.0
    %2936 = vmatprep.subr.mxu0 0.0
    %2937 = vmatpush1.msra.mxu0 0.0
    %2938 = vmatprep.subr.mxu0 0.0
    %2939 = vmatpush1.msra.mxu0 0.0
    %2940 = vmatprep.subr.mxu0 0.0
    %2941 = vmatpush1.msra.mxu0 0.0
    %2942 = vmatprep.subr.mxu0 0.0
    %2943 = vmatpush1.msra.mxu0 0.0
    %2944 = vmatprep.subr.mxu0 0.0
    %2945 = vmatpush1.msra.mxu0 0.0
    %2946 = vmatprep.subr.mxu0 0.0
    %2947 = vmatpush1.msra.mxu0 0.0
    %2948 = vmatprep.subr.mxu0 0.0
    %2949 = vmatpush1.msra.mxu0 0.0
    %2950 = vmatprep.subr.mxu0 0.0
    %2951 = vmatpush1.msra.mxu0 0.0
    %2952 = vmatprep.subr.mxu0 0.0
    %2953 = vmatpush1.msra.mxu0 0.0
    %2954 = vmatprep.subr.mxu0 0.0
    %2955 = vmatpush1.msra.mxu0 0.0
    %2956 = vmatprep.subr.mxu0 0.0
    %2957 = vmatpush1.msra.mxu0 %v231
    %2958 = vmatprep.subr.mxu0 0.0
    %2959 = vmatpush1.msra.mxu0 %v230
    %2960 = vmatprep.subr.mxu0 0.0
    %2961 = vmatpush1.msra.mxu0 %v229
    %2962 = vmatprep.subr.mxu0 0.0
    %2963 = vmatpush1.msra.mxu0 %v228
    %2964 = vmatprep.subr.mxu0 0.0
    %2965 = vmatpush2.msra.mxu0 0.0
    %2966 = vmatprep.subr.mxu0 0.0
    %2967 = vmatpush2.msra.mxu0 0.0
    %2968 = vmatprep.subr.mxu0 0.0
    %2969 = vmatpush2.msra.mxu0 0.0
    %2970 = vmatprep.subr.mxu0 0.0
    %2971 = vmatpush2.msra.mxu0 0.0
    %2972 = vmatprep.subr.mxu0 0.0
    %2973 = vmatpush2.msra.mxu0 0.0
    %2974 = vmatprep.subr.mxu0 0.0
    %2975 = vmatpush2.msra.mxu0 0.0
    %2976 = vmatprep.subr.mxu0 0.0
    %2977 = vmatpush2.msra.mxu0 0.0
    %2978 = vmatprep.subr.mxu0 0.0
    %2979 = vmatpush2.msra.mxu0 0.0
    %2980 = vmatprep.subr.mxu0 0.0
    %2981 = vmatpush2.msra.mxu0 0.0
    %2982 = vmatprep.subr.mxu0 0.0
    %2983 = vmatpush2.msra.mxu0 0.0
    %2984 = vmatprep.subr.mxu0 0.0
    %2985 = vmatpush2.msra.mxu0 0.0
    %2986 = vmatprep.subr.mxu0 0.0
    %2987 = vmatpush2.msra.mxu0 0.0
    %2988 = vmatprep.subr.mxu0 0.0
    %2989 = vmatpush2.msra.mxu0 0.0
    %2990 = vmatprep.subr.mxu0 0.0
    %2991 = vmatpush2.msra.mxu0 0.0
    %2992 = vmatprep.subr.mxu0 0.0
    %2993 = vmatpush2.msra.mxu0 0.0
    %2994 = vmatprep.subr.mxu0 0.0
    %2995 = vmatpush2.msra.mxu0 0.0
    %2996 = vmatprep.mubr.f32.mxu0 0.0
    %2997 = vmatmul.mubr.f32.gmra.mxu0 %v2930
    %v2998 = vpop.f32.mrf.mxu0
    %v2999 = vadd.f32 %v580, %v2998
    %v3000 = vpop.f32.mrf.mxu0
    %3001 = vdwg.mxu0
    %v3004 = vunpack.c.l.s4 1966171168
    %v3005 = vunpack.c.0.s8 %v3004
    %v3006 = vlaneseq
    %v3007 = vshrl.u32 %v3006, 7
    %v3008 = vsub.s32 %v3005, %v3007
    %v3009 = vrot.slane %v2999, %v3008
    %v3010 = vcombine.high %v3009, %v3009
    %v3012 = vunpack.c.l.s4 1966171168
    %v3013 = vunpack.c.0.s8 %v3012
    %v3014 = vlaneseq
    %v3015 = vshrl.u32 %v3014, 7
    %v3016 = vsub.s32 %v3013, %v3015
    %v3017 = vrot.slane %v3009, %v3016
    %v3019 = vunpack.c.l.s4 1966171168
    %v3020 = vunpack.c.0.s8 %v3019
    %v3021 = vlaneseq
    %v3022 = vshrl.u32 %v3021, 7
    %v3023 = vsub.s32 %v3020, %v3022
    %v3024 = vrot.slane %v3010, %v3023
    %3027 = vst.msk [vmem:[#allocation3 + $0x6] sm:$0x1] %vm573, %v3017
    %3028 = vst.msk [vmem:[#allocation3 + $0xe] sm:$0x1] %vm573, %v3024
    %s3029 = sld [smem:[#allocation4 + $0x7]]
    %v3030 = vstv %s3029
    %v3031 = vsel %vm261, %v3030, 0
    %s3032 = sld [smem:[#allocation4 + $0x87]]
    %v3033 = vstv %s3032
    %v3034 = vsel %vm265, %v3033, %v3031
    %vm3035 = vcmp.eq.s32.totalorder %v258, %v3034
    %v3036 = vsel %vm3035, 1, 0
    %v3037 = vcvt.s32.f32 %v3036
    %v3039 = vsel %vm272, %v3037, 0
    %3041 = vmatprep.subr.mxu0 0.0
    %3042 = vmatpush1.msra.mxu0 0.0
    %3043 = vmatprep.subr.mxu0 0.0
    %3044 = vmatpush1.msra.mxu0 0.0
    %3045 = vmatprep.subr.mxu0 0.0
    %3046 = vmatpush1.msra.mxu0 0.0
    %3047 = vmatprep.subr.mxu0 0.0
    %3048 = vmatpush1.msra.mxu0 0.0
    %3049 = vmatprep.subr.mxu0 0.0
    %3050 = vmatpush1.msra.mxu0 0.0
    %3051 = vmatprep.subr.mxu0 0.0
    %3052 = vmatpush1.msra.mxu0 0.0
    %3053 = vmatprep.subr.mxu0 0.0
    %3054 = vmatpush1.msra.mxu0 0.0
    %3055 = vmatprep.subr.mxu0 0.0
    %3056 = vmatpush1.msra.mxu0 0.0
    %3057 = vmatprep.subr.mxu0 0.0
    %3058 = vmatpush1.msra.mxu0 0.0
    %3059 = vmatprep.subr.mxu0 0.0
    %3060 = vmatpush1.msra.mxu0 0.0
    %3061 = vmatprep.subr.mxu0 0.0
    %3062 = vmatpush1.msra.mxu0 0.0
    %3063 = vmatprep.subr.mxu0 0.0
    %3064 = vmatpush1.msra.mxu0 0.0
    %3065 = vmatprep.subr.mxu0 0.0
    %3066 = vmatpush1.msra.mxu0 0.0
    %3067 = vmatprep.subr.mxu0 0.0
    %3068 = vmatpush1.msra.mxu0 %v278
    %3069 = vmatprep.subr.mxu0 0.0
    %3070 = vmatpush1.msra.mxu0 %v211
    %3071 = vmatprep.subr.mxu0 0.0
    %3072 = vmatpush1.msra.mxu0 %v210
    %3073 = vmatprep.subr.mxu0 0.0
    %3074 = vmatpush2.msra.mxu0 0.0
    %3075 = vmatprep.subr.mxu0 0.0
    %3076 = vmatpush2.msra.mxu0 0.0
    %3077 = vmatprep.subr.mxu0 0.0
    %3078 = vmatpush2.msra.mxu0 0.0
    %3079 = vmatprep.subr.mxu0 0.0
    %3080 = vmatpush2.msra.mxu0 0.0
    %3081 = vmatprep.subr.mxu0 0.0
    %3082 = vmatpush2.msra.mxu0 0.0
    %3083 = vmatprep.subr.mxu0 0.0
    %3084 = vmatpush2.msra.mxu0 0.0
    %3085 = vmatprep.subr.mxu0 0.0
    %3086 = vmatpush2.msra.mxu0 0.0
    %3087 = vmatprep.subr.mxu0 0.0
    %3088 = vmatpush2.msra.mxu0 0.0
    %3089 = vmatprep.subr.mxu0 0.0
    %3090 = vmatpush2.msra.mxu0 0.0
    %3091 = vmatprep.subr.mxu0 0.0
    %3092 = vmatpush2.msra.mxu0 0.0
    %3093 = vmatprep.subr.mxu0 0.0
    %3094 = vmatpush2.msra.mxu0 0.0
    %3095 = vmatprep.subr.mxu0 0.0
    %3096 = vmatpush2.msra.mxu0 0.0
    %3097 = vmatprep.subr.mxu0 0.0
    %3098 = vmatpush2.msra.mxu0 0.0
    %3099 = vmatprep.subr.mxu0 0.0
    %3100 = vmatpush2.msra.mxu0 0.0
    %3101 = vmatprep.subr.mxu0 0.0
    %3102 = vmatpush2.msra.mxu0 0.0
    %3103 = vmatprep.subr.mxu0 0.0
    %3104 = vmatpush2.msra.mxu0 0.0
    %3105 = vmatprep.mubr.f32.mxu0 0.0
    %3106 = vmatmul.mubr.f32.gmra.mxu0 %v3039
    %v3107 = vpop.f32.mrf.mxu0
    %v3108 = vadd.f32 0.0, %v3107
    %v3109 = vpop.f32.mrf.mxu0
    %3110 = vdwg.mxu0
    %v3112 = vsel %vm356, %v3108, 0
    %3114 = vmatprep.subr.mxu0 0.0
    %3115 = vmatpush1.msra.mxu0 0.0
    %3116 = vmatprep.subr.mxu0 0.0
    %3117 = vmatpush1.msra.mxu0 0.0
    %3118 = vmatprep.subr.mxu0 0.0
    %3119 = vmatpush1.msra.mxu0 0.0
    %3120 = vmatprep.subr.mxu0 0.0
    %3121 = vmatpush1.msra.mxu0 0.0
    %3122 = vmatprep.subr.mxu0 0.0
    %3123 = vmatpush1.msra.mxu0 0.0
    %3124 = vmatprep.subr.mxu0 0.0
    %3125 = vmatpush1.msra.mxu0 0.0
    %3126 = vmatprep.subr.mxu0 0.0
    %3127 = vmatpush1.msra.mxu0 0.0
    %3128 = vmatprep.subr.mxu0 0.0
    %3129 = vmatpush1.msra.mxu0 0.0
    %3130 = vmatprep.subr.mxu0 0.0
    %3131 = vmatpush1.msra.mxu0 0.0
    %3132 = vmatprep.subr.mxu0 0.0
    %3133 = vmatpush1.msra.mxu0 0.0
    %3134 = vmatprep.subr.mxu0 0.0
    %3135 = vmatpush1.msra.mxu0 0.0
    %3136 = vmatprep.subr.mxu0 0.0
    %3137 = vmatpush1.msra.mxu0 0.0
    %3138 = vmatprep.subr.mxu0 0.0
    %3139 = vmatpush1.msra.mxu0 0.0
    %3140 = vmatprep.subr.mxu0 0.0
    %3141 = vmatpush1.msra.mxu0 0.0
    %3142 = vmatprep.subr.mxu0 0.0
    %3143 = vmatpush1.msra.mxu0 %v217
    %3144 = vmatprep.subr.mxu0 0.0
    %3145 = vmatpush1.msra.mxu0 %v216
    %3146 = vmatprep.subr.mxu0 0.0
    %3147 = vmatpush2.msra.mxu0 0.0
    %3148 = vmatprep.subr.mxu0 0.0
    %3149 = vmatpush2.msra.mxu0 0.0
    %3150 = vmatprep.subr.mxu0 0.0
    %3151 = vmatpush2.msra.mxu0 0.0
    %3152 = vmatprep.subr.mxu0 0.0
    %3153 = vmatpush2.msra.mxu0 0.0
    %3154 = vmatprep.subr.mxu0 0.0
    %3155 = vmatpush2.msra.mxu0 0.0
    %3156 = vmatprep.subr.mxu0 0.0
    %3157 = vmatpush2.msra.mxu0 0.0
    %3158 = vmatprep.subr.mxu0 0.0
    %3159 = vmatpush2.msra.mxu0 0.0
    %3160 = vmatprep.subr.mxu0 0.0
    %3161 = vmatpush2.msra.mxu0 0.0
    %3162 = vmatprep.subr.mxu0 0.0
    %3163 = vmatpush2.msra.mxu0 0.0
    %3164 = vmatprep.subr.mxu0 0.0
    %3165 = vmatpush2.msra.mxu0 0.0
    %3166 = vmatprep.subr.mxu0 0.0
    %3167 = vmatpush2.msra.mxu0 0.0
    %3168 = vmatprep.subr.mxu0 0.0
    %3169 = vmatpush2.msra.mxu0 0.0
    %3170 = vmatprep.subr.mxu0 0.0
    %3171 = vmatpush2.msra.mxu0 0.0
    %3172 = vmatprep.subr.mxu0 0.0
    %3173 = vmatpush2.msra.mxu0 0.0
    %3174 = vmatprep.subr.mxu0 0.0
    %3175 = vmatpush2.msra.mxu0 0.0
    %3176 = vmatprep.subr.mxu0 0.0
    %3177 = vmatpush2.msra.mxu0 0.0
    %3178 = vmatprep.mubr.f32.mxu0 0.0
    %3179 = vmatmul.mubr.f32.gmra.mxu0 %v3112
    %v3180 = vpop.f32.mrf.mxu0
    %v3181 = vadd.f32 %v354, %v3180
    %v3182 = vpop.f32.mrf.mxu0
    %3183 = vdwg.mxu0
    %3184 = vmatprep.subr.mxu0 0.0
    %3185 = vmatpush1.msra.mxu0 0.0
    %3186 = vmatprep.subr.mxu0 0.0
    %3187 = vmatpush1.msra.mxu0 0.0
    %3188 = vmatprep.subr.mxu0 0.0
    %3189 = vmatpush1.msra.mxu0 0.0
    %3190 = vmatprep.subr.mxu0 0.0
    %3191 = vmatpush1.msra.mxu0 0.0
    %3192 = vmatprep.subr.mxu0 0.0
    %3193 = vmatpush1.msra.mxu0 0.0
    %3194 = vmatprep.subr.mxu0 0.0
    %3195 = vmatpush1.msra.mxu0 0.0
    %3196 = vmatprep.subr.mxu0 0.0
    %3197 = vmatpush1.msra.mxu0 0.0
    %3198 = vmatprep.subr.mxu0 0.0
    %3199 = vmatpush1.msra.mxu0 0.0
    %3200 = vmatprep.subr.mxu0 0.0
    %3201 = vmatpush1.msra.mxu0 0.0
    %3202 = vmatprep.subr.mxu0 0.0
    %3203 = vmatpush1.msra.mxu0 0.0
    %3204 = vmatprep.subr.mxu0 0.0
    %3205 = vmatpush1.msra.mxu0 0.0
    %3206 = vmatprep.subr.mxu0 0.0
    %3207 = vmatpush1.msra.mxu0 0.0
    %3208 = vmatprep.subr.mxu0 0.0
    %3209 = vmatpush1.msra.mxu0 %v221
    %3210 = vmatprep.subr.mxu0 0.0
    %3211 = vmatpush1.msra.mxu0 %v220
    %3212 = vmatprep.subr.mxu0 0.0
    %3213 = vmatpush1.msra.mxu0 %v219
    %3214 = vmatprep.subr.mxu0 0.0
    %3215 = vmatpush1.msra.mxu0 %v218
    %3216 = vmatprep.subr.mxu0 0.0
    %3217 = vmatpush2.msra.mxu0 0.0
    %3218 = vmatprep.subr.mxu0 0.0
    %3219 = vmatpush2.msra.mxu0 0.0
    %3220 = vmatprep.subr.mxu0 0.0
    %3221 = vmatpush2.msra.mxu0 0.0
    %3222 = vmatprep.subr.mxu0 0.0
    %3223 = vmatpush2.msra.mxu0 0.0
    %3224 = vmatprep.subr.mxu0 0.0
    %3225 = vmatpush2.msra.mxu0 0.0
    %3226 = vmatprep.subr.mxu0 0.0
    %3227 = vmatpush2.msra.mxu0 0.0
    %3228 = vmatprep.subr.mxu0 0.0
    %3229 = vmatpush2.msra.mxu0 0.0
    %3230 = vmatprep.subr.mxu0 0.0
    %3231 = vmatpush2.msra.mxu0 0.0
    %3232 = vmatprep.subr.mxu0 0.0
    %3233 = vmatpush2.msra.mxu0 0.0
    %3234 = vmatprep.subr.mxu0 0.0
    %3235 = vmatpush2.msra.mxu0 0.0
    %3236 = vmatprep.subr.mxu0 0.0
    %3237 = vmatpush2.msra.mxu0 0.0
    %3238 = vmatprep.subr.mxu0 0.0
    %3239 = vmatpush2.msra.mxu0 0.0
    %3240 = vmatprep.subr.mxu0 0.0
    %3241 = vmatpush2.msra.mxu0 0.0
    %3242 = vmatprep.subr.mxu0 0.0
    %3243 = vmatpush2.msra.mxu0 0.0
    %3244 = vmatprep.subr.mxu0 0.0
    %3245 = vmatpush2.msra.mxu0 0.0
    %3246 = vmatprep.subr.mxu0 0.0
    %3247 = vmatpush2.msra.mxu0 0.0
    %3248 = vmatprep.mubr.f32.mxu0 0.0
    %3249 = vmatmul.mubr.f32.gmra.mxu0 %v2930
    %v3250 = vpop.f32.mrf.mxu0
    %v3251 = vadd.f32 %v434, %v3250
    %v3252 = vpop.f32.mrf.mxu0
    %3253 = vdwg.mxu0
    %v3254 = vadd.f32 %v3181, %v3251
    %v3255 = vxor.u32 %v3254, 2147483648
    %v3256 = vmul.f32 %v3255, 1.442695
    %v3257 = vpow.pop %v3256
    %v3258 = vadd.f32 %v3257, 1.0
    %v3259 = vrcp.pop %v3258
    %v3260 = vmul.f32 1.0, %v3259
    %3262 = vrot.lane.b32.xlu0 %v3251, 64
    %v3263 = vpop.permute.xlu0 %3262
    %v3265 = vmul.f32 %v3260, %v3263
    %3267 = vrot.lane.b32.xlu0 %v3265, 64
    %v3268 = vpop.permute.xlu0 %3267
    %v3270 = vadd.f32 %v3181, %v3268
    %v3271 = vtanh.pop %v3270
    %v3272 = vsub.f32 1.0, %v3260
    %3274 = vrot.lane.b32.xlu0 %v3271, 96
    %v3275 = vpop.permute.xlu0 %3274
    %v3277 = vmul.f32 %v3272, %v3275
    %v3278 = vmul.f32 %v3260, %v2888
    %v3279 = vadd.f32 %v3277, %v3278
    %v3282 = vunpack.c.l.s4 1966171168
    %v3283 = vunpack.c.0.s8 %v3282
    %v3284 = vlaneseq
    %v3285 = vshrl.u32 %v3284, 7
    %v3286 = vsub.s32 %v3283, %v3285
    %v3287 = vrot.slane %v3279, %v3286
    %v3288 = vcombine.high %v3287, %v3287
    %v3290 = vunpack.c.l.s4 1966171168
    %v3291 = vunpack.c.0.s8 %v3290
    %v3292 = vlaneseq
    %v3293 = vshrl.u32 %v3292, 7
    %v3294 = vsub.s32 %v3291, %v3293
    %v3295 = vrot.slane %v3287, %v3294
    %v3297 = vunpack.c.l.s4 1966171168
    %v3298 = vunpack.c.0.s8 %v3297
    %v3299 = vlaneseq
    %v3300 = vshrl.u32 %v3299, 7
    %v3301 = vsub.s32 %v3298, %v3300
    %v3302 = vrot.slane %v3288, %v3301
    %v3303 = vlaneseq
    %v3304 = vshrl.u32 %v3303, 7
    %v3305 = vsub.s32 0, %v3304
    %v3306 = vrot.slane %v3295, %v3305
    %v3307 = vlaneseq
    %v3308 = vshrl.u32 %v3307, 7
    %v3309 = vsub.s32 0, %v3308
    %v3310 = vrot.slane %v3302, %v3309
    %3311 = vrot.lane.b32.xlu0 %v3306, 96
    %v3312 = vpop.permute.xlu0 %3311
    %3313 = vrot.lane.b32.xlu0 %v3310, 96
    %v3314 = vpop.permute.xlu0 %3313
    %3317 = vst.msk [vmem:[#allocation2 + $0x7] sm:$0x1] %vm573, %v3312
    %3318 = vst.msk [vmem:[#allocation2 + $0xf] sm:$0x1] %vm573, %v3314
    %3319 = vrot.lane.b32.xlu0 %v3279, 96
    %v3320 = vpop.permute.xlu0 %3319
    %v3321 = vsel %vm436, %v3320, 0
    %3323 = vmatprep.subr.mxu0 0.0
    %3324 = vmatpush1.msra.mxu0 0.0
    %3325 = vmatprep.subr.mxu0 0.0
    %3326 = vmatpush1.msra.mxu0 0.0
    %3327 = vmatprep.subr.mxu0 0.0
    %3328 = vmatpush1.msra.mxu0 0.0
    %3329 = vmatprep.subr.mxu0 0.0
    %3330 = vmatpush1.msra.mxu0 0.0
    %3331 = vmatprep.subr.mxu0 0.0
    %3332 = vmatpush1.msra.mxu0 0.0
    %3333 = vmatprep.subr.mxu0 0.0
    %3334 = vmatpush1.msra.mxu0 0.0
    %3335 = vmatprep.subr.mxu0 0.0
    %3336 = vmatpush1.msra.mxu0 0.0
    %3337 = vmatprep.subr.mxu0 0.0
    %3338 = vmatpush1.msra.mxu0 0.0
    %3339 = vmatprep.subr.mxu0 0.0
    %3340 = vmatpush1.msra.mxu0 0.0
    %3341 = vmatprep.subr.mxu0 0.0
    %3342 = vmatpush1.msra.mxu0 0.0
    %3343 = vmatprep.subr.mxu0 0.0
    %3344 = vmatpush1.msra.mxu0 0.0
    %3345 = vmatprep.subr.mxu0 0.0
    %3346 = vmatpush1.msra.mxu0 0.0
    %3347 = vmatprep.subr.mxu0 0.0
    %3348 = vmatpush1.msra.mxu0 %v231
    %3349 = vmatprep.subr.mxu0 0.0
    %3350 = vmatpush1.msra.mxu0 %v230
    %3351 = vmatprep.subr.mxu0 0.0
    %3352 = vmatpush1.msra.mxu0 %v229
    %3353 = vmatprep.subr.mxu0 0.0
    %3354 = vmatpush1.msra.mxu0 %v228
    %3355 = vmatprep.subr.mxu0 0.0
    %3356 = vmatpush2.msra.mxu0 0.0
    %3357 = vmatprep.subr.mxu0 0.0
    %3358 = vmatpush2.msra.mxu0 0.0
    %3359 = vmatprep.subr.mxu0 0.0
    %3360 = vmatpush2.msra.mxu0 0.0
    %3361 = vmatprep.subr.mxu0 0.0
    %3362 = vmatpush2.msra.mxu0 0.0
    %3363 = vmatprep.subr.mxu0 0.0
    %3364 = vmatpush2.msra.mxu0 0.0
    %3365 = vmatprep.subr.mxu0 0.0
    %3366 = vmatpush2.msra.mxu0 0.0
    %3367 = vmatprep.subr.mxu0 0.0
    %3368 = vmatpush2.msra.mxu0 0.0
    %3369 = vmatprep.subr.mxu0 0.0
    %3370 = vmatpush2.msra.mxu0 0.0
    %3371 = vmatprep.subr.mxu0 0.0
    %3372 = vmatpush2.msra.mxu0 0.0
    %3373 = vmatprep.subr.mxu0 0.0
    %3374 = vmatpush2.msra.mxu0 0.0
    %3375 = vmatprep.subr.mxu0 0.0
    %3376 = vmatpush2.msra.mxu0 0.0
    %3377 = vmatprep.subr.mxu0 0.0
    %3378 = vmatpush2.msra.mxu0 0.0
    %3379 = vmatprep.subr.mxu0 0.0
    %3380 = vmatpush2.msra.mxu0 0.0
    %3381 = vmatprep.subr.mxu0 0.0
    %3382 = vmatpush2.msra.mxu0 0.0
    %3383 = vmatprep.subr.mxu0 0.0
    %3384 = vmatpush2.msra.mxu0 0.0
    %3385 = vmatprep.subr.mxu0 0.0
    %3386 = vmatpush2.msra.mxu0 0.0
    %3387 = vmatprep.mubr.f32.mxu0 0.0
    %3388 = vmatmul.mubr.f32.gmra.mxu0 %v3321
    %v3389 = vpop.f32.mrf.mxu0
    %v3390 = vadd.f32 %v580, %v3389
    %v3391 = vpop.f32.mrf.mxu0
    %3392 = vdwg.mxu0
    %v3395 = vunpack.c.l.s4 1966171168
    %v3396 = vunpack.c.0.s8 %v3395
    %v3397 = vlaneseq
    %v3398 = vshrl.u32 %v3397, 7
    %v3399 = vsub.s32 %v3396, %v3398
    %v3400 = vrot.slane %v3390, %v3399
    %v3401 = vcombine.high %v3400, %v3400
    %v3403 = vunpack.c.l.s4 1966171168
    %v3404 = vunpack.c.0.s8 %v3403
    %v3405 = vlaneseq
    %v3406 = vshrl.u32 %v3405, 7
    %v3407 = vsub.s32 %v3404, %v3406
    %v3408 = vrot.slane %v3400, %v3407
    %v3410 = vunpack.c.l.s4 1966171168
    %v3411 = vunpack.c.0.s8 %v3410
    %v3412 = vlaneseq
    %v3413 = vshrl.u32 %v3412, 7
    %v3414 = vsub.s32 %v3411, %v3413
    %v3415 = vrot.slane %v3401, %v3414
    %3418 = vst.msk [vmem:[#allocation3 + $0x7] sm:$0x1] %vm573, %v3408
    %3419 = vst.msk [vmem:[#allocation3 + $0xf] sm:$0x1] %vm573, %v3415
    %v3420 = vld [vmem:[#allocation2] sm:$0xff]
    %v3421 = vld [vmem:[#allocation2 + $0x8] sm:$0xff]
    %v3422 = vld [vmem:[#allocation3] sm:$0xff]
    %v3423 = vld [vmem:[#allocation3 + $0x8] sm:$0xff]
    %vm3424 = vcmask 156672
    %3425 = vst.msk [vmem:[#allocation24] sm:$0x3] %vm3424, 0.0
    %s3426 = sld [smem:[#allocation8]]
    %v3427 = vstv %s3426
    %v3428 = vsel %vm261, %v3427, 0
    %s3429 = sld [smem:[#allocation8 + $0x80]]
    %v3430 = vstv %s3429
    %v3431 = vsel %vm265, %v3430, %v3428
    %vm3432 = vcmp.eq.s32.totalorder %v258, %v3431
    %v3433 = vsel %vm3432, 1, 0
    %v3434 = vcvt.s32.f32 %v3433
    %v3436 = vsel %vm272, %v3434, 0
    %v3439 = vsel %vm276, %v215, 0
    %3441 = vmatprep.subr.mxu0 0.0
    %3442 = vmatpush1.msra.mxu0 0.0
    %3443 = vmatprep.subr.mxu0 0.0
    %3444 = vmatpush1.msra.mxu0 0.0
    %3445 = vmatprep.subr.mxu0 0.0
    %3446 = vmatpush1.msra.mxu0 0.0
    %3447 = vmatprep.subr.mxu0 0.0
    %3448 = vmatpush1.msra.mxu0 0.0
    %3449 = vmatprep.subr.mxu0 0.0
    %3450 = vmatpush1.msra.mxu0 0.0
    %3451 = vmatprep.subr.mxu0 0.0
    %3452 = vmatpush1.msra.mxu0 0.0
    %3453 = vmatprep.subr.mxu0 0.0
    %3454 = vmatpush1.msra.mxu0 0.0
    %3455 = vmatprep.subr.mxu0 0.0
    %3456 = vmatpush1.msra.mxu0 0.0
    %3457 = vmatprep.subr.mxu0 0.0
    %3458 = vmatpush1.msra.mxu0 0.0
    %3459 = vmatprep.subr.mxu0 0.0
    %3460 = vmatpush1.msra.mxu0 0.0
    %3461 = vmatprep.subr.mxu0 0.0
    %3462 = vmatpush1.msra.mxu0 0.0
    %3463 = vmatprep.subr.mxu0 0.0
    %3464 = vmatpush1.msra.mxu0 0.0
    %3465 = vmatprep.subr.mxu0 0.0
    %3466 = vmatpush1.msra.mxu0 0.0
    %3467 = vmatprep.subr.mxu0 0.0
    %3468 = vmatpush1.msra.mxu0 %v3439
    %3469 = vmatprep.subr.mxu0 0.0
    %3470 = vmatpush1.msra.mxu0 %v214
    %3471 = vmatprep.subr.mxu0 0.0
    %3472 = vmatpush1.msra.mxu0 %v213
    %3473 = vmatprep.subr.mxu0 0.0
    %3474 = vmatpush2.msra.mxu0 0.0
    %3475 = vmatprep.subr.mxu0 0.0
    %3476 = vmatpush2.msra.mxu0 0.0
    %3477 = vmatprep.subr.mxu0 0.0
    %3478 = vmatpush2.msra.mxu0 0.0
    %3479 = vmatprep.subr.mxu0 0.0
    %3480 = vmatpush2.msra.mxu0 0.0
    %3481 = vmatprep.subr.mxu0 0.0
    %3482 = vmatpush2.msra.mxu0 0.0
    %3483 = vmatprep.subr.mxu0 0.0
    %3484 = vmatpush2.msra.mxu0 0.0
    %3485 = vmatprep.subr.mxu0 0.0
    %3486 = vmatpush2.msra.mxu0 0.0
    %3487 = vmatprep.subr.mxu0 0.0
    %3488 = vmatpush2.msra.mxu0 0.0
    %3489 = vmatprep.subr.mxu0 0.0
    %3490 = vmatpush2.msra.mxu0 0.0
    %3491 = vmatprep.subr.mxu0 0.0
    %3492 = vmatpush2.msra.mxu0 0.0
    %3493 = vmatprep.subr.mxu0 0.0
    %3494 = vmatpush2.msra.mxu0 0.0
    %3495 = vmatprep.subr.mxu0 0.0
    %3496 = vmatpush2.msra.mxu0 0.0
    %3497 = vmatprep.subr.mxu0 0.0
    %3498 = vmatpush2.msra.mxu0 0.0
    %3499 = vmatprep.subr.mxu0 0.0
    %3500 = vmatpush2.msra.mxu0 0.0
    %3501 = vmatprep.subr.mxu0 0.0
    %3502 = vmatpush2.msra.mxu0 0.0
    %3503 = vmatprep.subr.mxu0 0.0
    %3504 = vmatpush2.msra.mxu0 0.0
    %3505 = vmatprep.mubr.f32.mxu0 0.0
    %3506 = vmatmul.mubr.f32.gmra.mxu0 %v3436
    %v3507 = vpop.f32.mrf.mxu0
    %v3508 = vadd.f32 0.0, %v3507
    %v3509 = vpop.f32.mrf.mxu0
    %3510 = vdwg.mxu0
    %3511 = vmatprep.subr.mxu0 0.0
    %3512 = vmatpush1.msra.mxu0 0.0
    %3513 = vmatprep.subr.mxu0 0.0
    %3514 = vmatpush1.msra.mxu0 0.0
    %3515 = vmatprep.subr.mxu0 0.0
    %3516 = vmatpush1.msra.mxu0 0.0
    %3517 = vmatprep.subr.mxu0 0.0
    %3518 = vmatpush1.msra.mxu0 0.0
    %3519 = vmatprep.subr.mxu0 0.0
    %3520 = vmatpush1.msra.mxu0 0.0
    %3521 = vmatprep.subr.mxu0 0.0
    %3522 = vmatpush1.msra.mxu0 0.0
    %3523 = vmatprep.subr.mxu0 0.0
    %3524 = vmatpush1.msra.mxu0 0.0
    %3525 = vmatprep.subr.mxu0 0.0
    %3526 = vmatpush1.msra.mxu0 0.0
    %3527 = vmatprep.subr.mxu0 0.0
    %3528 = vmatpush1.msra.mxu0 0.0
    %3529 = vmatprep.subr.mxu0 0.0
    %3530 = vmatpush1.msra.mxu0 0.0
    %3531 = vmatprep.subr.mxu0 0.0
    %3532 = vmatpush1.msra.mxu0 0.0
    %3533 = vmatprep.subr.mxu0 0.0
    %3534 = vmatpush1.msra.mxu0 0.0
    %3535 = vmatprep.subr.mxu0 0.0
    %3536 = vmatpush1.msra.mxu0 %v227
    %3537 = vmatprep.subr.mxu0 0.0
    %3538 = vmatpush1.msra.mxu0 %v226
    %3539 = vmatprep.subr.mxu0 0.0
    %3540 = vmatpush1.msra.mxu0 %v225
    %3541 = vmatprep.subr.mxu0 0.0
    %3542 = vmatpush1.msra.mxu0 %v224
    %3543 = vmatprep.subr.mxu0 0.0
    %3544 = vmatpush2.msra.mxu0 0.0
    %3545 = vmatprep.subr.mxu0 0.0
    %3546 = vmatpush2.msra.mxu0 0.0
    %3547 = vmatprep.subr.mxu0 0.0
    %3548 = vmatpush2.msra.mxu0 0.0
    %3549 = vmatprep.subr.mxu0 0.0
    %3550 = vmatpush2.msra.mxu0 0.0
    %3551 = vmatprep.subr.mxu0 0.0
    %3552 = vmatpush2.msra.mxu0 0.0
    %3553 = vmatprep.subr.mxu0 0.0
    %3554 = vmatpush2.msra.mxu0 0.0
    %3555 = vmatprep.subr.mxu0 0.0
    %3556 = vmatpush2.msra.mxu0 0.0
    %3557 = vmatprep.subr.mxu0 0.0
    %3558 = vmatpush2.msra.mxu0 0.0
    %3559 = vmatprep.subr.mxu0 0.0
    %3560 = vmatpush2.msra.mxu0 0.0
    %3561 = vmatprep.subr.mxu0 0.0
    %3562 = vmatpush2.msra.mxu0 0.0
    %3563 = vmatprep.subr.mxu0 0.0
    %3564 = vmatpush2.msra.mxu0 0.0
    %3565 = vmatprep.subr.mxu0 0.0
    %3566 = vmatpush2.msra.mxu0 0.0
    %3567 = vmatprep.subr.mxu0 0.0
    %3568 = vmatpush2.msra.mxu0 0.0
    %3569 = vmatprep.subr.mxu0 0.0
    %3570 = vmatpush2.msra.mxu0 0.0
    %3571 = vmatprep.subr.mxu0 0.0
    %3572 = vmatpush2.msra.mxu0 0.0
    %3573 = vmatprep.subr.mxu0 0.0
    %3574 = vmatpush2.msra.mxu0 0.0
    %3575 = vmatprep.mubr.f32.mxu0 0.0
    %3576 = vmatmul.mubr.f32.gmra.mxu0 %v3321
    %v3577 = vpop.f32.mrf.mxu0
    %v3578 = vadd.f32 0.0, %v3577
    %v3579 = vpop.f32.mrf.mxu0
    %3580 = vdwg.mxu0
    %v3583 = vunpack.c.l.s4 1966171168
    %v3584 = vunpack.c.0.s8 %v3583
    %v3585 = vlaneseq
    %v3586 = vshrl.u32 %v3585, 7
    %v3587 = vsub.s32 %v3584, %v3586
    %v3588 = vrot.slane %v3578, %v3587
    %v3589 = vcombine.high %v3588, %v3588
    %v3591 = vunpack.c.l.s4 1966171168
    %v3592 = vunpack.c.0.s8 %v3591
    %v3593 = vlaneseq
    %v3594 = vshrl.u32 %v3593, 7
    %v3595 = vsub.s32 %v3592, %v3594
    %v3596 = vrot.slane %v3588, %v3595
    %v3598 = vunpack.c.l.s4 1966171168
    %v3599 = vunpack.c.0.s8 %v3598
    %v3600 = vlaneseq
    %v3601 = vshrl.u32 %v3600, 7
    %v3602 = vsub.s32 %v3599, %v3601
    %v3603 = vrot.slane %v3589, %v3602
    %v3604 = vlaneseq
    %v3605 = vshrl.u32 %v3604, 7
    %v3606 = vsub.s32 0, %v3605
    %v3607 = vrot.slane %v3596, %v3606
    %v3608 = vlaneseq
    %v3609 = vshrl.u32 %v3608, 7
    %v3610 = vsub.s32 0, %v3609
    %v3611 = vrot.slane %v3603, %v3610
    %v3614 = vadd.f32 %v3607, %v3422
    %v3615 = vadd.f32 %v3611, %v3423
    %v3616 = vtanh.pop %v3614
    %v3617 = vtanh.pop %v3615
    %v3619 = vlaneseq
    %v3620 = vshrl.u32 %v3619, 7
    %v3621 = vsub.s32 0, %v3620
    %v3622 = vrot.slane %v233, %v3621
    %v3624 = vmul.f32 %v3616, %v3622
    %v3625 = vmul.f32 %v3617, %v3622
    %v3626 = vsel %vm436, %v3624, 0.0
    %3627 = vadd.xlane.f32.xlu0 %v3626
    %v3628 = vpop.xlane.xlu0 %3627
    %v3629 = vsel %vm436, %v3625, 0.0
    %3630 = vadd.xlane.f32.xlu0 %v3629
    %v3631 = vpop.xlane.xlu0 %3630
    %v3634 = vlaneseq
    %v3635 = vshrl.u32 %v3634, 7
    %v3636 = vsub.s32 %v258, %v3635
    %v3637 = vrot.slane %v3628, %v3636
    %v3638 = vlaneseq
    %v3639 = vshrl.u32 %v3638, 7
    %v3640 = vsub.s32 %v258, %v3639
    %v3641 = vrot.slane %v3631, %v3640
    %vm3642 = vcmask 1041409
    %v3643 = vsel %vm3642, %v3641, %v3637
    %vm3645 = vcmask 58368
    %v3646 = vsel %vm3645, %v3643, -inf
    %3647 = vmax.xlane.f32.xlu0 %v3646
    %v3648 = vpop.xlane.xlu0 %3647
    %v3650 = vlaneseq
    %v3651 = vshrl.u32 %v3650, 7
    %v3652 = vsub.s32 0, %v3651
    %v3653 = vrot.slane %v3648, %v3652
    %v3654 = vlaneseq
    %v3655 = vshrl.u32 %v3654, 7
    %v3656 = vsub.s32 1, %v3655
    %v3657 = vrot.slane %v3648, %v3656
    %v3660 = vsub.f32 %v3628, %v3653
    %v3661 = vsub.f32 %v3631, %v3657
    %v3662 = vmul.f32 %v3660, 1.442695
    %v3663 = vpow.pop %v3662
    %v3664 = vmul.f32 %v3661, 1.442695
    %v3665 = vpow.pop %v3664
    %3668 = vset.pattern.permute.xlu0 0
    %3669 = vperm.xlu0 %3668, %v3663
    %v3670 = vpop.permute.xlu0 %3669
    %3671 = vset.pattern.permute.xlu0 0
    %3672 = vperm.xlu0 %3671, %v3665
    %v3673 = vpop.permute.xlu0 %3672
    %v3674 = vlaneseq
    %v3675 = vshrl.u32 %v3674, 7
    %v3676 = vsub.s32 %v258, %v3675
    %v3677 = vrot.slane %v3670, %v3676
    %v3678 = vlaneseq
    %v3679 = vshrl.u32 %v3678, 7
    %v3680 = vsub.s32 %v258, %v3679
    %v3681 = vrot.slane %v3673, %v3680
    %v3682 = vsel %vm3642, %v3681, %v3677
    %v3684 = vsel %vm3645, %v3682, 0.0
    %3685 = vadd.xlane.f32.xlu0 %v3684
    %v3686 = vpop.xlane.xlu0 %3685
    %v3687 = vrcp.pop %v3686
    %v3689 = vlaneseq
    %v3690 = vshrl.u32 %v3689, 7
    %v3691 = vsub.s32 0, %v3690
    %v3692 = vrot.slane %v3687, %v3691
    %v3693 = vlaneseq
    %v3694 = vshrl.u32 %v3693, 7
    %v3695 = vsub.s32 1, %v3694
    %v3696 = vrot.slane %v3687, %v3695
    %v3699 = vmul.f32 %v3663, %v3692
    %v3700 = vmul.f32 %v3665, %v3696
    %3702 = vset.pattern.permute.xlu0 0
    %3703 = vperm.xlu0 %3702, %v3699
    %v3704 = vpop.permute.xlu0 %3703
    %3707 = vset.pattern.permute.xlu0 0
    %3708 = vperm.xlu0 %3707, %v3700
    %v3709 = vpop.permute.xlu0 %3708
    %v3711 = vmul.f32 %v3704, %v3420
    %v3712 = vmul.f32 %v3709, %v3421
    %v3713 = vsel %vm436, %v3711, 0.0
    %v3714 = vrot.slane %v3713, 4
    %v3715 = vadd.f32 %v3713, %v3714
    %v3716 = vrot.slane %v3715, 2
    %v3717 = vadd.f32 %v3715, %v3716
    %v3718 = vrot.slane %v3717, 1
    %v3719 = vadd.f32 %v3717, %v3718
    %v3720 = vsel %vm436, %v3712, 0.0
    %v3721 = vrot.slane %v3720, 4
    %v3722 = vadd.f32 %v3720, %v3721
    %v3723 = vrot.slane %v3722, 2
    %v3724 = vadd.f32 %v3722, %v3723
    %v3725 = vrot.slane %v3724, 1
    %v3726 = vadd.f32 %v3724, %v3725
    %v3729 = vsel %vm3642, %v3726, %v3719
    %v3730 = vsel %vm436, %v3729, 0
    %3732 = vmatprep.subr.mxu0 0.0
    %3733 = vmatpush1.msra.mxu0 0.0
    %3734 = vmatprep.subr.mxu0 0.0
    %3735 = vmatpush1.msra.mxu0 0.0
    %3736 = vmatprep.subr.mxu0 0.0
    %3737 = vmatpush1.msra.mxu0 0.0
    %3738 = vmatprep.subr.mxu0 0.0
    %3739 = vmatpush1.msra.mxu0 0.0
    %3740 = vmatprep.subr.mxu0 0.0
    %3741 = vmatpush1.msra.mxu0 0.0
    %3742 = vmatprep.subr.mxu0 0.0
    %3743 = vmatpush1.msra.mxu0 0.0
    %3744 = vmatprep.subr.mxu0 0.0
    %3745 = vmatpush1.msra.mxu0 0.0
    %3746 = vmatprep.subr.mxu0 0.0
    %3747 = vmatpush1.msra.mxu0 0.0
    %3748 = vmatprep.subr.mxu0 0.0
    %3749 = vmatpush1.msra.mxu0 0.0
    %3750 = vmatprep.subr.mxu0 0.0
    %3751 = vmatpush1.msra.mxu0 0.0
    %3752 = vmatprep.subr.mxu0 0.0
    %3753 = vmatpush1.msra.mxu0 0.0
    %3754 = vmatprep.subr.mxu0 0.0
    %3755 = vmatpush1.msra.mxu0 0.0
    %3756 = vmatprep.subr.mxu0 0.0
    %3757 = vmatpush1.msra.mxu0 %v239
    %3758 = vmatprep.subr.mxu0 0.0
    %3759 = vmatpush1.msra.mxu0 %v238
    %3760 = vmatprep.subr.mxu0 0.0
    %3761 = vmatpush1.msra.mxu0 %v237
    %3762 = vmatprep.subr.mxu0 0.0
    %3763 = vmatpush1.msra.mxu0 %v236
    %3764 = vmatprep.subr.mxu0 0.0
    %3765 = vmatpush2.msra.mxu0 0.0
    %3766 = vmatprep.subr.mxu0 0.0
    %3767 = vmatpush2.msra.mxu0 0.0
    %3768 = vmatprep.subr.mxu0 0.0
    %3769 = vmatpush2.msra.mxu0 0.0
    %3770 = vmatprep.subr.mxu0 0.0
    %3771 = vmatpush2.msra.mxu0 0.0
    %3772 = vmatprep.subr.mxu0 0.0
    %3773 = vmatpush2.msra.mxu0 0.0
    %3774 = vmatprep.subr.mxu0 0.0
    %3775 = vmatpush2.msra.mxu0 0.0
    %3776 = vmatprep.subr.mxu0 0.0
    %3777 = vmatpush2.msra.mxu0 0.0
    %3778 = vmatprep.subr.mxu0 0.0
    %3779 = vmatpush2.msra.mxu0 0.0
    %3780 = vmatprep.subr.mxu0 0.0
    %3781 = vmatpush2.msra.mxu0 0.0
    %3782 = vmatprep.subr.mxu0 0.0
    %3783 = vmatpush2.msra.mxu0 0.0
    %3784 = vmatprep.subr.mxu0 0.0
    %3785 = vmatpush2.msra.mxu0 0.0
    %3786 = vmatprep.subr.mxu0 0.0
    %3787 = vmatpush2.msra.mxu0 0.0
    %3788 = vmatprep.subr.mxu0 0.0
    %3789 = vmatpush2.msra.mxu0 0.0
    %3790 = vmatprep.subr.mxu0 0.0
    %3791 = vmatpush2.msra.mxu0 0.0
    %3792 = vmatprep.subr.mxu0 0.0
    %3793 = vmatpush2.msra.mxu0 0.0
    %3794 = vmatprep.subr.mxu0 0.0
    %3795 = vmatpush2.msra.mxu0 0.0
    %3796 = vmatprep.mubr.f32.mxu0 0.0
    %3797 = vmatmul.mubr.f32.gmra.mxu0 %v3730
    %v3798 = vpop.f32.mrf.mxu0
    %v3799 = vadd.f32 0.0, %v3798
    %v3800 = vpop.f32.mrf.mxu0
    %3801 = vdwg.mxu0
    %v3803 = vsel %vm356, %v3508, 0
    %3805 = vmatprep.subr.mxu0 0.0
    %3806 = vmatpush1.msra.mxu0 0.0
    %3807 = vmatprep.subr.mxu0 0.0
    %3808 = vmatpush1.msra.mxu0 0.0
    %3809 = vmatprep.subr.mxu0 0.0
    %3810 = vmatpush1.msra.mxu0 0.0
    %3811 = vmatprep.subr.mxu0 0.0
    %3812 = vmatpush1.msra.mxu0 0.0
    %3813 = vmatprep.subr.mxu0 0.0
    %3814 = vmatpush1.msra.mxu0 0.0
    %3815 = vmatprep.subr.mxu0 0.0
    %3816 = vmatpush1.msra.mxu0 0.0
    %3817 = vmatprep.subr.mxu0 0.0
    %3818 = vmatpush1.msra.mxu0 0.0
    %3819 = vmatprep.subr.mxu0 0.0
    %3820 = vmatpush1.msra.mxu0 0.0
    %3821 = vmatprep.subr.mxu0 0.0
    %3822 = vmatpush1.msra.mxu0 0.0
    %3823 = vmatprep.subr.mxu0 0.0
    %3824 = vmatpush1.msra.mxu0 0.0
    %3825 = vmatprep.subr.mxu0 0.0
    %3826 = vmatpush1.msra.mxu0 0.0
    %3827 = vmatprep.subr.mxu0 0.0
    %3828 = vmatpush1.msra.mxu0 0.0
    %3829 = vmatprep.subr.mxu0 0.0
    %3830 = vmatpush1.msra.mxu0 0.0
    %3831 = vmatprep.subr.mxu0 0.0
    %3832 = vmatpush1.msra.mxu0 0.0
    %3833 = vmatprep.subr.mxu0 0.0
    %3834 = vmatpush1.msra.mxu0 %v235
    %3835 = vmatprep.subr.mxu0 0.0
    %3836 = vmatpush1.msra.mxu0 %v234
    %3837 = vmatprep.subr.mxu0 0.0
    %3838 = vmatpush2.msra.mxu0 0.0
    %3839 = vmatprep.subr.mxu0 0.0
    %3840 = vmatpush2.msra.mxu0 0.0
    %3841 = vmatprep.subr.mxu0 0.0
    %3842 = vmatpush2.msra.mxu0 0.0
    %3843 = vmatprep.subr.mxu0 0.0
    %3844 = vmatpush2.msra.mxu0 0.0
    %3845 = vmatprep.subr.mxu0 0.0
    %3846 = vmatpush2.msra.mxu0 0.0
    %3847 = vmatprep.subr.mxu0 0.0
    %3848 = vmatpush2.msra.mxu0 0.0
    %3849 = vmatprep.subr.mxu0 0.0
    %3850 = vmatpush2.msra.mxu0 0.0
    %3851 = vmatprep.subr.mxu0 0.0
    %3852 = vmatpush2.msra.mxu0 0.0
    %3853 = vmatprep.subr.mxu0 0.0
    %3854 = vmatpush2.msra.mxu0 0.0
    %3855 = vmatprep.subr.mxu0 0.0
    %3856 = vmatpush2.msra.mxu0 0.0
    %3857 = vmatprep.subr.mxu0 0.0
    %3858 = vmatpush2.msra.mxu0 0.0
    %3859 = vmatprep.subr.mxu0 0.0
    %3860 = vmatpush2.msra.mxu0 0.0
    %3861 = vmatprep.subr.mxu0 0.0
    %3862 = vmatpush2.msra.mxu0 0.0
    %3863 = vmatprep.subr.mxu0 0.0
    %3864 = vmatpush2.msra.mxu0 0.0
    %3865 = vmatprep.subr.mxu0 0.0
    %3866 = vmatpush2.msra.mxu0 0.0
    %3867 = vmatprep.subr.mxu0 0.0
    %3868 = vmatpush2.msra.mxu0 0.0
    %3869 = vmatprep.mubr.f32.mxu0 0.0
    %3870 = vmatmul.mubr.f32.gmra.mxu0 %v3803
    %v3871 = vpop.f32.mrf.mxu0
    %v3872 = vadd.f32 %v3799, %v3871
    %v3873 = vpop.f32.mrf.mxu0
    %3874 = vdwg.mxu0
    %v3876 = vlaneseq
    %v3877 = vshrl.u32 %v3876, 7
    %v3878 = vsub.s32 0, %v3877
    %v3879 = vrot.slane %v244, %v3878
    %v3881 = vadd.f32 %v3872, %v3879
    %v3883 = vlaneseq
    %v3884 = vshrl.u32 %v3883, 7
    %v3885 = vsub.s32 0, %v3884
    %v3886 = vrot.slane %v245, %v3885
    %3888 = vmatprep.subr.mxu0 0.0
    %3889 = vmatpush1.msra.mxu0 0.0
    %3890 = vmatprep.subr.mxu0 0.0
    %3891 = vmatpush1.msra.mxu0 0.0
    %3892 = vmatprep.subr.mxu0 0.0
    %3893 = vmatpush1.msra.mxu0 0.0
    %3894 = vmatprep.subr.mxu0 0.0
    %3895 = vmatpush1.msra.mxu0 0.0
    %3896 = vmatprep.subr.mxu0 0.0
    %3897 = vmatpush1.msra.mxu0 0.0
    %3898 = vmatprep.subr.mxu0 0.0
    %3899 = vmatpush1.msra.mxu0 0.0
    %3900 = vmatprep.subr.mxu0 0.0
    %3901 = vmatpush1.msra.mxu0 0.0
    %3902 = vmatprep.subr.mxu0 0.0
    %3903 = vmatpush1.msra.mxu0 0.0
    %3904 = vmatprep.subr.mxu0 0.0
    %3905 = vmatpush1.msra.mxu0 0.0
    %3906 = vmatprep.subr.mxu0 0.0
    %3907 = vmatpush1.msra.mxu0 0.0
    %3908 = vmatprep.subr.mxu0 0.0
    %3909 = vmatpush1.msra.mxu0 0.0
    %3910 = vmatprep.subr.mxu0 0.0
    %3911 = vmatpush1.msra.mxu0 0.0
    %3912 = vmatprep.subr.mxu0 0.0
    %3913 = vmatpush1.msra.mxu0 %v243
    %3914 = vmatprep.subr.mxu0 0.0
    %3915 = vmatpush1.msra.mxu0 %v242
    %3916 = vmatprep.subr.mxu0 0.0
    %3917 = vmatpush1.msra.mxu0 %v241
    %3918 = vmatprep.subr.mxu0 0.0
    %3919 = vmatpush1.msra.mxu0 %v240
    %3920 = vmatprep.subr.mxu0 0.0
    %3921 = vmatpush2.msra.mxu0 0.0
    %3922 = vmatprep.subr.mxu0 0.0
    %3923 = vmatpush2.msra.mxu0 0.0
    %3924 = vmatprep.subr.mxu0 0.0
    %3925 = vmatpush2.msra.mxu0 0.0
    %3926 = vmatprep.subr.mxu0 0.0
    %3927 = vmatpush2.msra.mxu0 0.0
    %3928 = vmatprep.subr.mxu0 0.0
    %3929 = vmatpush2.msra.mxu0 0.0
    %3930 = vmatprep.subr.mxu0 0.0
    %3931 = vmatpush2.msra.mxu0 0.0
    %3932 = vmatprep.subr.mxu0 0.0
    %3933 = vmatpush2.msra.mxu0 0.0
    %3934 = vmatprep.subr.mxu0 0.0
    %3935 = vmatpush2.msra.mxu0 0.0
    %3936 = vmatprep.subr.mxu0 0.0
    %3937 = vmatpush2.msra.mxu0 0.0
    %3938 = vmatprep.subr.mxu0 0.0
    %3939 = vmatpush2.msra.mxu0 0.0
    %3940 = vmatprep.subr.mxu0 0.0
    %3941 = vmatpush2.msra.mxu0 0.0
    %3942 = vmatprep.subr.mxu0 0.0
    %3943 = vmatpush2.msra.mxu0 0.0
    %3944 = vmatprep.subr.mxu0 0.0
    %3945 = vmatpush2.msra.mxu0 0.0
    %3946 = vmatprep.subr.mxu0 0.0
    %3947 = vmatpush2.msra.mxu0 0.0
    %3948 = vmatprep.subr.mxu0 0.0
    %3949 = vmatpush2.msra.mxu0 0.0
    %3950 = vmatprep.subr.mxu0 0.0
    %3951 = vmatpush2.msra.mxu0 0.0
    %3952 = vmatprep.mubr.f32.mxu0 0.0
    %3953 = vmatmul.mubr.f32.gmra.mxu0 %v3321
    %v3954 = vpop.f32.mrf.mxu0
    %v3955 = vadd.f32 %v3886, %v3954
    %v3956 = vpop.f32.mrf.mxu0
    %3957 = vdwg.mxu0
    %v3958 = vadd.f32 %v3881, %v3955
    %v3959 = vxor.u32 %v3958, 2147483648
    %v3960 = vmul.f32 %v3959, 1.442695
    %v3961 = vpow.pop %v3960
    %v3962 = vadd.f32 %v3961, 1.0
    %v3963 = vrcp.pop %v3962
    %v3964 = vmul.f32 1.0, %v3963
    %3966 = vrot.lane.b32.xlu0 %v3955, 64
    %v3967 = vpop.permute.xlu0 %3966
    %v3969 = vmul.f32 %v3964, %v3967
    %3971 = vrot.lane.b32.xlu0 %v3969, 64
    %v3972 = vpop.permute.xlu0 %3971
    %v3974 = vadd.f32 %v3881, %v3972
    %v3975 = vtanh.pop %v3974
    %v3976 = vsub.f32 1.0, %v3964
    %3978 = vrot.lane.b32.xlu0 %v3975, 96
    %v3979 = vpop.permute.xlu0 %3978
    %v3981 = vmul.f32 %v3976, %v3979
    %v3982 = vmul.f32 %v3964, %v3279
    %v3983 = vadd.f32 %v3981, %v3982
    %3984 = vmatprep.subr.mxu0 0.0
    %3985 = vmatpush1.msra.mxu0 0.0
    %3986 = vmatprep.subr.mxu0 0.0
    %3987 = vmatpush1.msra.mxu0 0.0
    %3988 = vmatprep.subr.mxu0 0.0
    %3989 = vmatpush1.msra.mxu0 0.0
    %3990 = vmatprep.subr.mxu0 0.0
    %3991 = vmatpush1.msra.mxu0 0.0
    %3992 = vmatprep.subr.mxu0 0.0
    %3993 = vmatpush1.msra.mxu0 0.0
    %3994 = vmatprep.subr.mxu0 0.0
    %3995 = vmatpush1.msra.mxu0 0.0
    %3996 = vmatprep.subr.mxu0 0.0
    %3997 = vmatpush1.msra.mxu0 0.0
    %3998 = vmatprep.subr.mxu0 0.0
    %3999 = vmatpush1.msra.mxu0 0.0
    %4000 = vmatprep.subr.mxu0 0.0
    %4001 = vmatpush1.msra.mxu0 0.0
    %4002 = vmatprep.subr.mxu0 0.0
    %4003 = vmatpush1.msra.mxu0 0.0
    %4004 = vmatprep.subr.mxu0 0.0
    %4005 = vmatpush1.msra.mxu0 0.0
    %4006 = vmatprep.subr.mxu0 0.0
    %4007 = vmatpush1.msra.mxu0 0.0
    %4008 = vmatprep.subr.mxu0 0.0
    %4009 = vmatpush1.msra.mxu0 %v253
    %4010 = vmatprep.subr.mxu0 0.0
    %4011 = vmatpush1.msra.mxu0 %v252
    %4012 = vmatprep.subr.mxu0 0.0
    %4013 = vmatpush1.msra.mxu0 %v251
    %4014 = vmatprep.subr.mxu0 0.0
    %4015 = vmatpush1.msra.mxu0 %v250
    %4016 = vmatprep.subr.mxu0 0.0
    %4017 = vmatpush2.msra.mxu0 0.0
    %4018 = vmatprep.subr.mxu0 0.0
    %4019 = vmatpush2.msra.mxu0 0.0
    %4020 = vmatprep.subr.mxu0 0.0
    %4021 = vmatpush2.msra.mxu0 0.0
    %4022 = vmatprep.subr.mxu0 0.0
    %4023 = vmatpush2.msra.mxu0 0.0
    %4024 = vmatprep.subr.mxu0 0.0
    %4025 = vmatpush2.msra.mxu0 0.0
    %4026 = vmatprep.subr.mxu0 0.0
    %4027 = vmatpush2.msra.mxu0 0.0
    %4028 = vmatprep.subr.mxu0 0.0
    %4029 = vmatpush2.msra.mxu0 0.0
    %4030 = vmatprep.subr.mxu0 0.0
    %4031 = vmatpush2.msra.mxu0 0.0
    %4032 = vmatprep.subr.mxu0 0.0
    %4033 = vmatpush2.msra.mxu0 0.0
    %4034 = vmatprep.subr.mxu0 0.0
    %4035 = vmatpush2.msra.mxu0 0.0
    %4036 = vmatprep.subr.mxu0 0.0
    %4037 = vmatpush2.msra.mxu0 0.0
    %4038 = vmatprep.subr.mxu0 0.0
    %4039 = vmatpush2.msra.mxu0 0.0
    %4040 = vmatprep.subr.mxu0 0.0
    %4041 = vmatpush2.msra.mxu0 0.0
    %4042 = vmatprep.subr.mxu0 0.0
    %4043 = vmatpush2.msra.mxu0 0.0
    %4044 = vmatprep.subr.mxu0 0.0
    %4045 = vmatpush2.msra.mxu0 0.0
    %4046 = vmatprep.subr.mxu0 0.0
    %4047 = vmatpush2.msra.mxu0 0.0
    %4048 = vmatprep.mubr.f32.mxu0 0.0
    %4049 = vmatmul.mubr.f32.gmra.mxu0 %v3730
    %v4050 = vpop.f32.mrf.mxu0
    %v4051 = vadd.f32 0.0, %v4050
    %v4052 = vpop.f32.mrf.mxu0
    %4053 = vdwg.mxu0
    %4055 = vrot.lane.b32.xlu0 %v3983, 96
    %v4056 = vpop.permute.xlu0 %4055
    %v4057 = vsel %vm436, %v4056, 0
    %4059 = vmatprep.subr.mxu0 0.0
    %4060 = vmatpush1.msra.mxu0 0.0
    %4061 = vmatprep.subr.mxu0 0.0
    %4062 = vmatpush1.msra.mxu0 0.0
    %4063 = vmatprep.subr.mxu0 0.0
    %4064 = vmatpush1.msra.mxu0 0.0
    %4065 = vmatprep.subr.mxu0 0.0
    %4066 = vmatpush1.msra.mxu0 0.0
    %4067 = vmatprep.subr.mxu0 0.0
    %4068 = vmatpush1.msra.mxu0 0.0
    %4069 = vmatprep.subr.mxu0 0.0
    %4070 = vmatpush1.msra.mxu0 0.0
    %4071 = vmatprep.subr.mxu0 0.0
    %4072 = vmatpush1.msra.mxu0 0.0
    %4073 = vmatprep.subr.mxu0 0.0
    %4074 = vmatpush1.msra.mxu0 0.0
    %4075 = vmatprep.subr.mxu0 0.0
    %4076 = vmatpush1.msra.mxu0 0.0
    %4077 = vmatprep.subr.mxu0 0.0
    %4078 = vmatpush1.msra.mxu0 0.0
    %4079 = vmatprep.subr.mxu0 0.0
    %4080 = vmatpush1.msra.mxu0 0.0
    %4081 = vmatprep.subr.mxu0 0.0
    %4082 = vmatpush1.msra.mxu0 0.0
    %4083 = vmatprep.subr.mxu0 0.0
    %4084 = vmatpush1.msra.mxu0 %v249
    %4085 = vmatprep.subr.mxu0 0.0
    %4086 = vmatpush1.msra.mxu0 %v248
    %4087 = vmatprep.subr.mxu0 0.0
    %4088 = vmatpush1.msra.mxu0 %v247
    %4089 = vmatprep.subr.mxu0 0.0
    %4090 = vmatpush1.msra.mxu0 %v246
    %4091 = vmatprep.subr.mxu0 0.0
    %4092 = vmatpush2.msra.mxu0 0.0
    %4093 = vmatprep.subr.mxu0 0.0
    %4094 = vmatpush2.msra.mxu0 0.0
    %4095 = vmatprep.subr.mxu0 0.0
    %4096 = vmatpush2.msra.mxu0 0.0
    %4097 = vmatprep.subr.mxu0 0.0
    %4098 = vmatpush2.msra.mxu0 0.0
    %4099 = vmatprep.subr.mxu0 0.0
    %4100 = vmatpush2.msra.mxu0 0.0
    %4101 = vmatprep.subr.mxu0 0.0
    %4102 = vmatpush2.msra.mxu0 0.0
    %4103 = vmatprep.subr.mxu0 0.0
    %4104 = vmatpush2.msra.mxu0 0.0
    %4105 = vmatprep.subr.mxu0 0.0
    %4106 = vmatpush2.msra.mxu0 0.0
    %4107 = vmatprep.subr.mxu0 0.0
    %4108 = vmatpush2.msra.mxu0 0.0
    %4109 = vmatprep.subr.mxu0 0.0
    %4110 = vmatpush2.msra.mxu0 0.0
    %4111 = vmatprep.subr.mxu0 0.0
    %4112 = vmatpush2.msra.mxu0 0.0
    %4113 = vmatprep.subr.mxu0 0.0
    %4114 = vmatpush2.msra.mxu0 0.0
    %4115 = vmatprep.subr.mxu0 0.0
    %4116 = vmatpush2.msra.mxu0 0.0
    %4117 = vmatprep.subr.mxu0 0.0
    %4118 = vmatpush2.msra.mxu0 0.0
    %4119 = vmatprep.subr.mxu0 0.0
    %4120 = vmatpush2.msra.mxu0 0.0
    %4121 = vmatprep.subr.mxu0 0.0
    %4122 = vmatpush2.msra.mxu0 0.0
    %4123 = vmatprep.mubr.f32.mxu0 0.0
    %4124 = vmatmul.mubr.f32.gmra.mxu0 %v4057
    %v4125 = vpop.f32.mrf.mxu0
    %v4126 = vadd.f32 %v4051, %v4125
    %v4127 = vpop.f32.mrf.mxu0
    %4128 = vdwg.mxu0
    %4129 = vmatprep.subr.mxu0 0.0
    %4130 = vmatpush1.msra.mxu0 0.0
    %4131 = vmatprep.subr.mxu0 0.0
    %4132 = vmatpush1.msra.mxu0 0.0
    %4133 = vmatprep.subr.mxu0 0.0
    %4134 = vmatpush1.msra.mxu0 0.0
    %4135 = vmatprep.subr.mxu0 0.0
    %4136 = vmatpush1.msra.mxu0 0.0
    %4137 = vmatprep.subr.mxu0 0.0
    %4138 = vmatpush1.msra.mxu0 0.0
    %4139 = vmatprep.subr.mxu0 0.0
    %4140 = vmatpush1.msra.mxu0 0.0
    %4141 = vmatprep.subr.mxu0 0.0
    %4142 = vmatpush1.msra.mxu0 0.0
    %4143 = vmatprep.subr.mxu0 0.0
    %4144 = vmatpush1.msra.mxu0 0.0
    %4145 = vmatprep.subr.mxu0 0.0
    %4146 = vmatpush1.msra.mxu0 0.0
    %4147 = vmatprep.subr.mxu0 0.0
    %4148 = vmatpush1.msra.mxu0 0.0
    %4149 = vmatprep.subr.mxu0 0.0
    %4150 = vmatpush1.msra.mxu0 0.0
    %4151 = vmatprep.subr.mxu0 0.0
    %4152 = vmatpush1.msra.mxu0 0.0
    %4153 = vmatprep.subr.mxu0 0.0
    %4154 = vmatpush1.msra.mxu0 0.0
    %4155 = vmatprep.subr.mxu0 0.0
    %4156 = vmatpush1.msra.mxu0 0.0
    %4157 = vmatprep.subr.mxu0 0.0
    %4158 = vmatpush1.msra.mxu0 %v255
    %4159 = vmatprep.subr.mxu0 0.0
    %4160 = vmatpush1.msra.mxu0 %v254
    %4161 = vmatprep.subr.mxu0 0.0
    %4162 = vmatpush2.msra.mxu0 0.0
    %4163 = vmatprep.subr.mxu0 0.0
    %4164 = vmatpush2.msra.mxu0 0.0
    %4165 = vmatprep.subr.mxu0 0.0
    %4166 = vmatpush2.msra.mxu0 0.0
    %4167 = vmatprep.subr.mxu0 0.0
    %4168 = vmatpush2.msra.mxu0 0.0
    %4169 = vmatprep.subr.mxu0 0.0
    %4170 = vmatpush2.msra.mxu0 0.0
    %4171 = vmatprep.subr.mxu0 0.0
    %4172 = vmatpush2.msra.mxu0 0.0
    %4173 = vmatprep.subr.mxu0 0.0
    %4174 = vmatpush2.msra.mxu0 0.0
    %4175 = vmatprep.subr.mxu0 0.0
    %4176 = vmatpush2.msra.mxu0 0.0
    %4177 = vmatprep.subr.mxu0 0.0
    %4178 = vmatpush2.msra.mxu0 0.0
    %4179 = vmatprep.subr.mxu0 0.0
    %4180 = vmatpush2.msra.mxu0 0.0
    %4181 = vmatprep.subr.mxu0 0.0
    %4182 = vmatpush2.msra.mxu0 0.0
    %4183 = vmatprep.subr.mxu0 0.0
    %4184 = vmatpush2.msra.mxu0 0.0
    %4185 = vmatprep.subr.mxu0 0.0
    %4186 = vmatpush2.msra.mxu0 0.0
    %4187 = vmatprep.subr.mxu0 0.0
    %4188 = vmatpush2.msra.mxu0 0.0
    %4189 = vmatprep.subr.mxu0 0.0
    %4190 = vmatpush2.msra.mxu0 0.0
    %4191 = vmatprep.subr.mxu0 0.0
    %4192 = vmatpush2.msra.mxu0 0.0
    %4193 = vmatprep.mubr.f32.mxu0 0.0
    %4194 = vmatmul.mubr.f32.gmra.mxu0 %v3803
    %v4195 = vpop.f32.mrf.mxu0
    %v4196 = vadd.f32 0.0, %v4195
    %v4197 = vpop.f32.mrf.mxu0
    %4198 = vdwg.mxu0
    %v4199 = vadd.f32 %v4126, %v4196
    %v4201 = vlaneseq
    %v4202 = vshrl.u32 %v4201, 7
    %v4203 = vsub.s32 0, %v4202
    %v4204 = vrot.slane %v256, %v4203
    %v4206 = vadd.f32 %v4199, %v4204
    %s4207 = scalar_lea.vmem [#allocation24], 2
    %4208 = vst.msk [vmem:[%s4207] sm:$0x3] %vm3424, %v4206
    %v4209 = vsel %vm3424, %v4206, -inf
    %4210 = vmax.xlane.f32.xlu0 %v4209
    %v4211 = vpop.xlane.xlu0 %4210
    %vm4212 = vcmp.ge.f32.partialorder %v4206, %v4211
    %v4213 = vsel %vm4212, %v258, 20
    %v4214 = vsel %vm3424, %v4213, 2147483647
    %v4215 = vand.u32 %v4214, 65535
    %v4216 = vshra.s32 %v4214, 16
    %v4217 = vcvt.s32.f32 %v4215
    %v4218 = vcvt.s32.f32 %v4216
    %4219 = vmin.xlane.f32.xlu0 %v4218
    %v4220 = vpop.xlane.xlu0 %4219
    %vm4221 = vcmp.eq.f32.partialorder %v4218, %v4220
    %v4222 = vsel %vm4221, %v4217, inf
    %4223 = vmin.xlane.f32.xlu0 %v4222
    %v4224 = vpop.xlane.xlu0 %4223
    %v4225 = vcvt.f32.s32 %v4224
    %v4226 = vcvt.f32.s32 %v4220
    %v4227 = vshll.u32 %v4226, 16
    %v4228 = vadd.s32 %v4227, %v4225
    %vm4229 = vcmp.eq.s32.totalorder %v258, %v4228
    %v4230 = vsel %vm4229, 1, 0
    %v4231 = vcvt.s32.f32 %v4230
    %s4232 = sld [smem:[#allocation8 + $0x1]]
    %v4233 = vstv %s4232
    %v4234 = vsel %vm261, %v4233, 0
    %s4235 = sld [smem:[#allocation8 + $0x81]]
    %v4236 = vstv %s4235
    %v4237 = vsel %vm265, %v4236, %v4234
    %vm4238 = vcmp.eq.s32.totalorder %v258, %v4237
    %v4239 = vsel %vm4238, 1, 0
    %v4240 = vcvt.s32.f32 %v4239
    %s4241 = sld [smem:[#allocation10]]
    %p4242 = scmp.gt.s32.totalorder %s4241, 0
    %s4243 = scalar_select %p4242, 1, 0
    %s4244 = scvt.s32.f32 %s4243
    %v4245 = vstv %s4244
    %v4246 = vmul.f32 %v4245, %v4240
    %s4247 = ssub.f32 1.0, %s4244
    %v4248 = vstv %s4247
    %v4249 = vmul.f32 %v4248, %v4231
    %v4250 = vadd.f32 %v4246, %v4249
    %v4252 = vsel %vm272, %v4250, 0
    %4254 = vmatprep.subr.mxu0 0.0
    %4255 = vmatpush1.msra.mxu0 0.0
    %4256 = vmatprep.subr.mxu0 0.0
    %4257 = vmatpush1.msra.mxu0 0.0
    %4258 = vmatprep.subr.mxu0 0.0
    %4259 = vmatpush1.msra.mxu0 0.0
    %4260 = vmatprep.subr.mxu0 0.0
    %4261 = vmatpush1.msra.mxu0 0.0
    %4262 = vmatprep.subr.mxu0 0.0
    %4263 = vmatpush1.msra.mxu0 0.0
    %4264 = vmatprep.subr.mxu0 0.0
    %4265 = vmatpush1.msra.mxu0 0.0
    %4266 = vmatprep.subr.mxu0 0.0
    %4267 = vmatpush1.msra.mxu0 0.0
    %4268 = vmatprep.subr.mxu0 0.0
    %4269 = vmatpush1.msra.mxu0 0.0
    %4270 = vmatprep.subr.mxu0 0.0
    %4271 = vmatpush1.msra.mxu0 0.0
    %4272 = vmatprep.subr.mxu0 0.0
    %4273 = vmatpush1.msra.mxu0 0.0
    %4274 = vmatprep.subr.mxu0 0.0
    %4275 = vmatpush1.msra.mxu0 0.0
    %4276 = vmatprep.subr.mxu0 0.0
    %4277 = vmatpush1.msra.mxu0 0.0
    %4278 = vmatprep.subr.mxu0 0.0
    %4279 = vmatpush1.msra.mxu0 0.0
    %4280 = vmatprep.subr.mxu0 0.0
    %4281 = vmatpush1.msra.mxu0 %v3439
    %4282 = vmatprep.subr.mxu0 0.0
    %4283 = vmatpush1.msra.mxu0 %v214
    %4284 = vmatprep.subr.mxu0 0.0
    %4285 = vmatpush1.msra.mxu0 %v213
    %4286 = vmatprep.subr.mxu0 0.0
    %4287 = vmatpush2.msra.mxu0 0.0
    %4288 = vmatprep.subr.mxu0 0.0
    %4289 = vmatpush2.msra.mxu0 0.0
    %4290 = vmatprep.subr.mxu0 0.0
    %4291 = vmatpush2.msra.mxu0 0.0
    %4292 = vmatprep.subr.mxu0 0.0
    %4293 = vmatpush2.msra.mxu0 0.0
    %4294 = vmatprep.subr.mxu0 0.0
    %4295 = vmatpush2.msra.mxu0 0.0
    %4296 = vmatprep.subr.mxu0 0.0
    %4297 = vmatpush2.msra.mxu0 0.0
    %4298 = vmatprep.subr.mxu0 0.0
    %4299 = vmatpush2.msra.mxu0 0.0
    %4300 = vmatprep.subr.mxu0 0.0
    %4301 = vmatpush2.msra.mxu0 0.0
    %4302 = vmatprep.subr.mxu0 0.0
    %4303 = vmatpush2.msra.mxu0 0.0
    %4304 = vmatprep.subr.mxu0 0.0
    %4305 = vmatpush2.msra.mxu0 0.0
    %4306 = vmatprep.subr.mxu0 0.0
    %4307 = vmatpush2.msra.mxu0 0.0
    %4308 = vmatprep.subr.mxu0 0.0
    %4309 = vmatpush2.msra.mxu0 0.0
    %4310 = vmatprep.subr.mxu0 0.0
    %4311 = vmatpush2.msra.mxu0 0.0
    %4312 = vmatprep.subr.mxu0 0.0
    %4313 = vmatpush2.msra.mxu0 0.0
    %4314 = vmatprep.subr.mxu0 0.0
    %4315 = vmatpush2.msra.mxu0 0.0
    %4316 = vmatprep.subr.mxu0 0.0
    %4317 = vmatpush2.msra.mxu0 0.0
    %4318 = vmatprep.mubr.f32.mxu0 0.0
    %4319 = vmatmul.mubr.f32.gmra.mxu0 %v4252
    %v4320 = vpop.f32.mrf.mxu0
    %v4321 = vadd.f32 0.0, %v4320
    %v4322 = vpop.f32.mrf.mxu0
    %4323 = vdwg.mxu0
    %4324 = vmatprep.subr.mxu0 0.0
    %4325 = vmatpush1.msra.mxu0 0.0
    %4326 = vmatprep.subr.mxu0 0.0
    %4327 = vmatpush1.msra.mxu0 0.0
    %4328 = vmatprep.subr.mxu0 0.0
    %4329 = vmatpush1.msra.mxu0 0.0
    %4330 = vmatprep.subr.mxu0 0.0
    %4331 = vmatpush1.msra.mxu0 0.0
    %4332 = vmatprep.subr.mxu0 0.0
    %4333 = vmatpush1.msra.mxu0 0.0
    %4334 = vmatprep.subr.mxu0 0.0
    %4335 = vmatpush1.msra.mxu0 0.0
    %4336 = vmatprep.subr.mxu0 0.0
    %4337 = vmatpush1.msra.mxu0 0.0
    %4338 = vmatprep.subr.mxu0 0.0
    %4339 = vmatpush1.msra.mxu0 0.0
    %4340 = vmatprep.subr.mxu0 0.0
    %4341 = vmatpush1.msra.mxu0 0.0
    %4342 = vmatprep.subr.mxu0 0.0
    %4343 = vmatpush1.msra.mxu0 0.0
    %4344 = vmatprep.subr.mxu0 0.0
    %4345 = vmatpush1.msra.mxu0 0.0
    %4346 = vmatprep.subr.mxu0 0.0
    %4347 = vmatpush1.msra.mxu0 0.0
    %4348 = vmatprep.subr.mxu0 0.0
    %4349 = vmatpush1.msra.mxu0 %v227
    %4350 = vmatprep.subr.mxu0 0.0
    %4351 = vmatpush1.msra.mxu0 %v226
    %4352 = vmatprep.subr.mxu0 0.0
    %4353 = vmatpush1.msra.mxu0 %v225
    %4354 = vmatprep.subr.mxu0 0.0
    %4355 = vmatpush1.msra.mxu0 %v224
    %4356 = vmatprep.subr.mxu0 0.0
    %4357 = vmatpush2.msra.mxu0 0.0
    %4358 = vmatprep.subr.mxu0 0.0
    %4359 = vmatpush2.msra.mxu0 0.0
    %4360 = vmatprep.subr.mxu0 0.0
    %4361 = vmatpush2.msra.mxu0 0.0
    %4362 = vmatprep.subr.mxu0 0.0
    %4363 = vmatpush2.msra.mxu0 0.0
    %4364 = vmatprep.subr.mxu0 0.0
    %4365 = vmatpush2.msra.mxu0 0.0
    %4366 = vmatprep.subr.mxu0 0.0
    %4367 = vmatpush2.msra.mxu0 0.0
    %4368 = vmatprep.subr.mxu0 0.0
    %4369 = vmatpush2.msra.mxu0 0.0
    %4370 = vmatprep.subr.mxu0 0.0
    %4371 = vmatpush2.msra.mxu0 0.0
    %4372 = vmatprep.subr.mxu0 0.0
    %4373 = vmatpush2.msra.mxu0 0.0
    %4374 = vmatprep.subr.mxu0 0.0
    %4375 = vmatpush2.msra.mxu0 0.0
    %4376 = vmatprep.subr.mxu0 0.0
    %4377 = vmatpush2.msra.mxu0 0.0
    %4378 = vmatprep.subr.mxu0 0.0
    %4379 = vmatpush2.msra.mxu0 0.0
    %4380 = vmatprep.subr.mxu0 0.0
    %4381 = vmatpush2.msra.mxu0 0.0
    %4382 = vmatprep.subr.mxu0 0.0
    %4383 = vmatpush2.msra.mxu0 0.0
    %4384 = vmatprep.subr.mxu0 0.0
    %4385 = vmatpush2.msra.mxu0 0.0
    %4386 = vmatprep.subr.mxu0 0.0
    %4387 = vmatpush2.msra.mxu0 0.0
    %4388 = vmatprep.mubr.f32.mxu0 0.0
    %4389 = vmatmul.mubr.f32.gmra.mxu0 %v4057
    %v4390 = vpop.f32.mrf.mxu0
    %v4391 = vadd.f32 0.0, %v4390
    %v4392 = vpop.f32.mrf.mxu0
    %4393 = vdwg.mxu0
    %v4396 = vunpack.c.l.s4 1966171168
    %v4397 = vunpack.c.0.s8 %v4396
    %v4398 = vlaneseq
    %v4399 = vshrl.u32 %v4398, 7
    %v4400 = vsub.s32 %v4397, %v4399
    %v4401 = vrot.slane %v4391, %v4400
    %v4402 = vcombine.high %v4401, %v4401
    %v4404 = vunpack.c.l.s4 1966171168
    %v4405 = vunpack.c.0.s8 %v4404
    %v4406 = vlaneseq
    %v4407 = vshrl.u32 %v4406, 7
    %v4408 = vsub.s32 %v4405, %v4407
    %v4409 = vrot.slane %v4401, %v4408
    %v4411 = vunpack.c.l.s4 1966171168
    %v4412 = vunpack.c.0.s8 %v4411
    %v4413 = vlaneseq
    %v4414 = vshrl.u32 %v4413, 7
    %v4415 = vsub.s32 %v4412, %v4414
    %v4416 = vrot.slane %v4402, %v4415
    %v4417 = vlaneseq
    %v4418 = vshrl.u32 %v4417, 7
    %v4419 = vsub.s32 0, %v4418
    %v4420 = vrot.slane %v4409, %v4419
    %v4421 = vlaneseq
    %v4422 = vshrl.u32 %v4421, 7
    %v4423 = vsub.s32 0, %v4422
    %v4424 = vrot.slane %v4416, %v4423
    %v4427 = vadd.f32 %v4420, %v3422
    %v4428 = vadd.f32 %v4424, %v3423
    %v4429 = vtanh.pop %v4427
    %v4430 = vtanh.pop %v4428
    %v4431 = vmul.f32 %v4429, %v3622
    %v4432 = vmul.f32 %v4430, %v3622
    %v4433 = vsel %vm436, %v4431, 0.0
    %4434 = vadd.xlane.f32.xlu0 %v4433
    %v4435 = vpop.xlane.xlu0 %4434
    %v4436 = vsel %vm436, %v4432, 0.0
    %4437 = vadd.xlane.f32.xlu0 %v4436
    %v4438 = vpop.xlane.xlu0 %4437
    %v4441 = vlaneseq
    %v4442 = vshrl.u32 %v4441, 7
    %v4443 = vsub.s32 %v258, %v4442
    %v4444 = vrot.slane %v4435, %v4443
    %v4445 = vlaneseq
    %v4446 = vshrl.u32 %v4445, 7
    %v4447 = vsub.s32 %v258, %v4446
    %v4448 = vrot.slane %v4438, %v4447
    %v4449 = vsel %vm3642, %v4448, %v4444
    %v4451 = vsel %vm3645, %v4449, -inf
    %4452 = vmax.xlane.f32.xlu0 %v4451
    %v4453 = vpop.xlane.xlu0 %4452
    %v4455 = vlaneseq
    %v4456 = vshrl.u32 %v4455, 7
    %v4457 = vsub.s32 0, %v4456
    %v4458 = vrot.slane %v4453, %v4457
    %v4459 = vlaneseq
    %v4460 = vshrl.u32 %v4459, 7
    %v4461 = vsub.s32 1, %v4460
    %v4462 = vrot.slane %v4453, %v4461
    %v4465 = vsub.f32 %v4435, %v4458
    %v4466 = vsub.f32 %v4438, %v4462
    %v4467 = vmul.f32 %v4465, 1.442695
    %v4468 = vpow.pop %v4467
    %v4469 = vmul.f32 %v4466, 1.442695
    %v4470 = vpow.pop %v4469
    %4473 = vset.pattern.permute.xlu0 0
    %4474 = vperm.xlu0 %4473, %v4468
    %v4475 = vpop.permute.xlu0 %4474
    %4476 = vset.pattern.permute.xlu0 0
    %4477 = vperm.xlu0 %4476, %v4470
    %v4478 = vpop.permute.xlu0 %4477
    %v4479 = vlaneseq
    %v4480 = vshrl.u32 %v4479, 7
    %v4481 = vsub.s32 %v258, %v4480
    %v4482 = vrot.slane %v4475, %v4481
    %v4483 = vlaneseq
    %v4484 = vshrl.u32 %v4483, 7
    %v4485 = vsub.s32 %v258, %v4484
    %v4486 = vrot.slane %v4478, %v4485
    %v4487 = vsel %vm3642, %v4486, %v4482
    %v4489 = vsel %vm3645, %v4487, 0.0
    %4490 = vadd.xlane.f32.xlu0 %v4489
    %v4491 = vpop.xlane.xlu0 %4490
    %v4492 = vrcp.pop %v4491
    %v4494 = vlaneseq
    %v4495 = vshrl.u32 %v4494, 7
    %v4496 = vsub.s32 0, %v4495
    %v4497 = vrot.slane %v4492, %v4496
    %v4498 = vlaneseq
    %v4499 = vshrl.u32 %v4498, 7
    %v4500 = vsub.s32 1, %v4499
    %v4501 = vrot.slane %v4492, %v4500
    %v4504 = vmul.f32 %v4468, %v4497
    %v4505 = vmul.f32 %v4470, %v4501
    %4507 = vset.pattern.permute.xlu0 0
    %4508 = vperm.xlu0 %4507, %v4504
    %v4509 = vpop.permute.xlu0 %4508
    %4512 = vset.pattern.permute.xlu0 0
    %4513 = vperm.xlu0 %4512, %v4505
    %v4514 = vpop.permute.xlu0 %4513
    %v4516 = vmul.f32 %v4509, %v3420
    %v4517 = vmul.f32 %v4514, %v3421
    %v4518 = vsel %vm436, %v4516, 0.0
    %v4519 = vrot.slane %v4518, 4
    %v4520 = vadd.f32 %v4518, %v4519
    %v4521 = vrot.slane %v4520, 2
    %v4522 = vadd.f32 %v4520, %v4521
    %v4523 = vrot.slane %v4522, 1
    %v4524 = vadd.f32 %v4522, %v4523
    %v4525 = vsel %vm436, %v4517, 0.0
    %v4526 = vrot.slane %v4525, 4
    %v4527 = vadd.f32 %v4525, %v4526
    %v4528 = vrot.slane %v4527, 2
    %v4529 = vadd.f32 %v4527, %v4528
    %v4530 = vrot.slane %v4529, 1
    %v4531 = vadd.f32 %v4529, %v4530
    %v4534 = vsel %vm3642, %v4531, %v4524
    %v4535 = vsel %vm436, %v4534, 0
    %4537 = vmatprep.subr.mxu0 0.0
    %4538 = vmatpush1.msra.mxu0 0.0
    %4539 = vmatprep.subr.mxu0 0.0
    %4540 = vmatpush1.msra.mxu0 0.0
    %4541 = vmatprep.subr.mxu0 0.0
    %4542 = vmatpush1.msra.mxu0 0.0
    %4543 = vmatprep.subr.mxu0 0.0
    %4544 = vmatpush1.msra.mxu0 0.0
    %4545 = vmatprep.subr.mxu0 0.0
    %4546 = vmatpush1.msra.mxu0 0.0
    %4547 = vmatprep.subr.mxu0 0.0
    %4548 = vmatpush1.msra.mxu0 0.0
    %4549 = vmatprep.subr.mxu0 0.0
    %4550 = vmatpush1.msra.mxu0 0.0
    %4551 = vmatprep.subr.mxu0 0.0
    %4552 = vmatpush1.msra.mxu0 0.0
    %4553 = vmatprep.subr.mxu0 0.0
    %4554 = vmatpush1.msra.mxu0 0.0
    %4555 = vmatprep.subr.mxu0 0.0
    %4556 = vmatpush1.msra.mxu0 0.0
    %4557 = vmatprep.subr.mxu0 0.0
    %4558 = vmatpush1.msra.mxu0 0.0
    %4559 = vmatprep.subr.mxu0 0.0
    %4560 = vmatpush1.msra.mxu0 0.0
    %4561 = vmatprep.subr.mxu0 0.0
    %4562 = vmatpush1.msra.mxu0 %v239
    %4563 = vmatprep.subr.mxu0 0.0
    %4564 = vmatpush1.msra.mxu0 %v238
    %4565 = vmatprep.subr.mxu0 0.0
    %4566 = vmatpush1.msra.mxu0 %v237
    %4567 = vmatprep.subr.mxu0 0.0
    %4568 = vmatpush1.msra.mxu0 %v236
    %4569 = vmatprep.subr.mxu0 0.0
    %4570 = vmatpush2.msra.mxu0 0.0
    %4571 = vmatprep.subr.mxu0 0.0
    %4572 = vmatpush2.msra.mxu0 0.0
    %4573 = vmatprep.subr.mxu0 0.0
    %4574 = vmatpush2.msra.mxu0 0.0
    %4575 = vmatprep.subr.mxu0 0.0
    %4576 = vmatpush2.msra.mxu0 0.0
    %4577 = vmatprep.subr.mxu0 0.0
    %4578 = vmatpush2.msra.mxu0 0.0
    %4579 = vmatprep.subr.mxu0 0.0
    %4580 = vmatpush2.msra.mxu0 0.0
    %4581 = vmatprep.subr.mxu0 0.0
    %4582 = vmatpush2.msra.mxu0 0.0
    %4583 = vmatprep.subr.mxu0 0.0
    %4584 = vmatpush2.msra.mxu0 0.0
    %4585 = vmatprep.subr.mxu0 0.0
    %4586 = vmatpush2.msra.mxu0 0.0
    %4587 = vmatprep.subr.mxu0 0.0
    %4588 = vmatpush2.msra.mxu0 0.0
    %4589 = vmatprep.subr.mxu0 0.0
    %4590 = vmatpush2.msra.mxu0 0.0
    %4591 = vmatprep.subr.mxu0 0.0
    %4592 = vmatpush2.msra.mxu0 0.0
    %4593 = vmatprep.subr.mxu0 0.0
    %4594 = vmatpush2.msra.mxu0 0.0
    %4595 = vmatprep.subr.mxu0 0.0
    %4596 = vmatpush2.msra.mxu0 0.0
    %4597 = vmatprep.subr.mxu0 0.0
    %4598 = vmatpush2.msra.mxu0 0.0
    %4599 = vmatprep.subr.mxu0 0.0
    %4600 = vmatpush2.msra.mxu0 0.0
    %4601 = vmatprep.mubr.f32.mxu0 0.0
    %4602 = vmatmul.mubr.f32.gmra.mxu0 %v4535
    %v4603 = vpop.f32.mrf.mxu0
    %v4604 = vadd.f32 0.0, %v4603
    %v4605 = vpop.f32.mrf.mxu0
    %4606 = vdwg.mxu0
    %v4608 = vsel %vm356, %v4321, 0
    %4610 = vmatprep.subr.mxu0 0.0
    %4611 = vmatpush1.msra.mxu0 0.0
    %4612 = vmatprep.subr.mxu0 0.0
    %4613 = vmatpush1.msra.mxu0 0.0
    %4614 = vmatprep.subr.mxu0 0.0
    %4615 = vmatpush1.msra.mxu0 0.0
    %4616 = vmatprep.subr.mxu0 0.0
    %4617 = vmatpush1.msra.mxu0 0.0
    %4618 = vmatprep.subr.mxu0 0.0
    %4619 = vmatpush1.msra.mxu0 0.0
    %4620 = vmatprep.subr.mxu0 0.0
    %4621 = vmatpush1.msra.mxu0 0.0
    %4622 = vmatprep.subr.mxu0 0.0
    %4623 = vmatpush1.msra.mxu0 0.0
    %4624 = vmatprep.subr.mxu0 0.0
    %4625 = vmatpush1.msra.mxu0 0.0
    %4626 = vmatprep.subr.mxu0 0.0
    %4627 = vmatpush1.msra.mxu0 0.0
    %4628 = vmatprep.subr.mxu0 0.0
    %4629 = vmatpush1.msra.mxu0 0.0
    %4630 = vmatprep.subr.mxu0 0.0
    %4631 = vmatpush1.msra.mxu0 0.0
    %4632 = vmatprep.subr.mxu0 0.0
    %4633 = vmatpush1.msra.mxu0 0.0
    %4634 = vmatprep.subr.mxu0 0.0
    %4635 = vmatpush1.msra.mxu0 0.0
    %4636 = vmatprep.subr.mxu0 0.0
    %4637 = vmatpush1.msra.mxu0 0.0
    %4638 = vmatprep.subr.mxu0 0.0
    %4639 = vmatpush1.msra.mxu0 %v235
    %4640 = vmatprep.subr.mxu0 0.0
    %4641 = vmatpush1.msra.mxu0 %v234
    %4642 = vmatprep.subr.mxu0 0.0
    %4643 = vmatpush2.msra.mxu0 0.0
    %4644 = vmatprep.subr.mxu0 0.0
    %4645 = vmatpush2.msra.mxu0 0.0
    %4646 = vmatprep.subr.mxu0 0.0
    %4647 = vmatpush2.msra.mxu0 0.0
    %4648 = vmatprep.subr.mxu0 0.0
    %4649 = vmatpush2.msra.mxu0 0.0
    %4650 = vmatprep.subr.mxu0 0.0
    %4651 = vmatpush2.msra.mxu0 0.0
    %4652 = vmatprep.subr.mxu0 0.0
    %4653 = vmatpush2.msra.mxu0 0.0
    %4654 = vmatprep.subr.mxu0 0.0
    %4655 = vmatpush2.msra.mxu0 0.0
    %4656 = vmatprep.subr.mxu0 0.0
    %4657 = vmatpush2.msra.mxu0 0.0
    %4658 = vmatprep.subr.mxu0 0.0
    %4659 = vmatpush2.msra.mxu0 0.0
    %4660 = vmatprep.subr.mxu0 0.0
    %4661 = vmatpush2.msra.mxu0 0.0
    %4662 = vmatprep.subr.mxu0 0.0
    %4663 = vmatpush2.msra.mxu0 0.0
    %4664 = vmatprep.subr.mxu0 0.0
    %4665 = vmatpush2.msra.mxu0 0.0
    %4666 = vmatprep.subr.mxu0 0.0
    %4667 = vmatpush2.msra.mxu0 0.0
    %4668 = vmatprep.subr.mxu0 0.0
    %4669 = vmatpush2.msra.mxu0 0.0
    %4670 = vmatprep.subr.mxu0 0.0
    %4671 = vmatpush2.msra.mxu0 0.0
    %4672 = vmatprep.subr.mxu0 0.0
    %4673 = vmatpush2.msra.mxu0 0.0
    %4674 = vmatprep.mubr.f32.mxu0 0.0
    %4675 = vmatmul.mubr.f32.gmra.mxu0 %v4608
    %v4676 = vpop.f32.mrf.mxu0
    %v4677 = vadd.f32 %v4604, %v4676
    %v4678 = vpop.f32.mrf.mxu0
    %4679 = vdwg.mxu0
    %v4680 = vadd.f32 %v4677, %v3879
    %4681 = vmatprep.subr.mxu0 0.0
    %4682 = vmatpush1.msra.mxu0 0.0
    %4683 = vmatprep.subr.mxu0 0.0
    %4684 = vmatpush1.msra.mxu0 0.0
    %4685 = vmatprep.subr.mxu0 0.0
    %4686 = vmatpush1.msra.mxu0 0.0
    %4687 = vmatprep.subr.mxu0 0.0
    %4688 = vmatpush1.msra.mxu0 0.0
    %4689 = vmatprep.subr.mxu0 0.0
    %4690 = vmatpush1.msra.mxu0 0.0
    %4691 = vmatprep.subr.mxu0 0.0
    %4692 = vmatpush1.msra.mxu0 0.0
    %4693 = vmatprep.subr.mxu0 0.0
    %4694 = vmatpush1.msra.mxu0 0.0
    %4695 = vmatprep.subr.mxu0 0.0
    %4696 = vmatpush1.msra.mxu0 0.0
    %4697 = vmatprep.subr.mxu0 0.0
    %4698 = vmatpush1.msra.mxu0 0.0
    %4699 = vmatprep.subr.mxu0 0.0
    %4700 = vmatpush1.msra.mxu0 0.0
    %4701 = vmatprep.subr.mxu0 0.0
    %4702 = vmatpush1.msra.mxu0 0.0
    %4703 = vmatprep.subr.mxu0 0.0
    %4704 = vmatpush1.msra.mxu0 0.0
    %4705 = vmatprep.subr.mxu0 0.0
    %4706 = vmatpush1.msra.mxu0 %v243
    %4707 = vmatprep.subr.mxu0 0.0
    %4708 = vmatpush1.msra.mxu0 %v242
    %4709 = vmatprep.subr.mxu0 0.0
    %4710 = vmatpush1.msra.mxu0 %v241
    %4711 = vmatprep.subr.mxu0 0.0
    %4712 = vmatpush1.msra.mxu0 %v240
    %4713 = vmatprep.subr.mxu0 0.0
    %4714 = vmatpush2.msra.mxu0 0.0
    %4715 = vmatprep.subr.mxu0 0.0
    %4716 = vmatpush2.msra.mxu0 0.0
    %4717 = vmatprep.subr.mxu0 0.0
    %4718 = vmatpush2.msra.mxu0 0.0
    %4719 = vmatprep.subr.mxu0 0.0
    %4720 = vmatpush2.msra.mxu0 0.0
    %4721 = vmatprep.subr.mxu0 0.0
    %4722 = vmatpush2.msra.mxu0 0.0
    %4723 = vmatprep.subr.mxu0 0.0
    %4724 = vmatpush2.msra.mxu0 0.0
    %4725 = vmatprep.subr.mxu0 0.0
    %4726 = vmatpush2.msra.mxu0 0.0
    %4727 = vmatprep.subr.mxu0 0.0
    %4728 = vmatpush2.msra.mxu0 0.0
    %4729 = vmatprep.subr.mxu0 0.0
    %4730 = vmatpush2.msra.mxu0 0.0
    %4731 = vmatprep.subr.mxu0 0.0
    %4732 = vmatpush2.msra.mxu0 0.0
    %4733 = vmatprep.subr.mxu0 0.0
    %4734 = vmatpush2.msra.mxu0 0.0
    %4735 = vmatprep.subr.mxu0 0.0
    %4736 = vmatpush2.msra.mxu0 0.0
    %4737 = vmatprep.subr.mxu0 0.0
    %4738 = vmatpush2.msra.mxu0 0.0
    %4739 = vmatprep.subr.mxu0 0.0
    %4740 = vmatpush2.msra.mxu0 0.0
    %4741 = vmatprep.subr.mxu0 0.0
    %4742 = vmatpush2.msra.mxu0 0.0
    %4743 = vmatprep.subr.mxu0 0.0
    %4744 = vmatpush2.msra.mxu0 0.0
    %4745 = vmatprep.mubr.f32.mxu0 0.0
    %4746 = vmatmul.mubr.f32.gmra.mxu0 %v4057
    %v4747 = vpop.f32.mrf.mxu0
    %v4748 = vadd.f32 %v3886, %v4747
    %v4749 = vpop.f32.mrf.mxu0
    %4750 = vdwg.mxu0
    %v4751 = vadd.f32 %v4680, %v4748
    %v4752 = vxor.u32 %v4751, 2147483648
    %v4753 = vmul.f32 %v4752, 1.442695
    %v4754 = vpow.pop %v4753
    %v4755 = vadd.f32 %v4754, 1.0
    %v4756 = vrcp.pop %v4755
    %v4757 = vmul.f32 1.0, %v4756
    %4759 = vrot.lane.b32.xlu0 %v4748, 64
    %v4760 = vpop.permute.xlu0 %4759
    %v4762 = vmul.f32 %v4757, %v4760
    %4764 = vrot.lane.b32.xlu0 %v4762, 64
    %v4765 = vpop.permute.xlu0 %4764
    %v4767 = vadd.f32 %v4680, %v4765
    %v4768 = vtanh.pop %v4767
    %v4769 = vsub.f32 1.0, %v4757
    %4771 = vrot.lane.b32.xlu0 %v4768, 96
    %v4772 = vpop.permute.xlu0 %4771
    %v4774 = vmul.f32 %v4769, %v4772
    %v4775 = vmul.f32 %v4757, %v3983
    %v4776 = vadd.f32 %v4774, %v4775
    %4777 = vmatprep.subr.mxu0 0.0
    %4778 = vmatpush1.msra.mxu0 0.0
    %4779 = vmatprep.subr.mxu0 0.0
    %4780 = vmatpush1.msra.mxu0 0.0
    %4781 = vmatprep.subr.mxu0 0.0
    %4782 = vmatpush1.msra.mxu0 0.0
    %4783 = vmatprep.subr.mxu0 0.0
    %4784 = vmatpush1.msra.mxu0 0.0
    %4785 = vmatprep.subr.mxu0 0.0
    %4786 = vmatpush1.msra.mxu0 0.0
    %4787 = vmatprep.subr.mxu0 0.0
    %4788 = vmatpush1.msra.mxu0 0.0
    %4789 = vmatprep.subr.mxu0 0.0
    %4790 = vmatpush1.msra.mxu0 0.0
    %4791 = vmatprep.subr.mxu0 0.0
    %4792 = vmatpush1.msra.mxu0 0.0
    %4793 = vmatprep.subr.mxu0 0.0
    %4794 = vmatpush1.msra.mxu0 0.0
    %4795 = vmatprep.subr.mxu0 0.0
    %4796 = vmatpush1.msra.mxu0 0.0
    %4797 = vmatprep.subr.mxu0 0.0
    %4798 = vmatpush1.msra.mxu0 0.0
    %4799 = vmatprep.subr.mxu0 0.0
    %4800 = vmatpush1.msra.mxu0 0.0
    %4801 = vmatprep.subr.mxu0 0.0
    %4802 = vmatpush1.msra.mxu0 %v253
    %4803 = vmatprep.subr.mxu0 0.0
    %4804 = vmatpush1.msra.mxu0 %v252
    %4805 = vmatprep.subr.mxu0 0.0
    %4806 = vmatpush1.msra.mxu0 %v251
    %4807 = vmatprep.subr.mxu0 0.0
    %4808 = vmatpush1.msra.mxu0 %v250
    %4809 = vmatprep.subr.mxu0 0.0
    %4810 = vmatpush2.msra.mxu0 0.0
    %4811 = vmatprep.subr.mxu0 0.0
    %4812 = vmatpush2.msra.mxu0 0.0
    %4813 = vmatprep.subr.mxu0 0.0
    %4814 = vmatpush2.msra.mxu0 0.0
    %4815 = vmatprep.subr.mxu0 0.0
    %4816 = vmatpush2.msra.mxu0 0.0
    %4817 = vmatprep.subr.mxu0 0.0
    %4818 = vmatpush2.msra.mxu0 0.0
    %4819 = vmatprep.subr.mxu0 0.0
    %4820 = vmatpush2.msra.mxu0 0.0
    %4821 = vmatprep.subr.mxu0 0.0
    %4822 = vmatpush2.msra.mxu0 0.0
    %4823 = vmatprep.subr.mxu0 0.0
    %4824 = vmatpush2.msra.mxu0 0.0
    %4825 = vmatprep.subr.mxu0 0.0
    %4826 = vmatpush2.msra.mxu0 0.0
    %4827 = vmatprep.subr.mxu0 0.0
    %4828 = vmatpush2.msra.mxu0 0.0
    %4829 = vmatprep.subr.mxu0 0.0
    %4830 = vmatpush2.msra.mxu0 0.0
    %4831 = vmatprep.subr.mxu0 0.0
    %4832 = vmatpush2.msra.mxu0 0.0
    %4833 = vmatprep.subr.mxu0 0.0
    %4834 = vmatpush2.msra.mxu0 0.0
    %4835 = vmatprep.subr.mxu0 0.0
    %4836 = vmatpush2.msra.mxu0 0.0
    %4837 = vmatprep.subr.mxu0 0.0
    %4838 = vmatpush2.msra.mxu0 0.0
    %4839 = vmatprep.subr.mxu0 0.0
    %4840 = vmatpush2.msra.mxu0 0.0
    %4841 = vmatprep.mubr.f32.mxu0 0.0
    %4842 = vmatmul.mubr.f32.gmra.mxu0 %v4535
    %v4843 = vpop.f32.mrf.mxu0
    %v4844 = vadd.f32 0.0, %v4843
    %v4845 = vpop.f32.mrf.mxu0
    %4846 = vdwg.mxu0
    %4848 = vrot.lane.b32.xlu0 %v4776, 96
    %v4849 = vpop.permute.xlu0 %4848
    %v4850 = vsel %vm436, %v4849, 0
    %4852 = vmatprep.subr.mxu0 0.0
    %4853 = vmatpush1.msra.mxu0 0.0
    %4854 = vmatprep.subr.mxu0 0.0
    %4855 = vmatpush1.msra.mxu0 0.0
    %4856 = vmatprep.subr.mxu0 0.0
    %4857 = vmatpush1.msra.mxu0 0.0
    %4858 = vmatprep.subr.mxu0 0.0
    %4859 = vmatpush1.msra.mxu0 0.0
    %4860 = vmatprep.subr.mxu0 0.0
    %4861 = vmatpush1.msra.mxu0 0.0
    %4862 = vmatprep.subr.mxu0 0.0
    %4863 = vmatpush1.msra.mxu0 0.0
    %4864 = vmatprep.subr.mxu0 0.0
    %4865 = vmatpush1.msra.mxu0 0.0
    %4866 = vmatprep.subr.mxu0 0.0
    %4867 = vmatpush1.msra.mxu0 0.0
    %4868 = vmatprep.subr.mxu0 0.0
    %4869 = vmatpush1.msra.mxu0 0.0
    %4870 = vmatprep.subr.mxu0 0.0
    %4871 = vmatpush1.msra.mxu0 0.0
    %4872 = vmatprep.subr.mxu0 0.0
    %4873 = vmatpush1.msra.mxu0 0.0
    %4874 = vmatprep.subr.mxu0 0.0
    %4875 = vmatpush1.msra.mxu0 0.0
    %4876 = vmatprep.subr.mxu0 0.0
    %4877 = vmatpush1.msra.mxu0 %v249
    %4878 = vmatprep.subr.mxu0 0.0
    %4879 = vmatpush1.msra.mxu0 %v248
    %4880 = vmatprep.subr.mxu0 0.0
    %4881 = vmatpush1.msra.mxu0 %v247
    %4882 = vmatprep.subr.mxu0 0.0
    %4883 = vmatpush1.msra.mxu0 %v246
    %4884 = vmatprep.subr.mxu0 0.0
    %4885 = vmatpush2.msra.mxu0 0.0
    %4886 = vmatprep.subr.mxu0 0.0
    %4887 = vmatpush2.msra.mxu0 0.0
    %4888 = vmatprep.subr.mxu0 0.0
    %4889 = vmatpush2.msra.mxu0 0.0
    %4890 = vmatprep.subr.mxu0 0.0
    %4891 = vmatpush2.msra.mxu0 0.0
    %4892 = vmatprep.subr.mxu0 0.0
    %4893 = vmatpush2.msra.mxu0 0.0
    %4894 = vmatprep.subr.mxu0 0.0
    %4895 = vmatpush2.msra.mxu0 0.0
    %4896 = vmatprep.subr.mxu0 0.0
    %4897 = vmatpush2.msra.mxu0 0.0
    %4898 = vmatprep.subr.mxu0 0.0
    %4899 = vmatpush2.msra.mxu0 0.0
    %4900 = vmatprep.subr.mxu0 0.0
    %4901 = vmatpush2.msra.mxu0 0.0
    %4902 = vmatprep.subr.mxu0 0.0
    %4903 = vmatpush2.msra.mxu0 0.0
    %4904 = vmatprep.subr.mxu0 0.0
    %4905 = vmatpush2.msra.mxu0 0.0
    %4906 = vmatprep.subr.mxu0 0.0
    %4907 = vmatpush2.msra.mxu0 0.0
    %4908 = vmatprep.subr.mxu0 0.0
    %4909 = vmatpush2.msra.mxu0 0.0
    %4910 = vmatprep.subr.mxu0 0.0
    %4911 = vmatpush2.msra.mxu0 0.0
    %4912 = vmatprep.subr.mxu0 0.0
    %4913 = vmatpush2.msra.mxu0 0.0
    %4914 = vmatprep.subr.mxu0 0.0
    %4915 = vmatpush2.msra.mxu0 0.0
    %4916 = vmatprep.mubr.f32.mxu0 0.0
    %4917 = vmatmul.mubr.f32.gmra.mxu0 %v4850
    %v4918 = vpop.f32.mrf.mxu0
    %v4919 = vadd.f32 %v4844, %v4918
    %v4920 = vpop.f32.mrf.mxu0
    %4921 = vdwg.mxu0
    %4922 = vmatprep.subr.mxu0 0.0
    %4923 = vmatpush1.msra.mxu0 0.0
    %4924 = vmatprep.subr.mxu0 0.0
    %4925 = vmatpush1.msra.mxu0 0.0
    %4926 = vmatprep.subr.mxu0 0.0
    %4927 = vmatpush1.msra.mxu0 0.0
    %4928 = vmatprep.subr.mxu0 0.0
    %4929 = vmatpush1.msra.mxu0 0.0
    %4930 = vmatprep.subr.mxu0 0.0
    %4931 = vmatpush1.msra.mxu0 0.0
    %4932 = vmatprep.subr.mxu0 0.0
    %4933 = vmatpush1.msra.mxu0 0.0
    %4934 = vmatprep.subr.mxu0 0.0
    %4935 = vmatpush1.msra.mxu0 0.0
    %4936 = vmatprep.subr.mxu0 0.0
    %4937 = vmatpush1.msra.mxu0 0.0
    %4938 = vmatprep.subr.mxu0 0.0
    %4939 = vmatpush1.msra.mxu0 0.0
    %4940 = vmatprep.subr.mxu0 0.0
    %4941 = vmatpush1.msra.mxu0 0.0
    %4942 = vmatprep.subr.mxu0 0.0
    %4943 = vmatpush1.msra.mxu0 0.0
    %4944 = vmatprep.subr.mxu0 0.0
    %4945 = vmatpush1.msra.mxu0 0.0
    %4946 = vmatprep.subr.mxu0 0.0
    %4947 = vmatpush1.msra.mxu0 0.0
    %4948 = vmatprep.subr.mxu0 0.0
    %4949 = vmatpush1.msra.mxu0 0.0
    %4950 = vmatprep.subr.mxu0 0.0
    %4951 = vmatpush1.msra.mxu0 %v255
    %4952 = vmatprep.subr.mxu0 0.0
    %4953 = vmatpush1.msra.mxu0 %v254
    %4954 = vmatprep.subr.mxu0 0.0
    %4955 = vmatpush2.msra.mxu0 0.0
    %4956 = vmatprep.subr.mxu0 0.0
    %4957 = vmatpush2.msra.mxu0 0.0
    %4958 = vmatprep.subr.mxu0 0.0
    %4959 = vmatpush2.msra.mxu0 0.0
    %4960 = vmatprep.subr.mxu0 0.0
    %4961 = vmatpush2.msra.mxu0 0.0
    %4962 = vmatprep.subr.mxu0 0.0
    %4963 = vmatpush2.msra.mxu0 0.0
    %4964 = vmatprep.subr.mxu0 0.0
    %4965 = vmatpush2.msra.mxu0 0.0
    %4966 = vmatprep.subr.mxu0 0.0
    %4967 = vmatpush2.msra.mxu0 0.0
    %4968 = vmatprep.subr.mxu0 0.0
    %4969 = vmatpush2.msra.mxu0 0.0
    %4970 = vmatprep.subr.mxu0 0.0
    %4971 = vmatpush2.msra.mxu0 0.0
    %4972 = vmatprep.subr.mxu0 0.0
    %4973 = vmatpush2.msra.mxu0 0.0
    %4974 = vmatprep.subr.mxu0 0.0
    %4975 = vmatpush2.msra.mxu0 0.0
    %4976 = vmatprep.subr.mxu0 0.0
    %4977 = vmatpush2.msra.mxu0 0.0
    %4978 = vmatprep.subr.mxu0 0.0
    %4979 = vmatpush2.msra.mxu0 0.0
    %4980 = vmatprep.subr.mxu0 0.0
    %4981 = vmatpush2.msra.mxu0 0.0
    %4982 = vmatprep.subr.mxu0 0.0
    %4983 = vmatpush2.msra.mxu0 0.0
    %4984 = vmatprep.subr.mxu0 0.0
    %4985 = vmatpush2.msra.mxu0 0.0
    %4986 = vmatprep.mubr.f32.mxu0 0.0
    %4987 = vmatmul.mubr.f32.gmra.mxu0 %v4608
    %v4988 = vpop.f32.mrf.mxu0
    %v4989 = vadd.f32 0.0, %v4988
    %v4990 = vpop.f32.mrf.mxu0
    %4991 = vdwg.mxu0
    %v4992 = vadd.f32 %v4919, %v4989
    %v4993 = vadd.f32 %v4992, %v4204
    %s4994 = scalar_lea.vmem [#allocation24], 4
    %4995 = vst.msk [vmem:[%s4994] sm:$0x3] %vm3424, %v4993
    %v4996 = vsel %vm3424, %v4993, -inf
    %4997 = vmax.xlane.f32.xlu0 %v4996
    %v4998 = vpop.xlane.xlu0 %4997
    %vm4999 = vcmp.ge.f32.partialorder %v4993, %v4998
    %v5000 = vsel %vm4999, %v258, 20
    %v5001 = vsel %vm3424, %v5000, 2147483647
    %v5002 = vand.u32 %v5001, 65535
    %v5003 = vshra.s32 %v5001, 16
    %v5004 = vcvt.s32.f32 %v5002
    %v5005 = vcvt.s32.f32 %v5003
    %5006 = vmin.xlane.f32.xlu0 %v5005
    %v5007 = vpop.xlane.xlu0 %5006
    %vm5008 = vcmp.eq.f32.partialorder %v5005, %v5007
    %v5009 = vsel %vm5008, %v5004, inf
    %5010 = vmin.xlane.f32.xlu0 %v5009
    %v5011 = vpop.xlane.xlu0 %5010
    %v5012 = vcvt.f32.s32 %v5011
    %v5013 = vcvt.f32.s32 %v5007
    %v5014 = vshll.u32 %v5013, 16
    %v5015 = vadd.s32 %v5014, %v5012
    %vm5016 = vcmp.eq.s32.totalorder %v258, %v5015
    %v5017 = vsel %vm5016, 1, 0
    %v5018 = vcvt.s32.f32 %v5017
    %s5019 = sld [smem:[#allocation8 + $0x2]]
    %v5020 = vstv %s5019
    %v5021 = vsel %vm261, %v5020, 0
    %s5022 = sld [smem:[#allocation8 + $0x82]]
    %v5023 = vstv %s5022
    %v5024 = vsel %vm265, %v5023, %v5021
    %vm5025 = vcmp.eq.s32.totalorder %v258, %v5024
    %v5026 = vsel %vm5025, 1, 0
    %v5027 = vcvt.s32.f32 %v5026
    %s5028 = sld [smem:[#allocation10 + $0x1]]
    %p5029 = scmp.gt.s32.totalorder %s5028, 0
    %s5030 = scalar_select %p5029, 1, 0
    %s5031 = scvt.s32.f32 %s5030
    %v5032 = vstv %s5031
    %v5033 = vmul.f32 %v5032, %v5027
    %s5034 = ssub.f32 1.0, %s5031
    %v5035 = vstv %s5034
    %v5036 = vmul.f32 %v5035, %v5018
    %v5037 = vadd.f32 %v5033, %v5036
    %v5039 = vsel %vm272, %v5037, 0
    %5041 = vmatprep.subr.mxu0 0.0
    %5042 = vmatpush1.msra.mxu0 0.0
    %5043 = vmatprep.subr.mxu0 0.0
    %5044 = vmatpush1.msra.mxu0 0.0
    %5045 = vmatprep.subr.mxu0 0.0
    %5046 = vmatpush1.msra.mxu0 0.0
    %5047 = vmatprep.subr.mxu0 0.0
    %5048 = vmatpush1.msra.mxu0 0.0
    %5049 = vmatprep.subr.mxu0 0.0
    %5050 = vmatpush1.msra.mxu0 0.0
    %5051 = vmatprep.subr.mxu0 0.0
    %5052 = vmatpush1.msra.mxu0 0.0
    %5053 = vmatprep.subr.mxu0 0.0
    %5054 = vmatpush1.msra.mxu0 0.0
    %5055 = vmatprep.subr.mxu0 0.0
    %5056 = vmatpush1.msra.mxu0 0.0
    %5057 = vmatprep.subr.mxu0 0.0
    %5058 = vmatpush1.msra.mxu0 0.0
    %5059 = vmatprep.subr.mxu0 0.0
    %5060 = vmatpush1.msra.mxu0 0.0
    %5061 = vmatprep.subr.mxu0 0.0
    %5062 = vmatpush1.msra.mxu0 0.0
    %5063 = vmatprep.subr.mxu0 0.0
    %5064 = vmatpush1.msra.mxu0 0.0
    %5065 = vmatprep.subr.mxu0 0.0
    %5066 = vmatpush1.msra.mxu0 0.0
    %5067 = vmatprep.subr.mxu0 0.0
    %5068 = vmatpush1.msra.mxu0 %v3439
    %5069 = vmatprep.subr.mxu0 0.0
    %5070 = vmatpush1.msra.mxu0 %v214
    %5071 = vmatprep.subr.mxu0 0.0
    %5072 = vmatpush1.msra.mxu0 %v213
    %5073 = vmatprep.subr.mxu0 0.0
    %5074 = vmatpush2.msra.mxu0 0.0
    %5075 = vmatprep.subr.mxu0 0.0
    %5076 = vmatpush2.msra.mxu0 0.0
    %5077 = vmatprep.subr.mxu0 0.0
    %5078 = vmatpush2.msra.mxu0 0.0
    %5079 = vmatprep.subr.mxu0 0.0
    %5080 = vmatpush2.msra.mxu0 0.0
    %5081 = vmatprep.subr.mxu0 0.0
    %5082 = vmatpush2.msra.mxu0 0.0
    %5083 = vmatprep.subr.mxu0 0.0
    %5084 = vmatpush2.msra.mxu0 0.0
    %5085 = vmatprep.subr.mxu0 0.0
    %5086 = vmatpush2.msra.mxu0 0.0
    %5087 = vmatprep.subr.mxu0 0.0
    %5088 = vmatpush2.msra.mxu0 0.0
    %5089 = vmatprep.subr.mxu0 0.0
    %5090 = vmatpush2.msra.mxu0 0.0
    %5091 = vmatprep.subr.mxu0 0.0
    %5092 = vmatpush2.msra.mxu0 0.0
    %5093 = vmatprep.subr.mxu0 0.0
    %5094 = vmatpush2.msra.mxu0 0.0
    %5095 = vmatprep.subr.mxu0 0.0
    %5096 = vmatpush2.msra.mxu0 0.0
    %5097 = vmatprep.subr.mxu0 0.0
    %5098 = vmatpush2.msra.mxu0 0.0
    %5099 = vmatprep.subr.mxu0 0.0
    %5100 = vmatpush2.msra.mxu0 0.0
    %5101 = vmatprep.subr.mxu0 0.0
    %5102 = vmatpush2.msra.mxu0 0.0
    %5103 = vmatprep.subr.mxu0 0.0
    %5104 = vmatpush2.msra.mxu0 0.0
    %5105 = vmatprep.mubr.f32.mxu0 0.0
    %5106 = vmatmul.mubr.f32.gmra.mxu0 %v5039
    %v5107 = vpop.f32.mrf.mxu0
    %v5108 = vadd.f32 0.0, %v5107
    %v5109 = vpop.f32.mrf.mxu0
    %5110 = vdwg.mxu0
    %5111 = vmatprep.subr.mxu0 0.0
    %5112 = vmatpush1.msra.mxu0 0.0
    %5113 = vmatprep.subr.mxu0 0.0
    %5114 = vmatpush1.msra.mxu0 0.0
    %5115 = vmatprep.subr.mxu0 0.0
    %5116 = vmatpush1.msra.mxu0 0.0
    %5117 = vmatprep.subr.mxu0 0.0
    %5118 = vmatpush1.msra.mxu0 0.0
    %5119 = vmatprep.subr.mxu0 0.0
    %5120 = vmatpush1.msra.mxu0 0.0
    %5121 = vmatprep.subr.mxu0 0.0
    %5122 = vmatpush1.msra.mxu0 0.0
    %5123 = vmatprep.subr.mxu0 0.0
    %5124 = vmatpush1.msra.mxu0 0.0
    %5125 = vmatprep.subr.mxu0 0.0
    %5126 = vmatpush1.msra.mxu0 0.0
    %5127 = vmatprep.subr.mxu0 0.0
    %5128 = vmatpush1.msra.mxu0 0.0
    %5129 = vmatprep.subr.mxu0 0.0
    %5130 = vmatpush1.msra.mxu0 0.0
    %5131 = vmatprep.subr.mxu0 0.0
    %5132 = vmatpush1.msra.mxu0 0.0
    %5133 = vmatprep.subr.mxu0 0.0
    %5134 = vmatpush1.msra.mxu0 0.0
    %5135 = vmatprep.subr.mxu0 0.0
    %5136 = vmatpush1.msra.mxu0 %v227
    %5137 = vmatprep.subr.mxu0 0.0
    %5138 = vmatpush1.msra.mxu0 %v226
    %5139 = vmatprep.subr.mxu0 0.0
    %5140 = vmatpush1.msra.mxu0 %v225
    %5141 = vmatprep.subr.mxu0 0.0
    %5142 = vmatpush1.msra.mxu0 %v224
    %5143 = vmatprep.subr.mxu0 0.0
    %5144 = vmatpush2.msra.mxu0 0.0
    %5145 = vmatprep.subr.mxu0 0.0
    %5146 = vmatpush2.msra.mxu0 0.0
    %5147 = vmatprep.subr.mxu0 0.0
    %5148 = vmatpush2.msra.mxu0 0.0
    %5149 = vmatprep.subr.mxu0 0.0
    %5150 = vmatpush2.msra.mxu0 0.0
    %5151 = vmatprep.subr.mxu0 0.0
    %5152 = vmatpush2.msra.mxu0 0.0
    %5153 = vmatprep.subr.mxu0 0.0
    %5154 = vmatpush2.msra.mxu0 0.0
    %5155 = vmatprep.subr.mxu0 0.0
    %5156 = vmatpush2.msra.mxu0 0.0
    %5157 = vmatprep.subr.mxu0 0.0
    %5158 = vmatpush2.msra.mxu0 0.0
    %5159 = vmatprep.subr.mxu0 0.0
    %5160 = vmatpush2.msra.mxu0 0.0
    %5161 = vmatprep.subr.mxu0 0.0
    %5162 = vmatpush2.msra.mxu0 0.0
    %5163 = vmatprep.subr.mxu0 0.0
    %5164 = vmatpush2.msra.mxu0 0.0
    %5165 = vmatprep.subr.mxu0 0.0
    %5166 = vmatpush2.msra.mxu0 0.0
    %5167 = vmatprep.subr.mxu0 0.0
    %5168 = vmatpush2.msra.mxu0 0.0
    %5169 = vmatprep.subr.mxu0 0.0
    %5170 = vmatpush2.msra.mxu0 0.0
    %5171 = vmatprep.subr.mxu0 0.0
    %5172 = vmatpush2.msra.mxu0 0.0
    %5173 = vmatprep.subr.mxu0 0.0
    %5174 = vmatpush2.msra.mxu0 0.0
    %5175 = vmatprep.mubr.f32.mxu0 0.0
    %5176 = vmatmul.mubr.f32.gmra.mxu0 %v4850
    %v5177 = vpop.f32.mrf.mxu0
    %v5178 = vadd.f32 0.0, %v5177
    %v5179 = vpop.f32.mrf.mxu0
    %5180 = vdwg.mxu0
    %v5183 = vunpack.c.l.s4 1966171168
    %v5184 = vunpack.c.0.s8 %v5183
    %v5185 = vlaneseq
    %v5186 = vshrl.u32 %v5185, 7
    %v5187 = vsub.s32 %v5184, %v5186
    %v5188 = vrot.slane %v5178, %v5187
    %v5189 = vcombine.high %v5188, %v5188
    %v5191 = vunpack.c.l.s4 1966171168
    %v5192 = vunpack.c.0.s8 %v5191
    %v5193 = vlaneseq
    %v5194 = vshrl.u32 %v5193, 7
    %v5195 = vsub.s32 %v5192, %v5194
    %v5196 = vrot.slane %v5188, %v5195
    %v5198 = vunpack.c.l.s4 1966171168
    %v5199 = vunpack.c.0.s8 %v5198
    %v5200 = vlaneseq
    %v5201 = vshrl.u32 %v5200, 7
    %v5202 = vsub.s32 %v5199, %v5201
    %v5203 = vrot.slane %v5189, %v5202
    %v5204 = vlaneseq
    %v5205 = vshrl.u32 %v5204, 7
    %v5206 = vsub.s32 0, %v5205
    %v5207 = vrot.slane %v5196, %v5206
    %v5208 = vlaneseq
    %v5209 = vshrl.u32 %v5208, 7
    %v5210 = vsub.s32 0, %v5209
    %v5211 = vrot.slane %v5203, %v5210
    %v5214 = vadd.f32 %v5207, %v3422
    %v5215 = vadd.f32 %v5211, %v3423
    %v5216 = vtanh.pop %v5214
    %v5217 = vtanh.pop %v5215
    %v5218 = vmul.f32 %v5216, %v3622
    %v5219 = vmul.f32 %v5217, %v3622
    %v5220 = vsel %vm436, %v5218, 0.0
    %5221 = vadd.xlane.f32.xlu0 %v5220
    %v5222 = vpop.xlane.xlu0 %5221
    %v5223 = vsel %vm436, %v5219, 0.0
    %5224 = vadd.xlane.f32.xlu0 %v5223
    %v5225 = vpop.xlane.xlu0 %5224
    %v5228 = vlaneseq
    %v5229 = vshrl.u32 %v5228, 7
    %v5230 = vsub.s32 %v258, %v5229
    %v5231 = vrot.slane %v5222, %v5230
    %v5232 = vlaneseq
    %v5233 = vshrl.u32 %v5232, 7
    %v5234 = vsub.s32 %v258, %v5233
    %v5235 = vrot.slane %v5225, %v5234
    %v5236 = vsel %vm3642, %v5235, %v5231
    %v5238 = vsel %vm3645, %v5236, -inf
    %5239 = vmax.xlane.f32.xlu0 %v5238
    %v5240 = vpop.xlane.xlu0 %5239
    %v5242 = vlaneseq
    %v5243 = vshrl.u32 %v5242, 7
    %v5244 = vsub.s32 0, %v5243
    %v5245 = vrot.slane %v5240, %v5244
    %v5246 = vlaneseq
    %v5247 = vshrl.u32 %v5246, 7
    %v5248 = vsub.s32 1, %v5247
    %v5249 = vrot.slane %v5240, %v5248
    %v5252 = vsub.f32 %v5222, %v5245
    %v5253 = vsub.f32 %v5225, %v5249
    %v5254 = vmul.f32 %v5252, 1.442695
    %v5255 = vpow.pop %v5254
    %v5256 = vmul.f32 %v5253, 1.442695
    %v5257 = vpow.pop %v5256
    %5260 = vset.pattern.permute.xlu0 0
    %5261 = vperm.xlu0 %5260, %v5255
    %v5262 = vpop.permute.xlu0 %5261
    %5263 = vset.pattern.permute.xlu0 0
    %5264 = vperm.xlu0 %5263, %v5257
    %v5265 = vpop.permute.xlu0 %5264
    %v5266 = vlaneseq
    %v5267 = vshrl.u32 %v5266, 7
    %v5268 = vsub.s32 %v258, %v5267
    %v5269 = vrot.slane %v5262, %v5268
    %v5270 = vlaneseq
    %v5271 = vshrl.u32 %v5270, 7
    %v5272 = vsub.s32 %v258, %v5271
    %v5273 = vrot.slane %v5265, %v5272
    %v5274 = vsel %vm3642, %v5273, %v5269
    %v5276 = vsel %vm3645, %v5274, 0.0
    %5277 = vadd.xlane.f32.xlu0 %v5276
    %v5278 = vpop.xlane.xlu0 %5277
    %v5279 = vrcp.pop %v5278
    %v5281 = vlaneseq
    %v5282 = vshrl.u32 %v5281, 7
    %v5283 = vsub.s32 0, %v5282
    %v5284 = vrot.slane %v5279, %v5283
    %v5285 = vlaneseq
    %v5286 = vshrl.u32 %v5285, 7
    %v5287 = vsub.s32 1, %v5286
    %v5288 = vrot.slane %v5279, %v5287
    %v5291 = vmul.f32 %v5255, %v5284
    %v5292 = vmul.f32 %v5257, %v5288
    %5294 = vset.pattern.permute.xlu0 0
    %5295 = vperm.xlu0 %5294, %v5291
    %v5296 = vpop.permute.xlu0 %5295
    %5299 = vset.pattern.permute.xlu0 0
    %5300 = vperm.xlu0 %5299, %v5292
    %v5301 = vpop.permute.xlu0 %5300
    %v5303 = vmul.f32 %v5296, %v3420
    %v5304 = vmul.f32 %v5301, %v3421
    %v5305 = vsel %vm436, %v5303, 0.0
    %v5306 = vrot.slane %v5305, 4
    %v5307 = vadd.f32 %v5305, %v5306
    %v5308 = vrot.slane %v5307, 2
    %v5309 = vadd.f32 %v5307, %v5308
    %v5310 = vrot.slane %v5309, 1
    %v5311 = vadd.f32 %v5309, %v5310
    %v5312 = vsel %vm436, %v5304, 0.0
    %v5313 = vrot.slane %v5312, 4
    %v5314 = vadd.f32 %v5312, %v5313
    %v5315 = vrot.slane %v5314, 2
    %v5316 = vadd.f32 %v5314, %v5315
    %v5317 = vrot.slane %v5316, 1
    %v5318 = vadd.f32 %v5316, %v5317
    %v5321 = vsel %vm3642, %v5318, %v5311
    %v5322 = vsel %vm436, %v5321, 0
    %5324 = vmatprep.subr.mxu0 0.0
    %5325 = vmatpush1.msra.mxu0 0.0
    %5326 = vmatprep.subr.mxu0 0.0
    %5327 = vmatpush1.msra.mxu0 0.0
    %5328 = vmatprep.subr.mxu0 0.0
    %5329 = vmatpush1.msra.mxu0 0.0
    %5330 = vmatprep.subr.mxu0 0.0
    %5331 = vmatpush1.msra.mxu0 0.0
    %5332 = vmatprep.subr.mxu0 0.0
    %5333 = vmatpush1.msra.mxu0 0.0
    %5334 = vmatprep.subr.mxu0 0.0
    %5335 = vmatpush1.msra.mxu0 0.0
    %5336 = vmatprep.subr.mxu0 0.0
    %5337 = vmatpush1.msra.mxu0 0.0
    %5338 = vmatprep.subr.mxu0 0.0
    %5339 = vmatpush1.msra.mxu0 0.0
    %5340 = vmatprep.subr.mxu0 0.0
    %5341 = vmatpush1.msra.mxu0 0.0
    %5342 = vmatprep.subr.mxu0 0.0
    %5343 = vmatpush1.msra.mxu0 0.0
    %5344 = vmatprep.subr.mxu0 0.0
    %5345 = vmatpush1.msra.mxu0 0.0
    %5346 = vmatprep.subr.mxu0 0.0
    %5347 = vmatpush1.msra.mxu0 0.0
    %5348 = vmatprep.subr.mxu0 0.0
    %5349 = vmatpush1.msra.mxu0 %v239
    %5350 = vmatprep.subr.mxu0 0.0
    %5351 = vmatpush1.msra.mxu0 %v238
    %5352 = vmatprep.subr.mxu0 0.0
    %5353 = vmatpush1.msra.mxu0 %v237
    %5354 = vmatprep.subr.mxu0 0.0
    %5355 = vmatpush1.msra.mxu0 %v236
    %5356 = vmatprep.subr.mxu0 0.0
    %5357 = vmatpush2.msra.mxu0 0.0
    %5358 = vmatprep.subr.mxu0 0.0
    %5359 = vmatpush2.msra.mxu0 0.0
    %5360 = vmatprep.subr.mxu0 0.0
    %5361 = vmatpush2.msra.mxu0 0.0
    %5362 = vmatprep.subr.mxu0 0.0
    %5363 = vmatpush2.msra.mxu0 0.0
    %5364 = vmatprep.subr.mxu0 0.0
    %5365 = vmatpush2.msra.mxu0 0.0
    %5366 = vmatprep.subr.mxu0 0.0
    %5367 = vmatpush2.msra.mxu0 0.0
    %5368 = vmatprep.subr.mxu0 0.0
    %5369 = vmatpush2.msra.mxu0 0.0
    %5370 = vmatprep.subr.mxu0 0.0
    %5371 = vmatpush2.msra.mxu0 0.0
    %5372 = vmatprep.subr.mxu0 0.0
    %5373 = vmatpush2.msra.mxu0 0.0
    %5374 = vmatprep.subr.mxu0 0.0
    %5375 = vmatpush2.msra.mxu0 0.0
    %5376 = vmatprep.subr.mxu0 0.0
    %5377 = vmatpush2.msra.mxu0 0.0
    %5378 = vmatprep.subr.mxu0 0.0
    %5379 = vmatpush2.msra.mxu0 0.0
    %5380 = vmatprep.subr.mxu0 0.0
    %5381 = vmatpush2.msra.mxu0 0.0
    %5382 = vmatprep.subr.mxu0 0.0
    %5383 = vmatpush2.msra.mxu0 0.0
    %5384 = vmatprep.subr.mxu0 0.0
    %5385 = vmatpush2.msra.mxu0 0.0
    %5386 = vmatprep.subr.mxu0 0.0
    %5387 = vmatpush2.msra.mxu0 0.0
    %5388 = vmatprep.mubr.f32.mxu0 0.0
    %5389 = vmatmul.mubr.f32.gmra.mxu0 %v5322
    %v5390 = vpop.f32.mrf.mxu0
    %v5391 = vadd.f32 0.0, %v5390
    %v5392 = vpop.f32.mrf.mxu0
    %5393 = vdwg.mxu0
    %v5395 = vsel %vm356, %v5108, 0
    %5397 = vmatprep.subr.mxu0 0.0
    %5398 = vmatpush1.msra.mxu0 0.0
    %5399 = vmatprep.subr.mxu0 0.0
    %5400 = vmatpush1.msra.mxu0 0.0
    %5401 = vmatprep.subr.mxu0 0.0
    %5402 = vmatpush1.msra.mxu0 0.0
    %5403 = vmatprep.subr.mxu0 0.0
    %5404 = vmatpush1.msra.mxu0 0.0
    %5405 = vmatprep.subr.mxu0 0.0
    %5406 = vmatpush1.msra.mxu0 0.0
    %5407 = vmatprep.subr.mxu0 0.0
    %5408 = vmatpush1.msra.mxu0 0.0
    %5409 = vmatprep.subr.mxu0 0.0
    %5410 = vmatpush1.msra.mxu0 0.0
    %5411 = vmatprep.subr.mxu0 0.0
    %5412 = vmatpush1.msra.mxu0 0.0
    %5413 = vmatprep.subr.mxu0 0.0
    %5414 = vmatpush1.msra.mxu0 0.0
    %5415 = vmatprep.subr.mxu0 0.0
    %5416 = vmatpush1.msra.mxu0 0.0
    %5417 = vmatprep.subr.mxu0 0.0
    %5418 = vmatpush1.msra.mxu0 0.0
    %5419 = vmatprep.subr.mxu0 0.0
    %5420 = vmatpush1.msra.mxu0 0.0
    %5421 = vmatprep.subr.mxu0 0.0
    %5422 = vmatpush1.msra.mxu0 0.0
    %5423 = vmatprep.subr.mxu0 0.0
    %5424 = vmatpush1.msra.mxu0 0.0
    %5425 = vmatprep.subr.mxu0 0.0
    %5426 = vmatpush1.msra.mxu0 %v235
    %5427 = vmatprep.subr.mxu0 0.0
    %5428 = vmatpush1.msra.mxu0 %v234
    %5429 = vmatprep.subr.mxu0 0.0
    %5430 = vmatpush2.msra.mxu0 0.0
    %5431 = vmatprep.subr.mxu0 0.0
    %5432 = vmatpush2.msra.mxu0 0.0
    %5433 = vmatprep.subr.mxu0 0.0
    %5434 = vmatpush2.msra.mxu0 0.0
    %5435 = vmatprep.subr.mxu0 0.0
    %5436 = vmatpush2.msra.mxu0 0.0
    %5437 = vmatprep.subr.mxu0 0.0
    %5438 = vmatpush2.msra.mxu0 0.0
    %5439 = vmatprep.subr.mxu0 0.0
    %5440 = vmatpush2.msra.mxu0 0.0
    %5441 = vmatprep.subr.mxu0 0.0
    %5442 = vmatpush2.msra.mxu0 0.0
    %5443 = vmatprep.subr.mxu0 0.0
    %5444 = vmatpush2.msra.mxu0 0.0
    %5445 = vmatprep.subr.mxu0 0.0
    %5446 = vmatpush2.msra.mxu0 0.0
    %5447 = vmatprep.subr.mxu0 0.0
    %5448 = vmatpush2.msra.mxu0 0.0
    %5449 = vmatprep.subr.mxu0 0.0
    %5450 = vmatpush2.msra.mxu0 0.0
    %5451 = vmatprep.subr.mxu0 0.0
    %5452 = vmatpush2.msra.mxu0 0.0
    %5453 = vmatprep.subr.mxu0 0.0
    %5454 = vmatpush2.msra.mxu0 0.0
    %5455 = vmatprep.subr.mxu0 0.0
    %5456 = vmatpush2.msra.mxu0 0.0
    %5457 = vmatprep.subr.mxu0 0.0
    %5458 = vmatpush2.msra.mxu0 0.0
    %5459 = vmatprep.subr.mxu0 0.0
    %5460 = vmatpush2.msra.mxu0 0.0
    %5461 = vmatprep.mubr.f32.mxu0 0.0
    %5462 = vmatmul.mubr.f32.gmra.mxu0 %v5395
    %v5463 = vpop.f32.mrf.mxu0
    %v5464 = vadd.f32 %v5391, %v5463
    %v5465 = vpop.f32.mrf.mxu0
    %5466 = vdwg.mxu0
    %v5467 = vadd.f32 %v5464, %v3879
    %5468 = vmatprep.subr.mxu0 0.0
    %5469 = vmatpush1.msra.mxu0 0.0
    %5470 = vmatprep.subr.mxu0 0.0
    %5471 = vmatpush1.msra.mxu0 0.0
    %5472 = vmatprep.subr.mxu0 0.0
    %5473 = vmatpush1.msra.mxu0 0.0
    %5474 = vmatprep.subr.mxu0 0.0
    %5475 = vmatpush1.msra.mxu0 0.0
    %5476 = vmatprep.subr.mxu0 0.0
    %5477 = vmatpush1.msra.mxu0 0.0
    %5478 = vmatprep.subr.mxu0 0.0
    %5479 = vmatpush1.msra.mxu0 0.0
    %5480 = vmatprep.subr.mxu0 0.0
    %5481 = vmatpush1.msra.mxu0 0.0
    %5482 = vmatprep.subr.mxu0 0.0
    %5483 = vmatpush1.msra.mxu0 0.0
    %5484 = vmatprep.subr.mxu0 0.0
    %5485 = vmatpush1.msra.mxu0 0.0
    %5486 = vmatprep.subr.mxu0 0.0
    %5487 = vmatpush1.msra.mxu0 0.0
    %5488 = vmatprep.subr.mxu0 0.0
    %5489 = vmatpush1.msra.mxu0 0.0
    %5490 = vmatprep.subr.mxu0 0.0
    %5491 = vmatpush1.msra.mxu0 0.0
    %5492 = vmatprep.subr.mxu0 0.0
    %5493 = vmatpush1.msra.mxu0 %v243
    %5494 = vmatprep.subr.mxu0 0.0
    %5495 = vmatpush1.msra.mxu0 %v242
    %5496 = vmatprep.subr.mxu0 0.0
    %5497 = vmatpush1.msra.mxu0 %v241
    %5498 = vmatprep.subr.mxu0 0.0
    %5499 = vmatpush1.msra.mxu0 %v240
    %5500 = vmatprep.subr.mxu0 0.0
    %5501 = vmatpush2.msra.mxu0 0.0
    %5502 = vmatprep.subr.mxu0 0.0
    %5503 = vmatpush2.msra.mxu0 0.0
    %5504 = vmatprep.subr.mxu0 0.0
    %5505 = vmatpush2.msra.mxu0 0.0
    %5506 = vmatprep.subr.mxu0 0.0
    %5507 = vmatpush2.msra.mxu0 0.0
    %5508 = vmatprep.subr.mxu0 0.0
    %5509 = vmatpush2.msra.mxu0 0.0
    %5510 = vmatprep.subr.mxu0 0.0
    %5511 = vmatpush2.msra.mxu0 0.0
    %5512 = vmatprep.subr.mxu0 0.0
    %5513 = vmatpush2.msra.mxu0 0.0
    %5514 = vmatprep.subr.mxu0 0.0
    %5515 = vmatpush2.msra.mxu0 0.0
    %5516 = vmatprep.subr.mxu0 0.0
    %5517 = vmatpush2.msra.mxu0 0.0
    %5518 = vmatprep.subr.mxu0 0.0
    %5519 = vmatpush2.msra.mxu0 0.0
    %5520 = vmatprep.subr.mxu0 0.0
    %5521 = vmatpush2.msra.mxu0 0.0
    %5522 = vmatprep.subr.mxu0 0.0
    %5523 = vmatpush2.msra.mxu0 0.0
    %5524 = vmatprep.subr.mxu0 0.0
    %5525 = vmatpush2.msra.mxu0 0.0
    %5526 = vmatprep.subr.mxu0 0.0
    %5527 = vmatpush2.msra.mxu0 0.0
    %5528 = vmatprep.subr.mxu0 0.0
    %5529 = vmatpush2.msra.mxu0 0.0
    %5530 = vmatprep.subr.mxu0 0.0
    %5531 = vmatpush2.msra.mxu0 0.0
    %5532 = vmatprep.mubr.f32.mxu0 0.0
    %5533 = vmatmul.mubr.f32.gmra.mxu0 %v4850
    %v5534 = vpop.f32.mrf.mxu0
    %v5535 = vadd.f32 %v3886, %v5534
    %v5536 = vpop.f32.mrf.mxu0
    %5537 = vdwg.mxu0
    %v5538 = vadd.f32 %v5467, %v5535
    %v5539 = vxor.u32 %v5538, 2147483648
    %v5540 = vmul.f32 %v5539, 1.442695
    %v5541 = vpow.pop %v5540
    %v5542 = vadd.f32 %v5541, 1.0
    %v5543 = vrcp.pop %v5542
    %v5544 = vmul.f32 1.0, %v5543
    %5546 = vrot.lane.b32.xlu0 %v5535, 64
    %v5547 = vpop.permute.xlu0 %5546
    %v5549 = vmul.f32 %v5544, %v5547
    %5551 = vrot.lane.b32.xlu0 %v5549, 64
    %v5552 = vpop.permute.xlu0 %5551
    %v5554 = vadd.f32 %v5467, %v5552
    %v5555 = vtanh.pop %v5554
    %v5556 = vsub.f32 1.0, %v5544
    %5558 = vrot.lane.b32.xlu0 %v5555, 96
    %v5559 = vpop.permute.xlu0 %5558
    %v5561 = vmul.f32 %v5556, %v5559
    %v5562 = vmul.f32 %v5544, %v4776
    %v5563 = vadd.f32 %v5561, %v5562
    %5564 = vmatprep.subr.mxu0 0.0
    %5565 = vmatpush1.msra.mxu0 0.0
    %5566 = vmatprep.subr.mxu0 0.0
    %5567 = vmatpush1.msra.mxu0 0.0
    %5568 = vmatprep.subr.mxu0 0.0
    %5569 = vmatpush1.msra.mxu0 0.0
    %5570 = vmatprep.subr.mxu0 0.0
    %5571 = vmatpush1.msra.mxu0 0.0
    %5572 = vmatprep.subr.mxu0 0.0
    %5573 = vmatpush1.msra.mxu0 0.0
    %5574 = vmatprep.subr.mxu0 0.0
    %5575 = vmatpush1.msra.mxu0 0.0
    %5576 = vmatprep.subr.mxu0 0.0
    %5577 = vmatpush1.msra.mxu0 0.0
    %5578 = vmatprep.subr.mxu0 0.0
    %5579 = vmatpush1.msra.mxu0 0.0
    %5580 = vmatprep.subr.mxu0 0.0
    %5581 = vmatpush1.msra.mxu0 0.0
    %5582 = vmatprep.subr.mxu0 0.0
    %5583 = vmatpush1.msra.mxu0 0.0
    %5584 = vmatprep.subr.mxu0 0.0
    %5585 = vmatpush1.msra.mxu0 0.0
    %5586 = vmatprep.subr.mxu0 0.0
    %5587 = vmatpush1.msra.mxu0 0.0
    %5588 = vmatprep.subr.mxu0 0.0
    %5589 = vmatpush1.msra.mxu0 %v253
    %5590 = vmatprep.subr.mxu0 0.0
    %5591 = vmatpush1.msra.mxu0 %v252
    %5592 = vmatprep.subr.mxu0 0.0
    %5593 = vmatpush1.msra.mxu0 %v251
    %5594 = vmatprep.subr.mxu0 0.0
    %5595 = vmatpush1.msra.mxu0 %v250
    %5596 = vmatprep.subr.mxu0 0.0
    %5597 = vmatpush2.msra.mxu0 0.0
    %5598 = vmatprep.subr.mxu0 0.0
    %5599 = vmatpush2.msra.mxu0 0.0
    %5600 = vmatprep.subr.mxu0 0.0
    %5601 = vmatpush2.msra.mxu0 0.0
    %5602 = vmatprep.subr.mxu0 0.0
    %5603 = vmatpush2.msra.mxu0 0.0
    %5604 = vmatprep.subr.mxu0 0.0
    %5605 = vmatpush2.msra.mxu0 0.0
    %5606 = vmatprep.subr.mxu0 0.0
    %5607 = vmatpush2.msra.mxu0 0.0
    %5608 = vmatprep.subr.mxu0 0.0
    %5609 = vmatpush2.msra.mxu0 0.0
    %5610 = vmatprep.subr.mxu0 0.0
    %5611 = vmatpush2.msra.mxu0 0.0
    %5612 = vmatprep.subr.mxu0 0.0
    %5613 = vmatpush2.msra.mxu0 0.0
    %5614 = vmatprep.subr.mxu0 0.0
    %5615 = vmatpush2.msra.mxu0 0.0
    %5616 = vmatprep.subr.mxu0 0.0
    %5617 = vmatpush2.msra.mxu0 0.0
    %5618 = vmatprep.subr.mxu0 0.0
    %5619 = vmatpush2.msra.mxu0 0.0
    %5620 = vmatprep.subr.mxu0 0.0
    %5621 = vmatpush2.msra.mxu0 0.0
    %5622 = vmatprep.subr.mxu0 0.0
    %5623 = vmatpush2.msra.mxu0 0.0
    %5624 = vmatprep.subr.mxu0 0.0
    %5625 = vmatpush2.msra.mxu0 0.0
    %5626 = vmatprep.subr.mxu0 0.0
    %5627 = vmatpush2.msra.mxu0 0.0
    %5628 = vmatprep.mubr.f32.mxu0 0.0
    %5629 = vmatmul.mubr.f32.gmra.mxu0 %v5322
    %v5630 = vpop.f32.mrf.mxu0
    %v5631 = vadd.f32 0.0, %v5630
    %v5632 = vpop.f32.mrf.mxu0
    %5633 = vdwg.mxu0
    %5635 = vrot.lane.b32.xlu0 %v5563, 96
    %v5636 = vpop.permute.xlu0 %5635
    %v5637 = vsel %vm436, %v5636, 0
    %5639 = vmatprep.subr.mxu0 0.0
    %5640 = vmatpush1.msra.mxu0 0.0
    %5641 = vmatprep.subr.mxu0 0.0
    %5642 = vmatpush1.msra.mxu0 0.0
    %5643 = vmatprep.subr.mxu0 0.0
    %5644 = vmatpush1.msra.mxu0 0.0
    %5645 = vmatprep.subr.mxu0 0.0
    %5646 = vmatpush1.msra.mxu0 0.0
    %5647 = vmatprep.subr.mxu0 0.0
    %5648 = vmatpush1.msra.mxu0 0.0
    %5649 = vmatprep.subr.mxu0 0.0
    %5650 = vmatpush1.msra.mxu0 0.0
    %5651 = vmatprep.subr.mxu0 0.0
    %5652 = vmatpush1.msra.mxu0 0.0
    %5653 = vmatprep.subr.mxu0 0.0
    %5654 = vmatpush1.msra.mxu0 0.0
    %5655 = vmatprep.subr.mxu0 0.0
    %5656 = vmatpush1.msra.mxu0 0.0
    %5657 = vmatprep.subr.mxu0 0.0
    %5658 = vmatpush1.msra.mxu0 0.0
    %5659 = vmatprep.subr.mxu0 0.0
    %5660 = vmatpush1.msra.mxu0 0.0
    %5661 = vmatprep.subr.mxu0 0.0
    %5662 = vmatpush1.msra.mxu0 0.0
    %5663 = vmatprep.subr.mxu0 0.0
    %5664 = vmatpush1.msra.mxu0 %v249
    %5665 = vmatprep.subr.mxu0 0.0
    %5666 = vmatpush1.msra.mxu0 %v248
    %5667 = vmatprep.subr.mxu0 0.0
    %5668 = vmatpush1.msra.mxu0 %v247
    %5669 = vmatprep.subr.mxu0 0.0
    %5670 = vmatpush1.msra.mxu0 %v246
    %5671 = vmatprep.subr.mxu0 0.0
    %5672 = vmatpush2.msra.mxu0 0.0
    %5673 = vmatprep.subr.mxu0 0.0
    %5674 = vmatpush2.msra.mxu0 0.0
    %5675 = vmatprep.subr.mxu0 0.0
    %5676 = vmatpush2.msra.mxu0 0.0
    %5677 = vmatprep.subr.mxu0 0.0
    %5678 = vmatpush2.msra.mxu0 0.0
    %5679 = vmatprep.subr.mxu0 0.0
    %5680 = vmatpush2.msra.mxu0 0.0
    %5681 = vmatprep.subr.mxu0 0.0
    %5682 = vmatpush2.msra.mxu0 0.0
    %5683 = vmatprep.subr.mxu0 0.0
    %5684 = vmatpush2.msra.mxu0 0.0
    %5685 = vmatprep.subr.mxu0 0.0
    %5686 = vmatpush2.msra.mxu0 0.0
    %5687 = vmatprep.subr.mxu0 0.0
    %5688 = vmatpush2.msra.mxu0 0.0
    %5689 = vmatprep.subr.mxu0 0.0
    %5690 = vmatpush2.msra.mxu0 0.0
    %5691 = vmatprep.subr.mxu0 0.0
    %5692 = vmatpush2.msra.mxu0 0.0
    %5693 = vmatprep.subr.mxu0 0.0
    %5694 = vmatpush2.msra.mxu0 0.0
    %5695 = vmatprep.subr.mxu0 0.0
    %5696 = vmatpush2.msra.mxu0 0.0
    %5697 = vmatprep.subr.mxu0 0.0
    %5698 = vmatpush2.msra.mxu0 0.0
    %5699 = vmatprep.subr.mxu0 0.0
    %5700 = vmatpush2.msra.mxu0 0.0
    %5701 = vmatprep.subr.mxu0 0.0
    %5702 = vmatpush2.msra.mxu0 0.0
    %5703 = vmatprep.mubr.f32.mxu0 0.0
    %5704 = vmatmul.mubr.f32.gmra.mxu0 %v5637
    %v5705 = vpop.f32.mrf.mxu0
    %v5706 = vadd.f32 %v5631, %v5705
    %v5707 = vpop.f32.mrf.mxu0
    %5708 = vdwg.mxu0
    %5709 = vmatprep.subr.mxu0 0.0
    %5710 = vmatpush1.msra.mxu0 0.0
    %5711 = vmatprep.subr.mxu0 0.0
    %5712 = vmatpush1.msra.mxu0 0.0
    %5713 = vmatprep.subr.mxu0 0.0
    %5714 = vmatpush1.msra.mxu0 0.0
    %5715 = vmatprep.subr.mxu0 0.0
    %5716 = vmatpush1.msra.mxu0 0.0
    %5717 = vmatprep.subr.mxu0 0.0
    %5718 = vmatpush1.msra.mxu0 0.0
    %5719 = vmatprep.subr.mxu0 0.0
    %5720 = vmatpush1.msra.mxu0 0.0
    %5721 = vmatprep.subr.mxu0 0.0
    %5722 = vmatpush1.msra.mxu0 0.0
    %5723 = vmatprep.subr.mxu0 0.0
    %5724 = vmatpush1.msra.mxu0 0.0
    %5725 = vmatprep.subr.mxu0 0.0
    %5726 = vmatpush1.msra.mxu0 0.0
    %5727 = vmatprep.subr.mxu0 0.0
    %5728 = vmatpush1.msra.mxu0 0.0
    %5729 = vmatprep.subr.mxu0 0.0
    %5730 = vmatpush1.msra.mxu0 0.0
    %5731 = vmatprep.subr.mxu0 0.0
    %5732 = vmatpush1.msra.mxu0 0.0
    %5733 = vmatprep.subr.mxu0 0.0
    %5734 = vmatpush1.msra.mxu0 0.0
    %5735 = vmatprep.subr.mxu0 0.0
    %5736 = vmatpush1.msra.mxu0 0.0
    %5737 = vmatprep.subr.mxu0 0.0
    %5738 = vmatpush1.msra.mxu0 %v255
    %5739 = vmatprep.subr.mxu0 0.0
    %5740 = vmatpush1.msra.mxu0 %v254
    %5741 = vmatprep.subr.mxu0 0.0
    %5742 = vmatpush2.msra.mxu0 0.0
    %5743 = vmatprep.subr.mxu0 0.0
    %5744 = vmatpush2.msra.mxu0 0.0
    %5745 = vmatprep.subr.mxu0 0.0
    %5746 = vmatpush2.msra.mxu0 0.0
    %5747 = vmatprep.subr.mxu0 0.0
    %5748 = vmatpush2.msra.mxu0 0.0
    %5749 = vmatprep.subr.mxu0 0.0
    %5750 = vmatpush2.msra.mxu0 0.0
    %5751 = vmatprep.subr.mxu0 0.0
    %5752 = vmatpush2.msra.mxu0 0.0
    %5753 = vmatprep.subr.mxu0 0.0
    %5754 = vmatpush2.msra.mxu0 0.0
    %5755 = vmatprep.subr.mxu0 0.0
    %5756 = vmatpush2.msra.mxu0 0.0
    %5757 = vmatprep.subr.mxu0 0.0
    %5758 = vmatpush2.msra.mxu0 0.0
    %5759 = vmatprep.subr.mxu0 0.0
    %5760 = vmatpush2.msra.mxu0 0.0
    %5761 = vmatprep.subr.mxu0 0.0
    %5762 = vmatpush2.msra.mxu0 0.0
    %5763 = vmatprep.subr.mxu0 0.0
    %5764 = vmatpush2.msra.mxu0 0.0
    %5765 = vmatprep.subr.mxu0 0.0
    %5766 = vmatpush2.msra.mxu0 0.0
    %5767 = vmatprep.subr.mxu0 0.0
    %5768 = vmatpush2.msra.mxu0 0.0
    %5769 = vmatprep.subr.mxu0 0.0
    %5770 = vmatpush2.msra.mxu0 0.0
    %5771 = vmatprep.subr.mxu0 0.0
    %5772 = vmatpush2.msra.mxu0 0.0
    %5773 = vmatprep.mubr.f32.mxu0 0.0
    %5774 = vmatmul.mubr.f32.gmra.mxu0 %v5395
    %v5775 = vpop.f32.mrf.mxu0
    %v5776 = vadd.f32 0.0, %v5775
    %v5777 = vpop.f32.mrf.mxu0
    %5778 = vdwg.mxu0
    %v5779 = vadd.f32 %v5706, %v5776
    %v5780 = vadd.f32 %v5779, %v4204
    %s5781 = scalar_lea.vmem [#allocation24], 6
    %5782 = vst.msk [vmem:[%s5781] sm:$0x3] %vm3424, %v5780
    %v5783 = vsel %vm3424, %v5780, -inf
    %5784 = vmax.xlane.f32.xlu0 %v5783
    %v5785 = vpop.xlane.xlu0 %5784
    %vm5786 = vcmp.ge.f32.partialorder %v5780, %v5785
    %v5787 = vsel %vm5786, %v258, 20
    %v5788 = vsel %vm3424, %v5787, 2147483647
    %v5789 = vand.u32 %v5788, 65535
    %v5790 = vshra.s32 %v5788, 16
    %v5791 = vcvt.s32.f32 %v5789
    %v5792 = vcvt.s32.f32 %v5790
    %5793 = vmin.xlane.f32.xlu0 %v5792
    %v5794 = vpop.xlane.xlu0 %5793
    %vm5795 = vcmp.eq.f32.partialorder %v5792, %v5794
    %v5796 = vsel %vm5795, %v5791, inf
    %5797 = vmin.xlane.f32.xlu0 %v5796
    %v5798 = vpop.xlane.xlu0 %5797
    %v5799 = vcvt.f32.s32 %v5798
    %v5800 = vcvt.f32.s32 %v5794
    %v5801 = vshll.u32 %v5800, 16
    %v5802 = vadd.s32 %v5801, %v5799
    %vm5803 = vcmp.eq.s32.totalorder %v258, %v5802
    %v5804 = vsel %vm5803, 1, 0
    %v5805 = vcvt.s32.f32 %v5804
    %s5806 = sld [smem:[#allocation8 + $0x3]]
    %v5807 = vstv %s5806
    %v5808 = vsel %vm261, %v5807, 0
    %s5809 = sld [smem:[#allocation8 + $0x83]]
    %v5810 = vstv %s5809
    %v5811 = vsel %vm265, %v5810, %v5808
    %vm5812 = vcmp.eq.s32.totalorder %v258, %v5811
    %v5813 = vsel %vm5812, 1, 0
    %v5814 = vcvt.s32.f32 %v5813
    %s5815 = sld [smem:[#allocation10 + $0x2]]
    %p5816 = scmp.gt.s32.totalorder %s5815, 0
    %s5817 = scalar_select %p5816, 1, 0
    %s5818 = scvt.s32.f32 %s5817
    %v5819 = vstv %s5818
    %v5820 = vmul.f32 %v5819, %v5814
    %s5821 = ssub.f32 1.0, %s5818
    %v5822 = vstv %s5821
    %v5823 = vmul.f32 %v5822, %v5805
    %v5824 = vadd.f32 %v5820, %v5823
    %v5826 = vsel %vm272, %v5824, 0
    %5828 = vmatprep.subr.mxu0 0.0
    %5829 = vmatpush1.msra.mxu0 0.0
    %5830 = vmatprep.subr.mxu0 0.0
    %5831 = vmatpush1.msra.mxu0 0.0
    %5832 = vmatprep.subr.mxu0 0.0
    %5833 = vmatpush1.msra.mxu0 0.0
    %5834 = vmatprep.subr.mxu0 0.0
    %5835 = vmatpush1.msra.mxu0 0.0
    %5836 = vmatprep.subr.mxu0 0.0
    %5837 = vmatpush1.msra.mxu0 0.0
    %5838 = vmatprep.subr.mxu0 0.0
    %5839 = vmatpush1.msra.mxu0 0.0
    %5840 = vmatprep.subr.mxu0 0.0
    %5841 = vmatpush1.msra.mxu0 0.0
    %5842 = vmatprep.subr.mxu0 0.0
    %5843 = vmatpush1.msra.mxu0 0.0
    %5844 = vmatprep.subr.mxu0 0.0
    %5845 = vmatpush1.msra.mxu0 0.0
    %5846 = vmatprep.subr.mxu0 0.0
    %5847 = vmatpush1.msra.mxu0 0.0
    %5848 = vmatprep.subr.mxu0 0.0
    %5849 = vmatpush1.msra.mxu0 0.0
    %5850 = vmatprep.subr.mxu0 0.0
    %5851 = vmatpush1.msra.mxu0 0.0
    %5852 = vmatprep.subr.mxu0 0.0
    %5853 = vmatpush1.msra.mxu0 0.0
    %5854 = vmatprep.subr.mxu0 0.0
    %5855 = vmatpush1.msra.mxu0 %v3439
    %5856 = vmatprep.subr.mxu0 0.0
    %5857 = vmatpush1.msra.mxu0 %v214
    %5858 = vmatprep.subr.mxu0 0.0
    %5859 = vmatpush1.msra.mxu0 %v213
    %5860 = vmatprep.subr.mxu0 0.0
    %5861 = vmatpush2.msra.mxu0 0.0
    %5862 = vmatprep.subr.mxu0 0.0
    %5863 = vmatpush2.msra.mxu0 0.0
    %5864 = vmatprep.subr.mxu0 0.0
    %5865 = vmatpush2.msra.mxu0 0.0
    %5866 = vmatprep.subr.mxu0 0.0
    %5867 = vmatpush2.msra.mxu0 0.0
    %5868 = vmatprep.subr.mxu0 0.0
    %5869 = vmatpush2.msra.mxu0 0.0
    %5870 = vmatprep.subr.mxu0 0.0
    %5871 = vmatpush2.msra.mxu0 0.0
    %5872 = vmatprep.subr.mxu0 0.0
    %5873 = vmatpush2.msra.mxu0 0.0
    %5874 = vmatprep.subr.mxu0 0.0
    %5875 = vmatpush2.msra.mxu0 0.0
    %5876 = vmatprep.subr.mxu0 0.0
    %5877 = vmatpush2.msra.mxu0 0.0
    %5878 = vmatprep.subr.mxu0 0.0
    %5879 = vmatpush2.msra.mxu0 0.0
    %5880 = vmatprep.subr.mxu0 0.0
    %5881 = vmatpush2.msra.mxu0 0.0
    %5882 = vmatprep.subr.mxu0 0.0
    %5883 = vmatpush2.msra.mxu0 0.0
    %5884 = vmatprep.subr.mxu0 0.0
    %5885 = vmatpush2.msra.mxu0 0.0
    %5886 = vmatprep.subr.mxu0 0.0
    %5887 = vmatpush2.msra.mxu0 0.0
    %5888 = vmatprep.subr.mxu0 0.0
    %5889 = vmatpush2.msra.mxu0 0.0
    %5890 = vmatprep.subr.mxu0 0.0
    %5891 = vmatpush2.msra.mxu0 0.0
    %5892 = vmatprep.mubr.f32.mxu0 0.0
    %5893 = vmatmul.mubr.f32.gmra.mxu0 %v5826
    %v5894 = vpop.f32.mrf.mxu0
    %v5895 = vadd.f32 0.0, %v5894
    %v5896 = vpop.f32.mrf.mxu0
    %5897 = vdwg.mxu0
    %5898 = vmatprep.subr.mxu0 0.0
    %5899 = vmatpush1.msra.mxu0 0.0
    %5900 = vmatprep.subr.mxu0 0.0
    %5901 = vmatpush1.msra.mxu0 0.0
    %5902 = vmatprep.subr.mxu0 0.0
    %5903 = vmatpush1.msra.mxu0 0.0
    %5904 = vmatprep.subr.mxu0 0.0
    %5905 = vmatpush1.msra.mxu0 0.0
    %5906 = vmatprep.subr.mxu0 0.0
    %5907 = vmatpush1.msra.mxu0 0.0
    %5908 = vmatprep.subr.mxu0 0.0
    %5909 = vmatpush1.msra.mxu0 0.0
    %5910 = vmatprep.subr.mxu0 0.0
    %5911 = vmatpush1.msra.mxu0 0.0
    %5912 = vmatprep.subr.mxu0 0.0
    %5913 = vmatpush1.msra.mxu0 0.0
    %5914 = vmatprep.subr.mxu0 0.0
    %5915 = vmatpush1.msra.mxu0 0.0
    %5916 = vmatprep.subr.mxu0 0.0
    %5917 = vmatpush1.msra.mxu0 0.0
    %5918 = vmatprep.subr.mxu0 0.0
    %5919 = vmatpush1.msra.mxu0 0.0
    %5920 = vmatprep.subr.mxu0 0.0
    %5921 = vmatpush1.msra.mxu0 0.0
    %5922 = vmatprep.subr.mxu0 0.0
    %5923 = vmatpush1.msra.mxu0 %v227
    %5924 = vmatprep.subr.mxu0 0.0
    %5925 = vmatpush1.msra.mxu0 %v226
    %5926 = vmatprep.subr.mxu0 0.0
    %5927 = vmatpush1.msra.mxu0 %v225
    %5928 = vmatprep.subr.mxu0 0.0
    %5929 = vmatpush1.msra.mxu0 %v224
    %5930 = vmatprep.subr.mxu0 0.0
    %5931 = vmatpush2.msra.mxu0 0.0
    %5932 = vmatprep.subr.mxu0 0.0
    %5933 = vmatpush2.msra.mxu0 0.0
    %5934 = vmatprep.subr.mxu0 0.0
    %5935 = vmatpush2.msra.mxu0 0.0
    %5936 = vmatprep.subr.mxu0 0.0
    %5937 = vmatpush2.msra.mxu0 0.0
    %5938 = vmatprep.subr.mxu0 0.0
    %5939 = vmatpush2.msra.mxu0 0.0
    %5940 = vmatprep.subr.mxu0 0.0
    %5941 = vmatpush2.msra.mxu0 0.0
    %5942 = vmatprep.subr.mxu0 0.0
    %5943 = vmatpush2.msra.mxu0 0.0
    %5944 = vmatprep.subr.mxu0 0.0
    %5945 = vmatpush2.msra.mxu0 0.0
    %5946 = vmatprep.subr.mxu0 0.0
    %5947 = vmatpush2.msra.mxu0 0.0
    %5948 = vmatprep.subr.mxu0 0.0
    %5949 = vmatpush2.msra.mxu0 0.0
    %5950 = vmatprep.subr.mxu0 0.0
    %5951 = vmatpush2.msra.mxu0 0.0
    %5952 = vmatprep.subr.mxu0 0.0
    %5953 = vmatpush2.msra.mxu0 0.0
    %5954 = vmatprep.subr.mxu0 0.0
    %5955 = vmatpush2.msra.mxu0 0.0
    %5956 = vmatprep.subr.mxu0 0.0
    %5957 = vmatpush2.msra.mxu0 0.0
    %5958 = vmatprep.subr.mxu0 0.0
    %5959 = vmatpush2.msra.mxu0 0.0
    %5960 = vmatprep.subr.mxu0 0.0
    %5961 = vmatpush2.msra.mxu0 0.0
    %5962 = vmatprep.mubr.f32.mxu0 0.0
    %5963 = vmatmul.mubr.f32.gmra.mxu0 %v5637
    %v5964 = vpop.f32.mrf.mxu0
    %v5965 = vadd.f32 0.0, %v5964
    %v5966 = vpop.f32.mrf.mxu0
    %5967 = vdwg.mxu0
    %v5970 = vunpack.c.l.s4 1966171168
    %v5971 = vunpack.c.0.s8 %v5970
    %v5972 = vlaneseq
    %v5973 = vshrl.u32 %v5972, 7
    %v5974 = vsub.s32 %v5971, %v5973
    %v5975 = vrot.slane %v5965, %v5974
    %v5976 = vcombine.high %v5975, %v5975
    %v5978 = vunpack.c.l.s4 1966171168
    %v5979 = vunpack.c.0.s8 %v5978
    %v5980 = vlaneseq
    %v5981 = vshrl.u32 %v5980, 7
    %v5982 = vsub.s32 %v5979, %v5981
    %v5983 = vrot.slane %v5975, %v5982
    %v5985 = vunpack.c.l.s4 1966171168
    %v5986 = vunpack.c.0.s8 %v5985
    %v5987 = vlaneseq
    %v5988 = vshrl.u32 %v5987, 7
    %v5989 = vsub.s32 %v5986, %v5988
    %v5990 = vrot.slane %v5976, %v5989
    %v5991 = vlaneseq
    %v5992 = vshrl.u32 %v5991, 7
    %v5993 = vsub.s32 0, %v5992
    %v5994 = vrot.slane %v5983, %v5993
    %v5995 = vlaneseq
    %v5996 = vshrl.u32 %v5995, 7
    %v5997 = vsub.s32 0, %v5996
    %v5998 = vrot.slane %v5990, %v5997
    %v6001 = vadd.f32 %v5994, %v3422
    %v6002 = vadd.f32 %v5998, %v3423
    %v6003 = vtanh.pop %v6001
    %v6004 = vtanh.pop %v6002
    %v6005 = vmul.f32 %v6003, %v3622
    %v6006 = vmul.f32 %v6004, %v3622
    %v6007 = vsel %vm436, %v6005, 0.0
    %6008 = vadd.xlane.f32.xlu0 %v6007
    %v6009 = vpop.xlane.xlu0 %6008
    %v6010 = vsel %vm436, %v6006, 0.0
    %6011 = vadd.xlane.f32.xlu0 %v6010
    %v6012 = vpop.xlane.xlu0 %6011
    %v6015 = vlaneseq
    %v6016 = vshrl.u32 %v6015, 7
    %v6017 = vsub.s32 %v258, %v6016
    %v6018 = vrot.slane %v6009, %v6017
    %v6019 = vlaneseq
    %v6020 = vshrl.u32 %v6019, 7
    %v6021 = vsub.s32 %v258, %v6020
    %v6022 = vrot.slane %v6012, %v6021
    %v6023 = vsel %vm3642, %v6022, %v6018
    %v6025 = vsel %vm3645, %v6023, -inf
    %6026 = vmax.xlane.f32.xlu0 %v6025
    %v6027 = vpop.xlane.xlu0 %6026
    %v6029 = vlaneseq
    %v6030 = vshrl.u32 %v6029, 7
    %v6031 = vsub.s32 0, %v6030
    %v6032 = vrot.slane %v6027, %v6031
    %v6033 = vlaneseq
    %v6034 = vshrl.u32 %v6033, 7
    %v6035 = vsub.s32 1, %v6034
    %v6036 = vrot.slane %v6027, %v6035
    %v6039 = vsub.f32 %v6009, %v6032
    %v6040 = vsub.f32 %v6012, %v6036
    %v6041 = vmul.f32 %v6039, 1.442695
    %v6042 = vpow.pop %v6041
    %v6043 = vmul.f32 %v6040, 1.442695
    %v6044 = vpow.pop %v6043
    %6047 = vset.pattern.permute.xlu0 0
    %6048 = vperm.xlu0 %6047, %v6042
    %v6049 = vpop.permute.xlu0 %6048
    %6050 = vset.pattern.permute.xlu0 0
    %6051 = vperm.xlu0 %6050, %v6044
    %v6052 = vpop.permute.xlu0 %6051
    %v6053 = vlaneseq
    %v6054 = vshrl.u32 %v6053, 7
    %v6055 = vsub.s32 %v258, %v6054
    %v6056 = vrot.slane %v6049, %v6055
    %v6057 = vlaneseq
    %v6058 = vshrl.u32 %v6057, 7
    %v6059 = vsub.s32 %v258, %v6058
    %v6060 = vrot.slane %v6052, %v6059
    %v6061 = vsel %vm3642, %v6060, %v6056
    %v6063 = vsel %vm3645, %v6061, 0.0
    %6064 = vadd.xlane.f32.xlu0 %v6063
    %v6065 = vpop.xlane.xlu0 %6064
    %v6066 = vrcp.pop %v6065
    %v6068 = vlaneseq
    %v6069 = vshrl.u32 %v6068, 7
    %v6070 = vsub.s32 0, %v6069
    %v6071 = vrot.slane %v6066, %v6070
    %v6072 = vlaneseq
    %v6073 = vshrl.u32 %v6072, 7
    %v6074 = vsub.s32 1, %v6073
    %v6075 = vrot.slane %v6066, %v6074
    %v6078 = vmul.f32 %v6042, %v6071
    %v6079 = vmul.f32 %v6044, %v6075
    %6081 = vset.pattern.permute.xlu0 0
    %6082 = vperm.xlu0 %6081, %v6078
    %v6083 = vpop.permute.xlu0 %6082
    %6086 = vset.pattern.permute.xlu0 0
    %6087 = vperm.xlu0 %6086, %v6079
    %v6088 = vpop.permute.xlu0 %6087
    %v6090 = vmul.f32 %v6083, %v3420
    %v6091 = vmul.f32 %v6088, %v3421
    %v6092 = vsel %vm436, %v6090, 0.0
    %v6093 = vrot.slane %v6092, 4
    %v6094 = vadd.f32 %v6092, %v6093
    %v6095 = vrot.slane %v6094, 2
    %v6096 = vadd.f32 %v6094, %v6095
    %v6097 = vrot.slane %v6096, 1
    %v6098 = vadd.f32 %v6096, %v6097
    %v6099 = vsel %vm436, %v6091, 0.0
    %v6100 = vrot.slane %v6099, 4
    %v6101 = vadd.f32 %v6099, %v6100
    %v6102 = vrot.slane %v6101, 2
    %v6103 = vadd.f32 %v6101, %v6102
    %v6104 = vrot.slane %v6103, 1
    %v6105 = vadd.f32 %v6103, %v6104
    %v6108 = vsel %vm3642, %v6105, %v6098
    %v6109 = vsel %vm436, %v6108, 0
    %6111 = vmatprep.subr.mxu0 0.0
    %6112 = vmatpush1.msra.mxu0 0.0
    %6113 = vmatprep.subr.mxu0 0.0
    %6114 = vmatpush1.msra.mxu0 0.0
    %6115 = vmatprep.subr.mxu0 0.0
    %6116 = vmatpush1.msra.mxu0 0.0
    %6117 = vmatprep.subr.mxu0 0.0
    %6118 = vmatpush1.msra.mxu0 0.0
    %6119 = vmatprep.subr.mxu0 0.0
    %6120 = vmatpush1.msra.mxu0 0.0
    %6121 = vmatprep.subr.mxu0 0.0
    %6122 = vmatpush1.msra.mxu0 0.0
    %6123 = vmatprep.subr.mxu0 0.0
    %6124 = vmatpush1.msra.mxu0 0.0
    %6125 = vmatprep.subr.mxu0 0.0
    %6126 = vmatpush1.msra.mxu0 0.0
    %6127 = vmatprep.subr.mxu0 0.0
    %6128 = vmatpush1.msra.mxu0 0.0
    %6129 = vmatprep.subr.mxu0 0.0
    %6130 = vmatpush1.msra.mxu0 0.0
    %6131 = vmatprep.subr.mxu0 0.0
    %6132 = vmatpush1.msra.mxu0 0.0
    %6133 = vmatprep.subr.mxu0 0.0
    %6134 = vmatpush1.msra.mxu0 0.0
    %6135 = vmatprep.subr.mxu0 0.0
    %6136 = vmatpush1.msra.mxu0 %v239
    %6137 = vmatprep.subr.mxu0 0.0
    %6138 = vmatpush1.msra.mxu0 %v238
    %6139 = vmatprep.subr.mxu0 0.0
    %6140 = vmatpush1.msra.mxu0 %v237
    %6141 = vmatprep.subr.mxu0 0.0
    %6142 = vmatpush1.msra.mxu0 %v236
    %6143 = vmatprep.subr.mxu0 0.0
    %6144 = vmatpush2.msra.mxu0 0.0
    %6145 = vmatprep.subr.mxu0 0.0
    %6146 = vmatpush2.msra.mxu0 0.0
    %6147 = vmatprep.subr.mxu0 0.0
    %6148 = vmatpush2.msra.mxu0 0.0
    %6149 = vmatprep.subr.mxu0 0.0
    %6150 = vmatpush2.msra.mxu0 0.0
    %6151 = vmatprep.subr.mxu0 0.0
    %6152 = vmatpush2.msra.mxu0 0.0
    %6153 = vmatprep.subr.mxu0 0.0
    %6154 = vmatpush2.msra.mxu0 0.0
    %6155 = vmatprep.subr.mxu0 0.0
    %6156 = vmatpush2.msra.mxu0 0.0
    %6157 = vmatprep.subr.mxu0 0.0
    %6158 = vmatpush2.msra.mxu0 0.0
    %6159 = vmatprep.subr.mxu0 0.0
    %6160 = vmatpush2.msra.mxu0 0.0
    %6161 = vmatprep.subr.mxu0 0.0
    %6162 = vmatpush2.msra.mxu0 0.0
    %6163 = vmatprep.subr.mxu0 0.0
    %6164 = vmatpush2.msra.mxu0 0.0
    %6165 = vmatprep.subr.mxu0 0.0
    %6166 = vmatpush2.msra.mxu0 0.0
    %6167 = vmatprep.subr.mxu0 0.0
    %6168 = vmatpush2.msra.mxu0 0.0
    %6169 = vmatprep.subr.mxu0 0.0
    %6170 = vmatpush2.msra.mxu0 0.0
    %6171 = vmatprep.subr.mxu0 0.0
    %6172 = vmatpush2.msra.mxu0 0.0
    %6173 = vmatprep.subr.mxu0 0.0
    %6174 = vmatpush2.msra.mxu0 0.0
    %6175 = vmatprep.mubr.f32.mxu0 0.0
    %6176 = vmatmul.mubr.f32.gmra.mxu0 %v6109
    %v6177 = vpop.f32.mrf.mxu0
    %v6178 = vadd.f32 0.0, %v6177
    %v6179 = vpop.f32.mrf.mxu0
    %6180 = vdwg.mxu0
    %v6182 = vsel %vm356, %v5895, 0
    %6184 = vmatprep.subr.mxu0 0.0
    %6185 = vmatpush1.msra.mxu0 0.0
    %6186 = vmatprep.subr.mxu0 0.0
    %6187 = vmatpush1.msra.mxu0 0.0
    %6188 = vmatprep.subr.mxu0 0.0
    %6189 = vmatpush1.msra.mxu0 0.0
    %6190 = vmatprep.subr.mxu0 0.0
    %6191 = vmatpush1.msra.mxu0 0.0
    %6192 = vmatprep.subr.mxu0 0.0
    %6193 = vmatpush1.msra.mxu0 0.0
    %6194 = vmatprep.subr.mxu0 0.0
    %6195 = vmatpush1.msra.mxu0 0.0
    %6196 = vmatprep.subr.mxu0 0.0
    %6197 = vmatpush1.msra.mxu0 0.0
    %6198 = vmatprep.subr.mxu0 0.0
    %6199 = vmatpush1.msra.mxu0 0.0
    %6200 = vmatprep.subr.mxu0 0.0
    %6201 = vmatpush1.msra.mxu0 0.0
    %6202 = vmatprep.subr.mxu0 0.0
    %6203 = vmatpush1.msra.mxu0 0.0
    %6204 = vmatprep.subr.mxu0 0.0
    %6205 = vmatpush1.msra.mxu0 0.0
    %6206 = vmatprep.subr.mxu0 0.0
    %6207 = vmatpush1.msra.mxu0 0.0
    %6208 = vmatprep.subr.mxu0 0.0
    %6209 = vmatpush1.msra.mxu0 0.0
    %6210 = vmatprep.subr.mxu0 0.0
    %6211 = vmatpush1.msra.mxu0 0.0
    %6212 = vmatprep.subr.mxu0 0.0
    %6213 = vmatpush1.msra.mxu0 %v235
    %6214 = vmatprep.subr.mxu0 0.0
    %6215 = vmatpush1.msra.mxu0 %v234
    %6216 = vmatprep.subr.mxu0 0.0
    %6217 = vmatpush2.msra.mxu0 0.0
    %6218 = vmatprep.subr.mxu0 0.0
    %6219 = vmatpush2.msra.mxu0 0.0
    %6220 = vmatprep.subr.mxu0 0.0
    %6221 = vmatpush2.msra.mxu0 0.0
    %6222 = vmatprep.subr.mxu0 0.0
    %6223 = vmatpush2.msra.mxu0 0.0
    %6224 = vmatprep.subr.mxu0 0.0
    %6225 = vmatpush2.msra.mxu0 0.0
    %6226 = vmatprep.subr.mxu0 0.0
    %6227 = vmatpush2.msra.mxu0 0.0
    %6228 = vmatprep.subr.mxu0 0.0
    %6229 = vmatpush2.msra.mxu0 0.0
    %6230 = vmatprep.subr.mxu0 0.0
    %6231 = vmatpush2.msra.mxu0 0.0
    %6232 = vmatprep.subr.mxu0 0.0
    %6233 = vmatpush2.msra.mxu0 0.0
    %6234 = vmatprep.subr.mxu0 0.0
    %6235 = vmatpush2.msra.mxu0 0.0
    %6236 = vmatprep.subr.mxu0 0.0
    %6237 = vmatpush2.msra.mxu0 0.0
    %6238 = vmatprep.subr.mxu0 0.0
    %6239 = vmatpush2.msra.mxu0 0.0
    %6240 = vmatprep.subr.mxu0 0.0
    %6241 = vmatpush2.msra.mxu0 0.0
    %6242 = vmatprep.subr.mxu0 0.0
    %6243 = vmatpush2.msra.mxu0 0.0
    %6244 = vmatprep.subr.mxu0 0.0
    %6245 = vmatpush2.msra.mxu0 0.0
    %6246 = vmatprep.subr.mxu0 0.0
    %6247 = vmatpush2.msra.mxu0 0.0
    %6248 = vmatprep.mubr.f32.mxu0 0.0
    %6249 = vmatmul.mubr.f32.gmra.mxu0 %v6182
    %v6250 = vpop.f32.mrf.mxu0
    %v6251 = vadd.f32 %v6178, %v6250
    %v6252 = vpop.f32.mrf.mxu0
    %6253 = vdwg.mxu0
    %v6254 = vadd.f32 %v6251, %v3879
    %6255 = vmatprep.subr.mxu0 0.0
    %6256 = vmatpush1.msra.mxu0 0.0
    %6257 = vmatprep.subr.mxu0 0.0
    %6258 = vmatpush1.msra.mxu0 0.0
    %6259 = vmatprep.subr.mxu0 0.0
    %6260 = vmatpush1.msra.mxu0 0.0
    %6261 = vmatprep.subr.mxu0 0.0
    %6262 = vmatpush1.msra.mxu0 0.0
    %6263 = vmatprep.subr.mxu0 0.0
    %6264 = vmatpush1.msra.mxu0 0.0
    %6265 = vmatprep.subr.mxu0 0.0
    %6266 = vmatpush1.msra.mxu0 0.0
    %6267 = vmatprep.subr.mxu0 0.0
    %6268 = vmatpush1.msra.mxu0 0.0
    %6269 = vmatprep.subr.mxu0 0.0
    %6270 = vmatpush1.msra.mxu0 0.0
    %6271 = vmatprep.subr.mxu0 0.0
    %6272 = vmatpush1.msra.mxu0 0.0
    %6273 = vmatprep.subr.mxu0 0.0
    %6274 = vmatpush1.msra.mxu0 0.0
    %6275 = vmatprep.subr.mxu0 0.0
    %6276 = vmatpush1.msra.mxu0 0.0
    %6277 = vmatprep.subr.mxu0 0.0
    %6278 = vmatpush1.msra.mxu0 0.0
    %6279 = vmatprep.subr.mxu0 0.0
    %6280 = vmatpush1.msra.mxu0 %v243
    %6281 = vmatprep.subr.mxu0 0.0
    %6282 = vmatpush1.msra.mxu0 %v242
    %6283 = vmatprep.subr.mxu0 0.0
    %6284 = vmatpush1.msra.mxu0 %v241
    %6285 = vmatprep.subr.mxu0 0.0
    %6286 = vmatpush1.msra.mxu0 %v240
    %6287 = vmatprep.subr.mxu0 0.0
    %6288 = vmatpush2.msra.mxu0 0.0
    %6289 = vmatprep.subr.mxu0 0.0
    %6290 = vmatpush2.msra.mxu0 0.0
    %6291 = vmatprep.subr.mxu0 0.0
    %6292 = vmatpush2.msra.mxu0 0.0
    %6293 = vmatprep.subr.mxu0 0.0
    %6294 = vmatpush2.msra.mxu0 0.0
    %6295 = vmatprep.subr.mxu0 0.0
    %6296 = vmatpush2.msra.mxu0 0.0
    %6297 = vmatprep.subr.mxu0 0.0
    %6298 = vmatpush2.msra.mxu0 0.0
    %6299 = vmatprep.subr.mxu0 0.0
    %6300 = vmatpush2.msra.mxu0 0.0
    %6301 = vmatprep.subr.mxu0 0.0
    %6302 = vmatpush2.msra.mxu0 0.0
    %6303 = vmatprep.subr.mxu0 0.0
    %6304 = vmatpush2.msra.mxu0 0.0
    %6305 = vmatprep.subr.mxu0 0.0
    %6306 = vmatpush2.msra.mxu0 0.0
    %6307 = vmatprep.subr.mxu0 0.0
    %6308 = vmatpush2.msra.mxu0 0.0
    %6309 = vmatprep.subr.mxu0 0.0
    %6310 = vmatpush2.msra.mxu0 0.0
    %6311 = vmatprep.subr.mxu0 0.0
    %6312 = vmatpush2.msra.mxu0 0.0
    %6313 = vmatprep.subr.mxu0 0.0
    %6314 = vmatpush2.msra.mxu0 0.0
    %6315 = vmatprep.subr.mxu0 0.0
    %6316 = vmatpush2.msra.mxu0 0.0
    %6317 = vmatprep.subr.mxu0 0.0
    %6318 = vmatpush2.msra.mxu0 0.0
    %6319 = vmatprep.mubr.f32.mxu0 0.0
    %6320 = vmatmul.mubr.f32.gmra.mxu0 %v5637
    %v6321 = vpop.f32.mrf.mxu0
    %v6322 = vadd.f32 %v3886, %v6321
    %v6323 = vpop.f32.mrf.mxu0
    %6324 = vdwg.mxu0
    %v6325 = vadd.f32 %v6254, %v6322
    %v6326 = vxor.u32 %v6325, 2147483648
    %v6327 = vmul.f32 %v6326, 1.442695
    %v6328 = vpow.pop %v6327
    %v6329 = vadd.f32 %v6328, 1.0
    %v6330 = vrcp.pop %v6329
    %v6331 = vmul.f32 1.0, %v6330
    %6333 = vrot.lane.b32.xlu0 %v6322, 64
    %v6334 = vpop.permute.xlu0 %6333
    %v6336 = vmul.f32 %v6331, %v6334
    %6338 = vrot.lane.b32.xlu0 %v6336, 64
    %v6339 = vpop.permute.xlu0 %6338
    %v6341 = vadd.f32 %v6254, %v6339
    %v6342 = vtanh.pop %v6341
    %v6343 = vsub.f32 1.0, %v6331
    %6345 = vrot.lane.b32.xlu0 %v6342, 96
    %v6346 = vpop.permute.xlu0 %6345
    %v6348 = vmul.f32 %v6343, %v6346
    %v6349 = vmul.f32 %v6331, %v5563
    %v6350 = vadd.f32 %v6348, %v6349
    %6351 = vmatprep.subr.mxu0 0.0
    %6352 = vmatpush1.msra.mxu0 0.0
    %6353 = vmatprep.subr.mxu0 0.0
    %6354 = vmatpush1.msra.mxu0 0.0
    %6355 = vmatprep.subr.mxu0 0.0
    %6356 = vmatpush1.msra.mxu0 0.0
    %6357 = vmatprep.subr.mxu0 0.0
    %6358 = vmatpush1.msra.mxu0 0.0
    %6359 = vmatprep.subr.mxu0 0.0
    %6360 = vmatpush1.msra.mxu0 0.0
    %6361 = vmatprep.subr.mxu0 0.0
    %6362 = vmatpush1.msra.mxu0 0.0
    %6363 = vmatprep.subr.mxu0 0.0
    %6364 = vmatpush1.msra.mxu0 0.0
    %6365 = vmatprep.subr.mxu0 0.0
    %6366 = vmatpush1.msra.mxu0 0.0
    %6367 = vmatprep.subr.mxu0 0.0
    %6368 = vmatpush1.msra.mxu0 0.0
    %6369 = vmatprep.subr.mxu0 0.0
    %6370 = vmatpush1.msra.mxu0 0.0
    %6371 = vmatprep.subr.mxu0 0.0
    %6372 = vmatpush1.msra.mxu0 0.0
    %6373 = vmatprep.subr.mxu0 0.0
    %6374 = vmatpush1.msra.mxu0 0.0
    %6375 = vmatprep.subr.mxu0 0.0
    %6376 = vmatpush1.msra.mxu0 %v253
    %6377 = vmatprep.subr.mxu0 0.0
    %6378 = vmatpush1.msra.mxu0 %v252
    %6379 = vmatprep.subr.mxu0 0.0
    %6380 = vmatpush1.msra.mxu0 %v251
    %6381 = vmatprep.subr.mxu0 0.0
    %6382 = vmatpush1.msra.mxu0 %v250
    %6383 = vmatprep.subr.mxu0 0.0
    %6384 = vmatpush2.msra.mxu0 0.0
    %6385 = vmatprep.subr.mxu0 0.0
    %6386 = vmatpush2.msra.mxu0 0.0
    %6387 = vmatprep.subr.mxu0 0.0
    %6388 = vmatpush2.msra.mxu0 0.0
    %6389 = vmatprep.subr.mxu0 0.0
    %6390 = vmatpush2.msra.mxu0 0.0
    %6391 = vmatprep.subr.mxu0 0.0
    %6392 = vmatpush2.msra.mxu0 0.0
    %6393 = vmatprep.subr.mxu0 0.0
    %6394 = vmatpush2.msra.mxu0 0.0
    %6395 = vmatprep.subr.mxu0 0.0
    %6396 = vmatpush2.msra.mxu0 0.0
    %6397 = vmatprep.subr.mxu0 0.0
    %6398 = vmatpush2.msra.mxu0 0.0
    %6399 = vmatprep.subr.mxu0 0.0
    %6400 = vmatpush2.msra.mxu0 0.0
    %6401 = vmatprep.subr.mxu0 0.0
    %6402 = vmatpush2.msra.mxu0 0.0
    %6403 = vmatprep.subr.mxu0 0.0
    %6404 = vmatpush2.msra.mxu0 0.0
    %6405 = vmatprep.subr.mxu0 0.0
    %6406 = vmatpush2.msra.mxu0 0.0
    %6407 = vmatprep.subr.mxu0 0.0
    %6408 = vmatpush2.msra.mxu0 0.0
    %6409 = vmatprep.subr.mxu0 0.0
    %6410 = vmatpush2.msra.mxu0 0.0
    %6411 = vmatprep.subr.mxu0 0.0
    %6412 = vmatpush2.msra.mxu0 0.0
    %6413 = vmatprep.subr.mxu0 0.0
    %6414 = vmatpush2.msra.mxu0 0.0
    %6415 = vmatprep.mubr.f32.mxu0 0.0
    %6416 = vmatmul.mubr.f32.gmra.mxu0 %v6109
    %v6417 = vpop.f32.mrf.mxu0
    %v6418 = vadd.f32 0.0, %v6417
    %v6419 = vpop.f32.mrf.mxu0
    %6420 = vdwg.mxu0
    %6422 = vrot.lane.b32.xlu0 %v6350, 96
    %v6423 = vpop.permute.xlu0 %6422
    %v6424 = vsel %vm436, %v6423, 0
    %6426 = vmatprep.subr.mxu0 0.0
    %6427 = vmatpush1.msra.mxu0 0.0
    %6428 = vmatprep.subr.mxu0 0.0
    %6429 = vmatpush1.msra.mxu0 0.0
    %6430 = vmatprep.subr.mxu0 0.0
    %6431 = vmatpush1.msra.mxu0 0.0
    %6432 = vmatprep.subr.mxu0 0.0
    %6433 = vmatpush1.msra.mxu0 0.0
    %6434 = vmatprep.subr.mxu0 0.0
    %6435 = vmatpush1.msra.mxu0 0.0
    %6436 = vmatprep.subr.mxu0 0.0
    %6437 = vmatpush1.msra.mxu0 0.0
    %6438 = vmatprep.subr.mxu0 0.0
    %6439 = vmatpush1.msra.mxu0 0.0
    %6440 = vmatprep.subr.mxu0 0.0
    %6441 = vmatpush1.msra.mxu0 0.0
    %6442 = vmatprep.subr.mxu0 0.0
    %6443 = vmatpush1.msra.mxu0 0.0
    %6444 = vmatprep.subr.mxu0 0.0
    %6445 = vmatpush1.msra.mxu0 0.0
    %6446 = vmatprep.subr.mxu0 0.0
    %6447 = vmatpush1.msra.mxu0 0.0
    %6448 = vmatprep.subr.mxu0 0.0
    %6449 = vmatpush1.msra.mxu0 0.0
    %6450 = vmatprep.subr.mxu0 0.0
    %6451 = vmatpush1.msra.mxu0 %v249
    %6452 = vmatprep.subr.mxu0 0.0
    %6453 = vmatpush1.msra.mxu0 %v248
    %6454 = vmatprep.subr.mxu0 0.0
    %6455 = vmatpush1.msra.mxu0 %v247
    %6456 = vmatprep.subr.mxu0 0.0
    %6457 = vmatpush1.msra.mxu0 %v246
    %6458 = vmatprep.subr.mxu0 0.0
    %6459 = vmatpush2.msra.mxu0 0.0
    %6460 = vmatprep.subr.mxu0 0.0
    %6461 = vmatpush2.msra.mxu0 0.0
    %6462 = vmatprep.subr.mxu0 0.0
    %6463 = vmatpush2.msra.mxu0 0.0
    %6464 = vmatprep.subr.mxu0 0.0
    %6465 = vmatpush2.msra.mxu0 0.0
    %6466 = vmatprep.subr.mxu0 0.0
    %6467 = vmatpush2.msra.mxu0 0.0
    %6468 = vmatprep.subr.mxu0 0.0
    %6469 = vmatpush2.msra.mxu0 0.0
    %6470 = vmatprep.subr.mxu0 0.0
    %6471 = vmatpush2.msra.mxu0 0.0
    %6472 = vmatprep.subr.mxu0 0.0
    %6473 = vmatpush2.msra.mxu0 0.0
    %6474 = vmatprep.subr.mxu0 0.0
    %6475 = vmatpush2.msra.mxu0 0.0
    %6476 = vmatprep.subr.mxu0 0.0
    %6477 = vmatpush2.msra.mxu0 0.0
    %6478 = vmatprep.subr.mxu0 0.0
    %6479 = vmatpush2.msra.mxu0 0.0
    %6480 = vmatprep.subr.mxu0 0.0
    %6481 = vmatpush2.msra.mxu0 0.0
    %6482 = vmatprep.subr.mxu0 0.0
    %6483 = vmatpush2.msra.mxu0 0.0
    %6484 = vmatprep.subr.mxu0 0.0
    %6485 = vmatpush2.msra.mxu0 0.0
    %6486 = vmatprep.subr.mxu0 0.0
    %6487 = vmatpush2.msra.mxu0 0.0
    %6488 = vmatprep.subr.mxu0 0.0
    %6489 = vmatpush2.msra.mxu0 0.0
    %6490 = vmatprep.mubr.f32.mxu0 0.0
    %6491 = vmatmul.mubr.f32.gmra.mxu0 %v6424
    %v6492 = vpop.f32.mrf.mxu0
    %v6493 = vadd.f32 %v6418, %v6492
    %v6494 = vpop.f32.mrf.mxu0
    %6495 = vdwg.mxu0
    %6496 = vmatprep.subr.mxu0 0.0
    %6497 = vmatpush1.msra.mxu0 0.0
    %6498 = vmatprep.subr.mxu0 0.0
    %6499 = vmatpush1.msra.mxu0 0.0
    %6500 = vmatprep.subr.mxu0 0.0
    %6501 = vmatpush1.msra.mxu0 0.0
    %6502 = vmatprep.subr.mxu0 0.0
    %6503 = vmatpush1.msra.mxu0 0.0
    %6504 = vmatprep.subr.mxu0 0.0
    %6505 = vmatpush1.msra.mxu0 0.0
    %6506 = vmatprep.subr.mxu0 0.0
    %6507 = vmatpush1.msra.mxu0 0.0
    %6508 = vmatprep.subr.mxu0 0.0
    %6509 = vmatpush1.msra.mxu0 0.0
    %6510 = vmatprep.subr.mxu0 0.0
    %6511 = vmatpush1.msra.mxu0 0.0
    %6512 = vmatprep.subr.mxu0 0.0
    %6513 = vmatpush1.msra.mxu0 0.0
    %6514 = vmatprep.subr.mxu0 0.0
    %6515 = vmatpush1.msra.mxu0 0.0
    %6516 = vmatprep.subr.mxu0 0.0
    %6517 = vmatpush1.msra.mxu0 0.0
    %6518 = vmatprep.subr.mxu0 0.0
    %6519 = vmatpush1.msra.mxu0 0.0
    %6520 = vmatprep.subr.mxu0 0.0
    %6521 = vmatpush1.msra.mxu0 0.0
    %6522 = vmatprep.subr.mxu0 0.0
    %6523 = vmatpush1.msra.mxu0 0.0
    %6524 = vmatprep.subr.mxu0 0.0
    %6525 = vmatpush1.msra.mxu0 %v255
    %6526 = vmatprep.subr.mxu0 0.0
    %6527 = vmatpush1.msra.mxu0 %v254
    %6528 = vmatprep.subr.mxu0 0.0
    %6529 = vmatpush2.msra.mxu0 0.0
    %6530 = vmatprep.subr.mxu0 0.0
    %6531 = vmatpush2.msra.mxu0 0.0
    %6532 = vmatprep.subr.mxu0 0.0
    %6533 = vmatpush2.msra.mxu0 0.0
    %6534 = vmatprep.subr.mxu0 0.0
    %6535 = vmatpush2.msra.mxu0 0.0
    %6536 = vmatprep.subr.mxu0 0.0
    %6537 = vmatpush2.msra.mxu0 0.0
    %6538 = vmatprep.subr.mxu0 0.0
    %6539 = vmatpush2.msra.mxu0 0.0
    %6540 = vmatprep.subr.mxu0 0.0
    %6541 = vmatpush2.msra.mxu0 0.0
    %6542 = vmatprep.subr.mxu0 0.0
    %6543 = vmatpush2.msra.mxu0 0.0
    %6544 = vmatprep.subr.mxu0 0.0
    %6545 = vmatpush2.msra.mxu0 0.0
    %6546 = vmatprep.subr.mxu0 0.0
    %6547 = vmatpush2.msra.mxu0 0.0
    %6548 = vmatprep.subr.mxu0 0.0
    %6549 = vmatpush2.msra.mxu0 0.0
    %6550 = vmatprep.subr.mxu0 0.0
    %6551 = vmatpush2.msra.mxu0 0.0
    %6552 = vmatprep.subr.mxu0 0.0
    %6553 = vmatpush2.msra.mxu0 0.0
    %6554 = vmatprep.subr.mxu0 0.0
    %6555 = vmatpush2.msra.mxu0 0.0
    %6556 = vmatprep.subr.mxu0 0.0
    %6557 = vmatpush2.msra.mxu0 0.0
    %6558 = vmatprep.subr.mxu0 0.0
    %6559 = vmatpush2.msra.mxu0 0.0
    %6560 = vmatprep.mubr.f32.mxu0 0.0
    %6561 = vmatmul.mubr.f32.gmra.mxu0 %v6182
    %v6562 = vpop.f32.mrf.mxu0
    %v6563 = vadd.f32 0.0, %v6562
    %v6564 = vpop.f32.mrf.mxu0
    %6565 = vdwg.mxu0
    %v6566 = vadd.f32 %v6493, %v6563
    %v6567 = vadd.f32 %v6566, %v4204
    %s6568 = scalar_lea.vmem [#allocation24], 8
    %6569 = vst.msk [vmem:[%s6568] sm:$0x3] %vm3424, %v6567
    %v6570 = vsel %vm3424, %v6567, -inf
    %6571 = vmax.xlane.f32.xlu0 %v6570
    %v6572 = vpop.xlane.xlu0 %6571
    %vm6573 = vcmp.ge.f32.partialorder %v6567, %v6572
    %v6574 = vsel %vm6573, %v258, 20
    %v6575 = vsel %vm3424, %v6574, 2147483647
    %v6576 = vand.u32 %v6575, 65535
    %v6577 = vshra.s32 %v6575, 16
    %v6578 = vcvt.s32.f32 %v6576
    %v6579 = vcvt.s32.f32 %v6577
    %6580 = vmin.xlane.f32.xlu0 %v6579
    %v6581 = vpop.xlane.xlu0 %6580
    %vm6582 = vcmp.eq.f32.partialorder %v6579, %v6581
    %v6583 = vsel %vm6582, %v6578, inf
    %6584 = vmin.xlane.f32.xlu0 %v6583
    %v6585 = vpop.xlane.xlu0 %6584
    %v6586 = vcvt.f32.s32 %v6585
    %v6587 = vcvt.f32.s32 %v6581
    %v6588 = vshll.u32 %v6587, 16
    %v6589 = vadd.s32 %v6588, %v6586
    %vm6590 = vcmp.eq.s32.totalorder %v258, %v6589
    %v6591 = vsel %vm6590, 1, 0
    %v6592 = vcvt.s32.f32 %v6591
    %s6593 = sld [smem:[#allocation8 + $0x4]]
    %v6594 = vstv %s6593
    %v6595 = vsel %vm261, %v6594, 0
    %s6596 = sld [smem:[#allocation8 + $0x84]]
    %v6597 = vstv %s6596
    %v6598 = vsel %vm265, %v6597, %v6595
    %vm6599 = vcmp.eq.s32.totalorder %v258, %v6598
    %v6600 = vsel %vm6599, 1, 0
    %v6601 = vcvt.s32.f32 %v6600
    %s6602 = sld [smem:[#allocation10 + $0x3]]
    %p6603 = scmp.gt.s32.totalorder %s6602, 0
    %s6604 = scalar_select %p6603, 1, 0
    %s6605 = scvt.s32.f32 %s6604
    %v6606 = vstv %s6605
    %v6607 = vmul.f32 %v6606, %v6601
    %s6608 = ssub.f32 1.0, %s6605
    %v6609 = vstv %s6608
    %v6610 = vmul.f32 %v6609, %v6592
    %v6611 = vadd.f32 %v6607, %v6610
    %v6613 = vsel %vm272, %v6611, 0
    %6615 = vmatprep.subr.mxu0 0.0
    %6616 = vmatpush1.msra.mxu0 0.0
    %6617 = vmatprep.subr.mxu0 0.0
    %6618 = vmatpush1.msra.mxu0 0.0
    %6619 = vmatprep.subr.mxu0 0.0
    %6620 = vmatpush1.msra.mxu0 0.0
    %6621 = vmatprep.subr.mxu0 0.0
    %6622 = vmatpush1.msra.mxu0 0.0
    %6623 = vmatprep.subr.mxu0 0.0
    %6624 = vmatpush1.msra.mxu0 0.0
    %6625 = vmatprep.subr.mxu0 0.0
    %6626 = vmatpush1.msra.mxu0 0.0
    %6627 = vmatprep.subr.mxu0 0.0
    %6628 = vmatpush1.msra.mxu0 0.0
    %6629 = vmatprep.subr.mxu0 0.0
    %6630 = vmatpush1.msra.mxu0 0.0
    %6631 = vmatprep.subr.mxu0 0.0
    %6632 = vmatpush1.msra.mxu0 0.0
    %6633 = vmatprep.subr.mxu0 0.0
    %6634 = vmatpush1.msra.mxu0 0.0
    %6635 = vmatprep.subr.mxu0 0.0
    %6636 = vmatpush1.msra.mxu0 0.0
    %6637 = vmatprep.subr.mxu0 0.0
    %6638 = vmatpush1.msra.mxu0 0.0
    %6639 = vmatprep.subr.mxu0 0.0
    %6640 = vmatpush1.msra.mxu0 0.0
    %6641 = vmatprep.subr.mxu0 0.0
    %6642 = vmatpush1.msra.mxu0 %v3439
    %6643 = vmatprep.subr.mxu0 0.0
    %6644 = vmatpush1.msra.mxu0 %v214
    %6645 = vmatprep.subr.mxu0 0.0
    %6646 = vmatpush1.msra.mxu0 %v213
    %6647 = vmatprep.subr.mxu0 0.0
    %6648 = vmatpush2.msra.mxu0 0.0
    %6649 = vmatprep.subr.mxu0 0.0
    %6650 = vmatpush2.msra.mxu0 0.0
    %6651 = vmatprep.subr.mxu0 0.0
    %6652 = vmatpush2.msra.mxu0 0.0
    %6653 = vmatprep.subr.mxu0 0.0
    %6654 = vmatpush2.msra.mxu0 0.0
    %6655 = vmatprep.subr.mxu0 0.0
    %6656 = vmatpush2.msra.mxu0 0.0
    %6657 = vmatprep.subr.mxu0 0.0
    %6658 = vmatpush2.msra.mxu0 0.0
    %6659 = vmatprep.subr.mxu0 0.0
    %6660 = vmatpush2.msra.mxu0 0.0
    %6661 = vmatprep.subr.mxu0 0.0
    %6662 = vmatpush2.msra.mxu0 0.0
    %6663 = vmatprep.subr.mxu0 0.0
    %6664 = vmatpush2.msra.mxu0 0.0
    %6665 = vmatprep.subr.mxu0 0.0
    %6666 = vmatpush2.msra.mxu0 0.0
    %6667 = vmatprep.subr.mxu0 0.0
    %6668 = vmatpush2.msra.mxu0 0.0
    %6669 = vmatprep.subr.mxu0 0.0
    %6670 = vmatpush2.msra.mxu0 0.0
    %6671 = vmatprep.subr.mxu0 0.0
    %6672 = vmatpush2.msra.mxu0 0.0
    %6673 = vmatprep.subr.mxu0 0.0
    %6674 = vmatpush2.msra.mxu0 0.0
    %6675 = vmatprep.subr.mxu0 0.0
    %6676 = vmatpush2.msra.mxu0 0.0
    %6677 = vmatprep.subr.mxu0 0.0
    %6678 = vmatpush2.msra.mxu0 0.0
    %6679 = vmatprep.mubr.f32.mxu0 0.0
    %6680 = vmatmul.mubr.f32.gmra.mxu0 %v6613
    %v6681 = vpop.f32.mrf.mxu0
    %v6682 = vadd.f32 0.0, %v6681
    %v6683 = vpop.f32.mrf.mxu0
    %6684 = vdwg.mxu0
    %6685 = vmatprep.subr.mxu0 0.0
    %6686 = vmatpush1.msra.mxu0 0.0
    %6687 = vmatprep.subr.mxu0 0.0
    %6688 = vmatpush1.msra.mxu0 0.0
    %6689 = vmatprep.subr.mxu0 0.0
    %6690 = vmatpush1.msra.mxu0 0.0
    %6691 = vmatprep.subr.mxu0 0.0
    %6692 = vmatpush1.msra.mxu0 0.0
    %6693 = vmatprep.subr.mxu0 0.0
    %6694 = vmatpush1.msra.mxu0 0.0
    %6695 = vmatprep.subr.mxu0 0.0
    %6696 = vmatpush1.msra.mxu0 0.0
    %6697 = vmatprep.subr.mxu0 0.0
    %6698 = vmatpush1.msra.mxu0 0.0
    %6699 = vmatprep.subr.mxu0 0.0
    %6700 = vmatpush1.msra.mxu0 0.0
    %6701 = vmatprep.subr.mxu0 0.0
    %6702 = vmatpush1.msra.mxu0 0.0
    %6703 = vmatprep.subr.mxu0 0.0
    %6704 = vmatpush1.msra.mxu0 0.0
    %6705 = vmatprep.subr.mxu0 0.0
    %6706 = vmatpush1.msra.mxu0 0.0
    %6707 = vmatprep.subr.mxu0 0.0
    %6708 = vmatpush1.msra.mxu0 0.0
    %6709 = vmatprep.subr.mxu0 0.0
    %6710 = vmatpush1.msra.mxu0 %v227
    %6711 = vmatprep.subr.mxu0 0.0
    %6712 = vmatpush1.msra.mxu0 %v226
    %6713 = vmatprep.subr.mxu0 0.0
    %6714 = vmatpush1.msra.mxu0 %v225
    %6715 = vmatprep.subr.mxu0 0.0
    %6716 = vmatpush1.msra.mxu0 %v224
    %6717 = vmatprep.subr.mxu0 0.0
    %6718 = vmatpush2.msra.mxu0 0.0
    %6719 = vmatprep.subr.mxu0 0.0
    %6720 = vmatpush2.msra.mxu0 0.0
    %6721 = vmatprep.subr.mxu0 0.0
    %6722 = vmatpush2.msra.mxu0 0.0
    %6723 = vmatprep.subr.mxu0 0.0
    %6724 = vmatpush2.msra.mxu0 0.0
    %6725 = vmatprep.subr.mxu0 0.0
    %6726 = vmatpush2.msra.mxu0 0.0
    %6727 = vmatprep.subr.mxu0 0.0
    %6728 = vmatpush2.msra.mxu0 0.0
    %6729 = vmatprep.subr.mxu0 0.0
    %6730 = vmatpush2.msra.mxu0 0.0
    %6731 = vmatprep.subr.mxu0 0.0
    %6732 = vmatpush2.msra.mxu0 0.0
    %6733 = vmatprep.subr.mxu0 0.0
    %6734 = vmatpush2.msra.mxu0 0.0
    %6735 = vmatprep.subr.mxu0 0.0
    %6736 = vmatpush2.msra.mxu0 0.0
    %6737 = vmatprep.subr.mxu0 0.0
    %6738 = vmatpush2.msra.mxu0 0.0
    %6739 = vmatprep.subr.mxu0 0.0
    %6740 = vmatpush2.msra.mxu0 0.0
    %6741 = vmatprep.subr.mxu0 0.0
    %6742 = vmatpush2.msra.mxu0 0.0
    %6743 = vmatprep.subr.mxu0 0.0
    %6744 = vmatpush2.msra.mxu0 0.0
    %6745 = vmatprep.subr.mxu0 0.0
    %6746 = vmatpush2.msra.mxu0 0.0
    %6747 = vmatprep.subr.mxu0 0.0
    %6748 = vmatpush2.msra.mxu0 0.0
    %6749 = vmatprep.mubr.f32.mxu0 0.0
    %6750 = vmatmul.mubr.f32.gmra.mxu0 %v6424
    %v6751 = vpop.f32.mrf.mxu0
    %v6752 = vadd.f32 0.0, %v6751
    %v6753 = vpop.f32.mrf.mxu0
    %6754 = vdwg.mxu0
    %v6757 = vunpack.c.l.s4 1966171168
    %v6758 = vunpack.c.0.s8 %v6757
    %v6759 = vlaneseq
    %v6760 = vshrl.u32 %v6759, 7
    %v6761 = vsub.s32 %v6758, %v6760
    %v6762 = vrot.slane %v6752, %v6761
    %v6763 = vcombine.high %v6762, %v6762
    %v6765 = vunpack.c.l.s4 1966171168
    %v6766 = vunpack.c.0.s8 %v6765
    %v6767 = vlaneseq
    %v6768 = vshrl.u32 %v6767, 7
    %v6769 = vsub.s32 %v6766, %v6768
    %v6770 = vrot.slane %v6762, %v6769
    %v6772 = vunpack.c.l.s4 1966171168
    %v6773 = vunpack.c.0.s8 %v6772
    %v6774 = vlaneseq
    %v6775 = vshrl.u32 %v6774, 7
    %v6776 = vsub.s32 %v6773, %v6775
    %v6777 = vrot.slane %v6763, %v6776
    %v6778 = vlaneseq
    %v6779 = vshrl.u32 %v6778, 7
    %v6780 = vsub.s32 0, %v6779
    %v6781 = vrot.slane %v6770, %v6780
    %v6782 = vlaneseq
    %v6783 = vshrl.u32 %v6782, 7
    %v6784 = vsub.s32 0, %v6783
    %v6785 = vrot.slane %v6777, %v6784
    %v6788 = vadd.f32 %v6781, %v3422
    %v6789 = vadd.f32 %v6785, %v3423
    %v6790 = vtanh.pop %v6788
    %v6791 = vtanh.pop %v6789
    %v6792 = vmul.f32 %v6790, %v3622
    %v6793 = vmul.f32 %v6791, %v3622
    %v6794 = vsel %vm436, %v6792, 0.0
    %6795 = vadd.xlane.f32.xlu0 %v6794
    %v6796 = vpop.xlane.xlu0 %6795
    %v6797 = vsel %vm436, %v6793, 0.0
    %6798 = vadd.xlane.f32.xlu0 %v6797
    %v6799 = vpop.xlane.xlu0 %6798
    %v6802 = vlaneseq
    %v6803 = vshrl.u32 %v6802, 7
    %v6804 = vsub.s32 %v258, %v6803
    %v6805 = vrot.slane %v6796, %v6804
    %v6806 = vlaneseq
    %v6807 = vshrl.u32 %v6806, 7
    %v6808 = vsub.s32 %v258, %v6807
    %v6809 = vrot.slane %v6799, %v6808
    %v6810 = vsel %vm3642, %v6809, %v6805
    %v6812 = vsel %vm3645, %v6810, -inf
    %6813 = vmax.xlane.f32.xlu0 %v6812
    %v6814 = vpop.xlane.xlu0 %6813
    %v6816 = vlaneseq
    %v6817 = vshrl.u32 %v6816, 7
    %v6818 = vsub.s32 0, %v6817
    %v6819 = vrot.slane %v6814, %v6818
    %v6820 = vlaneseq
    %v6821 = vshrl.u32 %v6820, 7
    %v6822 = vsub.s32 1, %v6821
    %v6823 = vrot.slane %v6814, %v6822
    %v6826 = vsub.f32 %v6796, %v6819
    %v6827 = vsub.f32 %v6799, %v6823
    %v6828 = vmul.f32 %v6826, 1.442695
    %v6829 = vpow.pop %v6828
    %v6830 = vmul.f32 %v6827, 1.442695
    %v6831 = vpow.pop %v6830
    %6834 = vset.pattern.permute.xlu0 0
    %6835 = vperm.xlu0 %6834, %v6829
    %v6836 = vpop.permute.xlu0 %6835
    %6837 = vset.pattern.permute.xlu0 0
    %6838 = vperm.xlu0 %6837, %v6831
    %v6839 = vpop.permute.xlu0 %6838
    %v6840 = vlaneseq
    %v6841 = vshrl.u32 %v6840, 7
    %v6842 = vsub.s32 %v258, %v6841
    %v6843 = vrot.slane %v6836, %v6842
    %v6844 = vlaneseq
    %v6845 = vshrl.u32 %v6844, 7
    %v6846 = vsub.s32 %v258, %v6845
    %v6847 = vrot.slane %v6839, %v6846
    %v6848 = vsel %vm3642, %v6847, %v6843
    %v6850 = vsel %vm3645, %v6848, 0.0
    %6851 = vadd.xlane.f32.xlu0 %v6850
    %v6852 = vpop.xlane.xlu0 %6851
    %v6853 = vrcp.pop %v6852
    %v6855 = vlaneseq
    %v6856 = vshrl.u32 %v6855, 7
    %v6857 = vsub.s32 0, %v6856
    %v6858 = vrot.slane %v6853, %v6857
    %v6859 = vlaneseq
    %v6860 = vshrl.u32 %v6859, 7
    %v6861 = vsub.s32 1, %v6860
    %v6862 = vrot.slane %v6853, %v6861
    %v6865 = vmul.f32 %v6829, %v6858
    %v6866 = vmul.f32 %v6831, %v6862
    %6868 = vset.pattern.permute.xlu0 0
    %6869 = vperm.xlu0 %6868, %v6865
    %v6870 = vpop.permute.xlu0 %6869
    %6873 = vset.pattern.permute.xlu0 0
    %6874 = vperm.xlu0 %6873, %v6866
    %v6875 = vpop.permute.xlu0 %6874
    %v6877 = vmul.f32 %v6870, %v3420
    %v6878 = vmul.f32 %v6875, %v3421
    %v6879 = vsel %vm436, %v6877, 0.0
    %v6880 = vrot.slane %v6879, 4
    %v6881 = vadd.f32 %v6879, %v6880
    %v6882 = vrot.slane %v6881, 2
    %v6883 = vadd.f32 %v6881, %v6882
    %v6884 = vrot.slane %v6883, 1
    %v6885 = vadd.f32 %v6883, %v6884
    %v6886 = vsel %vm436, %v6878, 0.0
    %v6887 = vrot.slane %v6886, 4
    %v6888 = vadd.f32 %v6886, %v6887
    %v6889 = vrot.slane %v6888, 2
    %v6890 = vadd.f32 %v6888, %v6889
    %v6891 = vrot.slane %v6890, 1
    %v6892 = vadd.f32 %v6890, %v6891
    %v6895 = vsel %vm3642, %v6892, %v6885
    %v6896 = vsel %vm436, %v6895, 0
    %6898 = vmatprep.subr.mxu0 0.0
    %6899 = vmatpush1.msra.mxu0 0.0
    %6900 = vmatprep.subr.mxu0 0.0
    %6901 = vmatpush1.msra.mxu0 0.0
    %6902 = vmatprep.subr.mxu0 0.0
    %6903 = vmatpush1.msra.mxu0 0.0
    %6904 = vmatprep.subr.mxu0 0.0
    %6905 = vmatpush1.msra.mxu0 0.0
    %6906 = vmatprep.subr.mxu0 0.0
    %6907 = vmatpush1.msra.mxu0 0.0
    %6908 = vmatprep.subr.mxu0 0.0
    %6909 = vmatpush1.msra.mxu0 0.0
    %6910 = vmatprep.subr.mxu0 0.0
    %6911 = vmatpush1.msra.mxu0 0.0
    %6912 = vmatprep.subr.mxu0 0.0
    %6913 = vmatpush1.msra.mxu0 0.0
    %6914 = vmatprep.subr.mxu0 0.0
    %6915 = vmatpush1.msra.mxu0 0.0
    %6916 = vmatprep.subr.mxu0 0.0
    %6917 = vmatpush1.msra.mxu0 0.0
    %6918 = vmatprep.subr.mxu0 0.0
    %6919 = vmatpush1.msra.mxu0 0.0
    %6920 = vmatprep.subr.mxu0 0.0
    %6921 = vmatpush1.msra.mxu0 0.0
    %6922 = vmatprep.subr.mxu0 0.0
    %6923 = vmatpush1.msra.mxu0 %v239
    %6924 = vmatprep.subr.mxu0 0.0
    %6925 = vmatpush1.msra.mxu0 %v238
    %6926 = vmatprep.subr.mxu0 0.0
    %6927 = vmatpush1.msra.mxu0 %v237
    %6928 = vmatprep.subr.mxu0 0.0
    %6929 = vmatpush1.msra.mxu0 %v236
    %6930 = vmatprep.subr.mxu0 0.0
    %6931 = vmatpush2.msra.mxu0 0.0
    %6932 = vmatprep.subr.mxu0 0.0
    %6933 = vmatpush2.msra.mxu0 0.0
    %6934 = vmatprep.subr.mxu0 0.0
    %6935 = vmatpush2.msra.mxu0 0.0
    %6936 = vmatprep.subr.mxu0 0.0
    %6937 = vmatpush2.msra.mxu0 0.0
    %6938 = vmatprep.subr.mxu0 0.0
    %6939 = vmatpush2.msra.mxu0 0.0
    %6940 = vmatprep.subr.mxu0 0.0
    %6941 = vmatpush2.msra.mxu0 0.0
    %6942 = vmatprep.subr.mxu0 0.0
    %6943 = vmatpush2.msra.mxu0 0.0
    %6944 = vmatprep.subr.mxu0 0.0
    %6945 = vmatpush2.msra.mxu0 0.0
    %6946 = vmatprep.subr.mxu0 0.0
    %6947 = vmatpush2.msra.mxu0 0.0
    %6948 = vmatprep.subr.mxu0 0.0
    %6949 = vmatpush2.msra.mxu0 0.0
    %6950 = vmatprep.subr.mxu0 0.0
    %6951 = vmatpush2.msra.mxu0 0.0
    %6952 = vmatprep.subr.mxu0 0.0
    %6953 = vmatpush2.msra.mxu0 0.0
    %6954 = vmatprep.subr.mxu0 0.0
    %6955 = vmatpush2.msra.mxu0 0.0
    %6956 = vmatprep.subr.mxu0 0.0
    %6957 = vmatpush2.msra.mxu0 0.0
    %6958 = vmatprep.subr.mxu0 0.0
    %6959 = vmatpush2.msra.mxu0 0.0
    %6960 = vmatprep.subr.mxu0 0.0
    %6961 = vmatpush2.msra.mxu0 0.0
    %6962 = vmatprep.mubr.f32.mxu0 0.0
    %6963 = vmatmul.mubr.f32.gmra.mxu0 %v6896
    %v6964 = vpop.f32.mrf.mxu0
    %v6965 = vadd.f32 0.0, %v6964
    %v6966 = vpop.f32.mrf.mxu0
    %6967 = vdwg.mxu0
    %v6969 = vsel %vm356, %v6682, 0
    %6971 = vmatprep.subr.mxu0 0.0
    %6972 = vmatpush1.msra.mxu0 0.0
    %6973 = vmatprep.subr.mxu0 0.0
    %6974 = vmatpush1.msra.mxu0 0.0
    %6975 = vmatprep.subr.mxu0 0.0
    %6976 = vmatpush1.msra.mxu0 0.0
    %6977 = vmatprep.subr.mxu0 0.0
    %6978 = vmatpush1.msra.mxu0 0.0
    %6979 = vmatprep.subr.mxu0 0.0
    %6980 = vmatpush1.msra.mxu0 0.0
    %6981 = vmatprep.subr.mxu0 0.0
    %6982 = vmatpush1.msra.mxu0 0.0
    %6983 = vmatprep.subr.mxu0 0.0
    %6984 = vmatpush1.msra.mxu0 0.0
    %6985 = vmatprep.subr.mxu0 0.0
    %6986 = vmatpush1.msra.mxu0 0.0
    %6987 = vmatprep.subr.mxu0 0.0
    %6988 = vmatpush1.msra.mxu0 0.0
    %6989 = vmatprep.subr.mxu0 0.0
    %6990 = vmatpush1.msra.mxu0 0.0
    %6991 = vmatprep.subr.mxu0 0.0
    %6992 = vmatpush1.msra.mxu0 0.0
    %6993 = vmatprep.subr.mxu0 0.0
    %6994 = vmatpush1.msra.mxu0 0.0
    %6995 = vmatprep.subr.mxu0 0.0
    %6996 = vmatpush1.msra.mxu0 0.0
    %6997 = vmatprep.subr.mxu0 0.0
    %6998 = vmatpush1.msra.mxu0 0.0
    %6999 = vmatprep.subr.mxu0 0.0
    %7000 = vmatpush1.msra.mxu0 %v235
    %7001 = vmatprep.subr.mxu0 0.0
    %7002 = vmatpush1.msra.mxu0 %v234
    %7003 = vmatprep.subr.mxu0 0.0
    %7004 = vmatpush2.msra.mxu0 0.0
    %7005 = vmatprep.subr.mxu0 0.0
    %7006 = vmatpush2.msra.mxu0 0.0
    %7007 = vmatprep.subr.mxu0 0.0
    %7008 = vmatpush2.msra.mxu0 0.0
    %7009 = vmatprep.subr.mxu0 0.0
    %7010 = vmatpush2.msra.mxu0 0.0
    %7011 = vmatprep.subr.mxu0 0.0
    %7012 = vmatpush2.msra.mxu0 0.0
    %7013 = vmatprep.subr.mxu0 0.0
    %7014 = vmatpush2.msra.mxu0 0.0
    %7015 = vmatprep.subr.mxu0 0.0
    %7016 = vmatpush2.msra.mxu0 0.0
    %7017 = vmatprep.subr.mxu0 0.0
    %7018 = vmatpush2.msra.mxu0 0.0
    %7019 = vmatprep.subr.mxu0 0.0
    %7020 = vmatpush2.msra.mxu0 0.0
    %7021 = vmatprep.subr.mxu0 0.0
    %7022 = vmatpush2.msra.mxu0 0.0
    %7023 = vmatprep.subr.mxu0 0.0
    %7024 = vmatpush2.msra.mxu0 0.0
    %7025 = vmatprep.subr.mxu0 0.0
    %7026 = vmatpush2.msra.mxu0 0.0
    %7027 = vmatprep.subr.mxu0 0.0
    %7028 = vmatpush2.msra.mxu0 0.0
    %7029 = vmatprep.subr.mxu0 0.0
    %7030 = vmatpush2.msra.mxu0 0.0
    %7031 = vmatprep.subr.mxu0 0.0
    %7032 = vmatpush2.msra.mxu0 0.0
    %7033 = vmatprep.subr.mxu0 0.0
    %7034 = vmatpush2.msra.mxu0 0.0
    %7035 = vmatprep.mubr.f32.mxu0 0.0
    %7036 = vmatmul.mubr.f32.gmra.mxu0 %v6969
    %v7037 = vpop.f32.mrf.mxu0
    %v7038 = vadd.f32 %v6965, %v7037
    %v7039 = vpop.f32.mrf.mxu0
    %7040 = vdwg.mxu0
    %v7041 = vadd.f32 %v7038, %v3879
    %7042 = vmatprep.subr.mxu0 0.0
    %7043 = vmatpush1.msra.mxu0 0.0
    %7044 = vmatprep.subr.mxu0 0.0
    %7045 = vmatpush1.msra.mxu0 0.0
    %7046 = vmatprep.subr.mxu0 0.0
    %7047 = vmatpush1.msra.mxu0 0.0
    %7048 = vmatprep.subr.mxu0 0.0
    %7049 = vmatpush1.msra.mxu0 0.0
    %7050 = vmatprep.subr.mxu0 0.0
    %7051 = vmatpush1.msra.mxu0 0.0
    %7052 = vmatprep.subr.mxu0 0.0
    %7053 = vmatpush1.msra.mxu0 0.0
    %7054 = vmatprep.subr.mxu0 0.0
    %7055 = vmatpush1.msra.mxu0 0.0
    %7056 = vmatprep.subr.mxu0 0.0
    %7057 = vmatpush1.msra.mxu0 0.0
    %7058 = vmatprep.subr.mxu0 0.0
    %7059 = vmatpush1.msra.mxu0 0.0
    %7060 = vmatprep.subr.mxu0 0.0
    %7061 = vmatpush1.msra.mxu0 0.0
    %7062 = vmatprep.subr.mxu0 0.0
    %7063 = vmatpush1.msra.mxu0 0.0
    %7064 = vmatprep.subr.mxu0 0.0
    %7065 = vmatpush1.msra.mxu0 0.0
    %7066 = vmatprep.subr.mxu0 0.0
    %7067 = vmatpush1.msra.mxu0 %v243
    %7068 = vmatprep.subr.mxu0 0.0
    %7069 = vmatpush1.msra.mxu0 %v242
    %7070 = vmatprep.subr.mxu0 0.0
    %7071 = vmatpush1.msra.mxu0 %v241
    %7072 = vmatprep.subr.mxu0 0.0
    %7073 = vmatpush1.msra.mxu0 %v240
    %7074 = vmatprep.subr.mxu0 0.0
    %7075 = vmatpush2.msra.mxu0 0.0
    %7076 = vmatprep.subr.mxu0 0.0
    %7077 = vmatpush2.msra.mxu0 0.0
    %7078 = vmatprep.subr.mxu0 0.0
    %7079 = vmatpush2.msra.mxu0 0.0
    %7080 = vmatprep.subr.mxu0 0.0
    %7081 = vmatpush2.msra.mxu0 0.0
    %7082 = vmatprep.subr.mxu0 0.0
    %7083 = vmatpush2.msra.mxu0 0.0
    %7084 = vmatprep.subr.mxu0 0.0
    %7085 = vmatpush2.msra.mxu0 0.0
    %7086 = vmatprep.subr.mxu0 0.0
    %7087 = vmatpush2.msra.mxu0 0.0
    %7088 = vmatprep.subr.mxu0 0.0
    %7089 = vmatpush2.msra.mxu0 0.0
    %7090 = vmatprep.subr.mxu0 0.0
    %7091 = vmatpush2.msra.mxu0 0.0
    %7092 = vmatprep.subr.mxu0 0.0
    %7093 = vmatpush2.msra.mxu0 0.0
    %7094 = vmatprep.subr.mxu0 0.0
    %7095 = vmatpush2.msra.mxu0 0.0
    %7096 = vmatprep.subr.mxu0 0.0
    %7097 = vmatpush2.msra.mxu0 0.0
    %7098 = vmatprep.subr.mxu0 0.0
    %7099 = vmatpush2.msra.mxu0 0.0
    %7100 = vmatprep.subr.mxu0 0.0
    %7101 = vmatpush2.msra.mxu0 0.0
    %7102 = vmatprep.subr.mxu0 0.0
    %7103 = vmatpush2.msra.mxu0 0.0
    %7104 = vmatprep.subr.mxu0 0.0
    %7105 = vmatpush2.msra.mxu0 0.0
    %7106 = vmatprep.mubr.f32.mxu0 0.0
    %7107 = vmatmul.mubr.f32.gmra.mxu0 %v6424
    %v7108 = vpop.f32.mrf.mxu0
    %v7109 = vadd.f32 %v3886, %v7108
    %v7110 = vpop.f32.mrf.mxu0
    %7111 = vdwg.mxu0
    %v7112 = vadd.f32 %v7041, %v7109
    %v7113 = vxor.u32 %v7112, 2147483648
    %v7114 = vmul.f32 %v7113, 1.442695
    %v7115 = vpow.pop %v7114
    %v7116 = vadd.f32 %v7115, 1.0
    %v7117 = vrcp.pop %v7116
    %v7118 = vmul.f32 1.0, %v7117
    %7120 = vrot.lane.b32.xlu0 %v7109, 64
    %v7121 = vpop.permute.xlu0 %7120
    %v7123 = vmul.f32 %v7118, %v7121
    %7125 = vrot.lane.b32.xlu0 %v7123, 64
    %v7126 = vpop.permute.xlu0 %7125
    %v7128 = vadd.f32 %v7041, %v7126
    %v7129 = vtanh.pop %v7128
    %v7130 = vsub.f32 1.0, %v7118
    %7132 = vrot.lane.b32.xlu0 %v7129, 96
    %v7133 = vpop.permute.xlu0 %7132
    %v7135 = vmul.f32 %v7130, %v7133
    %v7136 = vmul.f32 %v7118, %v6350
    %v7137 = vadd.f32 %v7135, %v7136
    %7138 = vmatprep.subr.mxu0 0.0
    %7139 = vmatpush1.msra.mxu0 0.0
    %7140 = vmatprep.subr.mxu0 0.0
    %7141 = vmatpush1.msra.mxu0 0.0
    %7142 = vmatprep.subr.mxu0 0.0
    %7143 = vmatpush1.msra.mxu0 0.0
    %7144 = vmatprep.subr.mxu0 0.0
    %7145 = vmatpush1.msra.mxu0 0.0
    %7146 = vmatprep.subr.mxu0 0.0
    %7147 = vmatpush1.msra.mxu0 0.0
    %7148 = vmatprep.subr.mxu0 0.0
    %7149 = vmatpush1.msra.mxu0 0.0
    %7150 = vmatprep.subr.mxu0 0.0
    %7151 = vmatpush1.msra.mxu0 0.0
    %7152 = vmatprep.subr.mxu0 0.0
    %7153 = vmatpush1.msra.mxu0 0.0
    %7154 = vmatprep.subr.mxu0 0.0
    %7155 = vmatpush1.msra.mxu0 0.0
    %7156 = vmatprep.subr.mxu0 0.0
    %7157 = vmatpush1.msra.mxu0 0.0
    %7158 = vmatprep.subr.mxu0 0.0
    %7159 = vmatpush1.msra.mxu0 0.0
    %7160 = vmatprep.subr.mxu0 0.0
    %7161 = vmatpush1.msra.mxu0 0.0
    %7162 = vmatprep.subr.mxu0 0.0
    %7163 = vmatpush1.msra.mxu0 %v253
    %7164 = vmatprep.subr.mxu0 0.0
    %7165 = vmatpush1.msra.mxu0 %v252
    %7166 = vmatprep.subr.mxu0 0.0
    %7167 = vmatpush1.msra.mxu0 %v251
    %7168 = vmatprep.subr.mxu0 0.0
    %7169 = vmatpush1.msra.mxu0 %v250
    %7170 = vmatprep.subr.mxu0 0.0
    %7171 = vmatpush2.msra.mxu0 0.0
    %7172 = vmatprep.subr.mxu0 0.0
    %7173 = vmatpush2.msra.mxu0 0.0
    %7174 = vmatprep.subr.mxu0 0.0
    %7175 = vmatpush2.msra.mxu0 0.0
    %7176 = vmatprep.subr.mxu0 0.0
    %7177 = vmatpush2.msra.mxu0 0.0
    %7178 = vmatprep.subr.mxu0 0.0
    %7179 = vmatpush2.msra.mxu0 0.0
    %7180 = vmatprep.subr.mxu0 0.0
    %7181 = vmatpush2.msra.mxu0 0.0
    %7182 = vmatprep.subr.mxu0 0.0
    %7183 = vmatpush2.msra.mxu0 0.0
    %7184 = vmatprep.subr.mxu0 0.0
    %7185 = vmatpush2.msra.mxu0 0.0
    %7186 = vmatprep.subr.mxu0 0.0
    %7187 = vmatpush2.msra.mxu0 0.0
    %7188 = vmatprep.subr.mxu0 0.0
    %7189 = vmatpush2.msra.mxu0 0.0
    %7190 = vmatprep.subr.mxu0 0.0
    %7191 = vmatpush2.msra.mxu0 0.0
    %7192 = vmatprep.subr.mxu0 0.0
    %7193 = vmatpush2.msra.mxu0 0.0
    %7194 = vmatprep.subr.mxu0 0.0
    %7195 = vmatpush2.msra.mxu0 0.0
    %7196 = vmatprep.subr.mxu0 0.0
    %7197 = vmatpush2.msra.mxu0 0.0
    %7198 = vmatprep.subr.mxu0 0.0
    %7199 = vmatpush2.msra.mxu0 0.0
    %7200 = vmatprep.subr.mxu0 0.0
    %7201 = vmatpush2.msra.mxu0 0.0
    %7202 = vmatprep.mubr.f32.mxu0 0.0
    %7203 = vmatmul.mubr.f32.gmra.mxu0 %v6896
    %v7204 = vpop.f32.mrf.mxu0
    %v7205 = vadd.f32 0.0, %v7204
    %v7206 = vpop.f32.mrf.mxu0
    %7207 = vdwg.mxu0
    %7209 = vrot.lane.b32.xlu0 %v7137, 96
    %v7210 = vpop.permute.xlu0 %7209
    %v7211 = vsel %vm436, %v7210, 0
    %7213 = vmatprep.subr.mxu0 0.0
    %7214 = vmatpush1.msra.mxu0 0.0
    %7215 = vmatprep.subr.mxu0 0.0
    %7216 = vmatpush1.msra.mxu0 0.0
    %7217 = vmatprep.subr.mxu0 0.0
    %7218 = vmatpush1.msra.mxu0 0.0
    %7219 = vmatprep.subr.mxu0 0.0
    %7220 = vmatpush1.msra.mxu0 0.0
    %7221 = vmatprep.subr.mxu0 0.0
    %7222 = vmatpush1.msra.mxu0 0.0
    %7223 = vmatprep.subr.mxu0 0.0
    %7224 = vmatpush1.msra.mxu0 0.0
    %7225 = vmatprep.subr.mxu0 0.0
    %7226 = vmatpush1.msra.mxu0 0.0
    %7227 = vmatprep.subr.mxu0 0.0
    %7228 = vmatpush1.msra.mxu0 0.0
    %7229 = vmatprep.subr.mxu0 0.0
    %7230 = vmatpush1.msra.mxu0 0.0
    %7231 = vmatprep.subr.mxu0 0.0
    %7232 = vmatpush1.msra.mxu0 0.0
    %7233 = vmatprep.subr.mxu0 0.0
    %7234 = vmatpush1.msra.mxu0 0.0
    %7235 = vmatprep.subr.mxu0 0.0
    %7236 = vmatpush1.msra.mxu0 0.0
    %7237 = vmatprep.subr.mxu0 0.0
    %7238 = vmatpush1.msra.mxu0 %v249
    %7239 = vmatprep.subr.mxu0 0.0
    %7240 = vmatpush1.msra.mxu0 %v248
    %7241 = vmatprep.subr.mxu0 0.0
    %7242 = vmatpush1.msra.mxu0 %v247
    %7243 = vmatprep.subr.mxu0 0.0
    %7244 = vmatpush1.msra.mxu0 %v246
    %7245 = vmatprep.subr.mxu0 0.0
    %7246 = vmatpush2.msra.mxu0 0.0
    %7247 = vmatprep.subr.mxu0 0.0
    %7248 = vmatpush2.msra.mxu0 0.0
    %7249 = vmatprep.subr.mxu0 0.0
    %7250 = vmatpush2.msra.mxu0 0.0
    %7251 = vmatprep.subr.mxu0 0.0
    %7252 = vmatpush2.msra.mxu0 0.0
    %7253 = vmatprep.subr.mxu0 0.0
    %7254 = vmatpush2.msra.mxu0 0.0
    %7255 = vmatprep.subr.mxu0 0.0
    %7256 = vmatpush2.msra.mxu0 0.0
    %7257 = vmatprep.subr.mxu0 0.0
    %7258 = vmatpush2.msra.mxu0 0.0
    %7259 = vmatprep.subr.mxu0 0.0
    %7260 = vmatpush2.msra.mxu0 0.0
    %7261 = vmatprep.subr.mxu0 0.0
    %7262 = vmatpush2.msra.mxu0 0.0
    %7263 = vmatprep.subr.mxu0 0.0
    %7264 = vmatpush2.msra.mxu0 0.0
    %7265 = vmatprep.subr.mxu0 0.0
    %7266 = vmatpush2.msra.mxu0 0.0
    %7267 = vmatprep.subr.mxu0 0.0
    %7268 = vmatpush2.msra.mxu0 0.0
    %7269 = vmatprep.subr.mxu0 0.0
    %7270 = vmatpush2.msra.mxu0 0.0
    %7271 = vmatprep.subr.mxu0 0.0
    %7272 = vmatpush2.msra.mxu0 0.0
    %7273 = vmatprep.subr.mxu0 0.0
    %7274 = vmatpush2.msra.mxu0 0.0
    %7275 = vmatprep.subr.mxu0 0.0
    %7276 = vmatpush2.msra.mxu0 0.0
    %7277 = vmatprep.mubr.f32.mxu0 0.0
    %7278 = vmatmul.mubr.f32.gmra.mxu0 %v7211
    %v7279 = vpop.f32.mrf.mxu0
    %v7280 = vadd.f32 %v7205, %v7279
    %v7281 = vpop.f32.mrf.mxu0
    %7282 = vdwg.mxu0
    %7283 = vmatprep.subr.mxu0 0.0
    %7284 = vmatpush1.msra.mxu0 0.0
    %7285 = vmatprep.subr.mxu0 0.0
    %7286 = vmatpush1.msra.mxu0 0.0
    %7287 = vmatprep.subr.mxu0 0.0
    %7288 = vmatpush1.msra.mxu0 0.0
    %7289 = vmatprep.subr.mxu0 0.0
    %7290 = vmatpush1.msra.mxu0 0.0
    %7291 = vmatprep.subr.mxu0 0.0
    %7292 = vmatpush1.msra.mxu0 0.0
    %7293 = vmatprep.subr.mxu0 0.0
    %7294 = vmatpush1.msra.mxu0 0.0
    %7295 = vmatprep.subr.mxu0 0.0
    %7296 = vmatpush1.msra.mxu0 0.0
    %7297 = vmatprep.subr.mxu0 0.0
    %7298 = vmatpush1.msra.mxu0 0.0
    %7299 = vmatprep.subr.mxu0 0.0
    %7300 = vmatpush1.msra.mxu0 0.0
    %7301 = vmatprep.subr.mxu0 0.0
    %7302 = vmatpush1.msra.mxu0 0.0
    %7303 = vmatprep.subr.mxu0 0.0
    %7304 = vmatpush1.msra.mxu0 0.0
    %7305 = vmatprep.subr.mxu0 0.0
    %7306 = vmatpush1.msra.mxu0 0.0
    %7307 = vmatprep.subr.mxu0 0.0
    %7308 = vmatpush1.msra.mxu0 0.0
    %7309 = vmatprep.subr.mxu0 0.0
    %7310 = vmatpush1.msra.mxu0 0.0
    %7311 = vmatprep.subr.mxu0 0.0
    %7312 = vmatpush1.msra.mxu0 %v255
    %7313 = vmatprep.subr.mxu0 0.0
    %7314 = vmatpush1.msra.mxu0 %v254
    %7315 = vmatprep.subr.mxu0 0.0
    %7316 = vmatpush2.msra.mxu0 0.0
    %7317 = vmatprep.subr.mxu0 0.0
    %7318 = vmatpush2.msra.mxu0 0.0
    %7319 = vmatprep.subr.mxu0 0.0
    %7320 = vmatpush2.msra.mxu0 0.0
    %7321 = vmatprep.subr.mxu0 0.0
    %7322 = vmatpush2.msra.mxu0 0.0
    %7323 = vmatprep.subr.mxu0 0.0
    %7324 = vmatpush2.msra.mxu0 0.0
    %7325 = vmatprep.subr.mxu0 0.0
    %7326 = vmatpush2.msra.mxu0 0.0
    %7327 = vmatprep.subr.mxu0 0.0
    %7328 = vmatpush2.msra.mxu0 0.0
    %7329 = vmatprep.subr.mxu0 0.0
    %7330 = vmatpush2.msra.mxu0 0.0
    %7331 = vmatprep.subr.mxu0 0.0
    %7332 = vmatpush2.msra.mxu0 0.0
    %7333 = vmatprep.subr.mxu0 0.0
    %7334 = vmatpush2.msra.mxu0 0.0
    %7335 = vmatprep.subr.mxu0 0.0
    %7336 = vmatpush2.msra.mxu0 0.0
    %7337 = vmatprep.subr.mxu0 0.0
    %7338 = vmatpush2.msra.mxu0 0.0
    %7339 = vmatprep.subr.mxu0 0.0
    %7340 = vmatpush2.msra.mxu0 0.0
    %7341 = vmatprep.subr.mxu0 0.0
    %7342 = vmatpush2.msra.mxu0 0.0
    %7343 = vmatprep.subr.mxu0 0.0
    %7344 = vmatpush2.msra.mxu0 0.0
    %7345 = vmatprep.subr.mxu0 0.0
    %7346 = vmatpush2.msra.mxu0 0.0
    %7347 = vmatprep.mubr.f32.mxu0 0.0
    %7348 = vmatmul.mubr.f32.gmra.mxu0 %v6969
    %v7349 = vpop.f32.mrf.mxu0
    %v7350 = vadd.f32 0.0, %v7349
    %v7351 = vpop.f32.mrf.mxu0
    %7352 = vdwg.mxu0
    %v7353 = vadd.f32 %v7280, %v7350
    %v7354 = vadd.f32 %v7353, %v4204
    %s7355 = scalar_lea.vmem [#allocation24], 10
    %7356 = vst.msk [vmem:[%s7355] sm:$0x3] %vm3424, %v7354
    %v7357 = vsel %vm3424, %v7354, -inf
    %7358 = vmax.xlane.f32.xlu0 %v7357
    %v7359 = vpop.xlane.xlu0 %7358
    %vm7360 = vcmp.ge.f32.partialorder %v7354, %v7359
    %v7361 = vsel %vm7360, %v258, 20
    %v7362 = vsel %vm3424, %v7361, 2147483647
    %v7363 = vand.u32 %v7362, 65535
    %v7364 = vshra.s32 %v7362, 16
    %v7365 = vcvt.s32.f32 %v7363
    %v7366 = vcvt.s32.f32 %v7364
    %7367 = vmin.xlane.f32.xlu0 %v7366
    %v7368 = vpop.xlane.xlu0 %7367
    %vm7369 = vcmp.eq.f32.partialorder %v7366, %v7368
    %v7370 = vsel %vm7369, %v7365, inf
    %7371 = vmin.xlane.f32.xlu0 %v7370
    %v7372 = vpop.xlane.xlu0 %7371
    %v7373 = vcvt.f32.s32 %v7372
    %v7374 = vcvt.f32.s32 %v7368
    %v7375 = vshll.u32 %v7374, 16
    %v7376 = vadd.s32 %v7375, %v7373
    %vm7377 = vcmp.eq.s32.totalorder %v258, %v7376
    %v7378 = vsel %vm7377, 1, 0
    %v7379 = vcvt.s32.f32 %v7378
    %s7380 = sld [smem:[#allocation8 + $0x5]]
    %v7381 = vstv %s7380
    %v7382 = vsel %vm261, %v7381, 0
    %s7383 = sld [smem:[#allocation8 + $0x85]]
    %v7384 = vstv %s7383
    %v7385 = vsel %vm265, %v7384, %v7382
    %vm7386 = vcmp.eq.s32.totalorder %v258, %v7385
    %v7387 = vsel %vm7386, 1, 0
    %v7388 = vcvt.s32.f32 %v7387
    %s7389 = sld [smem:[#allocation10 + $0x4]]
    %p7390 = scmp.gt.s32.totalorder %s7389, 0
    %s7391 = scalar_select %p7390, 1, 0
    %s7392 = scvt.s32.f32 %s7391
    %v7393 = vstv %s7392
    %v7394 = vmul.f32 %v7393, %v7388
    %s7395 = ssub.f32 1.0, %s7392
    %v7396 = vstv %s7395
    %v7397 = vmul.f32 %v7396, %v7379
    %v7398 = vadd.f32 %v7394, %v7397
    %v7400 = vsel %vm272, %v7398, 0
    %7402 = vmatprep.subr.mxu0 0.0
    %7403 = vmatpush1.msra.mxu0 0.0
    %7404 = vmatprep.subr.mxu0 0.0
    %7405 = vmatpush1.msra.mxu0 0.0
    %7406 = vmatprep.subr.mxu0 0.0
    %7407 = vmatpush1.msra.mxu0 0.0
    %7408 = vmatprep.subr.mxu0 0.0
    %7409 = vmatpush1.msra.mxu0 0.0
    %7410 = vmatprep.subr.mxu0 0.0
    %7411 = vmatpush1.msra.mxu0 0.0
    %7412 = vmatprep.subr.mxu0 0.0
    %7413 = vmatpush1.msra.mxu0 0.0
    %7414 = vmatprep.subr.mxu0 0.0
    %7415 = vmatpush1.msra.mxu0 0.0
    %7416 = vmatprep.subr.mxu0 0.0
    %7417 = vmatpush1.msra.mxu0 0.0
    %7418 = vmatprep.subr.mxu0 0.0
    %7419 = vmatpush1.msra.mxu0 0.0
    %7420 = vmatprep.subr.mxu0 0.0
    %7421 = vmatpush1.msra.mxu0 0.0
    %7422 = vmatprep.subr.mxu0 0.0
    %7423 = vmatpush1.msra.mxu0 0.0
    %7424 = vmatprep.subr.mxu0 0.0
    %7425 = vmatpush1.msra.mxu0 0.0
    %7426 = vmatprep.subr.mxu0 0.0
    %7427 = vmatpush1.msra.mxu0 0.0
    %7428 = vmatprep.subr.mxu0 0.0
    %7429 = vmatpush1.msra.mxu0 %v3439
    %7430 = vmatprep.subr.mxu0 0.0
    %7431 = vmatpush1.msra.mxu0 %v214
    %7432 = vmatprep.subr.mxu0 0.0
    %7433 = vmatpush1.msra.mxu0 %v213
    %7434 = vmatprep.subr.mxu0 0.0
    %7435 = vmatpush2.msra.mxu0 0.0
    %7436 = vmatprep.subr.mxu0 0.0
    %7437 = vmatpush2.msra.mxu0 0.0
    %7438 = vmatprep.subr.mxu0 0.0
    %7439 = vmatpush2.msra.mxu0 0.0
    %7440 = vmatprep.subr.mxu0 0.0
    %7441 = vmatpush2.msra.mxu0 0.0
    %7442 = vmatprep.subr.mxu0 0.0
    %7443 = vmatpush2.msra.mxu0 0.0
    %7444 = vmatprep.subr.mxu0 0.0
    %7445 = vmatpush2.msra.mxu0 0.0
    %7446 = vmatprep.subr.mxu0 0.0
    %7447 = vmatpush2.msra.mxu0 0.0
    %7448 = vmatprep.subr.mxu0 0.0
    %7449 = vmatpush2.msra.mxu0 0.0
    %7450 = vmatprep.subr.mxu0 0.0
    %7451 = vmatpush2.msra.mxu0 0.0
    %7452 = vmatprep.subr.mxu0 0.0
    %7453 = vmatpush2.msra.mxu0 0.0
    %7454 = vmatprep.subr.mxu0 0.0
    %7455 = vmatpush2.msra.mxu0 0.0
    %7456 = vmatprep.subr.mxu0 0.0
    %7457 = vmatpush2.msra.mxu0 0.0
    %7458 = vmatprep.subr.mxu0 0.0
    %7459 = vmatpush2.msra.mxu0 0.0
    %7460 = vmatprep.subr.mxu0 0.0
    %7461 = vmatpush2.msra.mxu0 0.0
    %7462 = vmatprep.subr.mxu0 0.0
    %7463 = vmatpush2.msra.mxu0 0.0
    %7464 = vmatprep.subr.mxu0 0.0
    %7465 = vmatpush2.msra.mxu0 0.0
    %7466 = vmatprep.mubr.f32.mxu0 0.0
    %7467 = vmatmul.mubr.f32.gmra.mxu0 %v7400
    %v7468 = vpop.f32.mrf.mxu0
    %v7469 = vadd.f32 0.0, %v7468
    %v7470 = vpop.f32.mrf.mxu0
    %7471 = vdwg.mxu0
    %7472 = vmatprep.subr.mxu0 0.0
    %7473 = vmatpush1.msra.mxu0 0.0
    %7474 = vmatprep.subr.mxu0 0.0
    %7475 = vmatpush1.msra.mxu0 0.0
    %7476 = vmatprep.subr.mxu0 0.0
    %7477 = vmatpush1.msra.mxu0 0.0
    %7478 = vmatprep.subr.mxu0 0.0
    %7479 = vmatpush1.msra.mxu0 0.0
    %7480 = vmatprep.subr.mxu0 0.0
    %7481 = vmatpush1.msra.mxu0 0.0
    %7482 = vmatprep.subr.mxu0 0.0
    %7483 = vmatpush1.msra.mxu0 0.0
    %7484 = vmatprep.subr.mxu0 0.0
    %7485 = vmatpush1.msra.mxu0 0.0
    %7486 = vmatprep.subr.mxu0 0.0
    %7487 = vmatpush1.msra.mxu0 0.0
    %7488 = vmatprep.subr.mxu0 0.0
    %7489 = vmatpush1.msra.mxu0 0.0
    %7490 = vmatprep.subr.mxu0 0.0
    %7491 = vmatpush1.msra.mxu0 0.0
    %7492 = vmatprep.subr.mxu0 0.0
    %7493 = vmatpush1.msra.mxu0 0.0
    %7494 = vmatprep.subr.mxu0 0.0
    %7495 = vmatpush1.msra.mxu0 0.0
    %7496 = vmatprep.subr.mxu0 0.0
    %7497 = vmatpush1.msra.mxu0 %v227
    %7498 = vmatprep.subr.mxu0 0.0
    %7499 = vmatpush1.msra.mxu0 %v226
    %7500 = vmatprep.subr.mxu0 0.0
    %7501 = vmatpush1.msra.mxu0 %v225
    %7502 = vmatprep.subr.mxu0 0.0
    %7503 = vmatpush1.msra.mxu0 %v224
    %7504 = vmatprep.subr.mxu0 0.0
    %7505 = vmatpush2.msra.mxu0 0.0
    %7506 = vmatprep.subr.mxu0 0.0
    %7507 = vmatpush2.msra.mxu0 0.0
    %7508 = vmatprep.subr.mxu0 0.0
    %7509 = vmatpush2.msra.mxu0 0.0
    %7510 = vmatprep.subr.mxu0 0.0
    %7511 = vmatpush2.msra.mxu0 0.0
    %7512 = vmatprep.subr.mxu0 0.0
    %7513 = vmatpush2.msra.mxu0 0.0
    %7514 = vmatprep.subr.mxu0 0.0
    %7515 = vmatpush2.msra.mxu0 0.0
    %7516 = vmatprep.subr.mxu0 0.0
    %7517 = vmatpush2.msra.mxu0 0.0
    %7518 = vmatprep.subr.mxu0 0.0
    %7519 = vmatpush2.msra.mxu0 0.0
    %7520 = vmatprep.subr.mxu0 0.0
    %7521 = vmatpush2.msra.mxu0 0.0
    %7522 = vmatprep.subr.mxu0 0.0
    %7523 = vmatpush2.msra.mxu0 0.0
    %7524 = vmatprep.subr.mxu0 0.0
    %7525 = vmatpush2.msra.mxu0 0.0
    %7526 = vmatprep.subr.mxu0 0.0
    %7527 = vmatpush2.msra.mxu0 0.0
    %7528 = vmatprep.subr.mxu0 0.0
    %7529 = vmatpush2.msra.mxu0 0.0
    %7530 = vmatprep.subr.mxu0 0.0
    %7531 = vmatpush2.msra.mxu0 0.0
    %7532 = vmatprep.subr.mxu0 0.0
    %7533 = vmatpush2.msra.mxu0 0.0
    %7534 = vmatprep.subr.mxu0 0.0
    %7535 = vmatpush2.msra.mxu0 0.0
    %7536 = vmatprep.mubr.f32.mxu0 0.0
    %7537 = vmatmul.mubr.f32.gmra.mxu0 %v7211
    %v7538 = vpop.f32.mrf.mxu0
    %v7539 = vadd.f32 0.0, %v7538
    %v7540 = vpop.f32.mrf.mxu0
    %7541 = vdwg.mxu0
    %v7544 = vunpack.c.l.s4 1966171168
    %v7545 = vunpack.c.0.s8 %v7544
    %v7546 = vlaneseq
    %v7547 = vshrl.u32 %v7546, 7
    %v7548 = vsub.s32 %v7545, %v7547
    %v7549 = vrot.slane %v7539, %v7548
    %v7550 = vcombine.high %v7549, %v7549
    %v7552 = vunpack.c.l.s4 1966171168
    %v7553 = vunpack.c.0.s8 %v7552
    %v7554 = vlaneseq
    %v7555 = vshrl.u32 %v7554, 7
    %v7556 = vsub.s32 %v7553, %v7555
    %v7557 = vrot.slane %v7549, %v7556
    %v7559 = vunpack.c.l.s4 1966171168
    %v7560 = vunpack.c.0.s8 %v7559
    %v7561 = vlaneseq
    %v7562 = vshrl.u32 %v7561, 7
    %v7563 = vsub.s32 %v7560, %v7562
    %v7564 = vrot.slane %v7550, %v7563
    %v7565 = vlaneseq
    %v7566 = vshrl.u32 %v7565, 7
    %v7567 = vsub.s32 0, %v7566
    %v7568 = vrot.slane %v7557, %v7567
    %v7569 = vlaneseq
    %v7570 = vshrl.u32 %v7569, 7
    %v7571 = vsub.s32 0, %v7570
    %v7572 = vrot.slane %v7564, %v7571
    %v7575 = vadd.f32 %v7568, %v3422
    %v7576 = vadd.f32 %v7572, %v3423
    %v7577 = vtanh.pop %v7575
    %v7578 = vtanh.pop %v7576
    %v7579 = vmul.f32 %v7577, %v3622
    %v7580 = vmul.f32 %v7578, %v3622
    %v7581 = vsel %vm436, %v7579, 0.0
    %7582 = vadd.xlane.f32.xlu0 %v7581
    %v7583 = vpop.xlane.xlu0 %7582
    %v7584 = vsel %vm436, %v7580, 0.0
    %7585 = vadd.xlane.f32.xlu0 %v7584
    %v7586 = vpop.xlane.xlu0 %7585
    %v7589 = vlaneseq
    %v7590 = vshrl.u32 %v7589, 7
    %v7591 = vsub.s32 %v258, %v7590
    %v7592 = vrot.slane %v7583, %v7591
    %v7593 = vlaneseq
    %v7594 = vshrl.u32 %v7593, 7
    %v7595 = vsub.s32 %v258, %v7594
    %v7596 = vrot.slane %v7586, %v7595
    %v7597 = vsel %vm3642, %v7596, %v7592
    %v7599 = vsel %vm3645, %v7597, -inf
    %7600 = vmax.xlane.f32.xlu0 %v7599
    %v7601 = vpop.xlane.xlu0 %7600
    %v7603 = vlaneseq
    %v7604 = vshrl.u32 %v7603, 7
    %v7605 = vsub.s32 0, %v7604
    %v7606 = vrot.slane %v7601, %v7605
    %v7607 = vlaneseq
    %v7608 = vshrl.u32 %v7607, 7
    %v7609 = vsub.s32 1, %v7608
    %v7610 = vrot.slane %v7601, %v7609
    %v7613 = vsub.f32 %v7583, %v7606
    %v7614 = vsub.f32 %v7586, %v7610
    %v7615 = vmul.f32 %v7613, 1.442695
    %v7616 = vpow.pop %v7615
    %v7617 = vmul.f32 %v7614, 1.442695
    %v7618 = vpow.pop %v7617
    %7621 = vset.pattern.permute.xlu0 0
    %7622 = vperm.xlu0 %7621, %v7616
    %v7623 = vpop.permute.xlu0 %7622
    %7624 = vset.pattern.permute.xlu0 0
    %7625 = vperm.xlu0 %7624, %v7618
    %v7626 = vpop.permute.xlu0 %7625
    %v7627 = vlaneseq
    %v7628 = vshrl.u32 %v7627, 7
    %v7629 = vsub.s32 %v258, %v7628
    %v7630 = vrot.slane %v7623, %v7629
    %v7631 = vlaneseq
    %v7632 = vshrl.u32 %v7631, 7
    %v7633 = vsub.s32 %v258, %v7632
    %v7634 = vrot.slane %v7626, %v7633
    %v7635 = vsel %vm3642, %v7634, %v7630
    %v7637 = vsel %vm3645, %v7635, 0.0
    %7638 = vadd.xlane.f32.xlu0 %v7637
    %v7639 = vpop.xlane.xlu0 %7638
    %v7640 = vrcp.pop %v7639
    %v7642 = vlaneseq
    %v7643 = vshrl.u32 %v7642, 7
    %v7644 = vsub.s32 0, %v7643
    %v7645 = vrot.slane %v7640, %v7644
    %v7646 = vlaneseq
    %v7647 = vshrl.u32 %v7646, 7
    %v7648 = vsub.s32 1, %v7647
    %v7649 = vrot.slane %v7640, %v7648
    %v7652 = vmul.f32 %v7616, %v7645
    %v7653 = vmul.f32 %v7618, %v7649
    %7655 = vset.pattern.permute.xlu0 0
    %7656 = vperm.xlu0 %7655, %v7652
    %v7657 = vpop.permute.xlu0 %7656
    %7660 = vset.pattern.permute.xlu0 0
    %7661 = vperm.xlu0 %7660, %v7653
    %v7662 = vpop.permute.xlu0 %7661
    %v7664 = vmul.f32 %v7657, %v3420
    %v7665 = vmul.f32 %v7662, %v3421
    %v7666 = vsel %vm436, %v7664, 0.0
    %v7667 = vrot.slane %v7666, 4
    %v7668 = vadd.f32 %v7666, %v7667
    %v7669 = vrot.slane %v7668, 2
    %v7670 = vadd.f32 %v7668, %v7669
    %v7671 = vrot.slane %v7670, 1
    %v7672 = vadd.f32 %v7670, %v7671
    %v7673 = vsel %vm436, %v7665, 0.0
    %v7674 = vrot.slane %v7673, 4
    %v7675 = vadd.f32 %v7673, %v7674
    %v7676 = vrot.slane %v7675, 2
    %v7677 = vadd.f32 %v7675, %v7676
    %v7678 = vrot.slane %v7677, 1
    %v7679 = vadd.f32 %v7677, %v7678
    %v7682 = vsel %vm3642, %v7679, %v7672
    %v7683 = vsel %vm436, %v7682, 0
    %7685 = vmatprep.subr.mxu0 0.0
    %7686 = vmatpush1.msra.mxu0 0.0
    %7687 = vmatprep.subr.mxu0 0.0
    %7688 = vmatpush1.msra.mxu0 0.0
    %7689 = vmatprep.subr.mxu0 0.0
    %7690 = vmatpush1.msra.mxu0 0.0
    %7691 = vmatprep.subr.mxu0 0.0
    %7692 = vmatpush1.msra.mxu0 0.0
    %7693 = vmatprep.subr.mxu0 0.0
    %7694 = vmatpush1.msra.mxu0 0.0
    %7695 = vmatprep.subr.mxu0 0.0
    %7696 = vmatpush1.msra.mxu0 0.0
    %7697 = vmatprep.subr.mxu0 0.0
    %7698 = vmatpush1.msra.mxu0 0.0
    %7699 = vmatprep.subr.mxu0 0.0
    %7700 = vmatpush1.msra.mxu0 0.0
    %7701 = vmatprep.subr.mxu0 0.0
    %7702 = vmatpush1.msra.mxu0 0.0
    %7703 = vmatprep.subr.mxu0 0.0
    %7704 = vmatpush1.msra.mxu0 0.0
    %7705 = vmatprep.subr.mxu0 0.0
    %7706 = vmatpush1.msra.mxu0 0.0
    %7707 = vmatprep.subr.mxu0 0.0
    %7708 = vmatpush1.msra.mxu0 0.0
    %7709 = vmatprep.subr.mxu0 0.0
    %7710 = vmatpush1.msra.mxu0 %v239
    %7711 = vmatprep.subr.mxu0 0.0
    %7712 = vmatpush1.msra.mxu0 %v238
    %7713 = vmatprep.subr.mxu0 0.0
    %7714 = vmatpush1.msra.mxu0 %v237
    %7715 = vmatprep.subr.mxu0 0.0
    %7716 = vmatpush1.msra.mxu0 %v236
    %7717 = vmatprep.subr.mxu0 0.0
    %7718 = vmatpush2.msra.mxu0 0.0
    %7719 = vmatprep.subr.mxu0 0.0
    %7720 = vmatpush2.msra.mxu0 0.0
    %7721 = vmatprep.subr.mxu0 0.0
    %7722 = vmatpush2.msra.mxu0 0.0
    %7723 = vmatprep.subr.mxu0 0.0
    %7724 = vmatpush2.msra.mxu0 0.0
    %7725 = vmatprep.subr.mxu0 0.0
    %7726 = vmatpush2.msra.mxu0 0.0
    %7727 = vmatprep.subr.mxu0 0.0
    %7728 = vmatpush2.msra.mxu0 0.0
    %7729 = vmatprep.subr.mxu0 0.0
    %7730 = vmatpush2.msra.mxu0 0.0
    %7731 = vmatprep.subr.mxu0 0.0
    %7732 = vmatpush2.msra.mxu0 0.0
    %7733 = vmatprep.subr.mxu0 0.0
    %7734 = vmatpush2.msra.mxu0 0.0
    %7735 = vmatprep.subr.mxu0 0.0
    %7736 = vmatpush2.msra.mxu0 0.0
    %7737 = vmatprep.subr.mxu0 0.0
    %7738 = vmatpush2.msra.mxu0 0.0
    %7739 = vmatprep.subr.mxu0 0.0
    %7740 = vmatpush2.msra.mxu0 0.0
    %7741 = vmatprep.subr.mxu0 0.0
    %7742 = vmatpush2.msra.mxu0 0.0
    %7743 = vmatprep.subr.mxu0 0.0
    %7744 = vmatpush2.msra.mxu0 0.0
    %7745 = vmatprep.subr.mxu0 0.0
    %7746 = vmatpush2.msra.mxu0 0.0
    %7747 = vmatprep.subr.mxu0 0.0
    %7748 = vmatpush2.msra.mxu0 0.0
    %7749 = vmatprep.mubr.f32.mxu0 0.0
    %7750 = vmatmul.mubr.f32.gmra.mxu0 %v7683
    %v7751 = vpop.f32.mrf.mxu0
    %v7752 = vadd.f32 0.0, %v7751
    %v7753 = vpop.f32.mrf.mxu0
    %7754 = vdwg.mxu0
    %v7756 = vsel %vm356, %v7469, 0
    %7758 = vmatprep.subr.mxu0 0.0
    %7759 = vmatpush1.msra.mxu0 0.0
    %7760 = vmatprep.subr.mxu0 0.0
    %7761 = vmatpush1.msra.mxu0 0.0
    %7762 = vmatprep.subr.mxu0 0.0
    %7763 = vmatpush1.msra.mxu0 0.0
    %7764 = vmatprep.subr.mxu0 0.0
    %7765 = vmatpush1.msra.mxu0 0.0
    %7766 = vmatprep.subr.mxu0 0.0
    %7767 = vmatpush1.msra.mxu0 0.0
    %7768 = vmatprep.subr.mxu0 0.0
    %7769 = vmatpush1.msra.mxu0 0.0
    %7770 = vmatprep.subr.mxu0 0.0
    %7771 = vmatpush1.msra.mxu0 0.0
    %7772 = vmatprep.subr.mxu0 0.0
    %7773 = vmatpush1.msra.mxu0 0.0
    %7774 = vmatprep.subr.mxu0 0.0
    %7775 = vmatpush1.msra.mxu0 0.0
    %7776 = vmatprep.subr.mxu0 0.0
    %7777 = vmatpush1.msra.mxu0 0.0
    %7778 = vmatprep.subr.mxu0 0.0
    %7779 = vmatpush1.msra.mxu0 0.0
    %7780 = vmatprep.subr.mxu0 0.0
    %7781 = vmatpush1.msra.mxu0 0.0
    %7782 = vmatprep.subr.mxu0 0.0
    %7783 = vmatpush1.msra.mxu0 0.0
    %7784 = vmatprep.subr.mxu0 0.0
    %7785 = vmatpush1.msra.mxu0 0.0
    %7786 = vmatprep.subr.mxu0 0.0
    %7787 = vmatpush1.msra.mxu0 %v235
    %7788 = vmatprep.subr.mxu0 0.0
    %7789 = vmatpush1.msra.mxu0 %v234
    %7790 = vmatprep.subr.mxu0 0.0
    %7791 = vmatpush2.msra.mxu0 0.0
    %7792 = vmatprep.subr.mxu0 0.0
    %7793 = vmatpush2.msra.mxu0 0.0
    %7794 = vmatprep.subr.mxu0 0.0
    %7795 = vmatpush2.msra.mxu0 0.0
    %7796 = vmatprep.subr.mxu0 0.0
    %7797 = vmatpush2.msra.mxu0 0.0
    %7798 = vmatprep.subr.mxu0 0.0
    %7799 = vmatpush2.msra.mxu0 0.0
    %7800 = vmatprep.subr.mxu0 0.0
    %7801 = vmatpush2.msra.mxu0 0.0
    %7802 = vmatprep.subr.mxu0 0.0
    %7803 = vmatpush2.msra.mxu0 0.0
    %7804 = vmatprep.subr.mxu0 0.0
    %7805 = vmatpush2.msra.mxu0 0.0
    %7806 = vmatprep.subr.mxu0 0.0
    %7807 = vmatpush2.msra.mxu0 0.0
    %7808 = vmatprep.subr.mxu0 0.0
    %7809 = vmatpush2.msra.mxu0 0.0
    %7810 = vmatprep.subr.mxu0 0.0
    %7811 = vmatpush2.msra.mxu0 0.0
    %7812 = vmatprep.subr.mxu0 0.0
    %7813 = vmatpush2.msra.mxu0 0.0
    %7814 = vmatprep.subr.mxu0 0.0
    %7815 = vmatpush2.msra.mxu0 0.0
    %7816 = vmatprep.subr.mxu0 0.0
    %7817 = vmatpush2.msra.mxu0 0.0
    %7818 = vmatprep.subr.mxu0 0.0
    %7819 = vmatpush2.msra.mxu0 0.0
    %7820 = vmatprep.subr.mxu0 0.0
    %7821 = vmatpush2.msra.mxu0 0.0
    %7822 = vmatprep.mubr.f32.mxu0 0.0
    %7823 = vmatmul.mubr.f32.gmra.mxu0 %v7756
    %v7824 = vpop.f32.mrf.mxu0
    %v7825 = vadd.f32 %v7752, %v7824
    %v7826 = vpop.f32.mrf.mxu0
    %7827 = vdwg.mxu0
    %v7828 = vadd.f32 %v7825, %v3879
    %7829 = vmatprep.subr.mxu0 0.0
    %7830 = vmatpush1.msra.mxu0 0.0
    %7831 = vmatprep.subr.mxu0 0.0
    %7832 = vmatpush1.msra.mxu0 0.0
    %7833 = vmatprep.subr.mxu0 0.0
    %7834 = vmatpush1.msra.mxu0 0.0
    %7835 = vmatprep.subr.mxu0 0.0
    %7836 = vmatpush1.msra.mxu0 0.0
    %7837 = vmatprep.subr.mxu0 0.0
    %7838 = vmatpush1.msra.mxu0 0.0
    %7839 = vmatprep.subr.mxu0 0.0
    %7840 = vmatpush1.msra.mxu0 0.0
    %7841 = vmatprep.subr.mxu0 0.0
    %7842 = vmatpush1.msra.mxu0 0.0
    %7843 = vmatprep.subr.mxu0 0.0
    %7844 = vmatpush1.msra.mxu0 0.0
    %7845 = vmatprep.subr.mxu0 0.0
    %7846 = vmatpush1.msra.mxu0 0.0
    %7847 = vmatprep.subr.mxu0 0.0
    %7848 = vmatpush1.msra.mxu0 0.0
    %7849 = vmatprep.subr.mxu0 0.0
    %7850 = vmatpush1.msra.mxu0 0.0
    %7851 = vmatprep.subr.mxu0 0.0
    %7852 = vmatpush1.msra.mxu0 0.0
    %7853 = vmatprep.subr.mxu0 0.0
    %7854 = vmatpush1.msra.mxu0 %v243
    %7855 = vmatprep.subr.mxu0 0.0
    %7856 = vmatpush1.msra.mxu0 %v242
    %7857 = vmatprep.subr.mxu0 0.0
    %7858 = vmatpush1.msra.mxu0 %v241
    %7859 = vmatprep.subr.mxu0 0.0
    %7860 = vmatpush1.msra.mxu0 %v240
    %7861 = vmatprep.subr.mxu0 0.0
    %7862 = vmatpush2.msra.mxu0 0.0
    %7863 = vmatprep.subr.mxu0 0.0
    %7864 = vmatpush2.msra.mxu0 0.0
    %7865 = vmatprep.subr.mxu0 0.0
    %7866 = vmatpush2.msra.mxu0 0.0
    %7867 = vmatprep.subr.mxu0 0.0
    %7868 = vmatpush2.msra.mxu0 0.0
    %7869 = vmatprep.subr.mxu0 0.0
    %7870 = vmatpush2.msra.mxu0 0.0
    %7871 = vmatprep.subr.mxu0 0.0
    %7872 = vmatpush2.msra.mxu0 0.0
    %7873 = vmatprep.subr.mxu0 0.0
    %7874 = vmatpush2.msra.mxu0 0.0
    %7875 = vmatprep.subr.mxu0 0.0
    %7876 = vmatpush2.msra.mxu0 0.0
    %7877 = vmatprep.subr.mxu0 0.0
    %7878 = vmatpush2.msra.mxu0 0.0
    %7879 = vmatprep.subr.mxu0 0.0
    %7880 = vmatpush2.msra.mxu0 0.0
    %7881 = vmatprep.subr.mxu0 0.0
    %7882 = vmatpush2.msra.mxu0 0.0
    %7883 = vmatprep.subr.mxu0 0.0
    %7884 = vmatpush2.msra.mxu0 0.0
    %7885 = vmatprep.subr.mxu0 0.0
    %7886 = vmatpush2.msra.mxu0 0.0
    %7887 = vmatprep.subr.mxu0 0.0
    %7888 = vmatpush2.msra.mxu0 0.0
    %7889 = vmatprep.subr.mxu0 0.0
    %7890 = vmatpush2.msra.mxu0 0.0
    %7891 = vmatprep.subr.mxu0 0.0
    %7892 = vmatpush2.msra.mxu0 0.0
    %7893 = vmatprep.mubr.f32.mxu0 0.0
    %7894 = vmatmul.mubr.f32.gmra.mxu0 %v7211
    %v7895 = vpop.f32.mrf.mxu0
    %v7896 = vadd.f32 %v3886, %v7895
    %v7897 = vpop.f32.mrf.mxu0
    %7898 = vdwg.mxu0
    %v7899 = vadd.f32 %v7828, %v7896
    %v7900 = vxor.u32 %v7899, 2147483648
    %v7901 = vmul.f32 %v7900, 1.442695
    %v7902 = vpow.pop %v7901
    %v7903 = vadd.f32 %v7902, 1.0
    %v7904 = vrcp.pop %v7903
    %v7905 = vmul.f32 1.0, %v7904
    %7907 = vrot.lane.b32.xlu0 %v7896, 64
    %v7908 = vpop.permute.xlu0 %7907
    %v7910 = vmul.f32 %v7905, %v7908
    %7912 = vrot.lane.b32.xlu0 %v7910, 64
    %v7913 = vpop.permute.xlu0 %7912
    %v7915 = vadd.f32 %v7828, %v7913
    %v7916 = vtanh.pop %v7915
    %v7917 = vsub.f32 1.0, %v7905
    %7919 = vrot.lane.b32.xlu0 %v7916, 96
    %v7920 = vpop.permute.xlu0 %7919
    %v7922 = vmul.f32 %v7917, %v7920
    %v7923 = vmul.f32 %v7905, %v7137
    %v7924 = vadd.f32 %v7922, %v7923
    %7925 = vmatprep.subr.mxu0 0.0
    %7926 = vmatpush1.msra.mxu0 0.0
    %7927 = vmatprep.subr.mxu0 0.0
    %7928 = vmatpush1.msra.mxu0 0.0
    %7929 = vmatprep.subr.mxu0 0.0
    %7930 = vmatpush1.msra.mxu0 0.0
    %7931 = vmatprep.subr.mxu0 0.0
    %7932 = vmatpush1.msra.mxu0 0.0
    %7933 = vmatprep.subr.mxu0 0.0
    %7934 = vmatpush1.msra.mxu0 0.0
    %7935 = vmatprep.subr.mxu0 0.0
    %7936 = vmatpush1.msra.mxu0 0.0
    %7937 = vmatprep.subr.mxu0 0.0
    %7938 = vmatpush1.msra.mxu0 0.0
    %7939 = vmatprep.subr.mxu0 0.0
    %7940 = vmatpush1.msra.mxu0 0.0
    %7941 = vmatprep.subr.mxu0 0.0
    %7942 = vmatpush1.msra.mxu0 0.0
    %7943 = vmatprep.subr.mxu0 0.0
    %7944 = vmatpush1.msra.mxu0 0.0
    %7945 = vmatprep.subr.mxu0 0.0
    %7946 = vmatpush1.msra.mxu0 0.0
    %7947 = vmatprep.subr.mxu0 0.0
    %7948 = vmatpush1.msra.mxu0 0.0
    %7949 = vmatprep.subr.mxu0 0.0
    %7950 = vmatpush1.msra.mxu0 %v253
    %7951 = vmatprep.subr.mxu0 0.0
    %7952 = vmatpush1.msra.mxu0 %v252
    %7953 = vmatprep.subr.mxu0 0.0
    %7954 = vmatpush1.msra.mxu0 %v251
    %7955 = vmatprep.subr.mxu0 0.0
    %7956 = vmatpush1.msra.mxu0 %v250
    %7957 = vmatprep.subr.mxu0 0.0
    %7958 = vmatpush2.msra.mxu0 0.0
    %7959 = vmatprep.subr.mxu0 0.0
    %7960 = vmatpush2.msra.mxu0 0.0
    %7961 = vmatprep.subr.mxu0 0.0
    %7962 = vmatpush2.msra.mxu0 0.0
    %7963 = vmatprep.subr.mxu0 0.0
    %7964 = vmatpush2.msra.mxu0 0.0
    %7965 = vmatprep.subr.mxu0 0.0
    %7966 = vmatpush2.msra.mxu0 0.0
    %7967 = vmatprep.subr.mxu0 0.0
    %7968 = vmatpush2.msra.mxu0 0.0
    %7969 = vmatprep.subr.mxu0 0.0
    %7970 = vmatpush2.msra.mxu0 0.0
    %7971 = vmatprep.subr.mxu0 0.0
    %7972 = vmatpush2.msra.mxu0 0.0
    %7973 = vmatprep.subr.mxu0 0.0
    %7974 = vmatpush2.msra.mxu0 0.0
    %7975 = vmatprep.subr.mxu0 0.0
    %7976 = vmatpush2.msra.mxu0 0.0
    %7977 = vmatprep.subr.mxu0 0.0
    %7978 = vmatpush2.msra.mxu0 0.0
    %7979 = vmatprep.subr.mxu0 0.0
    %7980 = vmatpush2.msra.mxu0 0.0
    %7981 = vmatprep.subr.mxu0 0.0
    %7982 = vmatpush2.msra.mxu0 0.0
    %7983 = vmatprep.subr.mxu0 0.0
    %7984 = vmatpush2.msra.mxu0 0.0
    %7985 = vmatprep.subr.mxu0 0.0
    %7986 = vmatpush2.msra.mxu0 0.0
    %7987 = vmatprep.subr.mxu0 0.0
    %7988 = vmatpush2.msra.mxu0 0.0
    %7989 = vmatprep.mubr.f32.mxu0 0.0
    %7990 = vmatmul.mubr.f32.gmra.mxu0 %v7683
    %v7991 = vpop.f32.mrf.mxu0
    %v7992 = vadd.f32 0.0, %v7991
    %v7993 = vpop.f32.mrf.mxu0
    %7994 = vdwg.mxu0
    %7996 = vrot.lane.b32.xlu0 %v7924, 96
    %v7997 = vpop.permute.xlu0 %7996
    %v7998 = vsel %vm436, %v7997, 0
    %8000 = vmatprep.subr.mxu0 0.0
    %8001 = vmatpush1.msra.mxu0 0.0
    %8002 = vmatprep.subr.mxu0 0.0
    %8003 = vmatpush1.msra.mxu0 0.0
    %8004 = vmatprep.subr.mxu0 0.0
    %8005 = vmatpush1.msra.mxu0 0.0
    %8006 = vmatprep.subr.mxu0 0.0
    %8007 = vmatpush1.msra.mxu0 0.0
    %8008 = vmatprep.subr.mxu0 0.0
    %8009 = vmatpush1.msra.mxu0 0.0
    %8010 = vmatprep.subr.mxu0 0.0
    %8011 = vmatpush1.msra.mxu0 0.0
    %8012 = vmatprep.subr.mxu0 0.0
    %8013 = vmatpush1.msra.mxu0 0.0
    %8014 = vmatprep.subr.mxu0 0.0
    %8015 = vmatpush1.msra.mxu0 0.0
    %8016 = vmatprep.subr.mxu0 0.0
    %8017 = vmatpush1.msra.mxu0 0.0
    %8018 = vmatprep.subr.mxu0 0.0
    %8019 = vmatpush1.msra.mxu0 0.0
    %8020 = vmatprep.subr.mxu0 0.0
    %8021 = vmatpush1.msra.mxu0 0.0
    %8022 = vmatprep.subr.mxu0 0.0
    %8023 = vmatpush1.msra.mxu0 0.0
    %8024 = vmatprep.subr.mxu0 0.0
    %8025 = vmatpush1.msra.mxu0 %v249
    %8026 = vmatprep.subr.mxu0 0.0
    %8027 = vmatpush1.msra.mxu0 %v248
    %8028 = vmatprep.subr.mxu0 0.0
    %8029 = vmatpush1.msra.mxu0 %v247
    %8030 = vmatprep.subr.mxu0 0.0
    %8031 = vmatpush1.msra.mxu0 %v246
    %8032 = vmatprep.subr.mxu0 0.0
    %8033 = vmatpush2.msra.mxu0 0.0
    %8034 = vmatprep.subr.mxu0 0.0
    %8035 = vmatpush2.msra.mxu0 0.0
    %8036 = vmatprep.subr.mxu0 0.0
    %8037 = vmatpush2.msra.mxu0 0.0
    %8038 = vmatprep.subr.mxu0 0.0
    %8039 = vmatpush2.msra.mxu0 0.0
    %8040 = vmatprep.subr.mxu0 0.0
    %8041 = vmatpush2.msra.mxu0 0.0
    %8042 = vmatprep.subr.mxu0 0.0
    %8043 = vmatpush2.msra.mxu0 0.0
    %8044 = vmatprep.subr.mxu0 0.0
    %8045 = vmatpush2.msra.mxu0 0.0
    %8046 = vmatprep.subr.mxu0 0.0
    %8047 = vmatpush2.msra.mxu0 0.0
    %8048 = vmatprep.subr.mxu0 0.0
    %8049 = vmatpush2.msra.mxu0 0.0
    %8050 = vmatprep.subr.mxu0 0.0
    %8051 = vmatpush2.msra.mxu0 0.0
    %8052 = vmatprep.subr.mxu0 0.0
    %8053 = vmatpush2.msra.mxu0 0.0
    %8054 = vmatprep.subr.mxu0 0.0
    %8055 = vmatpush2.msra.mxu0 0.0
    %8056 = vmatprep.subr.mxu0 0.0
    %8057 = vmatpush2.msra.mxu0 0.0
    %8058 = vmatprep.subr.mxu0 0.0
    %8059 = vmatpush2.msra.mxu0 0.0
    %8060 = vmatprep.subr.mxu0 0.0
    %8061 = vmatpush2.msra.mxu0 0.0
    %8062 = vmatprep.subr.mxu0 0.0
    %8063 = vmatpush2.msra.mxu0 0.0
    %8064 = vmatprep.mubr.f32.mxu0 0.0
    %8065 = vmatmul.mubr.f32.gmra.mxu0 %v7998
    %v8066 = vpop.f32.mrf.mxu0
    %v8067 = vadd.f32 %v7992, %v8066
    %v8068 = vpop.f32.mrf.mxu0
    %8069 = vdwg.mxu0
    %8070 = vmatprep.subr.mxu0 0.0
    %8071 = vmatpush1.msra.mxu0 0.0
    %8072 = vmatprep.subr.mxu0 0.0
    %8073 = vmatpush1.msra.mxu0 0.0
    %8074 = vmatprep.subr.mxu0 0.0
    %8075 = vmatpush1.msra.mxu0 0.0
    %8076 = vmatprep.subr.mxu0 0.0
    %8077 = vmatpush1.msra.mxu0 0.0
    %8078 = vmatprep.subr.mxu0 0.0
    %8079 = vmatpush1.msra.mxu0 0.0
    %8080 = vmatprep.subr.mxu0 0.0
    %8081 = vmatpush1.msra.mxu0 0.0
    %8082 = vmatprep.subr.mxu0 0.0
    %8083 = vmatpush1.msra.mxu0 0.0
    %8084 = vmatprep.subr.mxu0 0.0
    %8085 = vmatpush1.msra.mxu0 0.0
    %8086 = vmatprep.subr.mxu0 0.0
    %8087 = vmatpush1.msra.mxu0 0.0
    %8088 = vmatprep.subr.mxu0 0.0
    %8089 = vmatpush1.msra.mxu0 0.0
    %8090 = vmatprep.subr.mxu0 0.0
    %8091 = vmatpush1.msra.mxu0 0.0
    %8092 = vmatprep.subr.mxu0 0.0
    %8093 = vmatpush1.msra.mxu0 0.0
    %8094 = vmatprep.subr.mxu0 0.0
    %8095 = vmatpush1.msra.mxu0 0.0
    %8096 = vmatprep.subr.mxu0 0.0
    %8097 = vmatpush1.msra.mxu0 0.0
    %8098 = vmatprep.subr.mxu0 0.0
    %8099 = vmatpush1.msra.mxu0 %v255
    %8100 = vmatprep.subr.mxu0 0.0
    %8101 = vmatpush1.msra.mxu0 %v254
    %8102 = vmatprep.subr.mxu0 0.0
    %8103 = vmatpush2.msra.mxu0 0.0
    %8104 = vmatprep.subr.mxu0 0.0
    %8105 = vmatpush2.msra.mxu0 0.0
    %8106 = vmatprep.subr.mxu0 0.0
    %8107 = vmatpush2.msra.mxu0 0.0
    %8108 = vmatprep.subr.mxu0 0.0
    %8109 = vmatpush2.msra.mxu0 0.0
    %8110 = vmatprep.subr.mxu0 0.0
    %8111 = vmatpush2.msra.mxu0 0.0
    %8112 = vmatprep.subr.mxu0 0.0
    %8113 = vmatpush2.msra.mxu0 0.0
    %8114 = vmatprep.subr.mxu0 0.0
    %8115 = vmatpush2.msra.mxu0 0.0
    %8116 = vmatprep.subr.mxu0 0.0
    %8117 = vmatpush2.msra.mxu0 0.0
    %8118 = vmatprep.subr.mxu0 0.0
    %8119 = vmatpush2.msra.mxu0 0.0
    %8120 = vmatprep.subr.mxu0 0.0
    %8121 = vmatpush2.msra.mxu0 0.0
    %8122 = vmatprep.subr.mxu0 0.0
    %8123 = vmatpush2.msra.mxu0 0.0
    %8124 = vmatprep.subr.mxu0 0.0
    %8125 = vmatpush2.msra.mxu0 0.0
    %8126 = vmatprep.subr.mxu0 0.0
    %8127 = vmatpush2.msra.mxu0 0.0
    %8128 = vmatprep.subr.mxu0 0.0
    %8129 = vmatpush2.msra.mxu0 0.0
    %8130 = vmatprep.subr.mxu0 0.0
    %8131 = vmatpush2.msra.mxu0 0.0
    %8132 = vmatprep.subr.mxu0 0.0
    %8133 = vmatpush2.msra.mxu0 0.0
    %8134 = vmatprep.mubr.f32.mxu0 0.0
    %8135 = vmatmul.mubr.f32.gmra.mxu0 %v7756
    %v8136 = vpop.f32.mrf.mxu0
    %v8137 = vadd.f32 0.0, %v8136
    %v8138 = vpop.f32.mrf.mxu0
    %8139 = vdwg.mxu0
    %v8140 = vadd.f32 %v8067, %v8137
    %v8141 = vadd.f32 %v8140, %v4204
    %s8142 = scalar_lea.vmem [#allocation24], 12
    %8143 = vst.msk [vmem:[%s8142] sm:$0x3] %vm3424, %v8141
    %v8144 = vsel %vm3424, %v8141, -inf
    %8145 = vmax.xlane.f32.xlu0 %v8144
    %v8146 = vpop.xlane.xlu0 %8145
    %vm8147 = vcmp.ge.f32.partialorder %v8141, %v8146
    %v8148 = vsel %vm8147, %v258, 20
    %v8149 = vsel %vm3424, %v8148, 2147483647
    %v8150 = vand.u32 %v8149, 65535
    %v8151 = vshra.s32 %v8149, 16
    %v8152 = vcvt.s32.f32 %v8150
    %v8153 = vcvt.s32.f32 %v8151
    %8154 = vmin.xlane.f32.xlu0 %v8153
    %v8155 = vpop.xlane.xlu0 %8154
    %vm8156 = vcmp.eq.f32.partialorder %v8153, %v8155
    %v8157 = vsel %vm8156, %v8152, inf
    %8158 = vmin.xlane.f32.xlu0 %v8157
    %v8159 = vpop.xlane.xlu0 %8158
    %v8160 = vcvt.f32.s32 %v8159
    %v8161 = vcvt.f32.s32 %v8155
    %v8162 = vshll.u32 %v8161, 16
    %v8163 = vadd.s32 %v8162, %v8160
    %vm8164 = vcmp.eq.s32.totalorder %v258, %v8163
    %v8165 = vsel %vm8164, 1, 0
    %v8166 = vcvt.s32.f32 %v8165
    %s8167 = sld [smem:[#allocation8 + $0x6]]
    %v8168 = vstv %s8167
    %v8169 = vsel %vm261, %v8168, 0
    %s8170 = sld [smem:[#allocation8 + $0x86]]
    %v8171 = vstv %s8170
    %v8172 = vsel %vm265, %v8171, %v8169
    %vm8173 = vcmp.eq.s32.totalorder %v258, %v8172
    %v8174 = vsel %vm8173, 1, 0
    %v8175 = vcvt.s32.f32 %v8174
    %s8176 = sld [smem:[#allocation10 + $0x5]]
    %p8177 = scmp.gt.s32.totalorder %s8176, 0
    %s8178 = scalar_select %p8177, 1, 0
    %s8179 = scvt.s32.f32 %s8178
    %v8180 = vstv %s8179
    %v8181 = vmul.f32 %v8180, %v8175
    %s8182 = ssub.f32 1.0, %s8179
    %v8183 = vstv %s8182
    %v8184 = vmul.f32 %v8183, %v8166
    %v8185 = vadd.f32 %v8181, %v8184
    %v8187 = vsel %vm272, %v8185, 0
    %8189 = vmatprep.subr.mxu0 0.0
    %8190 = vmatpush1.msra.mxu0 0.0
    %8191 = vmatprep.subr.mxu0 0.0
    %8192 = vmatpush1.msra.mxu0 0.0
    %8193 = vmatprep.subr.mxu0 0.0
    %8194 = vmatpush1.msra.mxu0 0.0
    %8195 = vmatprep.subr.mxu0 0.0
    %8196 = vmatpush1.msra.mxu0 0.0
    %8197 = vmatprep.subr.mxu0 0.0
    %8198 = vmatpush1.msra.mxu0 0.0
    %8199 = vmatprep.subr.mxu0 0.0
    %8200 = vmatpush1.msra.mxu0 0.0
    %8201 = vmatprep.subr.mxu0 0.0
    %8202 = vmatpush1.msra.mxu0 0.0
    %8203 = vmatprep.subr.mxu0 0.0
    %8204 = vmatpush1.msra.mxu0 0.0
    %8205 = vmatprep.subr.mxu0 0.0
    %8206 = vmatpush1.msra.mxu0 0.0
    %8207 = vmatprep.subr.mxu0 0.0
    %8208 = vmatpush1.msra.mxu0 0.0
    %8209 = vmatprep.subr.mxu0 0.0
    %8210 = vmatpush1.msra.mxu0 0.0
    %8211 = vmatprep.subr.mxu0 0.0
    %8212 = vmatpush1.msra.mxu0 0.0
    %8213 = vmatprep.subr.mxu0 0.0
    %8214 = vmatpush1.msra.mxu0 0.0
    %8215 = vmatprep.subr.mxu0 0.0
    %8216 = vmatpush1.msra.mxu0 %v3439
    %8217 = vmatprep.subr.mxu0 0.0
    %8218 = vmatpush1.msra.mxu0 %v214
    %8219 = vmatprep.subr.mxu0 0.0
    %8220 = vmatpush1.msra.mxu0 %v213
    %8221 = vmatprep.subr.mxu0 0.0
    %8222 = vmatpush2.msra.mxu0 0.0
    %8223 = vmatprep.subr.mxu0 0.0
    %8224 = vmatpush2.msra.mxu0 0.0
    %8225 = vmatprep.subr.mxu0 0.0
    %8226 = vmatpush2.msra.mxu0 0.0
    %8227 = vmatprep.subr.mxu0 0.0
    %8228 = vmatpush2.msra.mxu0 0.0
    %8229 = vmatprep.subr.mxu0 0.0
    %8230 = vmatpush2.msra.mxu0 0.0
    %8231 = vmatprep.subr.mxu0 0.0
    %8232 = vmatpush2.msra.mxu0 0.0
    %8233 = vmatprep.subr.mxu0 0.0
    %8234 = vmatpush2.msra.mxu0 0.0
    %8235 = vmatprep.subr.mxu0 0.0
    %8236 = vmatpush2.msra.mxu0 0.0
    %8237 = vmatprep.subr.mxu0 0.0
    %8238 = vmatpush2.msra.mxu0 0.0
    %8239 = vmatprep.subr.mxu0 0.0
    %8240 = vmatpush2.msra.mxu0 0.0
    %8241 = vmatprep.subr.mxu0 0.0
    %8242 = vmatpush2.msra.mxu0 0.0
    %8243 = vmatprep.subr.mxu0 0.0
    %8244 = vmatpush2.msra.mxu0 0.0
    %8245 = vmatprep.subr.mxu0 0.0
    %8246 = vmatpush2.msra.mxu0 0.0
    %8247 = vmatprep.subr.mxu0 0.0
    %8248 = vmatpush2.msra.mxu0 0.0
    %8249 = vmatprep.subr.mxu0 0.0
    %8250 = vmatpush2.msra.mxu0 0.0
    %8251 = vmatprep.subr.mxu0 0.0
    %8252 = vmatpush2.msra.mxu0 0.0
    %8253 = vmatprep.mubr.f32.mxu0 0.0
    %8254 = vmatmul.mubr.f32.gmra.mxu0 %v8187
    %v8255 = vpop.f32.mrf.mxu0
    %v8256 = vadd.f32 0.0, %v8255
    %v8257 = vpop.f32.mrf.mxu0
    %8258 = vdwg.mxu0
    %8259 = vmatprep.subr.mxu0 0.0
    %8260 = vmatpush1.msra.mxu0 0.0
    %8261 = vmatprep.subr.mxu0 0.0
    %8262 = vmatpush1.msra.mxu0 0.0
    %8263 = vmatprep.subr.mxu0 0.0
    %8264 = vmatpush1.msra.mxu0 0.0
    %8265 = vmatprep.subr.mxu0 0.0
    %8266 = vmatpush1.msra.mxu0 0.0
    %8267 = vmatprep.subr.mxu0 0.0
    %8268 = vmatpush1.msra.mxu0 0.0
    %8269 = vmatprep.subr.mxu0 0.0
    %8270 = vmatpush1.msra.mxu0 0.0
    %8271 = vmatprep.subr.mxu0 0.0
    %8272 = vmatpush1.msra.mxu0 0.0
    %8273 = vmatprep.subr.mxu0 0.0
    %8274 = vmatpush1.msra.mxu0 0.0
    %8275 = vmatprep.subr.mxu0 0.0
    %8276 = vmatpush1.msra.mxu0 0.0
    %8277 = vmatprep.subr.mxu0 0.0
    %8278 = vmatpush1.msra.mxu0 0.0
    %8279 = vmatprep.subr.mxu0 0.0
    %8280 = vmatpush1.msra.mxu0 0.0
    %8281 = vmatprep.subr.mxu0 0.0
    %8282 = vmatpush1.msra.mxu0 0.0
    %8283 = vmatprep.subr.mxu0 0.0
    %8284 = vmatpush1.msra.mxu0 %v227
    %8285 = vmatprep.subr.mxu0 0.0
    %8286 = vmatpush1.msra.mxu0 %v226
    %8287 = vmatprep.subr.mxu0 0.0
    %8288 = vmatpush1.msra.mxu0 %v225
    %8289 = vmatprep.subr.mxu0 0.0
    %8290 = vmatpush1.msra.mxu0 %v224
    %8291 = vmatprep.subr.mxu0 0.0
    %8292 = vmatpush2.msra.mxu0 0.0
    %8293 = vmatprep.subr.mxu0 0.0
    %8294 = vmatpush2.msra.mxu0 0.0
    %8295 = vmatprep.subr.mxu0 0.0
    %8296 = vmatpush2.msra.mxu0 0.0
    %8297 = vmatprep.subr.mxu0 0.0
    %8298 = vmatpush2.msra.mxu0 0.0
    %8299 = vmatprep.subr.mxu0 0.0
    %8300 = vmatpush2.msra.mxu0 0.0
    %8301 = vmatprep.subr.mxu0 0.0
    %8302 = vmatpush2.msra.mxu0 0.0
    %8303 = vmatprep.subr.mxu0 0.0
    %8304 = vmatpush2.msra.mxu0 0.0
    %8305 = vmatprep.subr.mxu0 0.0
    %8306 = vmatpush2.msra.mxu0 0.0
    %8307 = vmatprep.subr.mxu0 0.0
    %8308 = vmatpush2.msra.mxu0 0.0
    %8309 = vmatprep.subr.mxu0 0.0
    %8310 = vmatpush2.msra.mxu0 0.0
    %8311 = vmatprep.subr.mxu0 0.0
    %8312 = vmatpush2.msra.mxu0 0.0
    %8313 = vmatprep.subr.mxu0 0.0
    %8314 = vmatpush2.msra.mxu0 0.0
    %8315 = vmatprep.subr.mxu0 0.0
    %8316 = vmatpush2.msra.mxu0 0.0
    %8317 = vmatprep.subr.mxu0 0.0
    %8318 = vmatpush2.msra.mxu0 0.0
    %8319 = vmatprep.subr.mxu0 0.0
    %8320 = vmatpush2.msra.mxu0 0.0
    %8321 = vmatprep.subr.mxu0 0.0
    %8322 = vmatpush2.msra.mxu0 0.0
    %8323 = vmatprep.mubr.f32.mxu0 0.0
    %8324 = vmatmul.mubr.f32.gmra.mxu0 %v7998
    %v8325 = vpop.f32.mrf.mxu0
    %v8326 = vadd.f32 0.0, %v8325
    %v8327 = vpop.f32.mrf.mxu0
    %8328 = vdwg.mxu0
    %v8331 = vunpack.c.l.s4 1966171168
    %v8332 = vunpack.c.0.s8 %v8331
    %v8333 = vlaneseq
    %v8334 = vshrl.u32 %v8333, 7
    %v8335 = vsub.s32 %v8332, %v8334
    %v8336 = vrot.slane %v8326, %v8335
    %v8337 = vcombine.high %v8336, %v8336
    %v8339 = vunpack.c.l.s4 1966171168
    %v8340 = vunpack.c.0.s8 %v8339
    %v8341 = vlaneseq
    %v8342 = vshrl.u32 %v8341, 7
    %v8343 = vsub.s32 %v8340, %v8342
    %v8344 = vrot.slane %v8336, %v8343
    %v8346 = vunpack.c.l.s4 1966171168
    %v8347 = vunpack.c.0.s8 %v8346
    %v8348 = vlaneseq
    %v8349 = vshrl.u32 %v8348, 7
    %v8350 = vsub.s32 %v8347, %v8349
    %v8351 = vrot.slane %v8337, %v8350
    %v8352 = vlaneseq
    %v8353 = vshrl.u32 %v8352, 7
    %v8354 = vsub.s32 0, %v8353
    %v8355 = vrot.slane %v8344, %v8354
    %v8356 = vlaneseq
    %v8357 = vshrl.u32 %v8356, 7
    %v8358 = vsub.s32 0, %v8357
    %v8359 = vrot.slane %v8351, %v8358
    %v8362 = vadd.f32 %v8355, %v3422
    %v8363 = vadd.f32 %v8359, %v3423
    %v8364 = vtanh.pop %v8362
    %v8365 = vtanh.pop %v8363
    %v8366 = vmul.f32 %v8364, %v3622
    %v8367 = vmul.f32 %v8365, %v3622
    %v8368 = vsel %vm436, %v8366, 0.0
    %8369 = vadd.xlane.f32.xlu0 %v8368
    %v8370 = vpop.xlane.xlu0 %8369
    %v8371 = vsel %vm436, %v8367, 0.0
    %8372 = vadd.xlane.f32.xlu0 %v8371
    %v8373 = vpop.xlane.xlu0 %8372
    %v8376 = vlaneseq
    %v8377 = vshrl.u32 %v8376, 7
    %v8378 = vsub.s32 %v258, %v8377
    %v8379 = vrot.slane %v8370, %v8378
    %v8380 = vlaneseq
    %v8381 = vshrl.u32 %v8380, 7
    %v8382 = vsub.s32 %v258, %v8381
    %v8383 = vrot.slane %v8373, %v8382
    %v8384 = vsel %vm3642, %v8383, %v8379
    %v8386 = vsel %vm3645, %v8384, -inf
    %8387 = vmax.xlane.f32.xlu0 %v8386
    %v8388 = vpop.xlane.xlu0 %8387
    %v8390 = vlaneseq
    %v8391 = vshrl.u32 %v8390, 7
    %v8392 = vsub.s32 0, %v8391
    %v8393 = vrot.slane %v8388, %v8392
    %v8394 = vlaneseq
    %v8395 = vshrl.u32 %v8394, 7
    %v8396 = vsub.s32 1, %v8395
    %v8397 = vrot.slane %v8388, %v8396
    %v8400 = vsub.f32 %v8370, %v8393
    %v8401 = vsub.f32 %v8373, %v8397
    %v8402 = vmul.f32 %v8400, 1.442695
    %v8403 = vpow.pop %v8402
    %v8404 = vmul.f32 %v8401, 1.442695
    %v8405 = vpow.pop %v8404
    %8408 = vset.pattern.permute.xlu0 0
    %8409 = vperm.xlu0 %8408, %v8403
    %v8410 = vpop.permute.xlu0 %8409
    %8411 = vset.pattern.permute.xlu0 0
    %8412 = vperm.xlu0 %8411, %v8405
    %v8413 = vpop.permute.xlu0 %8412
    %v8414 = vlaneseq
    %v8415 = vshrl.u32 %v8414, 7
    %v8416 = vsub.s32 %v258, %v8415
    %v8417 = vrot.slane %v8410, %v8416
    %v8418 = vlaneseq
    %v8419 = vshrl.u32 %v8418, 7
    %v8420 = vsub.s32 %v258, %v8419
    %v8421 = vrot.slane %v8413, %v8420
    %v8422 = vsel %vm3642, %v8421, %v8417
    %v8424 = vsel %vm3645, %v8422, 0.0
    %8425 = vadd.xlane.f32.xlu0 %v8424
    %v8426 = vpop.xlane.xlu0 %8425
    %v8427 = vrcp.pop %v8426
    %v8429 = vlaneseq
    %v8430 = vshrl.u32 %v8429, 7
    %v8431 = vsub.s32 0, %v8430
    %v8432 = vrot.slane %v8427, %v8431
    %v8433 = vlaneseq
    %v8434 = vshrl.u32 %v8433, 7
    %v8435 = vsub.s32 1, %v8434
    %v8436 = vrot.slane %v8427, %v8435
    %v8439 = vmul.f32 %v8403, %v8432
    %v8440 = vmul.f32 %v8405, %v8436
    %8442 = vset.pattern.permute.xlu0 0
    %8443 = vperm.xlu0 %8442, %v8439
    %v8444 = vpop.permute.xlu0 %8443
    %8447 = vset.pattern.permute.xlu0 0
    %8448 = vperm.xlu0 %8447, %v8440
    %v8449 = vpop.permute.xlu0 %8448
    %v8451 = vmul.f32 %v8444, %v3420
    %v8452 = vmul.f32 %v8449, %v3421
    %v8453 = vsel %vm436, %v8451, 0.0
    %v8454 = vrot.slane %v8453, 4
    %v8455 = vadd.f32 %v8453, %v8454
    %v8456 = vrot.slane %v8455, 2
    %v8457 = vadd.f32 %v8455, %v8456
    %v8458 = vrot.slane %v8457, 1
    %v8459 = vadd.f32 %v8457, %v8458
    %v8460 = vsel %vm436, %v8452, 0.0
    %v8461 = vrot.slane %v8460, 4
    %v8462 = vadd.f32 %v8460, %v8461
    %v8463 = vrot.slane %v8462, 2
    %v8464 = vadd.f32 %v8462, %v8463
    %v8465 = vrot.slane %v8464, 1
    %v8466 = vadd.f32 %v8464, %v8465
    %v8469 = vsel %vm3642, %v8466, %v8459
    %v8470 = vsel %vm436, %v8469, 0
    %8472 = vmatprep.subr.mxu0 0.0
    %8473 = vmatpush1.msra.mxu0 0.0
    %8474 = vmatprep.subr.mxu0 0.0
    %8475 = vmatpush1.msra.mxu0 0.0
    %8476 = vmatprep.subr.mxu0 0.0
    %8477 = vmatpush1.msra.mxu0 0.0
    %8478 = vmatprep.subr.mxu0 0.0
    %8479 = vmatpush1.msra.mxu0 0.0
    %8480 = vmatprep.subr.mxu0 0.0
    %8481 = vmatpush1.msra.mxu0 0.0
    %8482 = vmatprep.subr.mxu0 0.0
    %8483 = vmatpush1.msra.mxu0 0.0
    %8484 = vmatprep.subr.mxu0 0.0
    %8485 = vmatpush1.msra.mxu0 0.0
    %8486 = vmatprep.subr.mxu0 0.0
    %8487 = vmatpush1.msra.mxu0 0.0
    %8488 = vmatprep.subr.mxu0 0.0
    %8489 = vmatpush1.msra.mxu0 0.0
    %8490 = vmatprep.subr.mxu0 0.0
    %8491 = vmatpush1.msra.mxu0 0.0
    %8492 = vmatprep.subr.mxu0 0.0
    %8493 = vmatpush1.msra.mxu0 0.0
    %8494 = vmatprep.subr.mxu0 0.0
    %8495 = vmatpush1.msra.mxu0 0.0
    %8496 = vmatprep.subr.mxu0 0.0
    %8497 = vmatpush1.msra.mxu0 %v239
    %8498 = vmatprep.subr.mxu0 0.0
    %8499 = vmatpush1.msra.mxu0 %v238
    %8500 = vmatprep.subr.mxu0 0.0
    %8501 = vmatpush1.msra.mxu0 %v237
    %8502 = vmatprep.subr.mxu0 0.0
    %8503 = vmatpush1.msra.mxu0 %v236
    %8504 = vmatprep.subr.mxu0 0.0
    %8505 = vmatpush2.msra.mxu0 0.0
    %8506 = vmatprep.subr.mxu0 0.0
    %8507 = vmatpush2.msra.mxu0 0.0
    %8508 = vmatprep.subr.mxu0 0.0
    %8509 = vmatpush2.msra.mxu0 0.0
    %8510 = vmatprep.subr.mxu0 0.0
    %8511 = vmatpush2.msra.mxu0 0.0
    %8512 = vmatprep.subr.mxu0 0.0
    %8513 = vmatpush2.msra.mxu0 0.0
    %8514 = vmatprep.subr.mxu0 0.0
    %8515 = vmatpush2.msra.mxu0 0.0
    %8516 = vmatprep.subr.mxu0 0.0
    %8517 = vmatpush2.msra.mxu0 0.0
    %8518 = vmatprep.subr.mxu0 0.0
    %8519 = vmatpush2.msra.mxu0 0.0
    %8520 = vmatprep.subr.mxu0 0.0
    %8521 = vmatpush2.msra.mxu0 0.0
    %8522 = vmatprep.subr.mxu0 0.0
    %8523 = vmatpush2.msra.mxu0 0.0
    %8524 = vmatprep.subr.mxu0 0.0
    %8525 = vmatpush2.msra.mxu0 0.0
    %8526 = vmatprep.subr.mxu0 0.0
    %8527 = vmatpush2.msra.mxu0 0.0
    %8528 = vmatprep.subr.mxu0 0.0
    %8529 = vmatpush2.msra.mxu0 0.0
    %8530 = vmatprep.subr.mxu0 0.0
    %8531 = vmatpush2.msra.mxu0 0.0
    %8532 = vmatprep.subr.mxu0 0.0
    %8533 = vmatpush2.msra.mxu0 0.0
    %8534 = vmatprep.subr.mxu0 0.0
    %8535 = vmatpush2.msra.mxu0 0.0
    %8536 = vmatprep.mubr.f32.mxu0 0.0
    %8537 = vmatmul.mubr.f32.gmra.mxu0 %v8470
    %v8538 = vpop.f32.mrf.mxu0
    %v8539 = vadd.f32 0.0, %v8538
    %v8540 = vpop.f32.mrf.mxu0
    %8541 = vdwg.mxu0
    %v8543 = vsel %vm356, %v8256, 0
    %8545 = vmatprep.subr.mxu0 0.0
    %8546 = vmatpush1.msra.mxu0 0.0
    %8547 = vmatprep.subr.mxu0 0.0
    %8548 = vmatpush1.msra.mxu0 0.0
    %8549 = vmatprep.subr.mxu0 0.0
    %8550 = vmatpush1.msra.mxu0 0.0
    %8551 = vmatprep.subr.mxu0 0.0
    %8552 = vmatpush1.msra.mxu0 0.0
    %8553 = vmatprep.subr.mxu0 0.0
    %8554 = vmatpush1.msra.mxu0 0.0
    %8555 = vmatprep.subr.mxu0 0.0
    %8556 = vmatpush1.msra.mxu0 0.0
    %8557 = vmatprep.subr.mxu0 0.0
    %8558 = vmatpush1.msra.mxu0 0.0
    %8559 = vmatprep.subr.mxu0 0.0
    %8560 = vmatpush1.msra.mxu0 0.0
    %8561 = vmatprep.subr.mxu0 0.0
    %8562 = vmatpush1.msra.mxu0 0.0
    %8563 = vmatprep.subr.mxu0 0.0
    %8564 = vmatpush1.msra.mxu0 0.0
    %8565 = vmatprep.subr.mxu0 0.0
    %8566 = vmatpush1.msra.mxu0 0.0
    %8567 = vmatprep.subr.mxu0 0.0
    %8568 = vmatpush1.msra.mxu0 0.0
    %8569 = vmatprep.subr.mxu0 0.0
    %8570 = vmatpush1.msra.mxu0 0.0
    %8571 = vmatprep.subr.mxu0 0.0
    %8572 = vmatpush1.msra.mxu0 0.0
    %8573 = vmatprep.subr.mxu0 0.0
    %8574 = vmatpush1.msra.mxu0 %v235
    %8575 = vmatprep.subr.mxu0 0.0
    %8576 = vmatpush1.msra.mxu0 %v234
    %8577 = vmatprep.subr.mxu0 0.0
    %8578 = vmatpush2.msra.mxu0 0.0
    %8579 = vmatprep.subr.mxu0 0.0
    %8580 = vmatpush2.msra.mxu0 0.0
    %8581 = vmatprep.subr.mxu0 0.0
    %8582 = vmatpush2.msra.mxu0 0.0
    %8583 = vmatprep.subr.mxu0 0.0
    %8584 = vmatpush2.msra.mxu0 0.0
    %8585 = vmatprep.subr.mxu0 0.0
    %8586 = vmatpush2.msra.mxu0 0.0
    %8587 = vmatprep.subr.mxu0 0.0
    %8588 = vmatpush2.msra.mxu0 0.0
    %8589 = vmatprep.subr.mxu0 0.0
    %8590 = vmatpush2.msra.mxu0 0.0
    %8591 = vmatprep.subr.mxu0 0.0
    %8592 = vmatpush2.msra.mxu0 0.0
    %8593 = vmatprep.subr.mxu0 0.0
    %8594 = vmatpush2.msra.mxu0 0.0
    %8595 = vmatprep.subr.mxu0 0.0
    %8596 = vmatpush2.msra.mxu0 0.0
    %8597 = vmatprep.subr.mxu0 0.0
    %8598 = vmatpush2.msra.mxu0 0.0
    %8599 = vmatprep.subr.mxu0 0.0
    %8600 = vmatpush2.msra.mxu0 0.0
    %8601 = vmatprep.subr.mxu0 0.0
    %8602 = vmatpush2.msra.mxu0 0.0
    %8603 = vmatprep.subr.mxu0 0.0
    %8604 = vmatpush2.msra.mxu0 0.0
    %8605 = vmatprep.subr.mxu0 0.0
    %8606 = vmatpush2.msra.mxu0 0.0
    %8607 = vmatprep.subr.mxu0 0.0
    %8608 = vmatpush2.msra.mxu0 0.0
    %8609 = vmatprep.mubr.f32.mxu0 0.0
    %8610 = vmatmul.mubr.f32.gmra.mxu0 %v8543
    %v8611 = vpop.f32.mrf.mxu0
    %v8612 = vadd.f32 %v8539, %v8611
    %v8613 = vpop.f32.mrf.mxu0
    %8614 = vdwg.mxu0
    %v8615 = vadd.f32 %v8612, %v3879
    %8616 = vmatprep.subr.mxu0 0.0
    %8617 = vmatpush1.msra.mxu0 0.0
    %8618 = vmatprep.subr.mxu0 0.0
    %8619 = vmatpush1.msra.mxu0 0.0
    %8620 = vmatprep.subr.mxu0 0.0
    %8621 = vmatpush1.msra.mxu0 0.0
    %8622 = vmatprep.subr.mxu0 0.0
    %8623 = vmatpush1.msra.mxu0 0.0
    %8624 = vmatprep.subr.mxu0 0.0
    %8625 = vmatpush1.msra.mxu0 0.0
    %8626 = vmatprep.subr.mxu0 0.0
    %8627 = vmatpush1.msra.mxu0 0.0
    %8628 = vmatprep.subr.mxu0 0.0
    %8629 = vmatpush1.msra.mxu0 0.0
    %8630 = vmatprep.subr.mxu0 0.0
    %8631 = vmatpush1.msra.mxu0 0.0
    %8632 = vmatprep.subr.mxu0 0.0
    %8633 = vmatpush1.msra.mxu0 0.0
    %8634 = vmatprep.subr.mxu0 0.0
    %8635 = vmatpush1.msra.mxu0 0.0
    %8636 = vmatprep.subr.mxu0 0.0
    %8637 = vmatpush1.msra.mxu0 0.0
    %8638 = vmatprep.subr.mxu0 0.0
    %8639 = vmatpush1.msra.mxu0 0.0
    %8640 = vmatprep.subr.mxu0 0.0
    %8641 = vmatpush1.msra.mxu0 %v243
    %8642 = vmatprep.subr.mxu0 0.0
    %8643 = vmatpush1.msra.mxu0 %v242
    %8644 = vmatprep.subr.mxu0 0.0
    %8645 = vmatpush1.msra.mxu0 %v241
    %8646 = vmatprep.subr.mxu0 0.0
    %8647 = vmatpush1.msra.mxu0 %v240
    %8648 = vmatprep.subr.mxu0 0.0
    %8649 = vmatpush2.msra.mxu0 0.0
    %8650 = vmatprep.subr.mxu0 0.0
    %8651 = vmatpush2.msra.mxu0 0.0
    %8652 = vmatprep.subr.mxu0 0.0
    %8653 = vmatpush2.msra.mxu0 0.0
    %8654 = vmatprep.subr.mxu0 0.0
    %8655 = vmatpush2.msra.mxu0 0.0
    %8656 = vmatprep.subr.mxu0 0.0
    %8657 = vmatpush2.msra.mxu0 0.0
    %8658 = vmatprep.subr.mxu0 0.0
    %8659 = vmatpush2.msra.mxu0 0.0
    %8660 = vmatprep.subr.mxu0 0.0
    %8661 = vmatpush2.msra.mxu0 0.0
    %8662 = vmatprep.subr.mxu0 0.0
    %8663 = vmatpush2.msra.mxu0 0.0
    %8664 = vmatprep.subr.mxu0 0.0
    %8665 = vmatpush2.msra.mxu0 0.0
    %8666 = vmatprep.subr.mxu0 0.0
    %8667 = vmatpush2.msra.mxu0 0.0
    %8668 = vmatprep.subr.mxu0 0.0
    %8669 = vmatpush2.msra.mxu0 0.0
    %8670 = vmatprep.subr.mxu0 0.0
    %8671 = vmatpush2.msra.mxu0 0.0
    %8672 = vmatprep.subr.mxu0 0.0
    %8673 = vmatpush2.msra.mxu0 0.0
    %8674 = vmatprep.subr.mxu0 0.0
    %8675 = vmatpush2.msra.mxu0 0.0
    %8676 = vmatprep.subr.mxu0 0.0
    %8677 = vmatpush2.msra.mxu0 0.0
    %8678 = vmatprep.subr.mxu0 0.0
    %8679 = vmatpush2.msra.mxu0 0.0
    %8680 = vmatprep.mubr.f32.mxu0 0.0
    %8681 = vmatmul.mubr.f32.gmra.mxu0 %v7998
    %v8682 = vpop.f32.mrf.mxu0
    %v8683 = vadd.f32 %v3886, %v8682
    %v8684 = vpop.f32.mrf.mxu0
    %8685 = vdwg.mxu0
    %v8686 = vadd.f32 %v8615, %v8683
    %v8687 = vxor.u32 %v8686, 2147483648
    %v8688 = vmul.f32 %v8687, 1.442695
    %v8689 = vpow.pop %v8688
    %v8690 = vadd.f32 %v8689, 1.0
    %v8691 = vrcp.pop %v8690
    %v8692 = vmul.f32 1.0, %v8691
    %8694 = vrot.lane.b32.xlu0 %v8683, 64
    %v8695 = vpop.permute.xlu0 %8694
    %v8697 = vmul.f32 %v8692, %v8695
    %8699 = vrot.lane.b32.xlu0 %v8697, 64
    %v8700 = vpop.permute.xlu0 %8699
    %v8702 = vadd.f32 %v8615, %v8700
    %v8703 = vtanh.pop %v8702
    %v8704 = vsub.f32 1.0, %v8692
    %8706 = vrot.lane.b32.xlu0 %v8703, 96
    %v8707 = vpop.permute.xlu0 %8706
    %v8709 = vmul.f32 %v8704, %v8707
    %v8710 = vmul.f32 %v8692, %v7924
    %v8711 = vadd.f32 %v8709, %v8710
    %8712 = vmatprep.subr.mxu0 0.0
    %8713 = vmatpush1.msra.mxu0 0.0
    %8714 = vmatprep.subr.mxu0 0.0
    %8715 = vmatpush1.msra.mxu0 0.0
    %8716 = vmatprep.subr.mxu0 0.0
    %8717 = vmatpush1.msra.mxu0 0.0
    %8718 = vmatprep.subr.mxu0 0.0
    %8719 = vmatpush1.msra.mxu0 0.0
    %8720 = vmatprep.subr.mxu0 0.0
    %8721 = vmatpush1.msra.mxu0 0.0
    %8722 = vmatprep.subr.mxu0 0.0
    %8723 = vmatpush1.msra.mxu0 0.0
    %8724 = vmatprep.subr.mxu0 0.0
    %8725 = vmatpush1.msra.mxu0 0.0
    %8726 = vmatprep.subr.mxu0 0.0
    %8727 = vmatpush1.msra.mxu0 0.0
    %8728 = vmatprep.subr.mxu0 0.0
    %8729 = vmatpush1.msra.mxu0 0.0
    %8730 = vmatprep.subr.mxu0 0.0
    %8731 = vmatpush1.msra.mxu0 0.0
    %8732 = vmatprep.subr.mxu0 0.0
    %8733 = vmatpush1.msra.mxu0 0.0
    %8734 = vmatprep.subr.mxu0 0.0
    %8735 = vmatpush1.msra.mxu0 0.0
    %8736 = vmatprep.subr.mxu0 0.0
    %8737 = vmatpush1.msra.mxu0 %v253
    %8738 = vmatprep.subr.mxu0 0.0
    %8739 = vmatpush1.msra.mxu0 %v252
    %8740 = vmatprep.subr.mxu0 0.0
    %8741 = vmatpush1.msra.mxu0 %v251
    %8742 = vmatprep.subr.mxu0 0.0
    %8743 = vmatpush1.msra.mxu0 %v250
    %8744 = vmatprep.subr.mxu0 0.0
    %8745 = vmatpush2.msra.mxu0 0.0
    %8746 = vmatprep.subr.mxu0 0.0
    %8747 = vmatpush2.msra.mxu0 0.0
    %8748 = vmatprep.subr.mxu0 0.0
    %8749 = vmatpush2.msra.mxu0 0.0
    %8750 = vmatprep.subr.mxu0 0.0
    %8751 = vmatpush2.msra.mxu0 0.0
    %8752 = vmatprep.subr.mxu0 0.0
    %8753 = vmatpush2.msra.mxu0 0.0
    %8754 = vmatprep.subr.mxu0 0.0
    %8755 = vmatpush2.msra.mxu0 0.0
    %8756 = vmatprep.subr.mxu0 0.0
    %8757 = vmatpush2.msra.mxu0 0.0
    %8758 = vmatprep.subr.mxu0 0.0
    %8759 = vmatpush2.msra.mxu0 0.0
    %8760 = vmatprep.subr.mxu0 0.0
    %8761 = vmatpush2.msra.mxu0 0.0
    %8762 = vmatprep.subr.mxu0 0.0
    %8763 = vmatpush2.msra.mxu0 0.0
    %8764 = vmatprep.subr.mxu0 0.0
    %8765 = vmatpush2.msra.mxu0 0.0
    %8766 = vmatprep.subr.mxu0 0.0
    %8767 = vmatpush2.msra.mxu0 0.0
    %8768 = vmatprep.subr.mxu0 0.0
    %8769 = vmatpush2.msra.mxu0 0.0
    %8770 = vmatprep.subr.mxu0 0.0
    %8771 = vmatpush2.msra.mxu0 0.0
    %8772 = vmatprep.subr.mxu0 0.0
    %8773 = vmatpush2.msra.mxu0 0.0
    %8774 = vmatprep.subr.mxu0 0.0
    %8775 = vmatpush2.msra.mxu0 0.0
    %8776 = vmatprep.mubr.f32.mxu0 0.0
    %8777 = vmatmul.mubr.f32.gmra.mxu0 %v8470
    %v8778 = vpop.f32.mrf.mxu0
    %v8779 = vadd.f32 0.0, %v8778
    %v8780 = vpop.f32.mrf.mxu0
    %8781 = vdwg.mxu0
    %8783 = vrot.lane.b32.xlu0 %v8711, 96
    %v8784 = vpop.permute.xlu0 %8783
    %v8785 = vsel %vm436, %v8784, 0
    %8787 = vmatprep.subr.mxu0 0.0
    %8788 = vmatpush1.msra.mxu0 0.0
    %8789 = vmatprep.subr.mxu0 0.0
    %8790 = vmatpush1.msra.mxu0 0.0
    %8791 = vmatprep.subr.mxu0 0.0
    %8792 = vmatpush1.msra.mxu0 0.0
    %8793 = vmatprep.subr.mxu0 0.0
    %8794 = vmatpush1.msra.mxu0 0.0
    %8795 = vmatprep.subr.mxu0 0.0
    %8796 = vmatpush1.msra.mxu0 0.0
    %8797 = vmatprep.subr.mxu0 0.0
    %8798 = vmatpush1.msra.mxu0 0.0
    %8799 = vmatprep.subr.mxu0 0.0
    %8800 = vmatpush1.msra.mxu0 0.0
    %8801 = vmatprep.subr.mxu0 0.0
    %8802 = vmatpush1.msra.mxu0 0.0
    %8803 = vmatprep.subr.mxu0 0.0
    %8804 = vmatpush1.msra.mxu0 0.0
    %8805 = vmatprep.subr.mxu0 0.0
    %8806 = vmatpush1.msra.mxu0 0.0
    %8807 = vmatprep.subr.mxu0 0.0
    %8808 = vmatpush1.msra.mxu0 0.0
    %8809 = vmatprep.subr.mxu0 0.0
    %8810 = vmatpush1.msra.mxu0 0.0
    %8811 = vmatprep.subr.mxu0 0.0
    %8812 = vmatpush1.msra.mxu0 %v249
    %8813 = vmatprep.subr.mxu0 0.0
    %8814 = vmatpush1.msra.mxu0 %v248
    %8815 = vmatprep.subr.mxu0 0.0
    %8816 = vmatpush1.msra.mxu0 %v247
    %8817 = vmatprep.subr.mxu0 0.0
    %8818 = vmatpush1.msra.mxu0 %v246
    %8819 = vmatprep.subr.mxu0 0.0
    %8820 = vmatpush2.msra.mxu0 0.0
    %8821 = vmatprep.subr.mxu0 0.0
    %8822 = vmatpush2.msra.mxu0 0.0
    %8823 = vmatprep.subr.mxu0 0.0
    %8824 = vmatpush2.msra.mxu0 0.0
    %8825 = vmatprep.subr.mxu0 0.0
    %8826 = vmatpush2.msra.mxu0 0.0
    %8827 = vmatprep.subr.mxu0 0.0
    %8828 = vmatpush2.msra.mxu0 0.0
    %8829 = vmatprep.subr.mxu0 0.0
    %8830 = vmatpush2.msra.mxu0 0.0
    %8831 = vmatprep.subr.mxu0 0.0
    %8832 = vmatpush2.msra.mxu0 0.0
    %8833 = vmatprep.subr.mxu0 0.0
    %8834 = vmatpush2.msra.mxu0 0.0
    %8835 = vmatprep.subr.mxu0 0.0
    %8836 = vmatpush2.msra.mxu0 0.0
    %8837 = vmatprep.subr.mxu0 0.0
    %8838 = vmatpush2.msra.mxu0 0.0
    %8839 = vmatprep.subr.mxu0 0.0
    %8840 = vmatpush2.msra.mxu0 0.0
    %8841 = vmatprep.subr.mxu0 0.0
    %8842 = vmatpush2.msra.mxu0 0.0
    %8843 = vmatprep.subr.mxu0 0.0
    %8844 = vmatpush2.msra.mxu0 0.0
    %8845 = vmatprep.subr.mxu0 0.0
    %8846 = vmatpush2.msra.mxu0 0.0
    %8847 = vmatprep.subr.mxu0 0.0
    %8848 = vmatpush2.msra.mxu0 0.0
    %8849 = vmatprep.subr.mxu0 0.0
    %8850 = vmatpush2.msra.mxu0 0.0
    %8851 = vmatprep.mubr.f32.mxu0 0.0
    %8852 = vmatmul.mubr.f32.gmra.mxu0 %v8785
    %v8853 = vpop.f32.mrf.mxu0
    %v8854 = vadd.f32 %v8779, %v8853
    %v8855 = vpop.f32.mrf.mxu0
    %8856 = vdwg.mxu0
    %8857 = vmatprep.subr.mxu0 0.0
    %8858 = vmatpush1.msra.mxu0 0.0
    %8859 = vmatprep.subr.mxu0 0.0
    %8860 = vmatpush1.msra.mxu0 0.0
    %8861 = vmatprep.subr.mxu0 0.0
    %8862 = vmatpush1.msra.mxu0 0.0
    %8863 = vmatprep.subr.mxu0 0.0
    %8864 = vmatpush1.msra.mxu0 0.0
    %8865 = vmatprep.subr.mxu0 0.0
    %8866 = vmatpush1.msra.mxu0 0.0
    %8867 = vmatprep.subr.mxu0 0.0
    %8868 = vmatpush1.msra.mxu0 0.0
    %8869 = vmatprep.subr.mxu0 0.0
    %8870 = vmatpush1.msra.mxu0 0.0
    %8871 = vmatprep.subr.mxu0 0.0
    %8872 = vmatpush1.msra.mxu0 0.0
    %8873 = vmatprep.subr.mxu0 0.0
    %8874 = vmatpush1.msra.mxu0 0.0
    %8875 = vmatprep.subr.mxu0 0.0
    %8876 = vmatpush1.msra.mxu0 0.0
    %8877 = vmatprep.subr.mxu0 0.0
    %8878 = vmatpush1.msra.mxu0 0.0
    %8879 = vmatprep.subr.mxu0 0.0
    %8880 = vmatpush1.msra.mxu0 0.0
    %8881 = vmatprep.subr.mxu0 0.0
    %8882 = vmatpush1.msra.mxu0 0.0
    %8883 = vmatprep.subr.mxu0 0.0
    %8884 = vmatpush1.msra.mxu0 0.0
    %8885 = vmatprep.subr.mxu0 0.0
    %8886 = vmatpush1.msra.mxu0 %v255
    %8887 = vmatprep.subr.mxu0 0.0
    %8888 = vmatpush1.msra.mxu0 %v254
    %8889 = vmatprep.subr.mxu0 0.0
    %8890 = vmatpush2.msra.mxu0 0.0
    %8891 = vmatprep.subr.mxu0 0.0
    %8892 = vmatpush2.msra.mxu0 0.0
    %8893 = vmatprep.subr.mxu0 0.0
    %8894 = vmatpush2.msra.mxu0 0.0
    %8895 = vmatprep.subr.mxu0 0.0
    %8896 = vmatpush2.msra.mxu0 0.0
    %8897 = vmatprep.subr.mxu0 0.0
    %8898 = vmatpush2.msra.mxu0 0.0
    %8899 = vmatprep.subr.mxu0 0.0
    %8900 = vmatpush2.msra.mxu0 0.0
    %8901 = vmatprep.subr.mxu0 0.0
    %8902 = vmatpush2.msra.mxu0 0.0
    %8903 = vmatprep.subr.mxu0 0.0
    %8904 = vmatpush2.msra.mxu0 0.0
    %8905 = vmatprep.subr.mxu0 0.0
    %8906 = vmatpush2.msra.mxu0 0.0
    %8907 = vmatprep.subr.mxu0 0.0
    %8908 = vmatpush2.msra.mxu0 0.0
    %8909 = vmatprep.subr.mxu0 0.0
    %8910 = vmatpush2.msra.mxu0 0.0
    %8911 = vmatprep.subr.mxu0 0.0
    %8912 = vmatpush2.msra.mxu0 0.0
    %8913 = vmatprep.subr.mxu0 0.0
    %8914 = vmatpush2.msra.mxu0 0.0
    %8915 = vmatprep.subr.mxu0 0.0
    %8916 = vmatpush2.msra.mxu0 0.0
    %8917 = vmatprep.subr.mxu0 0.0
    %8918 = vmatpush2.msra.mxu0 0.0
    %8919 = vmatprep.subr.mxu0 0.0
    %8920 = vmatpush2.msra.mxu0 0.0
    %8921 = vmatprep.mubr.f32.mxu0 0.0
    %8922 = vmatmul.mubr.f32.gmra.mxu0 %v8543
    %v8923 = vpop.f32.mrf.mxu0
    %v8924 = vadd.f32 0.0, %v8923
    %v8925 = vpop.f32.mrf.mxu0
    %8926 = vdwg.mxu0
    %v8927 = vadd.f32 %v8854, %v8924
    %v8928 = vadd.f32 %v8927, %v4204
    %s8929 = scalar_lea.vmem [#allocation24], 14
    %8930 = vst.msk [vmem:[%s8929] sm:$0x3] %vm3424, %v8928
    // Predicated region
    $region138: #{seq2seq_forward_impl.1} parent=1 // pred_check
      _
    $region139: #{seq2seq_forward_impl.1} parent=1 // pred_check_branch
      %8932 = sbr.rel (0) target = $region141
    $region140: #{seq2seq_forward_impl.1} parent=1 // pred_region
      %s8934 = ssub.s32 256, 256
      %8935 = vsyncadd [#allocation6], %s8934
      %s8936 = sshll.u32 [#allocation24], 4
      %s8937 = int_to_ptr.vmem [resolvable:$true] %s8936
      %8942 = dma.vmem_to_hbm [thread:$0]  %s8937, 256, %s22, [#allocation6], 32, 32, 2
    $region141: #{seq2seq_forward_impl.1} parent=1 // pred_fallthru
      _
    // Predicated region
    $region142: #{seq2seq_forward_impl.1} parent=1 // pred_check
      _
    $region143: #{seq2seq_forward_impl.1} parent=1 // pred_check_branch
      %8944 = sbr.rel (0) target = $region145
    $region144: #{seq2seq_forward_impl.1} parent=1 // pred_region
      %8945 = dma.done [#allocation6], 256
    $region145: #{seq2seq_forward_impl.1} parent=1 // pred_fallthru
      _
    %8946 = vsyncpa [#allocation5], 1
    %8947 = vsyncpa [#allocation13], 1
    %8948 = vsyncpa [#allocation16], 1
    %8949 = vsyncpa [#allocation19], 1
    %8950 = vsyncpa [#allocation22], 1
    %8951 = vsyncpa [#allocation6], 1
    %8952 = vsyncpa [#allocation7], 1
    %8953 = vsyncpa [#allocation9], 1

</llo_original>
